<compile_context>
chip_gen: v5e
topology: v5e:2x2
jax: 0.10.0
libtpu: 0.0.40
codegen_flags: <defaults>
</compile_context>

<pallas_src>
import numpy as np
import jax
import jax.numpy as jnp
from jax.experimental import pallas as pl
from jax.experimental.pallas import tpu as pltpu

_VMEM_LIMIT = 48 * 1024 * 1024  # well under v7x's 64 MiB physical VMEM


def _cparams(*sem):
    return pltpu.CompilerParams(dimension_semantics=sem,
                                vmem_limit_bytes=_VMEM_LIMIT)


def _round_up(x, m):
    return (x + m - 1) // m * m


# ----------------------------------------------------------------------------
# Kernel A: tiled (M,K)@(K,N) + bias (+ optional ReLU). bf16 MXU, fp32 acc.
# Ragged last row-tile handled by Pallas block clamping (no host pad/slice).
# ----------------------------------------------------------------------------
def _mm_bias_kernel(relu):
    def kernel(a_ref, w_ref, b_ref, o_ref):
        acc = jnp.dot(a_ref[...], w_ref[...], preferred_element_type=jnp.float32)
        acc = acc + b_ref[...]
        if relu:
            acc = jnp.maximum(acc, 0.0)
        o_ref[...] = acc.astype(o_ref.dtype)
    return kernel


def matmul_bias(a, w, b, *, relu, out_dtype=jnp.bfloat16, tm=512):
    M, K = a.shape
    K2, N = w.shape
    assert K == K2
    tm = min(tm, _round_up(M, 8))          # single tile when M is small
    grid = (pl.cdiv(M, tm),)
    return pl.pallas_call(
        _mm_bias_kernel(relu),
        out_shape=jax.ShapeDtypeStruct((M, N), out_dtype),
        grid_spec=pltpu.PrefetchScalarGridSpec(
            num_scalar_prefetch=0,
            grid=grid,
            in_specs=[
                pl.BlockSpec((tm, K), lambda i: (i, 0)),
                pl.BlockSpec((K, N), lambda i: (0, 0)),
                pl.BlockSpec((1, N), lambda i: (0, 0)),
            ],
            out_specs=pl.BlockSpec((tm, N), lambda i: (i, 0)),
        ),
        compiler_params=_cparams("parallel"),
    )(a.astype(jnp.bfloat16), w.astype(jnp.bfloat16),
      b.reshape(1, N).astype(jnp.float32))


# ----------------------------------------------------------------------------
# Kernel B: generic fused direct conv on row-flattened inputs.
# Each tap = (input_index, row_offset); the kernel accumulates
# dot(inputs[i][n, off:off+out_rows, :], w_taps[k]) over taps, adds the bias
# and applies ReLU -- one sample per grid step, everything resident in VMEM.
# ----------------------------------------------------------------------------
def _conv_taps_kernel(n_inputs, tap_specs, out_rows, relu):
    def kernel(*refs):
        in_refs = refs[:n_inputs]
        w_ref, b_ref, o_ref = refs[n_inputs:]
        acc = None
        for k, (src, off) in enumerate(tap_specs):
            tap = in_refs[src][0, off:off + out_rows, :]          # (rows, Cin)
            contrib = jnp.dot(tap, w_ref[k],
                              preferred_element_type=jnp.float32)
            acc = contrib if acc is None else acc + contrib
        acc = acc + b_ref[...]
        if relu:
            acc = jnp.maximum(acc, 0.0)
        o_ref[0] = acc.astype(o_ref.dtype)
    return kernel


def conv_taps(inputs, w_taps, bias, *, out_rows, tap_specs, relu,
              out_dtype=jnp.bfloat16):
    n_in = len(inputs)
    N = inputs[0].shape[0]
    Cout = w_taps.shape[-1]
    in_specs = [pl.BlockSpec((1,) + tuple(x.shape[1:]), lambda n: (n, 0, 0))
                for x in inputs]
    in_specs += [
        pl.BlockSpec(tuple(w_taps.shape), lambda n: (0, 0, 0)),
        pl.BlockSpec((1, Cout), lambda n: (0, 0)),
    ]
    return pl.pallas_call(
        _conv_taps_kernel(n_in, tuple(tap_specs), out_rows, relu),
        out_shape=jax.ShapeDtypeStruct((N, out_rows, Cout), out_dtype),
        grid_spec=pltpu.PrefetchScalarGridSpec(
            num_scalar_prefetch=0,
            grid=(N,),
            in_specs=in_specs,
            out_specs=pl.BlockSpec((1, out_rows, Cout), lambda n: (n, 0, 0)),
        ),
        compiler_params=_cparams("parallel"),
    )(*[x.astype(jnp.bfloat16) for x in inputs],
      w_taps.astype(jnp.bfloat16), bias.reshape(1, Cout).astype(jnp.float32))


# ----------------------------------------------------------------------------
# Kernel C: per-sample left-multiply by an interpolation matrix (H-pass of the
# separable bicubic), with optional fused ReLU.
# ----------------------------------------------------------------------------
def _interp_rows_kernel(relu):
    def kernel(m_ref, x_ref, o_ref):
        acc = jnp.dot(m_ref[...], x_ref[0], preferred_element_type=jnp.float32)
        if relu:
            acc = jnp.maximum(acc, 0.0)
        o_ref[0] = acc.astype(o_ref.dtype)
    return kernel


def interp_rows(mat, x, *, relu, out_dtype=jnp.bfloat16):
    """out[n] = mat @ x[n]; x: (N, R, D) -> (N, P, D)."""
    N, R, D = x.shape
    P = mat.shape[0]
    return pl.pallas_call(
        _interp_rows_kernel(relu),
        out_shape=jax.ShapeDtypeStruct((N, P, D), out_dtype),
        grid_spec=pltpu.PrefetchScalarGridSpec(
            num_scalar_prefetch=0,
            grid=(N,),
            in_specs=[
                pl.BlockSpec((P, R), lambda n: (0, 0)),
                pl.BlockSpec((1, R, D), lambda n: (n, 0, 0)),
            ],
            out_specs=pl.BlockSpec((1, P, D), lambda n: (n, 0, 0)),
        ),
        compiler_params=_cparams("parallel"),
    )(mat.astype(jnp.bfloat16), x.astype(jnp.bfloat16))


# ----------------------------------------------------------------------------
# Bicubic (scale=2) interpolation matrix, PyTorch semantics (a=-0.75,
# align_corners=False, edge-clamped index accumulation).
# ----------------------------------------------------------------------------
def bicubic_up2_matrix(L):
    A = -0.75

    def cubic(d):
        d = abs(d)
        if d <= 1.0:
            return (A + 2.0) * d ** 3 - (A + 3.0) * d ** 2 + 1.0
        elif d < 2.0:
            return A * d ** 3 - 5.0 * A * d ** 2 + 8.0 * A * d - 4.0 * A
        return 0.0

    M = np.zeros((2 * L, L), dtype=np.float32)
    for o in range(2 * L):
        src = (o + 0.5) * 0.5 - 0.5
        f = int(np.floor(src))
        t = src - f
        for k in range(-1, 3):
            idx = min(max(f + k, 0), L - 1)
            M[o, idx] += cubic(t - k)
    return jnp.asarray(M)


# ----------------------------------------------------------------------------
# Conv wrappers (weight reshuffles, pads, phase split are cheap XLA glue).
# ----------------------------------------------------------------------------
def _taps_from_torch_w(w):
    # (Cout, Cin, 3, 3) -> (9, Cin, Cout), tap order kh-major / kw-minor.
    Cout, Cin = w.shape[0], w.shape[1]
    return jnp.transpose(w, (2, 3, 1, 0)).reshape(9, Cin, Cout)


def conv3x3_merge(a, b, w, bias, *, out_dtype):
    """relu(conv3x3(cat(a, b), pad=1, stride=1)) without materializing the cat.

    a, b: (N, H, W, C) NHWC; w: torch (Cout, 2C, 3, 3).
    """
    N, H, W, C = a.shape
    Wp = W + 2
    pad = ((0, 0), (1, 2), (1, 1), (0, 0))        # extra bottom row for flatten
    a_f = jnp.pad(a, pad).reshape(N, (H + 3) * Wp, C)
    b_f = jnp.pad(b, pad).reshape(N, (H + 3) * Wp, C)
    w_taps = jnp.concatenate(
        [_taps_from_torch_w(w[:, :C]), _taps_from_torch_w(w[:, C:])], axis=0)
    offs = [kh * Wp + kw for kh in range(3) for kw in range(3)]
    taps = [(0, o) for o in offs] + [(1, o) for o in offs]
    out = conv_taps([a_f, b_f], w_taps, bias, out_rows=H * Wp,
                    tap_specs=taps, relu=True, out_dtype=out_dtype)
    return out.reshape(N, H, Wp, -1)[:, :, :W, :]          # drop junk columns


def conv3x3_stride2(x, w, bias, *, out_dtype):
    """relu(conv3x3(x, pad=1, stride=2)) via even/odd phase decomposition.

    x: (N, 2H, 2W, C) NHWC -> (N, H, W, Cout).
    """
    N, H2, W2, C = x.shape
    H, W = H2 // 2, W2 // 2
    Wp = W + 1
    xp = jnp.pad(x, ((0, 0), (1, 3), (1, 1), (0, 0)))      # (N, 2H+4, 2W+2, C)
    phases = [xp[:, ph::2, pw::2, :].reshape(N, (H + 2) * Wp, C)
              for ph in range(2) for pw in range(2)]
    w_taps = _taps_from_torch_w(w)
    taps = []
    for kh in range(3):
        for kw in range(3):
            src = (kh % 2) * 2 + (kw % 2)
            taps.append((src, (kh // 2) * Wp + (kw // 2)))
    out = conv_taps(phases, w_taps, bias, out_rows=H * Wp,
                    tap_specs=taps, relu=True, out_dtype=out_dtype)
    return out.reshape(N, H, Wp, -1)[:, :, :W, :]


def conv12_upsample_relu(x1_nhwc, w12, b12):
    """relu(conv12(bicubic_x2(x1))) == relu(bicubic_x2(conv12(x1))).

    conv12 is 1x1 (linear in channels) and the bicubic weights sum to one per
    output pixel, so the 1x1 conv (incl. bias) commutes with the upsample; run
    it at low resolution (4x fewer pixels through the GEMM).
    """
    N, H, W, C = x1_nhwc.shape
    Cout = w12.shape[0]
    # 1x1 conv at low resolution (row GEMM).
    z = matmul_bias(x1_nhwc.reshape(N * H * W, C),
                    w12.reshape(Cout, C).T, b12, relu=False)
    z = z.reshape(N, H, W, Cout)
    # Separable bicubic x2: W-pass as a row GEMM (channels moved before W so
    # the contraction dim is last), H-pass as a per-sample left-multiply with
    # the ReLU fused; the intermediates stay in bf16.
    AW = bicubic_up2_matrix(W)                              # (2W, W)
    AH = bicubic_up2_matrix(H)                              # (2H, H)
    zc = jnp.transpose(z, (0, 1, 3, 2))                     # (N, H, C, W) small
    u = matmul_bias(zc.reshape(N * H * Cout, W), AW.T,
                    jnp.zeros((2 * W,), jnp.float32), relu=False)
    u = u.reshape(N, H, Cout * 2 * W)                       # (N, H, C*2W)
    v = interp_rows(AH, u, relu=True)                       # (N, 2H, C*2W)
    v = v.reshape(N, 2 * H, Cout, 2 * W)
    return jnp.transpose(v, (0, 1, 3, 2))                   # (N, 2H, 2W, C)


# ----------------------------------------------------------------------------
# CSFI2 forward
# ----------------------------------------------------------------------------
def csfi2_forward(params, x1, x2):
    # NCHW -> NHWC bf16 once at the entry.
    x1h = jnp.transpose(x1, (0, 2, 3, 1)).astype(jnp.bfloat16)
    x2h = jnp.transpose(x2, (0, 2, 3, 1)).astype(jnp.bfloat16)
    C = x1h.shape[-1]

    # x12 = relu(conv12(bicubic_x2(x1)))
    x12 = conv12_upsample_relu(x1h, params["conv12_w"], params["conv12_b"])

    # x21 = relu(conv21(x2))              [3x3, stride 2, pad 1]
    x21 = conv3x3_stride2(x2h, params["conv21_w"], params["conv21_b"],
                          out_dtype=jnp.bfloat16)

    # y1 = relu(conv_merge1(cat(x1, x21)))   -- concat never materialized
    y1 = conv3x3_merge(x1h, x21, params["merge1_w"], params["merge1_b"],
                       out_dtype=jnp.float32)
    # y2 = relu(conv_merge2(cat(x2, x12)))
    y2 = conv3x3_merge(x2h, x12, params["merge2_w"], params["merge2_b"],
                       out_dtype=jnp.float32)

    # NHWC -> NCHW once at the exit.
    return (jnp.transpose(y1, (0, 3, 1, 2)), jnp.transpose(y2, (0, 3, 1, 2)))


def init_params(key, C):
    ks = jax.random.split(key, 8)
    s = 0.05
    return {
        # torch-shaped conv weights (Cout, Cin, KH, KW)
        "conv12_w": s * jax.random.normal(ks[0], (C, C, 1, 1), jnp.float32),
        "conv12_b": s * jax.random.normal(ks[1], (C,), jnp.float32),
        "conv21_w": s * jax.random.normal(ks[2], (C, C, 3, 3), jnp.float32),
        "conv21_b": s * jax.random.normal(ks[3], (C,), jnp.float32),
        "merge1_w": s * jax.random.normal(ks[4], (C, 2 * C, 3, 3), jnp.float32),
        "merge1_b": s * jax.random.normal(ks[5], (C,), jnp.float32),
        "merge2_w": s * jax.random.normal(ks[6], (C, 2 * C, 3, 3), jnp.float32),
        "merge2_b": s * jax.random.normal(ks[7], (C,), jnp.float32),
    }


if __name__ == "__main__":
    key = jax.random.PRNGKey(0)
    k1, k2, kp = jax.random.split(key, 3)

    N, C, H, W = 2, 8, 8, 8
    x1 = jax.random.normal(k1, (N, C, H, W), jnp.float32)          # low-res
    x2 = jax.random.normal(k2, (N, C, 2 * H, 2 * W), jnp.float32)  # high-res
    params = init_params(kp, C)

    y1, y2 = jax.jit(csfi2_forward)(params, x1, x2)
    jax.block_until_ready((y1, y2))

    assert y1.shape == (N, C, H, W)
    assert y2.shape == (N, C, 2 * H, 2 * W)
    assert bool(jnp.all(jnp.isfinite(y1))) and bool(jnp.all(jnp.isfinite(y2)))
    print("KERNEL_OK")
</pallas_src>

<mosaic_0001>
module attributes {stable_mosaic.version = 11 : i64} {
  func.func @kernel(%arg0: i32, %arg1: memref<128x8xbf16, #tpu.memory_space<vmem>>, %arg2: memref<8x8xbf16, #tpu.memory_space<vmem>>, %arg3: memref<1x8xf32, #tpu.memory_space<vmem>>, %arg4: memref<128x8xbf16, #tpu.memory_space<vmem>>) attributes {dimension_semantics = [#tpu.dimension_semantics<parallel>], iteration_bounds = array<i64: 1>, scalar_prefetch = 0 : i64, scratch_operands = 0 : i64, tpu.core_type = #tpu.core_type<tc>, window_params = [{transform_indices = @transform_0, window_bounds = array<i64: 128, 8>}, {pipeline_mode = #tpu.pipeline_mode<synchronous>, transform_indices = @transform_1, window_bounds = array<i64: 8, 8>}, {pipeline_mode = #tpu.pipeline_mode<synchronous>, transform_indices = @transform_2, window_bounds = array<i64: 1, 8>}, {transform_indices = @transform_3, window_bounds = array<i64: 128, 8>}]} {
    %c0 = arith.constant 0 : index
    %c0_0 = arith.constant 0 : index
    %0 = vector.load %arg1[%c0, %c0_0] : memref<128x8xbf16, #tpu.memory_space<vmem>>, vector<128x8xbf16>
    %c0_1 = arith.constant 0 : index
    %c0_2 = arith.constant 0 : index
    %1 = vector.load %arg2[%c0_1, %c0_2] : memref<8x8xbf16, #tpu.memory_space<vmem>>, vector<8x8xbf16>
    %cst = arith.constant dense<0.000000e+00> : vector<128x8xf32>
    %2 = tpu.matmul %0, %1, %cst {dimension_numbers = #tpu.dot_dimension_numbers<[1], [0], [0], [1], [0, 0, 1, 1], [], []>} : vector<128x8xbf16>, vector<8x8xbf16>, vector<128x8xf32> -> vector<128x8xf32>
    %c0_3 = arith.constant 0 : index
    %c0_4 = arith.constant 0 : index
    %3 = vector.load %arg3[%c0_3, %c0_4] : memref<1x8xf32, #tpu.memory_space<vmem>>, vector<1x8xf32>
    %4 = vector.broadcast %3 : vector<1x8xf32> to vector<128x8xf32>
    %5 = arith.addf %2, %4 : vector<128x8xf32>
    %6 = arith.truncf %5 : vector<128x8xf32> to vector<128x8xbf16>
    %c0_5 = arith.constant 0 : index
    %c0_6 = arith.constant 0 : index
    %7 = vector.load %arg4[%c0_5, %c0_6] : memref<128x8xbf16, #tpu.memory_space<vmem>>, vector<128x8xbf16>
    tpu.vector_store %arg4[%c0_5, %c0_6], %6 {strides = array<i32>} : memref<128x8xbf16, #tpu.memory_space<vmem>>, vector<128x8xbf16>,
    return
  }
  func.func @transform_0(%arg0: i32) -> (i32, i32) {
    %c0_i32 = arith.constant 0 : i32
    %c0_i32_0 = arith.constant 0 : i32
    return %arg0, %c0_i32 : i32, i32
  }
  func.func @transform_1(%arg0: i32) -> (i32, i32) {
    %c0_i32 = arith.constant 0 : i32
    %c0_i32_0 = arith.constant 0 : i32
    %c0_i32_1 = arith.constant 0 : i32
    return %c0_i32, %c0_i32_0 : i32, i32
  }
  func.func @transform_2(%arg0: i32) -> (i32, i32) {
    %c0_i32 = arith.constant 0 : i32
    %c0_i32_0 = arith.constant 0 : i32
    %c0_i32_1 = arith.constant 0 : i32
    return %c0_i32, %c0_i32_0 : i32, i32
  }
  func.func @transform_3(%arg0: i32) -> (i32, i32) {
    %c0_i32 = arith.constant 0 : i32
    %c0_i32_0 = arith.constant 0 : i32
    return %arg0, %c0_i32 : i32, i32
  }
}

module attributes {stable_mosaic.version = 11 : i64} {
  func.func @kernel(%arg0: i32, %arg1: memref<128x8xbf16, #tpu.memory_space<vmem>>, %arg2: memref<8x16xbf16, #tpu.memory_space<vmem>>, %arg3: memref<1x16xf32, #tpu.memory_space<vmem>>, %arg4: memref<128x16xbf16, #tpu.memory_space<vmem>>) attributes {dimension_semantics = [#tpu.dimension_semantics<parallel>], iteration_bounds = array<i64: 1>, scalar_prefetch = 0 : i64, scratch_operands = 0 : i64, tpu.core_type = #tpu.core_type<tc>, window_params = [{transform_indices = @transform_0, window_bounds = array<i64: 128, 8>}, {pipeline_mode = #tpu.pipeline_mode<synchronous>, transform_indices = @transform_1, window_bounds = array<i64: 8, 16>}, {pipeline_mode = #tpu.pipeline_mode<synchronous>, transform_indices = @transform_2, window_bounds = array<i64: 1, 16>}, {transform_indices = @transform_3, window_bounds = array<i64: 128, 16>}]} {
    %c0 = arith.constant 0 : index
    %c0_0 = arith.constant 0 : index
    %0 = vector.load %arg1[%c0, %c0_0] : memref<128x8xbf16, #tpu.memory_space<vmem>>, vector<128x8xbf16>
    %c0_1 = arith.constant 0 : index
    %c0_2 = arith.constant 0 : index
    %1 = vector.load %arg2[%c0_1, %c0_2] : memref<8x16xbf16, #tpu.memory_space<vmem>>, vector<8x16xbf16>
    %cst = arith.constant dense<0.000000e+00> : vector<128x16xf32>
    %2 = tpu.matmul %0, %1, %cst {dimension_numbers = #tpu.dot_dimension_numbers<[1], [0], [0], [1], [0, 0, 1, 1], [], []>} : vector<128x8xbf16>, vector<8x16xbf16>, vector<128x16xf32> -> vector<128x16xf32>
    %c0_3 = arith.constant 0 : index
    %c0_4 = arith.constant 0 : index
    %3 = vector.load %arg3[%c0_3, %c0_4] : memref<1x16xf32, #tpu.memory_space<vmem>>, vector<1x16xf32>
    %4 = vector.broadcast %3 : vector<1x16xf32> to vector<128x16xf32>
    %5 = arith.addf %2, %4 : vector<128x16xf32>
    %6 = arith.truncf %5 : vector<128x16xf32> to vector<128x16xbf16>
    %c0_5 = arith.constant 0 : index
    %c0_6 = arith.constant 0 : index
    %7 = vector.load %arg4[%c0_5, %c0_6] : memref<128x16xbf16, #tpu.memory_space<vmem>>, vector<128x16xbf16>
    tpu.vector_store %arg4[%c0_5, %c0_6], %6 {strides = array<i32>} : memref<128x16xbf16, #tpu.memory_space<vmem>>, vector<128x16xbf16>,
    return
  }
  func.func @transform_0(%arg0: i32) -> (i32, i32) {
    %c0_i32 = arith.constant 0 : i32
    %c0_i32_0 = arith.constant 0 : i32
    return %arg0, %c0_i32 : i32, i32
  }
  func.func @transform_1(%arg0: i32) -> (i32, i32) {
    %c0_i32 = arith.constant 0 : i32
    %c0_i32_0 = arith.constant 0 : i32
    %c0_i32_1 = arith.constant 0 : i32
    return %c0_i32, %c0_i32_0 : i32, i32
  }
  func.func @transform_2(%arg0: i32) -> (i32, i32) {
    %c0_i32 = arith.constant 0 : i32
    %c0_i32_0 = arith.constant 0 : i32
    %c0_i32_1 = arith.constant 0 : i32
    return %c0_i32, %c0_i32_0 : i32, i32
  }
  func.func @transform_3(%arg0: i32) -> (i32, i32) {
    %c0_i32 = arith.constant 0 : i32
    %c0_i32_0 = arith.constant 0 : i32
    return %arg0, %c0_i32 : i32, i32
  }
}

module attributes {stable_mosaic.version = 11 : i64} {
  func.func @kernel(%arg0: i32, %arg1: memref<16x8xbf16, #tpu.memory_space<vmem>>, %arg2: memref<1x8x128xbf16, #tpu.memory_space<vmem>>, %arg3: memref<1x16x128xbf16, #tpu.memory_space<vmem>>) attributes {dimension_semantics = [#tpu.dimension_semantics<parallel>], iteration_bounds = array<i64: 2>, scalar_prefetch = 0 : i64, scratch_operands = 0 : i64, tpu.core_type = #tpu.core_type<tc>, window_params = [{pipeline_mode = #tpu.pipeline_mode<synchronous>, transform_indices = @transform_0, window_bounds = array<i64: 16, 8>}, {transform_indices = @transform_1, window_bounds = array<i64: 1, 8, 128>}, {transform_indices = @transform_2, window_bounds = array<i64: 1, 16, 128>}]} {
    %c0 = arith.constant 0 : index
    %c0_0 = arith.constant 0 : index
    %0 = vector.load %arg1[%c0, %c0_0] : memref<16x8xbf16, #tpu.memory_space<vmem>>, vector<16x8xbf16>
    %c0_1 = arith.constant 0 : index
    %c0_2 = arith.constant 0 : index
    %c0_3 = arith.constant 0 : index
    %1 = vector.load %arg2[%c0_1, %c0_2, %c0_3] : memref<1x8x128xbf16, #tpu.memory_space<vmem>>, vector<1x8x128xbf16>
    %2 = vector.shape_cast %1 : vector<1x8x128xbf16> to vector<8x128xbf16>
    %cst = arith.constant dense<0.000000e+00> : vector<16x128xf32>
    %3 = tpu.matmul %0, %2, %cst {dimension_numbers = #tpu.dot_dimension_numbers<[1], [0], [0], [1], [0, 0, 1, 1], [], []>} : vector<16x8xbf16>, vector<8x128xbf16>, vector<16x128xf32> -> vector<16x128xf32>
    %cst_4 = arith.constant 0.000000e+00 : f32
    %4 = vector.broadcast %cst_4 : f32 to vector<16x128xf32>
    %5 = arith.maximumf %3, %4 : vector<16x128xf32>
    %6 = arith.truncf %5 : vector<16x128xf32> to vector<16x128xbf16>
    %c0_5 = arith.constant 0 : index
    %c0_6 = arith.constant 0 : index
    %c0_7 = arith.constant 0 : index
    %7 = vector.load %arg3[%c0_5, %c0_6, %c0_7] : memref<1x16x128xbf16, #tpu.memory_space<vmem>>, vector<1x16x128xbf16>
    %8 = vector.shape_cast %7 : vector<1x16x128xbf16> to vector<16x128xbf16>
    %9 = vector.shape_cast %6 : vector<16x128xbf16> to vector<1x16x128xbf16>
    tpu.vector_store %arg3[%c0_5, %c0_6, %c0_7], %9 {strides = array<i32>} : memref<1x16x128xbf16, #tpu.memory_space<vmem>>, vector<1x16x128xbf16>,
    return
  }
  func.func @transform_0(%arg0: i32) -> (i32, i32) {
    %c0_i32 = arith.constant 0 : i32
    %c0_i32_0 = arith.constant 0 : i32
    %c0_i32_1 = arith.constant 0 : i32
    return %c0_i32, %c0_i32_0 : i32, i32
  }
  func.func @transform_1(%arg0: i32) -> (i32, i32, i32) {
    %c0_i32 = arith.constant 0 : i32
    %c0_i32_0 = arith.constant 0 : i32
    %c0_i32_1 = arith.constant 0 : i32
    return %arg0, %c0_i32, %c0_i32_0 : i32, i32, i32
  }
  func.func @transform_2(%arg0: i32) -> (i32, i32, i32) {
    %c0_i32 = arith.constant 0 : i32
    %c0_i32_0 = arith.constant 0 : i32
    %c0_i32_1 = arith.constant 0 : i32
    return %arg0, %c0_i32, %c0_i32_0 : i32, i32, i32
  }
}

module attributes {stable_mosaic.version = 11 : i64} {
  func.func @kernel(%arg0: i32, %arg1: memref<1x90x8xbf16, #tpu.memory_space<vmem>>, %arg2: memref<1x90x8xbf16, #tpu.memory_space<vmem>>, %arg3: memref<1x90x8xbf16, #tpu.memory_space<vmem>>, %arg4: memref<1x90x8xbf16, #tpu.memory_space<vmem>>, %arg5: memref<9x8x8xbf16, #tpu.memory_space<vmem>>, %arg6: memref<1x8xf32, #tpu.memory_space<vmem>>, %arg7: memref<1x72x8xbf16, #tpu.memory_space<vmem>>) attributes {dimension_semantics = [#tpu.dimension_semantics<parallel>], iteration_bounds = array<i64: 2>, scalar_prefetch = 0 : i64, scratch_operands = 0 : i64, tpu.core_type = #tpu.core_type<tc>, window_params = [{transform_indices = @transform_0, window_bounds = array<i64: 1, 90, 8>}, {transform_indices = @transform_1, window_bounds = array<i64: 1, 90, 8>}, {transform_indices = @transform_2, window_bounds = array<i64: 1, 90, 8>}, {transform_indices = @transform_3, window_bounds = array<i64: 1, 90, 8>}, {pipeline_mode = #tpu.pipeline_mode<synchronous>, transform_indices = @transform_4, window_bounds = array<i64: 9, 8, 8>}, {pipeline_mode = #tpu.pipeline_mode<synchronous>, transform_indices = @transform_5, window_bounds = array<i64: 1, 8>}, {transform_indices = @transform_6, window_bounds = array<i64: 1, 72, 8>}]} {
    %c0 = arith.constant 0 : index
    %c0_0 = arith.constant 0 : index
    %c0_1 = arith.constant 0 : index
    %0 = vector.load %arg1[%c0, %c0_0, %c0_1] : memref<1x90x8xbf16, #tpu.memory_space<vmem>>, vector<1x72x8xbf16>
    %1 = vector.shape_cast %0 : vector<1x72x8xbf16> to vector<72x8xbf16>
    %c0_2 = arith.constant 0 : index
    %c0_3 = arith.constant 0 : index
    %c0_4 = arith.constant 0 : index
    %2 = vector.load %arg5[%c0_2, %c0_3, %c0_4] : memref<9x8x8xbf16, #tpu.memory_space<vmem>>, vector<1x8x8xbf16>
    %3 = vector.shape_cast %2 : vector<1x8x8xbf16> to vector<8x8xbf16>
    %cst = arith.constant dense<0.000000e+00> : vector<72x8xf32>
    %4 = tpu.matmul %1, %3, %cst {dimension_numbers = #tpu.dot_dimension_numbers<[1], [0], [0], [1], [0, 0, 1, 1], [], []>} : vector<72x8xbf16>, vector<8x8xbf16>, vector<72x8xf32> -> vector<72x8xf32>
    %c0_5 = arith.constant 0 : index
    %c0_6 = arith.constant 0 : index
    %c0_7 = arith.constant 0 : index
    %5 = vector.load %arg2[%c0_5, %c0_6, %c0_7] : memref<1x90x8xbf16, #tpu.memory_space<vmem>>, vector<1x72x8xbf16>
    %6 = vector.shape_cast %5 : vector<1x72x8xbf16> to vector<72x8xbf16>
    %c1 = arith.constant 1 : index
    %c0_8 = arith.constant 0 : index
    %c0_9 = arith.constant 0 : index
    %7 = vector.load %arg5[%c1, %c0_8, %c0_9] : memref<9x8x8xbf16, #tpu.memory_space<vmem>>, vector<1x8x8xbf16>
    %8 = vector.shape_cast %7 : vector<1x8x8xbf16> to vector<8x8xbf16>
    %cst_10 = arith.constant dense<0.000000e+00> : vector<72x8xf32>
    %9 = tpu.matmul %6, %8, %cst_10 {dimension_numbers = #tpu.dot_dimension_numbers<[1], [0], [0], [1], [0, 0, 1, 1], [], []>} : vector<72x8xbf16>, vector<8x8xbf16>, vector<72x8xf32> -> vector<72x8xf32>
    %10 = arith.addf %4, %9 : vector<72x8xf32>
    %c0_11 = arith.constant 0 : index
    %c1_12 = arith.constant 1 : index
    %c0_13 = arith.constant 0 : index
    %11 = vector.load %arg1[%c0_11, %c1_12, %c0_13] : memref<1x90x8xbf16, #tpu.memory_space<vmem>>, vector<1x72x8xbf16>
    %12 = vector.shape_cast %11 : vector<1x72x8xbf16> to vector<72x8xbf16>
    %c2 = arith.constant 2 : index
    %c0_14 = arith.constant 0 : index
    %c0_15 = arith.constant 0 : index
    %13 = vector.load %arg5[%c2, %c0_14, %c0_15] : memref<9x8x8xbf16, #tpu.memory_space<vmem>>, vector<1x8x8xbf16>
    %14 = vector.shape_cast %13 : vector<1x8x8xbf16> to vector<8x8xbf16>
    %cst_16 = arith.constant dense<0.000000e+00> : vector<72x8xf32>
    %15 = tpu.matmul %12, %14, %cst_16 {dimension_numbers = #tpu.dot_dimension_numbers<[1], [0], [0], [1], [0, 0, 1, 1], [], []>} : vector<72x8xbf16>, vector<8x8xbf16>, vector<72x8xf32> -> vector<72x8xf32>
    %16 = arith.addf %10, %15 : vector<72x8xf32>
    %c0_17 = arith.constant 0 : index
    %c0_18 = arith.constant 0 : index
    %c0_19 = arith.constant 0 : index
    %17 = vector.load %arg3[%c0_17, %c0_18, %c0_19] : memref<1x90x8xbf16, #tpu.memory_space<vmem>>, vector<1x72x8xbf16>
    %18 = vector.shape_cast %17 : vector<1x72x8xbf16> to vector<72x8xbf16>
    %c3 = arith.constant 3 : index
    %c0_20 = arith.constant 0 : index
    %c0_21 = arith.constant 0 : index
    %19 = vector.load %arg5[%c3, %c0_20, %c0_21] : memref<9x8x8xbf16, #tpu.memory_space<vmem>>, vector<1x8x8xbf16>
    %20 = vector.shape_cast %19 : vector<1x8x8xbf16> to vector<8x8xbf16>
    %cst_22 = arith.constant dense<0.000000e+00> : vector<72x8xf32>
    %21 = tpu.matmul %18, %20, %cst_22 {dimension_numbers = #tpu.dot_dimension_numbers<[1], [0], [0], [1], [0, 0, 1, 1], [], []>} : vector<72x8xbf16>, vector<8x8xbf16>, vector<72x8xf32> -> vector<72x8xf32>
    %22 = arith.addf %16, %21 : vector<72x8xf32>
    %c0_23 = arith.constant 0 : index
    %c0_24 = arith.constant 0 : index
    %c0_25 = arith.constant 0 : index
    %23 = vector.load %arg4[%c0_23, %c0_24, %c0_25] : memref<1x90x8xbf16, #tpu.memory_space<vmem>>, vector<1x72x8xbf16>
    %24 = vector.shape_cast %23 : vector<1x72x8xbf16> to vector<72x8xbf16>
    %c4 = arith.constant 4 : index
    %c0_26 = arith.constant 0 : index
    %c0_27 = arith.constant 0 : index
    %25 = vector.load %arg5[%c4, %c0_26, %c0_27] : memref<9x8x8xbf16, #tpu.memory_space<vmem>>, vector<1x8x8xbf16>
    %26 = vector.shape_cast %25 : vector<1x8x8xbf16> to vector<8x8xbf16>
    %cst_28 = arith.constant dense<0.000000e+00> : vector<72x8xf32>
    %27 = tpu.matmul %24, %26, %cst_28 {dimension_numbers = #tpu.dot_dimension_numbers<[1], [0], [0], [1], [0, 0, 1, 1], [], []>} : vector<72x8xbf16>, vector<8x8xbf16>, vector<72x8xf32> -> vector<72x8xf32>
    %28 = arith.addf %22, %27 : vector<72x8xf32>
    %c0_29 = arith.constant 0 : index
    %c1_30 = arith.constant 1 : index
    %c0_31 = arith.constant 0 : index
    %29 = vector.load %arg3[%c0_29, %c1_30, %c0_31] : memref<1x90x8xbf16, #tpu.memory_space<vmem>>, vector<1x72x8xbf16>
    %30 = vector.shape_cast %29 : vector<1x72x8xbf16> to vector<72x8xbf16>
    %c5 = arith.constant 5 : index
    %c0_32 = arith.constant 0 : index
    %c0_33 = arith.constant 0 : index
    %31 = vector.load %arg5[%c5, %c0_32, %c0_33] : memref<9x8x8xbf16, #tpu.memory_space<vmem>>, vector<1x8x8xbf16>
    %32 = vector.shape_cast %31 : vector<1x8x8xbf16> to vector<8x8xbf16>
    %cst_34 = arith.constant dense<0.000000e+00> : vector<72x8xf32>
    %33 = tpu.matmul %30, %32, %cst_34 {dimension_numbers = #tpu.dot_dimension_numbers<[1], [0], [0], [1], [0, 0, 1, 1], [], []>} : vector<72x8xbf16>, vector<8x8xbf16>, vector<72x8xf32> -> vector<72x8xf32>
    %34 = arith.addf %28, %33 : vector<72x8xf32>
    %c0_35 = arith.constant 0 : index
    %c9 = arith.constant 9 : index
    %c0_36 = arith.constant 0 : index
    %35 = vector.load %arg1[%c0_35, %c9, %c0_36] : memref<1x90x8xbf16, #tpu.memory_space<vmem>>, vector<1x72x8xbf16>
    %36 = vector.shape_cast %35 : vector<1x72x8xbf16> to vector<72x8xbf16>
    %c6 = arith.constant 6 : index
    %c0_37 = arith.constant 0 : index
    %c0_38 = arith.constant 0 : index
    %37 = vector.load %arg5[%c6, %c0_37, %c0_38] : memref<9x8x8xbf16, #tpu.memory_space<vmem>>, vector<1x8x8xbf16>
    %38 = vector.shape_cast %37 : vector<1x8x8xbf16> to vector<8x8xbf16>
    %cst_39 = arith.constant dense<0.000000e+00> : vector<72x8xf32>
    %39 = tpu.matmul %36, %38, %cst_39 {dimension_numbers = #tpu.dot_dimension_numbers<[1], [0], [0], [1], [0, 0, 1, 1], [], []>} : vector<72x8xbf16>, vector<8x8xbf16>, vector<72x8xf32> -> vector<72x8xf32>
    %40 = arith.addf %34, %39 : vector<72x8xf32>
    %c0_40 = arith.constant 0 : index
    %c9_41 = arith.constant 9 : index
    %c0_42 = arith.constant 0 : index
    %41 = vector.load %arg2[%c0_40, %c9_41, %c0_42] : memref<1x90x8xbf16, #tpu.memory_space<vmem>>, vector<1x72x8xbf16>
    %42 = vector.shape_cast %41 : vector<1x72x8xbf16> to vector<72x8xbf16>
    %c7 = arith.constant 7 : index
    %c0_43 = arith.constant 0 : index
    %c0_44 = arith.constant 0 : index
    %43 = vector.load %arg5[%c7, %c0_43, %c0_44] : memref<9x8x8xbf16, #tpu.memory_space<vmem>>, vector<1x8x8xbf16>
    %44 = vector.shape_cast %43 : vector<1x8x8xbf16> to vector<8x8xbf16>
    %cst_45 = arith.constant dense<0.000000e+00> : vector<72x8xf32>
    %45 = tpu.matmul %42, %44, %cst_45 {dimension_numbers = #tpu.dot_dimension_numbers<[1], [0], [0], [1], [0, 0, 1, 1], [], []>} : vector<72x8xbf16>, vector<8x8xbf16>, vector<72x8xf32> -> vector<72x8xf32>
    %46 = arith.addf %40, %45 : vector<72x8xf32>
    %c0_46 = arith.constant 0 : index
    %c10 = arith.constant 10 : index
    %c0_47 = arith.constant 0 : index
    %47 = vector.load %arg1[%c0_46, %c10, %c0_47] : memref<1x90x8xbf16, #tpu.memory_space<vmem>>, vector<1x72x8xbf16>
    %48 = vector.shape_cast %47 : vector<1x72x8xbf16> to vector<72x8xbf16>
    %c8 = arith.constant 8 : index
    %c0_48 = arith.constant 0 : index
    %c0_49 = arith.constant 0 : index
    %49 = vector.load %arg5[%c8, %c0_48, %c0_49] : memref<9x8x8xbf16, #tpu.memory_space<vmem>>, vector<1x8x8xbf16>
    %50 = vector.shape_cast %49 : vector<1x8x8xbf16> to vector<8x8xbf16>
    %cst_50 = arith.constant dense<0.000000e+00> : vector<72x8xf32>
    %51 = tpu.matmul %48, %50, %cst_50 {dimension_numbers = #tpu.dot_dimension_numbers<[1], [0], [0], [1], [0, 0, 1, 1], [], []>} : vector<72x8xbf16>, vector<8x8xbf16>, vector<72x8xf32> -> vector<72x8xf32>
    %52 = arith.addf %46, %51 : vector<72x8xf32>
    %c0_51 = arith.constant 0 : index
    %c0_52 = arith.constant 0 : index
    %53 = vector.load %arg6[%c0_51, %c0_52] : memref<1x8xf32, #tpu.memory_space<vmem>>, vector<1x8xf32>
    %54 = vector.broadcast %53 : vector<1x8xf32> to vector<72x8xf32>
    %55 = arith.addf %52, %54 : vector<72x8xf32>
    %cst_53 = arith.constant 0.000000e+00 : f32
    %56 = vector.broadcast %cst_53 : f32 to vector<72x8xf32>
    %57 = arith.maximumf %55, %56 : vector<72x8xf32>
    %58 = arith.truncf %57 : vector<72x8xf32> to vector<72x8xbf16>
    %c0_54 = arith.constant 0 : index
    %c0_55 = arith.constant 0 : index
    %c0_56 = arith.constant 0 : index
    %59 = vector.load %arg7[%c0_54, %c0_55, %c0_56] : memref<1x72x8xbf16, #tpu.memory_space<vmem>>, vector<1x72x8xbf16>
    %60 = vector.shape_cast %59 : vector<1x72x8xbf16> to vector<72x8xbf16>
    %61 = vector.shape_cast %58 : vector<72x8xbf16> to vector<1x72x8xbf16>
    tpu.vector_store %arg7[%c0_54, %c0_55, %c0_56], %61 {strides = array<i32>} : memref<1x72x8xbf16, #tpu.memory_space<vmem>>, vector<1x72x8xbf16>,
    return
  }
  func.func @transform_0(%arg0: i32) -> (i32, i32, i32) {
    %c0_i32 = arith.constant 0 : i32
    %c0_i32_0 = arith.constant 0 : i32
    %c0_i32_1 = arith.constant 0 : i32
    return %arg0, %c0_i32, %c0_i32_0 : i32, i32, i32
  }
  func.func @transform_1(%arg0: i32) -> (i32, i32, i32) {
    %c0_i32 = arith.constant 0 : i32
    %c0_i32_0 = arith.constant 0 : i32
    %c0_i32_1 = arith.constant 0 : i32
    return %arg0, %c0_i32, %c0_i32_0 : i32, i32, i32
  }
  func.func @transform_2(%arg0: i32) -> (i32, i32, i32) {
    %c0_i32 = arith.constant 0 : i32
    %c0_i32_0 = arith.constant 0 : i32
    %c0_i32_1 = arith.constant 0 : i32
    return %arg0, %c0_i32, %c0_i32_0 : i32, i32, i32
  }
  func.func @transform_3(%arg0: i32) -> (i32, i32, i32) {
    %c0_i32 = arith.constant 0 : i32
    %c0_i32_0 = arith.constant 0 : i32
    %c0_i32_1 = arith.constant 0 : i32
    return %arg0, %c0_i32, %c0_i32_0 : i32, i32, i32
  }
  func.func @transform_4(%arg0: i32) -> (i32, i32, i32) {
    %c0_i32 = arith.constant 0 : i32
    %c0_i32_0 = arith.constant 0 : i32
    %c0_i32_1 = arith.constant 0 : i32
    %c0_i32_2 = arith.constant 0 : i32
    return %c0_i32, %c0_i32_0, %c0_i32_1 : i32, i32, i32
  }
  func.func @transform_5(%arg0: i32) -> (i32, i32) {
    %c0_i32 = arith.constant 0 : i32
    %c0_i32_0 = arith.constant 0 : i32
    %c0_i32_1 = arith.constant 0 : i32
    return %c0_i32, %c0_i32_0 : i32, i32
  }
  func.func @transform_6(%arg0: i32) -> (i32, i32, i32) {
    %c0_i32 = arith.constant 0 : i32
    %c0_i32_0 = arith.constant 0 : i32
    %c0_i32_1 = arith.constant 0 : i32
    return %arg0, %c0_i32, %c0_i32_0 : i32, i32, i32
  }
}

module attributes {stable_mosaic.version = 11 : i64} {
  func.func @kernel(%arg0: i32, %arg1: memref<1x110x8xbf16, #tpu.memory_space<vmem>>, %arg2: memref<1x110x8xbf16, #tpu.memory_space<vmem>>, %arg3: memref<18x8x8xbf16, #tpu.memory_space<vmem>>, %arg4: memref<1x8xf32, #tpu.memory_space<vmem>>, %arg5: memref<1x80x8xf32, #tpu.memory_space<vmem>>) attributes {dimension_semantics = [#tpu.dimension_semantics<parallel>], iteration_bounds = array<i64: 2>, scalar_prefetch = 0 : i64, scratch_operands = 0 : i64, tpu.core_type = #tpu.core_type<tc>, window_params = [{transform_indices = @transform_0, window_bounds = array<i64: 1, 110, 8>}, {transform_indices = @transform_1, window_bounds = array<i64: 1, 110, 8>}, {pipeline_mode = #tpu.pipeline_mode<synchronous>, transform_indices = @transform_2, window_bounds = array<i64: 18, 8, 8>}, {pipeline_mode = #tpu.pipeline_mode<synchronous>, transform_indices = @transform_3, window_bounds = array<i64: 1, 8>}, {transform_indices = @transform_4, window_bounds = array<i64: 1, 80, 8>}]} {
    %c0 = arith.constant 0 : index
    %c0_0 = arith.constant 0 : index
    %c0_1 = arith.constant 0 : index
    %0 = vector.load %arg1[%c0, %c0_0, %c0_1] : memref<1x110x8xbf16, #tpu.memory_space<vmem>>, vector<1x80x8xbf16>
    %1 = vector.shape_cast %0 : vector<1x80x8xbf16> to vector<80x8xbf16>
    %c0_2 = arith.constant 0 : index
    %c0_3 = arith.constant 0 : index
    %c0_4 = arith.constant 0 : index
    %2 = vector.load %arg3[%c0_2, %c0_3, %c0_4] : memref<18x8x8xbf16, #tpu.memory_space<vmem>>, vector<1x8x8xbf16>
    %3 = vector.shape_cast %2 : vector<1x8x8xbf16> to vector<8x8xbf16>
    %cst = arith.constant dense<0.000000e+00> : vector<80x8xf32>
    %4 = tpu.matmul %1, %3, %cst {dimension_numbers = #tpu.dot_dimension_numbers<[1], [0], [0], [1], [0, 0, 1, 1], [], []>} : vector<80x8xbf16>, vector<8x8xbf16>, vector<80x8xf32> -> vector<80x8xf32>
    %c0_5 = arith.constant 0 : index
    %c1 = arith.constant 1 : index
    %c0_6 = arith.constant 0 : index
    %5 = vector.load %arg1[%c0_5, %c1, %c0_6] : memref<1x110x8xbf16, #tpu.memory_space<vmem>>, vector<1x80x8xbf16>
    %6 = vector.shape_cast %5 : vector<1x80x8xbf16> to vector<80x8xbf16>
    %c1_7 = arith.constant 1 : index
    %c0_8 = arith.constant 0 : index
    %c0_9 = arith.constant 0 : index
    %7 = vector.load %arg3[%c1_7, %c0_8, %c0_9] : memref<18x8x8xbf16, #tpu.memory_space<vmem>>, vector<1x8x8xbf16>
    %8 = vector.shape_cast %7 : vector<1x8x8xbf16> to vector<8x8xbf16>
    %cst_10 = arith.constant dense<0.000000e+00> : vector<80x8xf32>
    %9 = tpu.matmul %6, %8, %cst_10 {dimension_numbers = #tpu.dot_dimension_numbers<[1], [0], [0], [1], [0, 0, 1, 1], [], []>} : vector<80x8xbf16>, vector<8x8xbf16>, vector<80x8xf32> -> vector<80x8xf32>
    %10 = arith.addf %4, %9 : vector<80x8xf32>
    %c0_11 = arith.constant 0 : index
    %c2 = arith.constant 2 : index
    %c0_12 = arith.constant 0 : index
    %11 = vector.load %arg1[%c0_11, %c2, %c0_12] : memref<1x110x8xbf16, #tpu.memory_space<vmem>>, vector<1x80x8xbf16>
    %12 = vector.shape_cast %11 : vector<1x80x8xbf16> to vector<80x8xbf16>
    %c2_13 = arith.constant 2 : index
    %c0_14 = arith.constant 0 : index
    %c0_15 = arith.constant 0 : index
    %13 = vector.load %arg3[%c2_13, %c0_14, %c0_15] : memref<18x8x8xbf16, #tpu.memory_space<vmem>>, vector<1x8x8xbf16>
    %14 = vector.shape_cast %13 : vector<1x8x8xbf16> to vector<8x8xbf16>
    %cst_16 = arith.constant dense<0.000000e+00> : vector<80x8xf32>
    %15 = tpu.matmul %12, %14, %cst_16 {dimension_numbers = #tpu.dot_dimension_numbers<[1], [0], [0], [1], [0, 0, 1, 1], [], []>} : vector<80x8xbf16>, vector<8x8xbf16>, vector<80x8xf32> -> vector<80x8xf32>
    %16 = arith.addf %10, %15 : vector<80x8xf32>
    %c0_17 = arith.constant 0 : index
    %c10 = arith.constant 10 : index
    %c0_18 = arith.constant 0 : index
    %17 = vector.load %arg1[%c0_17, %c10, %c0_18] : memref<1x110x8xbf16, #tpu.memory_space<vmem>>, vector<1x80x8xbf16>
    %18 = vector.shape_cast %17 : vector<1x80x8xbf16> to vector<80x8xbf16>
    %c3 = arith.constant 3 : index
    %c0_19 = arith.constant 0 : index
    %c0_20 = arith.constant 0 : index
    %19 = vector.load %arg3[%c3, %c0_19, %c0_20] : memref<18x8x8xbf16, #tpu.memory_space<vmem>>, vector<1x8x8xbf16>
    %20 = vector.shape_cast %19 : vector<1x8x8xbf16> to vector<8x8xbf16>
    %cst_21 = arith.constant dense<0.000000e+00> : vector<80x8xf32>
    %21 = tpu.matmul %18, %20, %cst_21 {dimension_numbers = #tpu.dot_dimension_numbers<[1], [0], [0], [1], [0, 0, 1, 1], [], []>} : vector<80x8xbf16>, vector<8x8xbf16>, vector<80x8xf32> -> vector<80x8xf32>
    %22 = arith.addf %16, %21 : vector<80x8xf32>
    %c0_22 = arith.constant 0 : index
    %c11 = arith.constant 11 : index
    %c0_23 = arith.constant 0 : index
    %23 = vector.load %arg1[%c0_22, %c11, %c0_23] : memref<1x110x8xbf16, #tpu.memory_space<vmem>>, vector<1x80x8xbf16>
    %24 = vector.shape_cast %23 : vector<1x80x8xbf16> to vector<80x8xbf16>
    %c4 = arith.constant 4 : index
    %c0_24 = arith.constant 0 : index
    %c0_25 = arith.constant 0 : index
    %25 = vector.load %arg3[%c4, %c0_24, %c0_25] : memref<18x8x8xbf16, #tpu.memory_space<vmem>>, vector<1x8x8xbf16>
    %26 = vector.shape_cast %25 : vector<1x8x8xbf16> to vector<8x8xbf16>
    %cst_26 = arith.constant dense<0.000000e+00> : vector<80x8xf32>
    %27 = tpu.matmul %24, %26, %cst_26 {dimension_numbers = #tpu.dot_dimension_numbers<[1], [0], [0], [1], [0, 0, 1, 1], [], []>} : vector<80x8xbf16>, vector<8x8xbf16>, vector<80x8xf32> -> vector<80x8xf32>
    %28 = arith.addf %22, %27 : vector<80x8xf32>
    %c0_27 = arith.constant 0 : index
    %c12 = arith.constant 12 : index
    %c0_28 = arith.constant 0 : index
    %29 = vector.load %arg1[%c0_27, %c12, %c0_28] : memref<1x110x8xbf16, #tpu.memory_space<vmem>>, vector<1x80x8xbf16>
    %30 = vector.shape_cast %29 : vector<1x80x8xbf16> to vector<80x8xbf16>
    %c5 = arith.constant 5 : index
    %c0_29 = arith.constant 0 : index
    %c0_30 = arith.constant 0 : index
    %31 = vector.load %arg3[%c5, %c0_29, %c0_30] : memref<18x8x8xbf16, #tpu.memory_space<vmem>>, vector<1x8x8xbf16>
    %32 = vector.shape_cast %31 : vector<1x8x8xbf16> to vector<8x8xbf16>
    %cst_31 = arith.constant dense<0.000000e+00> : vector<80x8xf32>
    %33 = tpu.matmul %30, %32, %cst_31 {dimension_numbers = #tpu.dot_dimension_numbers<[1], [0], [0], [1], [0, 0, 1, 1], [], []>} : vector<80x8xbf16>, vector<8x8xbf16>, vector<80x8xf32> -> vector<80x8xf32>
    %34 = arith.addf %28, %33 : vector<80x8xf32>
    %c0_32 = arith.constant 0 : index
    %c20 = arith.constant 20 : index
    %c0_33 = arith.constant 0 : index
    %35 = vector.load %arg1[%c0_32, %c20, %c0_33] : memref<1x110x8xbf16, #tpu.memory_space<vmem>>, vector<1x80x8xbf16>
    %36 = vector.shape_cast %35 : vector<1x80x8xbf16> to vector<80x8xbf16>
    %c6 = arith.constant 6 : index
    %c0_34 = arith.constant 0 : index
    %c0_35 = arith.constant 0 : index
    %37 = vector.load %arg3[%c6, %c0_34, %c0_35] : memref<18x8x8xbf16, #tpu.memory_space<vmem>>, vector<1x8x8xbf16>
    %38 = vector.shape_cast %37 : vector<1x8x8xbf16> to vector<8x8xbf16>
    %cst_36 = arith.constant dense<0.000000e+00> : vector<80x8xf32>
    %39 = tpu.matmul %36, %38, %cst_36 {dimension_numbers = #tpu.dot_dimension_numbers<[1], [0], [0], [1], [0, 0, 1, 1], [], []>} : vector<80x8xbf16>, vector<8x8xbf16>, vector<80x8xf32> -> vector<80x8xf32>
    %40 = arith.addf %34, %39 : vector<80x8xf32>
    %c0_37 = arith.constant 0 : index
    %c21 = arith.constant 21 : index
    %c0_38 = arith.constant 0 : index
    %41 = vector.load %arg1[%c0_37, %c21, %c0_38] : memref<1x110x8xbf16, #tpu.memory_space<vmem>>, vector<1x80x8xbf16>
    %42 = vector.shape_cast %41 : vector<1x80x8xbf16> to vector<80x8xbf16>
    %c7 = arith.constant 7 : index
    %c0_39 = arith.constant 0 : index
    %c0_40 = arith.constant 0 : index
    %43 = vector.load %arg3[%c7, %c0_39, %c0_40] : memref<18x8x8xbf16, #tpu.memory_space<vmem>>, vector<1x8x8xbf16>
    %44 = vector.shape_cast %43 : vector<1x8x8xbf16> to vector<8x8xbf16>
    %cst_41 = arith.constant dense<0.000000e+00> : vector<80x8xf32>
    %45 = tpu.matmul %42, %44, %cst_41 {dimension_numbers = #tpu.dot_dimension_numbers<[1], [0], [0], [1], [0, 0, 1, 1], [], []>} : vector<80x8xbf16>, vector<8x8xbf16>, vector<80x8xf32> -> vector<80x8xf32>
    %46 = arith.addf %40, %45 : vector<80x8xf32>
    %c0_42 = arith.constant 0 : index
    %c22 = arith.constant 22 : index
    %c0_43 = arith.constant 0 : index
    %47 = vector.load %arg1[%c0_42, %c22, %c0_43] : memref<1x110x8xbf16, #tpu.memory_space<vmem>>, vector<1x80x8xbf16>
    %48 = vector.shape_cast %47 : vector<1x80x8xbf16> to vector<80x8xbf16>
    %c8 = arith.constant 8 : index
    %c0_44 = arith.constant 0 : index
    %c0_45 = arith.constant 0 : index
    %49 = vector.load %arg3[%c8, %c0_44, %c0_45] : memref<18x8x8xbf16, #tpu.memory_space<vmem>>, vector<1x8x8xbf16>
    %50 = vector.shape_cast %49 : vector<1x8x8xbf16> to vector<8x8xbf16>
    %cst_46 = arith.constant dense<0.000000e+00> : vector<80x8xf32>
    %51 = tpu.matmul %48, %50, %cst_46 {dimension_numbers = #tpu.dot_dimension_numbers<[1], [0], [0], [1], [0, 0, 1, 1], [], []>} : vector<80x8xbf16>, vector<8x8xbf16>, vector<80x8xf32> -> vector<80x8xf32>
    %52 = arith.addf %46, %51 : vector<80x8xf32>
    %c0_47 = arith.constant 0 : index
    %c0_48 = arith.constant 0 : index
    %c0_49 = arith.constant 0 : index
    %53 = vector.load %arg2[%c0_47, %c0_48, %c0_49] : memref<1x110x8xbf16, #tpu.memory_space<vmem>>, vector<1x80x8xbf16>
    %54 = vector.shape_cast %53 : vector<1x80x8xbf16> to vector<80x8xbf16>
    %c9 = arith.constant 9 : index
    %c0_50 = arith.constant 0 : index
    %c0_51 = arith.constant 0 : index
    %55 = vector.load %arg3[%c9, %c0_50, %c0_51] : memref<18x8x8xbf16, #tpu.memory_space<vmem>>, vector<1x8x8xbf16>
    %56 = vector.shape_cast %55 : vector<1x8x8xbf16> to vector<8x8xbf16>
    %cst_52 = arith.constant dense<0.000000e+00> : vector<80x8xf32>
    %57 = tpu.matmul %54, %56, %cst_52 {dimension_numbers = #tpu.dot_dimension_numbers<[1], [0], [0], [1], [0, 0, 1, 1], [], []>} : vector<80x8xbf16>, vector<8x8xbf16>, vector<80x8xf32> -> vector<80x8xf32>
    %58 = arith.addf %52, %57 : vector<80x8xf32>
    %c0_53 = arith.constant 0 : index
    %c1_54 = arith.constant 1 : index
    %c0_55 = arith.constant 0 : index
    %59 = vector.load %arg2[%c0_53, %c1_54, %c0_55] : memref<1x110x8xbf16, #tpu.memory_space<vmem>>, vector<1x80x8xbf16>
    %60 = vector.shape_cast %59 : vector<1x80x8xbf16> to vector<80x8xbf16>
    %c10_56 = arith.constant 10 : index
    %c0_57 = arith.constant 0 : index
    %c0_58 = arith.constant 0 : index
    %61 = vector.load %arg3[%c10_56, %c0_57, %c0_58] : memref<18x8x8xbf16, #tpu.memory_space<vmem>>, vector<1x8x8xbf16>
    %62 = vector.shape_cast %61 : vector<1x8x8xbf16> to vector<8x8xbf16>
    %cst_59 = arith.constant dense<0.000000e+00> : vector<80x8xf32>
    %63 = tpu.matmul %60, %62, %cst_59 {dimension_numbers = #tpu.dot_dimension_numbers<[1], [0], [0], [1], [0, 0, 1, 1], [], []>} : vector<80x8xbf16>, vector<8x8xbf16>, vector<80x8xf32> -> vector<80x8xf32>
    %64 = arith.addf %58, %63 : vector<80x8xf32>
    %c0_60 = arith.constant 0 : index
    %c2_61 = arith.constant 2 : index
    %c0_62 = arith.constant 0 : index
    %65 = vector.load %arg2[%c0_60, %c2_61, %c0_62] : memref<1x110x8xbf16, #tpu.memory_space<vmem>>, vector<1x80x8xbf16>
    %66 = vector.shape_cast %65 : vector<1x80x8xbf16> to vector<80x8xbf16>
    %c11_63 = arith.constant 11 : index
    %c0_64 = arith.constant 0 : index
    %c0_65 = arith.constant 0 : index
    %67 = vector.load %arg3[%c11_63, %c0_64, %c0_65] : memref<18x8x8xbf16, #tpu.memory_space<vmem>>, vector<1x8x8xbf16>
    %68 = vector.shape_cast %67 : vector<1x8x8xbf16> to vector<8x8xbf16>
    %cst_66 = arith.constant dense<0.000000e+00> : vector<80x8xf32>
    %69 = tpu.matmul %66, %68, %cst_66 {dimension_numbers = #tpu.dot_dimension_numbers<[1], [0], [0], [1], [0, 0, 1, 1], [], []>} : vector<80x8xbf16>, vector<8x8xbf16>, vector<80x8xf32> -> vector<80x8xf32>
    %70 = arith.addf %64, %69 : vector<80x8xf32>
    %c0_67 = arith.constant 0 : index
    %c10_68 = arith.constant 10 : index
    %c0_69 = arith.constant 0 : index
    %71 = vector.load %arg2[%c0_67, %c10_68, %c0_69] : memref<1x110x8xbf16, #tpu.memory_space<vmem>>, vector<1x80x8xbf16>
    %72 = vector.shape_cast %71 : vector<1x80x8xbf16> to vector<80x8xbf16>
    %c12_70 = arith.constant 12 : index
    %c0_71 = arith.constant 0 : index
    %c0_72 = arith.constant 0 : index
    %73 = vector.load %arg3[%c12_70, %c0_71, %c0_72] : memref<18x8x8xbf16, #tpu.memory_space<vmem>>, vector<1x8x8xbf16>
    %74 = vector.shape_cast %73 : vector<1x8x8xbf16> to vector<8x8xbf16>
    %cst_73 = arith.constant dense<0.000000e+00> : vector<80x8xf32>
    %75 = tpu.matmul %72, %74, %cst_73 {dimension_numbers = #tpu.dot_dimension_numbers<[1], [0], [0], [1], [0, 0, 1, 1], [], []>} : vector<80x8xbf16>, vector<8x8xbf16>, vector<80x8xf32> -> vector<80x8xf32>
    %76 = arith.addf %70, %75 : vector<80x8xf32>
    %c0_74 = arith.constant 0 : index
    %c11_75 = arith.constant 11 : index
    %c0_76 = arith.constant 0 : index
    %77 = vector.load %arg2[%c0_74, %c11_75, %c0_76] : memref<1x110x8xbf16, #tpu.memory_space<vmem>>, vector<1x80x8xbf16>
    %78 = vector.shape_cast %77 : vector<1x80x8xbf16> to vector<80x8xbf16>
    %c13 = arith.constant 13 : index
    %c0_77 = arith.constant 0 : index
    %c0_78 = arith.constant 0 : index
    %79 = vector.load %arg3[%c13, %c0_77, %c0_78] : memref<18x8x8xbf16, #tpu.memory_space<vmem>>, vector<1x8x8xbf16>
    %80 = vector.shape_cast %79 : vector<1x8x8xbf16> to vector<8x8xbf16>
    %cst_79 = arith.constant dense<0.000000e+00> : vector<80x8xf32>
    %81 = tpu.matmul %78, %80, %cst_79 {dimension_numbers = #tpu.dot_dimension_numbers<[1], [0], [0], [1], [0, 0, 1, 1], [], []>} : vector<80x8xbf16>, vector<8x8xbf16>, vector<80x8xf32> -> vector<80x8xf32>
    %82 = arith.addf %76, %81 : vector<80x8xf32>
    %c0_80 = arith.constant 0 : index
    %c12_81 = arith.constant 12 : index
    %c0_82 = arith.constant 0 : index
    %83 = vector.load %arg2[%c0_80, %c12_81, %c0_82] : memref<1x110x8xbf16, #tpu.memory_space<vmem>>, vector<1x80x8xbf16>
    %84 = vector.shape_cast %83 : vector<1x80x8xbf16> to vector<80x8xbf16>
    %c14 = arith.constant 14 : index
    %c0_83 = arith.constant 0 : index
    %c0_84 = arith.constant 0 : index
    %85 = vector.load %arg3[%c14, %c0_83, %c0_84] : memref<18x8x8xbf16, #tpu.memory_space<vmem>>, vector<1x8x8xbf16>
    %86 = vector.shape_cast %85 : vector<1x8x8xbf16> to vector<8x8xbf16>
    %cst_85 = arith.constant dense<0.000000e+00> : vector<80x8xf32>
    %87 = tpu.matmul %84, %86, %cst_85 {dimension_numbers = #tpu.dot_dimension_numbers<[1], [0], [0], [1], [0, 0, 1, 1], [], []>} : vector<80x8xbf16>, vector<8x8xbf16>, vector<80x8xf32> -> vector<80x8xf32>
    %88 = arith.addf %82, %87 : vector<80x8xf32>
    %c0_86 = arith.constant 0 : index
    %c20_87 = arith.constant 20 : index
    %c0_88 = arith.constant 0 : index
    %89 = vector.load %arg2[%c0_86, %c20_87, %c0_88] : memref<1x110x8xbf16, #tpu.memory_space<vmem>>, vector<1x80x8xbf16>
    %90 = vector.shape_cast %89 : vector<1x80x8xbf16> to vector<80x8xbf16>
    %c15 = arith.constant 15 : index
    %c0_89 = arith.constant 0 : index
    %c0_90 = arith.constant 0 : index
    %91 = vector.load %arg3[%c15, %c0_89, %c0_90] : memref<18x8x8xbf16, #tpu.memory_space<vmem>>, vector<1x8x8xbf16>
    %92 = vector.shape_cast %91 : vector<1x8x8xbf16> to vector<8x8xbf16>
    %cst_91 = arith.constant dense<0.000000e+00> : vector<80x8xf32>
    %93 = tpu.matmul %90, %92, %cst_91 {dimension_numbers = #tpu.dot_dimension_numbers<[1], [0], [0], [1], [0, 0, 1, 1], [], []>} : vector<80x8xbf16>, vector<8x8xbf16>, vector<80x8xf32> -> vector<80x8xf32>
    %94 = arith.addf %88, %93 : vector<80x8xf32>
    %c0_92 = arith.constant 0 : index
    %c21_93 = arith.constant 21 : index
    %c0_94 = arith.constant 0 : index
    %95 = vector.load %arg2[%c0_92, %c21_93, %c0_94] : memref<1x110x8xbf16, #tpu.memory_space<vmem>>, vector<1x80x8xbf16>
    %96 = vector.shape_cast %95 : vector<1x80x8xbf16> to vector<80x8xbf16>
    %c16 = arith.constant 16 : index
    %c0_95 = arith.constant 0 : index
    %c0_96 = arith.constant 0 : index
    %97 = vector.load %arg3[%c16, %c0_95, %c0_96] : memref<18x8x8xbf16, #tpu.memory_space<vmem>>, vector<1x8x8xbf16>
    %98 = vector.shape_cast %97 : vector<1x8x8xbf16> to vector<8x8xbf16>
    %cst_97 = arith.constant dense<0.000000e+00> : vector<80x8xf32>
    %99 = tpu.matmul %96, %98, %cst_97 {dimension_numbers = #tpu.dot_dimension_numbers<[1], [0], [0], [1], [0, 0, 1, 1], [], []>} : vector<80x8xbf16>, vector<8x8xbf16>, vector<80x8xf32> -> vector<80x8xf32>
    %100 = arith.addf %94, %99 : vector<80x8xf32>
    %c0_98 = arith.constant 0 : index
    %c22_99 = arith.constant 22 : index
    %c0_100 = arith.constant 0 : index
    %101 = vector.load %arg2[%c0_98, %c22_99, %c0_100] : memref<1x110x8xbf16, #tpu.memory_space<vmem>>, vector<1x80x8xbf16>
    %102 = vector.shape_cast %101 : vector<1x80x8xbf16> to vector<80x8xbf16>
    %c17 = arith.constant 17 : index
    %c0_101 = arith.constant 0 : index
    %c0_102 = arith.constant 0 : index
    %103 = vector.load %arg3[%c17, %c0_101, %c0_102] : memref<18x8x8xbf16, #tpu.memory_space<vmem>>, vector<1x8x8xbf16>
    %104 = vector.shape_cast %103 : vector<1x8x8xbf16> to vector<8x8xbf16>
    %cst_103 = arith.constant dense<0.000000e+00> : vector<80x8xf32>
    %105 = tpu.matmul %102, %104, %cst_103 {dimension_numbers = #tpu.dot_dimension_numbers<[1], [0], [0], [1], [0, 0, 1, 1], [], []>} : vector<80x8xbf16>, vector<8x8xbf16>, vector<80x8xf32> -> vector<80x8xf32>
    %106 = arith.addf %100, %105 : vector<80x8xf32>
    %c0_104 = arith.constant 0 : index
    %c0_105 = arith.constant 0 : index
    %107 = vector.load %arg4[%c0_104, %c0_105] : memref<1x8xf32, #tpu.memory_space<vmem>>, vector<1x8xf32>
    %108 = vector.broadcast %107 : vector<1x8xf32> to vector<80x8xf32>
    %109 = arith.addf %106, %108 : vector<80x8xf32>
    %cst_106 = arith.constant 0.000000e+00 : f32
    %110 = vector.broadcast %cst_106 : f32 to vector<80x8xf32>
    %111 = arith.maximumf %109, %110 : vector<80x8xf32>
    %c0_107 = arith.constant 0 : index
    %c0_108 = arith.constant 0 : index
    %c0_109 = arith.constant 0 : index
    %112 = vector.load %arg5[%c0_107, %c0_108, %c0_109] : memref<1x80x8xf32, #tpu.memory_space<vmem>>, vector<1x80x8xf32>
    %113 = vector.shape_cast %112 : vector<1x80x8xf32> to vector<80x8xf32>
    %114 = vector.shape_cast %111 : vector<80x8xf32> to vector<1x80x8xf32>
    tpu.vector_store %arg5[%c0_107, %c0_108, %c0_109], %114 {strides = array<i32>} : memref<1x80x8xf32, #tpu.memory_space<vmem>>, vector<1x80x8xf32>,
    return
  }
  func.func @transform_0(%arg0: i32) -> (i32, i32, i32) {
    %c0_i32 = arith.constant 0 : i32
    %c0_i32_0 = arith.constant 0 : i32
    %c0_i32_1 = arith.constant 0 : i32
    return %arg0, %c0_i32, %c0_i32_0 : i32, i32, i32
  }
  func.func @transform_1(%arg0: i32) -> (i32, i32, i32) {
    %c0_i32 = arith.constant 0 : i32
    %c0_i32_0 = arith.constant 0 : i32
    %c0_i32_1 = arith.constant 0 : i32
    return %arg0, %c0_i32, %c0_i32_0 : i32, i32, i32
  }
  func.func @transform_2(%arg0: i32) -> (i32, i32, i32) {
    %c0_i32 = arith.constant 0 : i32
    %c0_i32_0 = arith.constant 0 : i32
    %c0_i32_1 = arith.constant 0 : i32
    %c0_i32_2 = arith.constant 0 : i32
    return %c0_i32, %c0_i32_0, %c0_i32_1 : i32, i32, i32
  }
  func.func @transform_3(%arg0: i32) -> (i32, i32) {
    %c0_i32 = arith.constant 0 : i32
    %c0_i32_0 = arith.constant 0 : i32
    %c0_i32_1 = arith.constant 0 : i32
    return %c0_i32, %c0_i32_0 : i32, i32
  }
  func.func @transform_4(%arg0: i32) -> (i32, i32, i32) {
    %c0_i32 = arith.constant 0 : i32
    %c0_i32_0 = arith.constant 0 : i32
    %c0_i32_1 = arith.constant 0 : i32
    return %arg0, %c0_i32, %c0_i32_0 : i32, i32, i32
  }
}

module attributes {stable_mosaic.version = 11 : i64} {
  func.func @kernel(%arg0: i32, %arg1: memref<1x342x8xbf16, #tpu.memory_space<vmem>>, %arg2: memref<1x342x8xbf16, #tpu.memory_space<vmem>>, %arg3: memref<18x8x8xbf16, #tpu.memory_space<vmem>>, %arg4: memref<1x8xf32, #tpu.memory_space<vmem>>, %arg5: memref<1x288x8xf32, #tpu.memory_space<vmem>>) attributes {dimension_semantics = [#tpu.dimension_semantics<parallel>], iteration_bounds = array<i64: 2>, scalar_prefetch = 0 : i64, scratch_operands = 0 : i64, tpu.core_type = #tpu.core_type<tc>, window_params = [{transform_indices = @transform_0, window_bounds = array<i64: 1, 342, 8>}, {transform_indices = @transform_1, window_bounds = array<i64: 1, 342, 8>}, {pipeline_mode = #tpu.pipeline_mode<synchronous>, transform_indices = @transform_2, window_bounds = array<i64: 18, 8, 8>}, {pipeline_mode = #tpu.pipeline_mode<synchronous>, transform_indices = @transform_3, window_bounds = array<i64: 1, 8>}, {transform_indices = @transform_4, window_bounds = array<i64: 1, 288, 8>}]} {
    %c0 = arith.constant 0 : index
    %c0_0 = arith.constant 0 : index
    %c0_1 = arith.constant 0 : index
    %0 = vector.load %arg1[%c0, %c0_0, %c0_1] : memref<1x342x8xbf16, #tpu.memory_space<vmem>>, vector<1x288x8xbf16>
    %1 = vector.shape_cast %0 : vector<1x288x8xbf16> to vector<288x8xbf16>
    %c0_2 = arith.constant 0 : index
    %c0_3 = arith.constant 0 : index
    %c0_4 = arith.constant 0 : index
    %2 = vector.load %arg3[%c0_2, %c0_3, %c0_4] : memref<18x8x8xbf16, #tpu.memory_space<vmem>>, vector<1x8x8xbf16>
    %3 = vector.shape_cast %2 : vector<1x8x8xbf16> to vector<8x8xbf16>
    %cst = arith.constant dense<0.000000e+00> : vector<288x8xf32>
    %4 = tpu.matmul %1, %3, %cst {dimension_numbers = #tpu.dot_dimension_numbers<[1], [0], [0], [1], [0, 0, 1, 1], [], []>} : vector<288x8xbf16>, vector<8x8xbf16>, vector<288x8xf32> -> vector<288x8xf32>
    %c0_5 = arith.constant 0 : index
    %c1 = arith.constant 1 : index
    %c0_6 = arith.constant 0 : index
    %5 = vector.load %arg1[%c0_5, %c1, %c0_6] : memref<1x342x8xbf16, #tpu.memory_space<vmem>>, vector<1x288x8xbf16>
    %6 = vector.shape_cast %5 : vector<1x288x8xbf16> to vector<288x8xbf16>
    %c1_7 = arith.constant 1 : index
    %c0_8 = arith.constant 0 : index
    %c0_9 = arith.constant 0 : index
    %7 = vector.load %arg3[%c1_7, %c0_8, %c0_9] : memref<18x8x8xbf16, #tpu.memory_space<vmem>>, vector<1x8x8xbf16>
    %8 = vector.shape_cast %7 : vector<1x8x8xbf16> to vector<8x8xbf16>
    %cst_10 = arith.constant dense<0.000000e+00> : vector<288x8xf32>
    %9 = tpu.matmul %6, %8, %cst_10 {dimension_numbers = #tpu.dot_dimension_numbers<[1], [0], [0], [1], [0, 0, 1, 1], [], []>} : vector<288x8xbf16>, vector<8x8xbf16>, vector<288x8xf32> -> vector<288x8xf32>
    %10 = arith.addf %4, %9 : vector<288x8xf32>
    %c0_11 = arith.constant 0 : index
    %c2 = arith.constant 2 : index
    %c0_12 = arith.constant 0 : index
    %11 = vector.load %arg1[%c0_11, %c2, %c0_12] : memref<1x342x8xbf16, #tpu.memory_space<vmem>>, vector<1x288x8xbf16>
    %12 = vector.shape_cast %11 : vector<1x288x8xbf16> to vector<288x8xbf16>
    %c2_13 = arith.constant 2 : index
    %c0_14 = arith.constant 0 : index
    %c0_15 = arith.constant 0 : index
    %13 = vector.load %arg3[%c2_13, %c0_14, %c0_15] : memref<18x8x8xbf16, #tpu.memory_space<vmem>>, vector<1x8x8xbf16>
    %14 = vector.shape_cast %13 : vector<1x8x8xbf16> to vector<8x8xbf16>
    %cst_16 = arith.constant dense<0.000000e+00> : vector<288x8xf32>
    %15 = tpu.matmul %12, %14, %cst_16 {dimension_numbers = #tpu.dot_dimension_numbers<[1], [0], [0], [1], [0, 0, 1, 1], [], []>} : vector<288x8xbf16>, vector<8x8xbf16>, vector<288x8xf32> -> vector<288x8xf32>
    %16 = arith.addf %10, %15 : vector<288x8xf32>
    %c0_17 = arith.constant 0 : index
    %c18 = arith.constant 18 : index
    %c0_18 = arith.constant 0 : index
    %17 = vector.load %arg1[%c0_17, %c18, %c0_18] : memref<1x342x8xbf16, #tpu.memory_space<vmem>>, vector<1x288x8xbf16>
    %18 = vector.shape_cast %17 : vector<1x288x8xbf16> to vector<288x8xbf16>
    %c3 = arith.constant 3 : index
    %c0_19 = arith.constant 0 : index
    %c0_20 = arith.constant 0 : index
    %19 = vector.load %arg3[%c3, %c0_19, %c0_20] : memref<18x8x8xbf16, #tpu.memory_space<vmem>>, vector<1x8x8xbf16>
    %20 = vector.shape_cast %19 : vector<1x8x8xbf16> to vector<8x8xbf16>
    %cst_21 = arith.constant dense<0.000000e+00> : vector<288x8xf32>
    %21 = tpu.matmul %18, %20, %cst_21 {dimension_numbers = #tpu.dot_dimension_numbers<[1], [0], [0], [1], [0, 0, 1, 1], [], []>} : vector<288x8xbf16>, vector<8x8xbf16>, vector<288x8xf32> -> vector<288x8xf32>
    %22 = arith.addf %16, %21 : vector<288x8xf32>
    %c0_22 = arith.constant 0 : index
    %c19 = arith.constant 19 : index
    %c0_23 = arith.constant 0 : index
    %23 = vector.load %arg1[%c0_22, %c19, %c0_23] : memref<1x342x8xbf16, #tpu.memory_space<vmem>>, vector<1x288x8xbf16>
    %24 = vector.shape_cast %23 : vector<1x288x8xbf16> to vector<288x8xbf16>
    %c4 = arith.constant 4 : index
    %c0_24 = arith.constant 0 : index
    %c0_25 = arith.constant 0 : index
    %25 = vector.load %arg3[%c4, %c0_24, %c0_25] : memref<18x8x8xbf16, #tpu.memory_space<vmem>>, vector<1x8x8xbf16>
    %26 = vector.shape_cast %25 : vector<1x8x8xbf16> to vector<8x8xbf16>
    %cst_26 = arith.constant dense<0.000000e+00> : vector<288x8xf32>
    %27 = tpu.matmul %24, %26, %cst_26 {dimension_numbers = #tpu.dot_dimension_numbers<[1], [0], [0], [1], [0, 0, 1, 1], [], []>} : vector<288x8xbf16>, vector<8x8xbf16>, vector<288x8xf32> -> vector<288x8xf32>
    %28 = arith.addf %22, %27 : vector<288x8xf32>
    %c0_27 = arith.constant 0 : index
    %c20 = arith.constant 20 : index
    %c0_28 = arith.constant 0 : index
    %29 = vector.load %arg1[%c0_27, %c20, %c0_28] : memref<1x342x8xbf16, #tpu.memory_space<vmem>>, vector<1x288x8xbf16>
    %30 = vector.shape_cast %29 : vector<1x288x8xbf16> to vector<288x8xbf16>
    %c5 = arith.constant 5 : index
    %c0_29 = arith.constant 0 : index
    %c0_30 = arith.constant 0 : index
    %31 = vector.load %arg3[%c5, %c0_29, %c0_30] : memref<18x8x8xbf16, #tpu.memory_space<vmem>>, vector<1x8x8xbf16>
    %32 = vector.shape_cast %31 : vector<1x8x8xbf16> to vector<8x8xbf16>
    %cst_31 = arith.constant dense<0.000000e+00> : vector<288x8xf32>
    %33 = tpu.matmul %30, %32, %cst_31 {dimension_numbers = #tpu.dot_dimension_numbers<[1], [0], [0], [1], [0, 0, 1, 1], [], []>} : vector<288x8xbf16>, vector<8x8xbf16>, vector<288x8xf32> -> vector<288x8xf32>
    %34 = arith.addf %28, %33 : vector<288x8xf32>
    %c0_32 = arith.constant 0 : index
    %c36 = arith.constant 36 : index
    %c0_33 = arith.constant 0 : index
    %35 = vector.load %arg1[%c0_32, %c36, %c0_33] : memref<1x342x8xbf16, #tpu.memory_space<vmem>>, vector<1x288x8xbf16>
    %36 = vector.shape_cast %35 : vector<1x288x8xbf16> to vector<288x8xbf16>
    %c6 = arith.constant 6 : index
    %c0_34 = arith.constant 0 : index
    %c0_35 = arith.constant 0 : index
    %37 = vector.load %arg3[%c6, %c0_34, %c0_35] : memref<18x8x8xbf16, #tpu.memory_space<vmem>>, vector<1x8x8xbf16>
    %38 = vector.shape_cast %37 : vector<1x8x8xbf16> to vector<8x8xbf16>
    %cst_36 = arith.constant dense<0.000000e+00> : vector<288x8xf32>
    %39 = tpu.matmul %36, %38, %cst_36 {dimension_numbers = #tpu.dot_dimension_numbers<[1], [0], [0], [1], [0, 0, 1, 1], [], []>} : vector<288x8xbf16>, vector<8x8xbf16>, vector<288x8xf32> -> vector<288x8xf32>
    %40 = arith.addf %34, %39 : vector<288x8xf32>
    %c0_37 = arith.constant 0 : index
    %c37 = arith.constant 37 : index
    %c0_38 = arith.constant 0 : index
    %41 = vector.load %arg1[%c0_37, %c37, %c0_38] : memref<1x342x8xbf16, #tpu.memory_space<vmem>>, vector<1x288x8xbf16>
    %42 = vector.shape_cast %41 : vector<1x288x8xbf16> to vector<288x8xbf16>
    %c7 = arith.constant 7 : index
    %c0_39 = arith.constant 0 : index
    %c0_40 = arith.constant 0 : index
    %43 = vector.load %arg3[%c7, %c0_39, %c0_40] : memref<18x8x8xbf16, #tpu.memory_space<vmem>>, vector<1x8x8xbf16>
    %44 = vector.shape_cast %43 : vector<1x8x8xbf16> to vector<8x8xbf16>
    %cst_41 = arith.constant dense<0.000000e+00> : vector<288x8xf32>
    %45 = tpu.matmul %42, %44, %cst_41 {dimension_numbers = #tpu.dot_dimension_numbers<[1], [0], [0], [1], [0, 0, 1, 1], [], []>} : vector<288x8xbf16>, vector<8x8xbf16>, vector<288x8xf32> -> vector<288x8xf32>
    %46 = arith.addf %40, %45 : vector<288x8xf32>
    %c0_42 = arith.constant 0 : index
    %c38 = arith.constant 38 : index
    %c0_43 = arith.constant 0 : index
    %47 = vector.load %arg1[%c0_42, %c38, %c0_43] : memref<1x342x8xbf16, #tpu.memory_space<vmem>>, vector<1x288x8xbf16>
    %48 = vector.shape_cast %47 : vector<1x288x8xbf16> to vector<288x8xbf16>
    %c8 = arith.constant 8 : index
    %c0_44 = arith.constant 0 : index
    %c0_45 = arith.constant 0 : index
    %49 = vector.load %arg3[%c8, %c0_44, %c0_45] : memref<18x8x8xbf16, #tpu.memory_space<vmem>>, vector<1x8x8xbf16>
    %50 = vector.shape_cast %49 : vector<1x8x8xbf16> to vector<8x8xbf16>
    %cst_46 = arith.constant dense<0.000000e+00> : vector<288x8xf32>
    %51 = tpu.matmul %48, %50, %cst_46 {dimension_numbers = #tpu.dot_dimension_numbers<[1], [0], [0], [1], [0, 0, 1, 1], [], []>} : vector<288x8xbf16>, vector<8x8xbf16>, vector<288x8xf32> -> vector<288x8xf32>
    %52 = arith.addf %46, %51 : vector<288x8xf32>
    %c0_47 = arith.constant 0 : index
    %c0_48 = arith.constant 0 : index
    %c0_49 = arith.constant 0 : index
    %53 = vector.load %arg2[%c0_47, %c0_48, %c0_49] : memref<1x342x8xbf16, #tpu.memory_space<vmem>>, vector<1x288x8xbf16>
    %54 = vector.shape_cast %53 : vector<1x288x8xbf16> to vector<288x8xbf16>
    %c9 = arith.constant 9 : index
    %c0_50 = arith.constant 0 : index
    %c0_51 = arith.constant 0 : index
    %55 = vector.load %arg3[%c9, %c0_50, %c0_51] : memref<18x8x8xbf16, #tpu.memory_space<vmem>>, vector<1x8x8xbf16>
    %56 = vector.shape_cast %55 : vector<1x8x8xbf16> to vector<8x8xbf16>
    %cst_52 = arith.constant dense<0.000000e+00> : vector<288x8xf32>
    %57 = tpu.matmul %54, %56, %cst_52 {dimension_numbers = #tpu.dot_dimension_numbers<[1], [0], [0], [1], [0, 0, 1, 1], [], []>} : vector<288x8xbf16>, vector<8x8xbf16>, vector<288x8xf32> -> vector<288x8xf32>
    %58 = arith.addf %52, %57 : vector<288x8xf32>
    %c0_53 = arith.constant 0 : index
    %c1_54 = arith.constant 1 : index
    %c0_55 = arith.constant 0 : index
    %59 = vector.load %arg2[%c0_53, %c1_54, %c0_55] : memref<1x342x8xbf16, #tpu.memory_space<vmem>>, vector<1x288x8xbf16>
    %60 = vector.shape_cast %59 : vector<1x288x8xbf16> to vector<288x8xbf16>
    %c10 = arith.constant 10 : index
    %c0_56 = arith.constant 0 : index
    %c0_57 = arith.constant 0 : index
    %61 = vector.load %arg3[%c10, %c0_56, %c0_57] : memref<18x8x8xbf16, #tpu.memory_space<vmem>>, vector<1x8x8xbf16>
    %62 = vector.shape_cast %61 : vector<1x8x8xbf16> to vector<8x8xbf16>
    %cst_58 = arith.constant dense<0.000000e+00> : vector<288x8xf32>
    %63 = tpu.matmul %60, %62, %cst_58 {dimension_numbers = #tpu.dot_dimension_numbers<[1], [0], [0], [1], [0, 0, 1, 1], [], []>} : vector<288x8xbf16>, vector<8x8xbf16>, vector<288x8xf32> -> vector<288x8xf32>
    %64 = arith.addf %58, %63 : vector<288x8xf32>
    %c0_59 = arith.constant 0 : index
    %c2_60 = arith.constant 2 : index
    %c0_61 = arith.constant 0 : index
    %65 = vector.load %arg2[%c0_59, %c2_60, %c0_61] : memref<1x342x8xbf16, #tpu.memory_space<vmem>>, vector<1x288x8xbf16>
    %66 = vector.shape_cast %65 : vector<1x288x8xbf16> to vector<288x8xbf16>
    %c11 = arith.constant 11 : index
    %c0_62 = arith.constant 0 : index
    %c0_63 = arith.constant 0 : index
    %67 = vector.load %arg3[%c11, %c0_62, %c0_63] : memref<18x8x8xbf16, #tpu.memory_space<vmem>>, vector<1x8x8xbf16>
    %68 = vector.shape_cast %67 : vector<1x8x8xbf16> to vector<8x8xbf16>
    %cst_64 = arith.constant dense<0.000000e+00> : vector<288x8xf32>
    %69 = tpu.matmul %66, %68, %cst_64 {dimension_numbers = #tpu.dot_dimension_numbers<[1], [0], [0], [1], [0, 0, 1, 1], [], []>} : vector<288x8xbf16>, vector<8x8xbf16>, vector<288x8xf32> -> vector<288x8xf32>
    %70 = arith.addf %64, %69 : vector<288x8xf32>
    %c0_65 = arith.constant 0 : index
    %c18_66 = arith.constant 18 : index
    %c0_67 = arith.constant 0 : index
    %71 = vector.load %arg2[%c0_65, %c18_66, %c0_67] : memref<1x342x8xbf16, #tpu.memory_space<vmem>>, vector<1x288x8xbf16>
    %72 = vector.shape_cast %71 : vector<1x288x8xbf16> to vector<288x8xbf16>
    %c12 = arith.constant 12 : index
    %c0_68 = arith.constant 0 : index
    %c0_69 = arith.constant 0 : index
    %73 = vector.load %arg3[%c12, %c0_68, %c0_69] : memref<18x8x8xbf16, #tpu.memory_space<vmem>>, vector<1x8x8xbf16>
    %74 = vector.shape_cast %73 : vector<1x8x8xbf16> to vector<8x8xbf16>
    %cst_70 = arith.constant dense<0.000000e+00> : vector<288x8xf32>
    %75 = tpu.matmul %72, %74, %cst_70 {dimension_numbers = #tpu.dot_dimension_numbers<[1], [0], [0], [1], [0, 0, 1, 1], [], []>} : vector<288x8xbf16>, vector<8x8xbf16>, vector<288x8xf32> -> vector<288x8xf32>
    %76 = arith.addf %70, %75 : vector<288x8xf32>
    %c0_71 = arith.constant 0 : index
    %c19_72 = arith.constant 19 : index
    %c0_73 = arith.constant 0 : index
    %77 = vector.load %arg2[%c0_71, %c19_72, %c0_73] : memref<1x342x8xbf16, #tpu.memory_space<vmem>>, vector<1x288x8xbf16>
    %78 = vector.shape_cast %77 : vector<1x288x8xbf16> to vector<288x8xbf16>
    %c13 = arith.constant 13 : index
    %c0_74 = arith.constant 0 : index
    %c0_75 = arith.constant 0 : index
    %79 = vector.load %arg3[%c13, %c0_74, %c0_75] : memref<18x8x8xbf16, #tpu.memory_space<vmem>>, vector<1x8x8xbf16>
    %80 = vector.shape_cast %79 : vector<1x8x8xbf16> to vector<8x8xbf16>
    %cst_76 = arith.constant dense<0.000000e+00> : vector<288x8xf32>
    %81 = tpu.matmul %78, %80, %cst_76 {dimension_numbers = #tpu.dot_dimension_numbers<[1], [0], [0], [1], [0, 0, 1, 1], [], []>} : vector<288x8xbf16>, vector<8x8xbf16>, vector<288x8xf32> -> vector<288x8xf32>
    %82 = arith.addf %76, %81 : vector<288x8xf32>
    %c0_77 = arith.constant 0 : index
    %c20_78 = arith.constant 20 : index
    %c0_79 = arith.constant 0 : index
    %83 = vector.load %arg2[%c0_77, %c20_78, %c0_79] : memref<1x342x8xbf16, #tpu.memory_space<vmem>>, vector<1x288x8xbf16>
    %84 = vector.shape_cast %83 : vector<1x288x8xbf16> to vector<288x8xbf16>
    %c14 = arith.constant 14 : index
    %c0_80 = arith.constant 0 : index
    %c0_81 = arith.constant 0 : index
    %85 = vector.load %arg3[%c14, %c0_80, %c0_81] : memref<18x8x8xbf16, #tpu.memory_space<vmem>>, vector<1x8x8xbf16>
    %86 = vector.shape_cast %85 : vector<1x8x8xbf16> to vector<8x8xbf16>
    %cst_82 = arith.constant dense<0.000000e+00> : vector<288x8xf32>
    %87 = tpu.matmul %84, %86, %cst_82 {dimension_numbers = #tpu.dot_dimension_numbers<[1], [0], [0], [1], [0, 0, 1, 1], [], []>} : vector<288x8xbf16>, vector<8x8xbf16>, vector<288x8xf32> -> vector<288x8xf32>
    %88 = arith.addf %82, %87 : vector<288x8xf32>
    %c0_83 = arith.constant 0 : index
    %c36_84 = arith.constant 36 : index
    %c0_85 = arith.constant 0 : index
    %89 = vector.load %arg2[%c0_83, %c36_84, %c0_85] : memref<1x342x8xbf16, #tpu.memory_space<vmem>>, vector<1x288x8xbf16>
    %90 = vector.shape_cast %89 : vector<1x288x8xbf16> to vector<288x8xbf16>
    %c15 = arith.constant 15 : index
    %c0_86 = arith.constant 0 : index
    %c0_87 = arith.constant 0 : index
    %91 = vector.load %arg3[%c15, %c0_86, %c0_87] : memref<18x8x8xbf16, #tpu.memory_space<vmem>>, vector<1x8x8xbf16>
    %92 = vector.shape_cast %91 : vector<1x8x8xbf16> to vector<8x8xbf16>
    %cst_88 = arith.constant dense<0.000000e+00> : vector<288x8xf32>
    %93 = tpu.matmul %90, %92, %cst_88 {dimension_numbers = #tpu.dot_dimension_numbers<[1], [0], [0], [1], [0, 0, 1, 1], [], []>} : vector<288x8xbf16>, vector<8x8xbf16>, vector<288x8xf32> -> vector<288x8xf32>
    %94 = arith.addf %88, %93 : vector<288x8xf32>
    %c0_89 = arith.constant 0 : index
    %c37_90 = arith.constant 37 : index
    %c0_91 = arith.constant 0 : index
    %95 = vector.load %arg2[%c0_89, %c37_90, %c0_91] : memref<1x342x8xbf16, #tpu.memory_space<vmem>>, vector<1x288x8xbf16>
    %96 = vector.shape_cast %95 : vector<1x288x8xbf16> to vector<288x8xbf16>
    %c16 = arith.constant 16 : index
    %c0_92 = arith.constant 0 : index
    %c0_93 = arith.constant 0 : index
    %97 = vector.load %arg3[%c16, %c0_92, %c0_93] : memref<18x8x8xbf16, #tpu.memory_space<vmem>>, vector<1x8x8xbf16>
    %98 = vector.shape_cast %97 : vector<1x8x8xbf16> to vector<8x8xbf16>
    %cst_94 = arith.constant dense<0.000000e+00> : vector<288x8xf32>
    %99 = tpu.matmul %96, %98, %cst_94 {dimension_numbers = #tpu.dot_dimension_numbers<[1], [0], [0], [1], [0, 0, 1, 1], [], []>} : vector<288x8xbf16>, vector<8x8xbf16>, vector<288x8xf32> -> vector<288x8xf32>
    %100 = arith.addf %94, %99 : vector<288x8xf32>
    %c0_95 = arith.constant 0 : index
    %c38_96 = arith.constant 38 : index
    %c0_97 = arith.constant 0 : index
    %101 = vector.load %arg2[%c0_95, %c38_96, %c0_97] : memref<1x342x8xbf16, #tpu.memory_space<vmem>>, vector<1x288x8xbf16>
    %102 = vector.shape_cast %101 : vector<1x288x8xbf16> to vector<288x8xbf16>
    %c17 = arith.constant 17 : index
    %c0_98 = arith.constant 0 : index
    %c0_99 = arith.constant 0 : index
    %103 = vector.load %arg3[%c17, %c0_98, %c0_99] : memref<18x8x8xbf16, #tpu.memory_space<vmem>>, vector<1x8x8xbf16>
    %104 = vector.shape_cast %103 : vector<1x8x8xbf16> to vector<8x8xbf16>
    %cst_100 = arith.constant dense<0.000000e+00> : vector<288x8xf32>
    %105 = tpu.matmul %102, %104, %cst_100 {dimension_numbers = #tpu.dot_dimension_numbers<[1], [0], [0], [1], [0, 0, 1, 1], [], []>} : vector<288x8xbf16>, vector<8x8xbf16>, vector<288x8xf32> -> vector<288x8xf32>
    %106 = arith.addf %100, %105 : vector<288x8xf32>
    %c0_101 = arith.constant 0 : index
    %c0_102 = arith.constant 0 : index
    %107 = vector.load %arg4[%c0_101, %c0_102] : memref<1x8xf32, #tpu.memory_space<vmem>>, vector<1x8xf32>
    %108 = vector.broadcast %107 : vector<1x8xf32> to vector<288x8xf32>
    %109 = arith.addf %106, %108 : vector<288x8xf32>
    %cst_103 = arith.constant 0.000000e+00 : f32
    %110 = vector.broadcast %cst_103 : f32 to vector<288x8xf32>
    %111 = arith.maximumf %109, %110 : vector<288x8xf32>
    %c0_104 = arith.constant 0 : index
    %c0_105 = arith.constant 0 : index
    %c0_106 = arith.constant 0 : index
    %112 = vector.load %arg5[%c0_104, %c0_105, %c0_106] : memref<1x288x8xf32, #tpu.memory_space<vmem>>, vector<1x288x8xf32>
    %113 = vector.shape_cast %112 : vector<1x288x8xf32> to vector<288x8xf32>
    %114 = vector.shape_cast %111 : vector<288x8xf32> to vector<1x288x8xf32>
    tpu.vector_store %arg5[%c0_104, %c0_105, %c0_106], %114 {strides = array<i32>} : memref<1x288x8xf32, #tpu.memory_space<vmem>>, vector<1x288x8xf32>,
    return
  }
  func.func @transform_0(%arg0: i32) -> (i32, i32, i32) {
    %c0_i32 = arith.constant 0 : i32
    %c0_i32_0 = arith.constant 0 : i32
    %c0_i32_1 = arith.constant 0 : i32
    return %arg0, %c0_i32, %c0_i32_0 : i32, i32, i32
  }
  func.func @transform_1(%arg0: i32) -> (i32, i32, i32) {
    %c0_i32 = arith.constant 0 : i32
    %c0_i32_0 = arith.constant 0 : i32
    %c0_i32_1 = arith.constant 0 : i32
    return %arg0, %c0_i32, %c0_i32_0 : i32, i32, i32
  }
  func.func @transform_2(%arg0: i32) -> (i32, i32, i32) {
    %c0_i32 = arith.constant 0 : i32
    %c0_i32_0 = arith.constant 0 : i32
    %c0_i32_1 = arith.constant 0 : i32
    %c0_i32_2 = arith.constant 0 : i32
    return %c0_i32, %c0_i32_0, %c0_i32_1 : i32, i32, i32
  }
  func.func @transform_3(%arg0: i32) -> (i32, i32) {
    %c0_i32 = arith.constant 0 : i32
    %c0_i32_0 = arith.constant 0 : i32
    %c0_i32_1 = arith.constant 0 : i32
    return %c0_i32, %c0_i32_0 : i32, i32
  }
  func.func @transform_4(%arg0: i32) -> (i32, i32, i32) {
    %c0_i32 = arith.constant 0 : i32
    %c0_i32_0 = arith.constant 0 : i32
    %c0_i32_1 = arith.constant 0 : i32
    return %arg0, %c0_i32, %c0_i32_0 : i32, i32, i32
  }
}

</mosaic_0001>

<llo_original>
// kernel: csfi2_forward.7
$region0: #{csfi2_forward.7}
  #allocation0 [shape = 'u32[]', space=smem, size = 0x4, offset = 0x4, fixed_abs, tag = 'smem constant byte address 0x4 - core index']
  #allocation1 [shape = 'u32[72,128]{1,0:T(1,128)}', space=vmem, size = 0x9000, scoped, tag = 'internal scratch']
  %s0 = inlined_call_operand.vmem [shape: bf16[128,8], index: 0, kind: input, shape index: {}]
  %s1 = inlined_call_operand.vmem [shape: bf16[8,16], index: 1, kind: input, shape index: {}]
  %s2 = inlined_call_operand.vmem [shape: f32[1,16], index: 2, kind: input, shape index: {}]
  %s3 = inlined_call_operand.vmem [shape: bf16[128,16], index: 3, kind: output, shape index: {}]
  %s4 = sld [smem:[#allocation0]]
  $region22: #{csfi2_forward.7} parent=0
    _
  %s6 = ssub.s32 1, %s4
  %s7 = scalar_select 0, %s6, %s4
  // Predicated region
  $region2: #{csfi2_forward.7} parent=0 // pred_check
    _
  $region3: #{csfi2_forward.7} parent=0 // pred_check_branch
    %9 = sbr.rel (0) target = $region5
  $region4: #{csfi2_forward.7} parent=0 // pred_region
    _
  $region5: #{csfi2_forward.7} parent=0 // pred_fallthru
    _
  // Predicated region
  $region6: #{csfi2_forward.7} parent=0 // pred_check
    _
  $region7: #{csfi2_forward.7} parent=0 // pred_check_branch
    %11 = sbr.rel (0) target = $region9
  $region8: #{csfi2_forward.7} parent=0 // pred_region
    _
  $region9: #{csfi2_forward.7} parent=0 // pred_fallthru
    _
  // Predicated region
  $region10: #{csfi2_forward.7} parent=0 // pred_check
    _
  $region11: #{csfi2_forward.7} parent=0 // pred_check_branch
    %13 = sbr.rel (0) target = $region13
  $region12: #{csfi2_forward.7} parent=0 // pred_region
    _
  $region13: #{csfi2_forward.7} parent=0 // pred_fallthru
    _
  %v15 = vld [vmem:[%s0] sm:$0xf]
  %v16 = vld [vmem:[%s0 + $0x4] sm:$0xf]
  %v17 = vld [vmem:[%s0 + $0x8] sm:$0xf]
  %v18 = vld [vmem:[%s0 + $0xc] sm:$0xf]
  %v19 = vld [vmem:[%s0 + $0x10] sm:$0xf]
  %v20 = vld [vmem:[%s0 + $0x14] sm:$0xf]
  %v21 = vld [vmem:[%s0 + $0x18] sm:$0xf]
  %v22 = vld [vmem:[%s0 + $0x1c] sm:$0xf]
  %v23 = vld [vmem:[%s0 + $0x20] sm:$0xf]
  %v24 = vld [vmem:[%s0 + $0x24] sm:$0xf]
  %v25 = vld [vmem:[%s0 + $0x28] sm:$0xf]
  %v26 = vld [vmem:[%s0 + $0x2c] sm:$0xf]
  %v27 = vld [vmem:[%s0 + $0x30] sm:$0xf]
  %v28 = vld [vmem:[%s0 + $0x34] sm:$0xf]
  %v29 = vld [vmem:[%s0 + $0x38] sm:$0xf]
  %v30 = vld [vmem:[%s0 + $0x3c] sm:$0xf]
  %v31 = vld [vmem:[%s1] sm:$0xf]
  %v32 = vld [vmem:[%s2] sm:$0x1]
  %v34 = vperm.slane %v32, 0
  %v52 = vunpack.c.l.b16 %v15
  %v53 = vunpack.c.l.b16 %v16
  %v54 = vunpack.c.l.b16 %v17
  %v55 = vunpack.c.l.b16 %v18
  %v56 = vunpack.c.l.b16 %v19
  %v57 = vunpack.c.l.b16 %v20
  %v58 = vunpack.c.l.b16 %v21
  %v59 = vunpack.c.l.b16 %v22
  %v60 = vunpack.c.l.b16 %v23
  %v61 = vunpack.c.l.b16 %v24
  %v62 = vunpack.c.l.b16 %v25
  %v63 = vunpack.c.l.b16 %v26
  %v64 = vunpack.c.l.b16 %v27
  %v65 = vunpack.c.l.b16 %v28
  %v66 = vunpack.c.l.b16 %v29
  %v67 = vunpack.c.l.b16 %v30
  %v68 = vpack.c.b16 %v53, %v52
  %v69 = vpack.c.b16 %v55, %v54
  %v70 = vpack.c.b16 %v57, %v56
  %v71 = vpack.c.b16 %v59, %v58
  %v72 = vpack.c.b16 %v61, %v60
  %v73 = vpack.c.b16 %v63, %v62
  %v74 = vpack.c.b16 %v65, %v64
  %v75 = vpack.c.b16 %v67, %v66
  %vm76 = vcmask 64512
  %v78 = vsel %vm76, %v68, 0
  %v81 = vsel %vm76, %v69, 0
  %v84 = vsel %vm76, %v70, 0
  %v87 = vsel %vm76, %v71, 0
  %v90 = vsel %vm76, %v72, 0
  %v93 = vsel %vm76, %v73, 0
  %v96 = vsel %vm76, %v74, 0
  %v99 = vsel %vm76, %v75, 0
  %vm101 = vcmask 1043456
  %v103 = vsel %vm101, %v31, 0
  %105 = vmatpush.bf16.msra.mxu0 0
  %106 = vmatpush.bf16.msra.mxu0 0
  %107 = vmatpush.bf16.msra.mxu0 0
  %108 = vmatpush.bf16.msra.mxu0 0
  %109 = vmatpush.bf16.msra.mxu0 0
  %110 = vmatpush.bf16.msra.mxu0 0
  %111 = vmatpush.bf16.msra.mxu0 0
  %112 = vmatpush.bf16.msra.mxu0 %v103
  %113 = vmatmul.bf16.gmra.mxu0 %v78
  %v114 = vpop.f32.mrf.mxu0
  %v115 = vadd.f32 %v34, %v114
  %v116 = vpop.f32.mrf.mxu0
  %v117 = vadd.f32 %v34, %v116
  %118 = vmatmul.bf16.gmra.mxu0 %v81
  %v119 = vpop.f32.mrf.mxu0
  %v120 = vadd.f32 %v34, %v119
  %v121 = vpop.f32.mrf.mxu0
  %v122 = vadd.f32 %v34, %v121
  %123 = vmatmul.bf16.gmra.mxu0 %v84
  %v124 = vpop.f32.mrf.mxu0
  %v125 = vadd.f32 %v34, %v124
  %v126 = vpop.f32.mrf.mxu0
  %v127 = vadd.f32 %v34, %v126
  %128 = vmatmul.bf16.gmra.mxu0 %v87
  %v129 = vpop.f32.mrf.mxu0
  %v130 = vadd.f32 %v34, %v129
  %v131 = vpop.f32.mrf.mxu0
  %v132 = vadd.f32 %v34, %v131
  %133 = vmatmul.bf16.gmra.mxu0 %v90
  %v134 = vpop.f32.mrf.mxu0
  %v135 = vadd.f32 %v34, %v134
  %v136 = vpop.f32.mrf.mxu0
  %v137 = vadd.f32 %v34, %v136
  %138 = vmatmul.bf16.gmra.mxu0 %v93
  %v139 = vpop.f32.mrf.mxu0
  %v140 = vadd.f32 %v34, %v139
  %v141 = vpop.f32.mrf.mxu0
  %v142 = vadd.f32 %v34, %v141
  %143 = vmatmul.bf16.gmra.mxu0 %v96
  %v144 = vpop.f32.mrf.mxu0
  %v145 = vadd.f32 %v34, %v144
  %v146 = vpop.f32.mrf.mxu0
  %v147 = vadd.f32 %v34, %v146
  %148 = vmatmul.bf16.gmra.mxu0 %v99
  %v149 = vpop.f32.mrf.mxu0
  %v150 = vadd.f32 %v34, %v149
  %v151 = vpop.f32.mrf.mxu0
  %v152 = vadd.f32 %v34, %v151
  %153 = vdwg.mxu0
  %v154 = vpack.c.bf16 %v115, %v115
  %v155 = vpack.c.bf16 %v117, %v117
  %v156 = vpack.c.bf16 %v120, %v120
  %v157 = vpack.c.bf16 %v122, %v122
  %v158 = vpack.c.bf16 %v125, %v125
  %v159 = vpack.c.bf16 %v127, %v127
  %v160 = vpack.c.bf16 %v130, %v130
  %v161 = vpack.c.bf16 %v132, %v132
  %v162 = vpack.c.bf16 %v135, %v135
  %v163 = vpack.c.bf16 %v137, %v137
  %v164 = vpack.c.bf16 %v140, %v140
  %v165 = vpack.c.bf16 %v142, %v142
  %v166 = vpack.c.bf16 %v145, %v145
  %v167 = vpack.c.bf16 %v147, %v147
  %v168 = vpack.c.bf16 %v150, %v150
  %v169 = vpack.c.bf16 %v152, %v152
  %vm170 = vcmask 125952
  %171 = vst.msk [vmem:[%s3] sm:$0xf] %vm170, %v154
  %172 = vst.msk [vmem:[%s3 + $0x4] sm:$0xf] %vm170, %v155
  %173 = vst.msk [vmem:[%s3 + $0x8] sm:$0xf] %vm170, %v156
  %174 = vst.msk [vmem:[%s3 + $0xc] sm:$0xf] %vm170, %v157
  %175 = vst.msk [vmem:[%s3 + $0x10] sm:$0xf] %vm170, %v158
  %176 = vst.msk [vmem:[%s3 + $0x14] sm:$0xf] %vm170, %v159
  %177 = vst.msk [vmem:[%s3 + $0x18] sm:$0xf] %vm170, %v160
  %178 = vst.msk [vmem:[%s3 + $0x1c] sm:$0xf] %vm170, %v161
  %179 = vst.msk [vmem:[%s3 + $0x20] sm:$0xf] %vm170, %v162
  %180 = vst.msk [vmem:[%s3 + $0x24] sm:$0xf] %vm170, %v163
  %181 = vst.msk [vmem:[%s3 + $0x28] sm:$0xf] %vm170, %v164
  %182 = vst.msk [vmem:[%s3 + $0x2c] sm:$0xf] %vm170, %v165
  %183 = vst.msk [vmem:[%s3 + $0x30] sm:$0xf] %vm170, %v166
  %184 = vst.msk [vmem:[%s3 + $0x34] sm:$0xf] %vm170, %v167
  %185 = vst.msk [vmem:[%s3 + $0x38] sm:$0xf] %vm170, %v168
  %186 = vst.msk [vmem:[%s3 + $0x3c] sm:$0xf] %vm170, %v169
  // Predicated region
  $region14: #{csfi2_forward.7} parent=0 // pred_check
    _
  $region15: #{csfi2_forward.7} parent=0 // pred_check_branch
    %188 = sbr.rel (0) target = $region17
  $region16: #{csfi2_forward.7} parent=0 // pred_region
    _
  $region17: #{csfi2_forward.7} parent=0 // pred_fallthru
    _
  // Predicated region
  $region18: #{csfi2_forward.7} parent=0 // pred_check
    _
  $region19: #{csfi2_forward.7} parent=0 // pred_check_branch
    %190 = sbr.rel (0) target = $region21
  $region20: #{csfi2_forward.7} parent=0 // pred_region
    _
  $region21: #{csfi2_forward.7} parent=0 // pred_fallthru
    _

// kernel: csfi2_forward.6
$region0: #{csfi2_forward.6}
  #allocation0 [shape = 'u32[]', space=smem, size = 0x4, offset = 0x4, fixed_abs, tag = 'smem constant byte address 0x4 - core index']
  #allocation1 [shape = 'u32[72,128]{1,0:T(1,128)}', space=vmem, size = 0x9000, scoped, tag = 'internal scratch']
  %s0 = inlined_call_operand.vmem [shape: bf16[128,8], index: 0, kind: input, shape index: {}]
  %s1 = inlined_call_operand.vmem [shape: bf16[8,8], index: 1, kind: input, shape index: {}]
  %s2 = inlined_call_operand.vmem [shape: f32[1,8], index: 2, kind: input, shape index: {}]
  %s3 = inlined_call_operand.vmem [shape: bf16[128,8], index: 3, kind: output, shape index: {}]
  %s4 = sld [smem:[#allocation0]]
  $region22: #{csfi2_forward.6} parent=0
    _
  %s6 = ssub.s32 1, %s4
  %s7 = scalar_select 0, %s6, %s4
  // Predicated region
  $region2: #{csfi2_forward.6} parent=0 // pred_check
    _
  $region3: #{csfi2_forward.6} parent=0 // pred_check_branch
    %9 = sbr.rel (0) target = $region5
  $region4: #{csfi2_forward.6} parent=0 // pred_region
    _
  $region5: #{csfi2_forward.6} parent=0 // pred_fallthru
    _
  // Predicated region
  $region6: #{csfi2_forward.6} parent=0 // pred_check
    _
  $region7: #{csfi2_forward.6} parent=0 // pred_check_branch
    %11 = sbr.rel (0) target = $region9
  $region8: #{csfi2_forward.6} parent=0 // pred_region
    _
  $region9: #{csfi2_forward.6} parent=0 // pred_fallthru
    _
  // Predicated region
  $region10: #{csfi2_forward.6} parent=0 // pred_check
    _
  $region11: #{csfi2_forward.6} parent=0 // pred_check_branch
    %13 = sbr.rel (0) target = $region13
  $region12: #{csfi2_forward.6} parent=0 // pred_region
    _
  $region13: #{csfi2_forward.6} parent=0 // pred_fallthru
    _
  %v15 = vld [vmem:[%s0] sm:$0xf]
  %v16 = vld [vmem:[%s0 + $0x4] sm:$0xf]
  %v17 = vld [vmem:[%s0 + $0x8] sm:$0xf]
  %v18 = vld [vmem:[%s0 + $0xc] sm:$0xf]
  %v19 = vld [vmem:[%s0 + $0x10] sm:$0xf]
  %v20 = vld [vmem:[%s0 + $0x14] sm:$0xf]
  %v21 = vld [vmem:[%s0 + $0x18] sm:$0xf]
  %v22 = vld [vmem:[%s0 + $0x1c] sm:$0xf]
  %v23 = vld [vmem:[%s0 + $0x20] sm:$0xf]
  %v24 = vld [vmem:[%s0 + $0x24] sm:$0xf]
  %v25 = vld [vmem:[%s0 + $0x28] sm:$0xf]
  %v26 = vld [vmem:[%s0 + $0x2c] sm:$0xf]
  %v27 = vld [vmem:[%s0 + $0x30] sm:$0xf]
  %v28 = vld [vmem:[%s0 + $0x34] sm:$0xf]
  %v29 = vld [vmem:[%s0 + $0x38] sm:$0xf]
  %v30 = vld [vmem:[%s0 + $0x3c] sm:$0xf]
  %v31 = vld [vmem:[%s1] sm:$0xf]
  %v32 = vld [vmem:[%s2] sm:$0x1]
  %v34 = vperm.slane %v32, 0
  %v52 = vunpack.c.l.b16 %v15
  %v53 = vunpack.c.l.b16 %v16
  %v54 = vunpack.c.l.b16 %v17
  %v55 = vunpack.c.l.b16 %v18
  %v56 = vunpack.c.l.b16 %v19
  %v57 = vunpack.c.l.b16 %v20
  %v58 = vunpack.c.l.b16 %v21
  %v59 = vunpack.c.l.b16 %v22
  %v60 = vunpack.c.l.b16 %v23
  %v61 = vunpack.c.l.b16 %v24
  %v62 = vunpack.c.l.b16 %v25
  %v63 = vunpack.c.l.b16 %v26
  %v64 = vunpack.c.l.b16 %v27
  %v65 = vunpack.c.l.b16 %v28
  %v66 = vunpack.c.l.b16 %v29
  %v67 = vunpack.c.l.b16 %v30
  %v68 = vpack.c.b16 %v53, %v52
  %v69 = vpack.c.b16 %v55, %v54
  %v70 = vpack.c.b16 %v57, %v56
  %v71 = vpack.c.b16 %v59, %v58
  %v72 = vpack.c.b16 %v61, %v60
  %v73 = vpack.c.b16 %v63, %v62
  %v74 = vpack.c.b16 %v65, %v64
  %v75 = vpack.c.b16 %v67, %v66
  %vm76 = vcmask 64512
  %v78 = vsel %vm76, %v68, 0
  %v81 = vsel %vm76, %v69, 0
  %v84 = vsel %vm76, %v70, 0
  %v87 = vsel %vm76, %v71, 0
  %v90 = vsel %vm76, %v72, 0
  %v93 = vsel %vm76, %v73, 0
  %v96 = vsel %vm76, %v74, 0
  %v99 = vsel %vm76, %v75, 0
  %vm101 = vcmask 1043456
  %v103 = vsel %vm101, %v31, 0
  %105 = vmatpush.bf16.msra.mxu0 0
  %106 = vmatpush.bf16.msra.mxu0 0
  %107 = vmatpush.bf16.msra.mxu0 0
  %108 = vmatpush.bf16.msra.mxu0 0
  %109 = vmatpush.bf16.msra.mxu0 0
  %110 = vmatpush.bf16.msra.mxu0 0
  %111 = vmatpush.bf16.msra.mxu0 0
  %112 = vmatpush.bf16.msra.mxu0 %v103
  %113 = vmatmul.bf16.gmra.mxu0 %v78
  %v114 = vpop.f32.mrf.mxu0
  %v115 = vadd.f32 %v34, %v114
  %v116 = vpop.f32.mrf.mxu0
  %v117 = vadd.f32 %v34, %v116
  %118 = vmatmul.bf16.gmra.mxu0 %v81
  %v119 = vpop.f32.mrf.mxu0
  %v120 = vadd.f32 %v34, %v119
  %v121 = vpop.f32.mrf.mxu0
  %v122 = vadd.f32 %v34, %v121
  %123 = vmatmul.bf16.gmra.mxu0 %v84
  %v124 = vpop.f32.mrf.mxu0
  %v125 = vadd.f32 %v34, %v124
  %v126 = vpop.f32.mrf.mxu0
  %v127 = vadd.f32 %v34, %v126
  %128 = vmatmul.bf16.gmra.mxu0 %v87
  %v129 = vpop.f32.mrf.mxu0
  %v130 = vadd.f32 %v34, %v129
  %v131 = vpop.f32.mrf.mxu0
  %v132 = vadd.f32 %v34, %v131
  %133 = vmatmul.bf16.gmra.mxu0 %v90
  %v134 = vpop.f32.mrf.mxu0
  %v135 = vadd.f32 %v34, %v134
  %v136 = vpop.f32.mrf.mxu0
  %v137 = vadd.f32 %v34, %v136
  %138 = vmatmul.bf16.gmra.mxu0 %v93
  %v139 = vpop.f32.mrf.mxu0
  %v140 = vadd.f32 %v34, %v139
  %v141 = vpop.f32.mrf.mxu0
  %v142 = vadd.f32 %v34, %v141
  %143 = vmatmul.bf16.gmra.mxu0 %v96
  %v144 = vpop.f32.mrf.mxu0
  %v145 = vadd.f32 %v34, %v144
  %v146 = vpop.f32.mrf.mxu0
  %v147 = vadd.f32 %v34, %v146
  %148 = vmatmul.bf16.gmra.mxu0 %v99
  %v149 = vpop.f32.mrf.mxu0
  %v150 = vadd.f32 %v34, %v149
  %v151 = vpop.f32.mrf.mxu0
  %v152 = vadd.f32 %v34, %v151
  %153 = vdwg.mxu0
  %v154 = vpack.c.bf16 %v115, %v115
  %v155 = vpack.c.bf16 %v117, %v117
  %v156 = vpack.c.bf16 %v120, %v120
  %v157 = vpack.c.bf16 %v122, %v122
  %v158 = vpack.c.bf16 %v125, %v125
  %v159 = vpack.c.bf16 %v127, %v127
  %v160 = vpack.c.bf16 %v130, %v130
  %v161 = vpack.c.bf16 %v132, %v132
  %v162 = vpack.c.bf16 %v135, %v135
  %v163 = vpack.c.bf16 %v137, %v137
  %v164 = vpack.c.bf16 %v140, %v140
  %v165 = vpack.c.bf16 %v142, %v142
  %v166 = vpack.c.bf16 %v145, %v145
  %v167 = vpack.c.bf16 %v147, %v147
  %v168 = vpack.c.bf16 %v150, %v150
  %v169 = vpack.c.bf16 %v152, %v152
  %vm170 = vcmask 60416
  %171 = vst.msk [vmem:[%s3] sm:$0xf] %vm170, %v154
  %172 = vst.msk [vmem:[%s3 + $0x4] sm:$0xf] %vm170, %v155
  %173 = vst.msk [vmem:[%s3 + $0x8] sm:$0xf] %vm170, %v156
  %174 = vst.msk [vmem:[%s3 + $0xc] sm:$0xf] %vm170, %v157
  %175 = vst.msk [vmem:[%s3 + $0x10] sm:$0xf] %vm170, %v158
  %176 = vst.msk [vmem:[%s3 + $0x14] sm:$0xf] %vm170, %v159
  %177 = vst.msk [vmem:[%s3 + $0x18] sm:$0xf] %vm170, %v160
  %178 = vst.msk [vmem:[%s3 + $0x1c] sm:$0xf] %vm170, %v161
  %179 = vst.msk [vmem:[%s3 + $0x20] sm:$0xf] %vm170, %v162
  %180 = vst.msk [vmem:[%s3 + $0x24] sm:$0xf] %vm170, %v163
  %181 = vst.msk [vmem:[%s3 + $0x28] sm:$0xf] %vm170, %v164
  %182 = vst.msk [vmem:[%s3 + $0x2c] sm:$0xf] %vm170, %v165
  %183 = vst.msk [vmem:[%s3 + $0x30] sm:$0xf] %vm170, %v166
  %184 = vst.msk [vmem:[%s3 + $0x34] sm:$0xf] %vm170, %v167
  %185 = vst.msk [vmem:[%s3 + $0x38] sm:$0xf] %vm170, %v168
  %186 = vst.msk [vmem:[%s3 + $0x3c] sm:$0xf] %vm170, %v169
  // Predicated region
  $region14: #{csfi2_forward.6} parent=0 // pred_check
    _
  $region15: #{csfi2_forward.6} parent=0 // pred_check_branch
    %188 = sbr.rel (0) target = $region17
  $region16: #{csfi2_forward.6} parent=0 // pred_region
    _
  $region17: #{csfi2_forward.6} parent=0 // pred_fallthru
    _
  // Predicated region
  $region18: #{csfi2_forward.6} parent=0 // pred_check
    _
  $region19: #{csfi2_forward.6} parent=0 // pred_check_branch
    %190 = sbr.rel (0) target = $region21
  $region20: #{csfi2_forward.6} parent=0 // pred_region
    _
  $region21: #{csfi2_forward.6} parent=0 // pred_fallthru
    _

// kernel: csfi2_forward.8
$region0: #{csfi2_forward.8}
  #allocation0 [shape = 'u32[]', space=smem, size = 0x4, offset = 0x4, fixed_abs, tag = 'smem constant byte address 0x4 - core index']
  #allocation1 [shape = 'u32[72,128]{1,0:T(1,128)}', space=vmem, size = 0x9000, scoped, tag = 'internal scratch']
  %s0 = inlined_call_operand.vmem [shape: bf16[16,8], index: 0, kind: input, shape index: {}]
  %s1 = inlined_call_operand.vmem [shape: bf16[2,8,128], index: 1, kind: input, shape index: {}]
  %s2 = inlined_call_operand.vmem [shape: bf16[2,16,128], index: 2, kind: output, shape index: {}]
  %s3 = sld [smem:[#allocation0]]
  $region41: #{csfi2_forward.8} parent=0
    _
  %s5 = ssub.s32 1, %s3
  %s6 = scalar_select 0, %s5, %s3
  loop: start=0, step=1, limit=4
  $region2: #{csfi2_forward.8} parent=0 // loop_pre_header
    _
  $region3: #{csfi2_forward.8} parent=0 // loop_header
    %s8 = sphi 0, %s12
    %p9 = scmp.ge.s32.totalorder %s8, 4
    %s16 = sphi 0, %s16
    %s18 = sphi 0, %s16
    %s19 = sphi 0, %s18
    %s33 = sphi 0, %s19
    %s39 = sphi 0, %s41
    %s42 = sphi 0, %s39
    %s43 = sphi 0, %s42
    %s59 = sphi 0, %s43
    %s65 = sphi 0, %s67
    %s68 = sphi 0, %s65
    %s69 = sphi 0, %s68
    %s85 = sphi 0, %s69
  $region4: #{csfi2_forward.8} parent=0 // loop_header_branch
    %11 = sbr.rel (%p9) target = $region8
  $region5: #{csfi2_forward.8} parent=0 // loop_body
    %s13 = ssub.s32 %s8, 1
    %s14 = ssub.s32 %s8, 2
    %s15 = sadd.s32 %s8, 1
    %s17 = sadd.s32 %s16, 1
    %p20 = scmp.eq.s32.totalorder %s8, 1
    %p21 = scmp.ne.s32.totalorder %s16, %s18
    %p22 = scmp.eq.s32.totalorder %s8, 0
    %p23 = por %p21, %p22
    %p24 = scmp.ne.s32.totalorder %s16, %s18
    %p25 = scmp.eq.s32.totalorder %s13, 1
    %p26 = por %p24, %p25
    %p27 = scmp.ne.s32.totalorder %s18, %s19
    %p28 = scmp.eq.s32.totalorder %s13, 0
    %p29 = por %p27, %p28
    %p30 = scmp.ne.s32.totalorder %s18, %s19
    %p31 = scmp.eq.s32.totalorder %s14, 1
    %p32 = por %p30, %p31
    %p34 = scmp.ne.s32.totalorder %s19, %s33
    %p35 = scmp.eq.s32.totalorder %s14, 0
    %p36 = por %p34, %p35
    %s37 = ssub.s32 %s8, %s15
    %p38 = scmp.eq.s32.totalorder %s37, 0
    %s40 = sadd.s32 %s39, 1
    %s41 = scalar_select %p38, %s39, %s40
    %p44 = pneg %p38
    %p45 = scmp.eq.s32.totalorder %s8, 1
    %p46 = por %p44, %p45
    %p47 = scmp.ne.s32.totalorder %s39, %s42
    %p48 = scmp.eq.s32.totalorder %s8, 0
    %p49 = por %p47, %p48
    %p50 = scmp.ne.s32.totalorder %s39, %s42
    %p51 = scmp.eq.s32.totalorder %s13, 1
    %p52 = por %p50, %p51
    %p53 = scmp.ne.s32.totalorder %s42, %s43
    %p54 = scmp.eq.s32.totalorder %s13, 0
    %p55 = por %p53, %p54
    %p56 = scmp.ne.s32.totalorder %s42, %s43
    %p57 = scmp.eq.s32.totalorder %s14, 1
    %p58 = por %p56, %p57
    %p60 = scmp.ne.s32.totalorder %s43, %s59
    %p61 = scmp.eq.s32.totalorder %s14, 0
    %p62 = por %p60, %p61
    %s63 = ssub.s32 %s8, %s15
    %p64 = scmp.eq.s32.totalorder %s63, 0
    %s66 = sadd.s32 %s65, 1
    %s67 = scalar_select %p64, %s65, %s66
    %p70 = pneg %p64
    %p71 = scmp.eq.s32.totalorder %s8, 1
    %p72 = por %p70, %p71
    %p73 = scmp.ne.s32.totalorder %s65, %s68
    %p74 = scmp.eq.s32.totalorder %s8, 0
    %p75 = por %p73, %p74
    %p76 = scmp.ne.s32.totalorder %s65, %s68
    %p77 = scmp.eq.s32.totalorder %s13, 1
    %p78 = por %p76, %p77
    %p79 = scmp.ne.s32.totalorder %s68, %s69
    %p80 = scmp.eq.s32.totalorder %s13, 0
    %p81 = por %p79, %p80
    %p82 = scmp.ne.s32.totalorder %s68, %s69
    %p83 = scmp.eq.s32.totalorder %s14, 1
    %p84 = por %p82, %p83
    %p86 = scmp.ne.s32.totalorder %s69, %s85
    %p87 = scmp.eq.s32.totalorder %s14, 0
    %p88 = por %p86, %p87
    %p89 = scmp.le.s32.totalorder 1, %s8
    %p90 = scmp.lt.s32.totalorder %s8, 3
    %p91 = pnand %p89, %p90
    %p92 = pneg %p91
    // Predicated region
    $region9: #{csfi2_forward.8} parent=5 // pred_check
      _
    $region10: #{csfi2_forward.8} parent=5 // pred_check_branch
      %94 = sbr.rel (%p91) target = $region12
    $region11: #{csfi2_forward.8} parent=5 // pred_region
      %s95 = ssub.s32 %s8, 1
      // Predicated region
      $region13: #{csfi2_forward.8} parent=11 // pred_check
        %p96 = pneg %p29
      $region14: #{csfi2_forward.8} parent=11 // pred_check_branch
        %98 = sbr.rel (%p96) target = $region16
      $region15: #{csfi2_forward.8} parent=11 // pred_region
        _
      $region16: #{csfi2_forward.8} parent=11 // pred_fallthru
        _
    $region12: #{csfi2_forward.8} parent=5 // pred_fallthru
      _
    %p99 = scmp.lt.s32.totalorder %s8, 2
    // Predicated region
    $region17: #{csfi2_forward.8} parent=5 // pred_check
      %p100 = pneg %p99
    $region18: #{csfi2_forward.8} parent=5 // pred_check_branch
      %102 = sbr.rel (%p100) target = $region20
    $region19: #{csfi2_forward.8} parent=5 // pred_region
      // Predicated region
      $region21: #{csfi2_forward.8} parent=19 // pred_check
        %p103 = pneg %p49
      $region22: #{csfi2_forward.8} parent=19 // pred_check_branch
        %105 = sbr.rel (%p103) target = $region24
      $region23: #{csfi2_forward.8} parent=19 // pred_region
        %p106 = scmp.lt.s32.totalorder %s8, 1
        %s107 = scalar_select %p106, %s8, 1
        %s108 = smul.addr %s107, 4
        %s109 = scalar_lea.vmem %s1, %s108
      $region24: #{csfi2_forward.8} parent=19 // pred_fallthru
        _
    $region20: #{csfi2_forward.8} parent=5 // pred_fallthru
      _
    %p110 = scmp.le.s32.totalorder 1, %s8
    %p111 = scmp.lt.s32.totalorder %s8, 3
    %p112 = pnand %p110, %p111
    %p113 = pneg %p112
    // Predicated region
    $region25: #{csfi2_forward.8} parent=5 // pred_check
      _
    $region26: #{csfi2_forward.8} parent=5 // pred_check_branch
      %115 = sbr.rel (%p112) target = $region28
    $region27: #{csfi2_forward.8} parent=5 // pred_region
      %s116 = ssub.s32 %s8, 1
      %p117 = pneg %p29
      %p118 = pneg %p26
      %p119 = scmp.lt.s32.totalorder %s13, 1
      %s120 = scalar_select %p119, %s13, 1
      %s121 = smul.addr %s120, 4
      %s122 = scalar_lea.vmem %s1, %s121
      %p123 = pneg %p55
      %p124 = pneg %p52
      %p125 = pneg %p81
      %p126 = pneg %p78
      %p127 = scmp.lt.s32.totalorder %s13, 1
      %s128 = scalar_select %p127, %s13, 1
      %s129 = smul.addr %s128, 2
      %s130 = smul.addr %s129, 4
      %s131 = scalar_lea.vmem %s2, %s130
      %p132 = scmp.lt.s32.totalorder %s13, 1
      %s133 = scalar_select %p132, %s13, 1
      %s134 = smul.addr %s133, 4
      %s135 = scalar_lea.vmem %s1, %s134
      %p136 = scmp.lt.s32.totalorder %s13, 1
      %s137 = scalar_select %p136, %s13, 1
      %s138 = smul.addr %s137, 2
      %s139 = smul.addr %s138, 4
      %s140 = scalar_lea.vmem %s2, %s139
      %v142 = vld [vmem:[%s0] sm:$0xf]
      %v143 = vld [vmem:[%s0 + $0x4] sm:$0xf]
      %v144 = vld [vmem:[%s135] sm:$0xf]
      %v147 = vunpack.c.l.b16 %v142
      %v148 = vunpack.c.l.b16 %v143
      %v149 = vpack.c.b16 %v148, %v147
      %vm150 = vcmask 64512
      %v152 = vsel %vm150, %v149, 0
      %vm154 = vcmask 1043456
      %v156 = vsel %vm154, %v144, 0
      %158 = vmatpush.bf16.msra.mxu0 0
      %159 = vmatpush.bf16.msra.mxu0 0
      %160 = vmatpush.bf16.msra.mxu0 0
      %161 = vmatpush.bf16.msra.mxu0 0
      %162 = vmatpush.bf16.msra.mxu0 0
      %163 = vmatpush.bf16.msra.mxu0 0
      %164 = vmatpush.bf16.msra.mxu0 0
      %165 = vmatpush.bf16.msra.mxu0 %v156
      %166 = vmatmul.bf16.gmra.mxu0 %v152
      %v167 = vpop.f32.mrf.mxu0
      %v168 = vadd.f32 0.0, %v167
      %v169 = vpop.f32.mrf.mxu0
      %v170 = vadd.f32 0.0, %v169
      %171 = vdwg.mxu0
      %v172 = vmax.f32 %v168, 0.0
      %v173 = vmax.f32 %v170, 0.0
      %v174 = vpack.c.bf16 %v172, %v172
      %v175 = vpack.c.bf16 %v173, %v173
      %176 = vst [vmem:[%s140] sm:$0xf] %v174
      %177 = vst [vmem:[%s140 + $0x4] sm:$0xf] %v175
      %p178 = scmp.lt.s32.totalorder %s13, 1
      %s179 = scalar_select %p178, %s13, 1
      %s180 = smul.addr %s179, 2
      %s181 = smul.addr %s180, 4
      %s182 = scalar_lea.vmem %s2, %s181
      // Predicated region
      $region29: #{csfi2_forward.8} parent=27 // pred_check
        %p183 = pneg %p78
      $region30: #{csfi2_forward.8} parent=27 // pred_check_branch
        %185 = sbr.rel (%p183) target = $region32
      $region31: #{csfi2_forward.8} parent=27 // pred_region
        _
      $region32: #{csfi2_forward.8} parent=27 // pred_fallthru
        _
    $region28: #{csfi2_forward.8} parent=5 // pred_fallthru
      _
    %p186 = scmp.le.s32.totalorder 2, %s8
    // Predicated region
    $region33: #{csfi2_forward.8} parent=5 // pred_check
      %p187 = pneg %p186
    $region34: #{csfi2_forward.8} parent=5 // pred_check_branch
      %189 = sbr.rel (%p187) target = $region36
    $region35: #{csfi2_forward.8} parent=5 // pred_region
      %s190 = ssub.s32 %s8, 2
      // Predicated region
      $region37: #{csfi2_forward.8} parent=35 // pred_check
        %p191 = pneg %p84
      $region38: #{csfi2_forward.8} parent=35 // pred_check_branch
        %193 = sbr.rel (%p191) target = $region40
      $region39: #{csfi2_forward.8} parent=35 // pred_region
        %p194 = scmp.lt.s32.totalorder %s14, 1
        %s195 = scalar_select %p194, %s14, 1
        %s196 = smul.addr %s195, 2
        %s197 = smul.addr %s196, 4
        %s198 = scalar_lea.vmem %s2, %s197
      $region40: #{csfi2_forward.8} parent=35 // pred_fallthru
        _
    $region36: #{csfi2_forward.8} parent=5 // pred_fallthru
      _
  $region6: #{csfi2_forward.8} parent=0 // loop_footer
    %s12 = sadd.s32 1, %s8
  $region7: #{csfi2_forward.8} parent=0 // loop_footer_branch
    %7 = sbr.rel target = $region3
  $region8: #{csfi2_forward.8} parent=0 // loop_exit
    _

// kernel: csfi2_forward.9
$region0: #{csfi2_forward.9}
  #allocation0 [shape = 'u32[]', space=smem, size = 0x4, offset = 0x4, fixed_abs, tag = 'smem constant byte address 0x4 - core index']
  #allocation1 [shape = 'u32[72,128]{1,0:T(1,128)}', space=vmem, size = 0x9000, scoped, tag = 'internal scratch']
  %s0 = inlined_call_operand.vmem [shape: bf16[2,90,8], index: 0, kind: input, shape index: {}]
  %s1 = inlined_call_operand.vmem [shape: bf16[2,90,8], index: 1, kind: input, shape index: {}]
  %s2 = inlined_call_operand.vmem [shape: bf16[2,90,8], index: 2, kind: input, shape index: {}]
  %s3 = inlined_call_operand.vmem [shape: bf16[2,90,8], index: 3, kind: input, shape index: {}]
  %s4 = inlined_call_operand.vmem [shape: bf16[9,8,8], index: 4, kind: input, shape index: {}]
  %s5 = inlined_call_operand.vmem [shape: f32[1,8], index: 5, kind: input, shape index: {}]
  %s6 = inlined_call_operand.vmem [shape: bf16[2,72,8], index: 6, kind: output, shape index: {}]
  %s7 = sld [smem:[#allocation0]]
  $region57: #{csfi2_forward.9} parent=0
    _
  %s9 = ssub.s32 1, %s7
  %s10 = scalar_select 0, %s9, %s7
  loop: start=0, step=1, limit=4
  $region2: #{csfi2_forward.9} parent=0 // loop_pre_header
    _
  $region3: #{csfi2_forward.9} parent=0 // loop_header
    %s12 = sphi 0, %s16
    %p13 = scmp.ge.s32.totalorder %s12, 4
    %s22 = sphi 0, %s24
    %s25 = sphi 0, %s22
    %s26 = sphi 0, %s25
    %s42 = sphi 0, %s26
    %s48 = sphi 0, %s50
    %s51 = sphi 0, %s48
    %s52 = sphi 0, %s51
    %s68 = sphi 0, %s52
    %s74 = sphi 0, %s76
    %s77 = sphi 0, %s74
    %s78 = sphi 0, %s77
    %s94 = sphi 0, %s78
    %s100 = sphi 0, %s102
    %s103 = sphi 0, %s100
    %s104 = sphi 0, %s103
    %s120 = sphi 0, %s104
    %s124 = sphi 0, %s124
    %s126 = sphi 0, %s124
    %s127 = sphi 0, %s126
    %s141 = sphi 0, %s127
    %s145 = sphi 0, %s145
    %s147 = sphi 0, %s145
    %s148 = sphi 0, %s147
    %s162 = sphi 0, %s148
    %s168 = sphi 0, %s170
    %s171 = sphi 0, %s168
    %s172 = sphi 0, %s171
    %s188 = sphi 0, %s172
  $region4: #{csfi2_forward.9} parent=0 // loop_header_branch
    %15 = sbr.rel (%p13) target = $region8
  $region5: #{csfi2_forward.9} parent=0 // loop_body
    %s17 = ssub.s32 %s12, 1
    %s18 = ssub.s32 %s12, 2
    %s19 = sadd.s32 %s12, 1
    %s20 = ssub.s32 %s12, %s19
    %p21 = scmp.eq.s32.totalorder %s20, 0
    %s23 = sadd.s32 %s22, 1
    %s24 = scalar_select %p21, %s22, %s23
    %p27 = pneg %p21
    %p28 = scmp.eq.s32.totalorder %s12, 1
    %p29 = por %p27, %p28
    %p30 = scmp.ne.s32.totalorder %s22, %s25
    %p31 = scmp.eq.s32.totalorder %s12, 0
    %p32 = por %p30, %p31
    %p33 = scmp.ne.s32.totalorder %s22, %s25
    %p34 = scmp.eq.s32.totalorder %s17, 1
    %p35 = por %p33, %p34
    %p36 = scmp.ne.s32.totalorder %s25, %s26
    %p37 = scmp.eq.s32.totalorder %s17, 0
    %p38 = por %p36, %p37
    %p39 = scmp.ne.s32.totalorder %s25, %s26
    %p40 = scmp.eq.s32.totalorder %s18, 1
    %p41 = por %p39, %p40
    %p43 = scmp.ne.s32.totalorder %s26, %s42
    %p44 = scmp.eq.s32.totalorder %s18, 0
    %p45 = por %p43, %p44
    %s46 = ssub.s32 %s12, %s19
    %p47 = scmp.eq.s32.totalorder %s46, 0
    %s49 = sadd.s32 %s48, 1
    %s50 = scalar_select %p47, %s48, %s49
    %p53 = pneg %p47
    %p54 = scmp.eq.s32.totalorder %s12, 1
    %p55 = por %p53, %p54
    %p56 = scmp.ne.s32.totalorder %s48, %s51
    %p57 = scmp.eq.s32.totalorder %s12, 0
    %p58 = por %p56, %p57
    %p59 = scmp.ne.s32.totalorder %s48, %s51
    %p60 = scmp.eq.s32.totalorder %s17, 1
    %p61 = por %p59, %p60
    %p62 = scmp.ne.s32.totalorder %s51, %s52
    %p63 = scmp.eq.s32.totalorder %s17, 0
    %p64 = por %p62, %p63
    %p65 = scmp.ne.s32.totalorder %s51, %s52
    %p66 = scmp.eq.s32.totalorder %s18, 1
    %p67 = por %p65, %p66
    %p69 = scmp.ne.s32.totalorder %s52, %s68
    %p70 = scmp.eq.s32.totalorder %s18, 0
    %p71 = por %p69, %p70
    %s72 = ssub.s32 %s12, %s19
    %p73 = scmp.eq.s32.totalorder %s72, 0
    %s75 = sadd.s32 %s74, 1
    %s76 = scalar_select %p73, %s74, %s75
    %p79 = pneg %p73
    %p80 = scmp.eq.s32.totalorder %s12, 1
    %p81 = por %p79, %p80
    %p82 = scmp.ne.s32.totalorder %s74, %s77
    %p83 = scmp.eq.s32.totalorder %s12, 0
    %p84 = por %p82, %p83
    %p85 = scmp.ne.s32.totalorder %s74, %s77
    %p86 = scmp.eq.s32.totalorder %s17, 1
    %p87 = por %p85, %p86
    %p88 = scmp.ne.s32.totalorder %s77, %s78
    %p89 = scmp.eq.s32.totalorder %s17, 0
    %p90 = por %p88, %p89
    %p91 = scmp.ne.s32.totalorder %s77, %s78
    %p92 = scmp.eq.s32.totalorder %s18, 1
    %p93 = por %p91, %p92
    %p95 = scmp.ne.s32.totalorder %s78, %s94
    %p96 = scmp.eq.s32.totalorder %s18, 0
    %p97 = por %p95, %p96
    %s98 = ssub.s32 %s12, %s19
    %p99 = scmp.eq.s32.totalorder %s98, 0
    %s101 = sadd.s32 %s100, 1
    %s102 = scalar_select %p99, %s100, %s101
    %p105 = pneg %p99
    %p106 = scmp.eq.s32.totalorder %s12, 1
    %p107 = por %p105, %p106
    %p108 = scmp.ne.s32.totalorder %s100, %s103
    %p109 = scmp.eq.s32.totalorder %s12, 0
    %p110 = por %p108, %p109
    %p111 = scmp.ne.s32.totalorder %s100, %s103
    %p112 = scmp.eq.s32.totalorder %s17, 1
    %p113 = por %p111, %p112
    %p114 = scmp.ne.s32.totalorder %s103, %s104
    %p115 = scmp.eq.s32.totalorder %s17, 0
    %p116 = por %p114, %p115
    %p117 = scmp.ne.s32.totalorder %s103, %s104
    %p118 = scmp.eq.s32.totalorder %s18, 1
    %p119 = por %p117, %p118
    %p121 = scmp.ne.s32.totalorder %s104, %s120
    %p122 = scmp.eq.s32.totalorder %s18, 0
    %p123 = por %p121, %p122
    %s125 = sadd.s32 %s124, 1
    %p128 = scmp.eq.s32.totalorder %s12, 1
    %p129 = scmp.ne.s32.totalorder %s124, %s126
    %p130 = scmp.eq.s32.totalorder %s12, 0
    %p131 = por %p129, %p130
    %p132 = scmp.ne.s32.totalorder %s124, %s126
    %p133 = scmp.eq.s32.totalorder %s17, 1
    %p134 = por %p132, %p133
    %p135 = scmp.ne.s32.totalorder %s126, %s127
    %p136 = scmp.eq.s32.totalorder %s17, 0
    %p137 = por %p135, %p136
    %p138 = scmp.ne.s32.totalorder %s126, %s127
    %p139 = scmp.eq.s32.totalorder %s18, 1
    %p140 = por %p138, %p139
    %p142 = scmp.ne.s32.totalorder %s127, %s141
    %p143 = scmp.eq.s32.totalorder %s18, 0
    %p144 = por %p142, %p143
    %s146 = sadd.s32 %s145, 1
    %p149 = scmp.eq.s32.totalorder %s12, 1
    %p150 = scmp.ne.s32.totalorder %s145, %s147
    %p151 = scmp.eq.s32.totalorder %s12, 0
    %p152 = por %p150, %p151
    %p153 = scmp.ne.s32.totalorder %s145, %s147
    %p154 = scmp.eq.s32.totalorder %s17, 1
    %p155 = por %p153, %p154
    %p156 = scmp.ne.s32.totalorder %s147, %s148
    %p157 = scmp.eq.s32.totalorder %s17, 0
    %p158 = por %p156, %p157
    %p159 = scmp.ne.s32.totalorder %s147, %s148
    %p160 = scmp.eq.s32.totalorder %s18, 1
    %p161 = por %p159, %p160
    %p163 = scmp.ne.s32.totalorder %s148, %s162
    %p164 = scmp.eq.s32.totalorder %s18, 0
    %p165 = por %p163, %p164
    %s166 = ssub.s32 %s12, %s19
    %p167 = scmp.eq.s32.totalorder %s166, 0
    %s169 = sadd.s32 %s168, 1
    %s170 = scalar_select %p167, %s168, %s169
    %p173 = pneg %p167
    %p174 = scmp.eq.s32.totalorder %s12, 1
    %p175 = por %p173, %p174
    %p176 = scmp.ne.s32.totalorder %s168, %s171
    %p177 = scmp.eq.s32.totalorder %s12, 0
    %p178 = por %p176, %p177
    %p179 = scmp.ne.s32.totalorder %s168, %s171
    %p180 = scmp.eq.s32.totalorder %s17, 1
    %p181 = por %p179, %p180
    %p182 = scmp.ne.s32.totalorder %s171, %s172
    %p183 = scmp.eq.s32.totalorder %s17, 0
    %p184 = por %p182, %p183
    %p185 = scmp.ne.s32.totalorder %s171, %s172
    %p186 = scmp.eq.s32.totalorder %s18, 1
    %p187 = por %p185, %p186
    %p189 = scmp.ne.s32.totalorder %s172, %s188
    %p190 = scmp.eq.s32.totalorder %s18, 0
    %p191 = por %p189, %p190
    %p192 = scmp.le.s32.totalorder 1, %s12
    %p193 = scmp.lt.s32.totalorder %s12, 3
    %p194 = pnand %p192, %p193
    %p195 = pneg %p194
    // Predicated region
    $region9: #{csfi2_forward.9} parent=5 // pred_check
      _
    $region10: #{csfi2_forward.9} parent=5 // pred_check_branch
      %197 = sbr.rel (%p194) target = $region12
    $region11: #{csfi2_forward.9} parent=5 // pred_region
      %s198 = ssub.s32 %s12, 1
      // Predicated region
      $region13: #{csfi2_forward.9} parent=11 // pred_check
        %p199 = pneg %p137
      $region14: #{csfi2_forward.9} parent=11 // pred_check_branch
        %201 = sbr.rel (%p199) target = $region16
      $region15: #{csfi2_forward.9} parent=11 // pred_region
        _
      $region16: #{csfi2_forward.9} parent=11 // pred_fallthru
        _
      // Predicated region
      $region17: #{csfi2_forward.9} parent=11 // pred_check
        %p202 = pneg %p158
      $region18: #{csfi2_forward.9} parent=11 // pred_check_branch
        %204 = sbr.rel (%p202) target = $region20
      $region19: #{csfi2_forward.9} parent=11 // pred_region
        _
      $region20: #{csfi2_forward.9} parent=11 // pred_fallthru
        _
    $region12: #{csfi2_forward.9} parent=5 // pred_fallthru
      _
    %p205 = scmp.lt.s32.totalorder %s12, 2
    // Predicated region
    $region21: #{csfi2_forward.9} parent=5 // pred_check
      %p206 = pneg %p205
    $region22: #{csfi2_forward.9} parent=5 // pred_check_branch
      %208 = sbr.rel (%p206) target = $region24
    $region23: #{csfi2_forward.9} parent=5 // pred_region
      // Predicated region
      $region25: #{csfi2_forward.9} parent=23 // pred_check
        %p209 = pneg %p32
      $region26: #{csfi2_forward.9} parent=23 // pred_check_branch
        %211 = sbr.rel (%p209) target = $region28
      $region27: #{csfi2_forward.9} parent=23 // pred_region
        %p212 = scmp.lt.s32.totalorder %s12, 1
        %s213 = scalar_select %p212, %s12, 1
        %s214 = smul.addr %s213, 12
        %s215 = smul.addr %s214, 4
        %s216 = scalar_lea.vmem %s0, %s215
      $region28: #{csfi2_forward.9} parent=23 // pred_fallthru
        _
      // Predicated region
      $region29: #{csfi2_forward.9} parent=23 // pred_check
        %p217 = pneg %p58
      $region30: #{csfi2_forward.9} parent=23 // pred_check_branch
        %219 = sbr.rel (%p217) target = $region32
      $region31: #{csfi2_forward.9} parent=23 // pred_region
        %p220 = scmp.lt.s32.totalorder %s12, 1
        %s221 = scalar_select %p220, %s12, 1
        %s222 = smul.addr %s221, 12
        %s223 = smul.addr %s222, 4
        %s224 = scalar_lea.vmem %s1, %s223
      $region32: #{csfi2_forward.9} parent=23 // pred_fallthru
        _
      // Predicated region
      $region33: #{csfi2_forward.9} parent=23 // pred_check
        %p225 = pneg %p84
      $region34: #{csfi2_forward.9} parent=23 // pred_check_branch
        %227 = sbr.rel (%p225) target = $region36
      $region35: #{csfi2_forward.9} parent=23 // pred_region
        %p228 = scmp.lt.s32.totalorder %s12, 1
        %s229 = scalar_select %p228, %s12, 1
        %s230 = smul.addr %s229, 12
        %s231 = smul.addr %s230, 4
        %s232 = scalar_lea.vmem %s2, %s231
      $region36: #{csfi2_forward.9} parent=23 // pred_fallthru
        _
      // Predicated region
      $region37: #{csfi2_forward.9} parent=23 // pred_check
        %p233 = pneg %p110
      $region38: #{csfi2_forward.9} parent=23 // pred_check_branch
        %235 = sbr.rel (%p233) target = $region40
      $region39: #{csfi2_forward.9} parent=23 // pred_region
        %p236 = scmp.lt.s32.totalorder %s12, 1
        %s237 = scalar_select %p236, %s12, 1
        %s238 = smul.addr %s237, 12
        %s239 = smul.addr %s238, 4
        %s240 = scalar_lea.vmem %s3, %s239
      $region40: #{csfi2_forward.9} parent=23 // pred_fallthru
        _
    $region24: #{csfi2_forward.9} parent=5 // pred_fallthru
      _
    %p241 = scmp.le.s32.totalorder 1, %s12
    %p242 = scmp.lt.s32.totalorder %s12, 3
    %p243 = pnand %p241, %p242
    %p244 = pneg %p243
    // Predicated region
    $region41: #{csfi2_forward.9} parent=5 // pred_check
      _
    $region42: #{csfi2_forward.9} parent=5 // pred_check_branch
      %246 = sbr.rel (%p243) target = $region44
    $region43: #{csfi2_forward.9} parent=5 // pred_region
      %s247 = ssub.s32 %s12, 1
      %p248 = scmp.lt.s32.totalorder %s17, 1
      %s249 = scalar_select %p248, %s17, 1
      %s250 = smul.addr %s249, 12
      %s251 = smul.addr %s250, 4
      %s252 = scalar_lea.vmem %s0, %s251
      %p253 = pneg %p38
      %p254 = pneg %p35
      %p255 = scmp.lt.s32.totalorder %s17, 1
      %s256 = scalar_select %p255, %s17, 1
      %s257 = smul.addr %s256, 12
      %s258 = smul.addr %s257, 4
      %s259 = scalar_lea.vmem %s1, %s258
      %p260 = pneg %p64
      %p261 = pneg %p61
      %p262 = scmp.lt.s32.totalorder %s17, 1
      %s263 = scalar_select %p262, %s17, 1
      %s264 = smul.addr %s263, 12
      %s265 = smul.addr %s264, 4
      %s266 = scalar_lea.vmem %s2, %s265
      %p267 = pneg %p90
      %p268 = pneg %p87
      %p269 = scmp.lt.s32.totalorder %s17, 1
      %s270 = scalar_select %p269, %s17, 1
      %s271 = smul.addr %s270, 12
      %s272 = smul.addr %s271, 4
      %s273 = scalar_lea.vmem %s3, %s272
      %p274 = pneg %p116
      %p275 = pneg %p113
      %p276 = pneg %p137
      %p277 = pneg %p134
      %p278 = pneg %p158
      %p279 = pneg %p155
      %p280 = pneg %p184
      %p281 = pneg %p181
      %p282 = scmp.lt.s32.totalorder %s17, 1
      %s283 = scalar_select %p282, %s17, 1
      %s284 = smul.addr %s283, 9
      %s285 = smul.addr %s284, 4
      %s286 = scalar_lea.vmem %s6, %s285
      %p287 = scmp.lt.s32.totalorder %s17, 1
      %s288 = scalar_select %p287, %s17, 1
      %s289 = smul.addr %s288, 12
      %s290 = smul.addr %s289, 4
      %s291 = scalar_lea.vmem %s0, %s290
      %p292 = scmp.lt.s32.totalorder %s17, 1
      %s293 = scalar_select %p292, %s17, 1
      %s294 = smul.addr %s293, 12
      %s295 = smul.addr %s294, 4
      %s296 = scalar_lea.vmem %s1, %s295
      %p297 = scmp.lt.s32.totalorder %s17, 1
      %s298 = scalar_select %p297, %s17, 1
      %s299 = smul.addr %s298, 12
      %s300 = smul.addr %s299, 4
      %s301 = scalar_lea.vmem %s2, %s300
      %p302 = scmp.lt.s32.totalorder %s17, 1
      %s303 = scalar_select %p302, %s17, 1
      %s304 = smul.addr %s303, 12
      %s305 = smul.addr %s304, 4
      %s306 = scalar_lea.vmem %s3, %s305
      %p307 = scmp.lt.s32.totalorder %s17, 1
      %s308 = scalar_select %p307, %s17, 1
      %s309 = smul.addr %s308, 9
      %s310 = smul.addr %s309, 4
      %s311 = scalar_lea.vmem %s6, %s310
      %v313 = vld [vmem:[%s291] sm:$0xf]
      %v314 = vld [vmem:[%s291 + $0x4] sm:$0xf]
      %v315 = vld [vmem:[%s291 + $0x8] sm:$0xf]
      %v316 = vld [vmem:[%s291 + $0xc] sm:$0xf]
      %v317 = vld [vmem:[%s291 + $0x10] sm:$0xf]
      %v318 = vld [vmem:[%s291 + $0x14] sm:$0xf]
      %v319 = vld [vmem:[%s291 + $0x18] sm:$0xf]
      %v320 = vld [vmem:[%s291 + $0x1c] sm:$0xf]
      %v321 = vld [vmem:[%s291 + $0x20] sm:$0xf]
      %v322 = vld [vmem:[%s4] sm:$0xf]
      %v323 = vld [vmem:[%s296] sm:$0xf]
      %v324 = vld [vmem:[%s296 + $0x4] sm:$0xf]
      %v325 = vld [vmem:[%s296 + $0x8] sm:$0xf]
      %v326 = vld [vmem:[%s296 + $0xc] sm:$0xf]
      %v327 = vld [vmem:[%s296 + $0x10] sm:$0xf]
      %v328 = vld [vmem:[%s296 + $0x14] sm:$0xf]
      %v329 = vld [vmem:[%s296 + $0x18] sm:$0xf]
      %v330 = vld [vmem:[%s296 + $0x1c] sm:$0xf]
      %v331 = vld [vmem:[%s296 + $0x20] sm:$0xf]
      %s332 = scalar_lea.vmem %s4, 4
      %v333 = vld [vmem:[%s332] sm:$0xf]
      %v343 = vunpack.c.l.b16 %v323
      %v344 = vunpack.c.l.b16 %v324
      %v345 = vunpack.c.l.b16 %v325
      %v346 = vunpack.c.l.b16 %v326
      %v347 = vunpack.c.l.b16 %v327
      %v348 = vunpack.c.l.b16 %v328
      %v349 = vunpack.c.l.b16 %v329
      %v350 = vunpack.c.l.b16 %v330
      %v351 = vunpack.c.l.b16 %v331
      %v352 = vpack.c.b16 %v344, %v343
      %v353 = vpack.c.b16 %v346, %v345
      %v354 = vpack.c.b16 %v348, %v347
      %v355 = vpack.c.b16 %v350, %v349
      %v356 = vpack.c.b16 %v351, %v351
      %vm357 = vcmask 64512
      %v359 = vsel %vm357, %v352, 0
      %v362 = vsel %vm357, %v353, 0
      %v365 = vsel %vm357, %v354, 0
      %v368 = vsel %vm357, %v355, 0
      %v371 = vsel %vm357, %v356, 0
      %vm373 = vcmask 1043456
      %v375 = vsel %vm373, %v333, 0
      %377 = vmatpush.bf16.msra.mxu0 0
      %378 = vmatpush.bf16.msra.mxu0 0
      %379 = vmatpush.bf16.msra.mxu0 0
      %380 = vmatpush.bf16.msra.mxu0 0
      %381 = vmatpush.bf16.msra.mxu0 0
      %382 = vmatpush.bf16.msra.mxu0 0
      %383 = vmatpush.bf16.msra.mxu0 0
      %384 = vmatpush.bf16.msra.mxu0 %v375
      %385 = vmatmul.bf16.gmra.mxu0 %v359
      %v386 = vpop.f32.mrf.mxu0
      %v387 = vadd.f32 0.0, %v386
      %v388 = vpop.f32.mrf.mxu0
      %v389 = vadd.f32 0.0, %v388
      %390 = vmatmul.bf16.gmra.mxu0 %v362
      %v391 = vpop.f32.mrf.mxu0
      %v392 = vadd.f32 0.0, %v391
      %v393 = vpop.f32.mrf.mxu0
      %v394 = vadd.f32 0.0, %v393
      %395 = vmatmul.bf16.gmra.mxu0 %v365
      %v396 = vpop.f32.mrf.mxu0
      %v397 = vadd.f32 0.0, %v396
      %v398 = vpop.f32.mrf.mxu0
      %v399 = vadd.f32 0.0, %v398
      %400 = vmatmul.bf16.gmra.mxu0 %v368
      %v401 = vpop.f32.mrf.mxu0
      %v402 = vadd.f32 0.0, %v401
      %v403 = vpop.f32.mrf.mxu0
      %v404 = vadd.f32 0.0, %v403
      %405 = vmatmul.bf16.gmra.mxu0 %v371
      %v406 = vpop.f32.mrf.mxu0
      %v407 = vadd.f32 0.0, %v406
      %v408 = vpop.f32.mrf.mxu0
      %409 = vdwg.mxu0
      %v419 = vunpack.c.l.b16 %v313
      %v420 = vunpack.c.l.b16 %v314
      %v421 = vunpack.c.l.b16 %v315
      %v422 = vunpack.c.l.b16 %v316
      %v423 = vunpack.c.l.b16 %v317
      %v424 = vunpack.c.l.b16 %v318
      %v425 = vunpack.c.l.b16 %v319
      %v426 = vunpack.c.l.b16 %v320
      %v427 = vunpack.c.l.b16 %v321
      %v428 = vpack.c.b16 %v420, %v419
      %v429 = vpack.c.b16 %v422, %v421
      %v430 = vpack.c.b16 %v424, %v423
      %v431 = vpack.c.b16 %v426, %v425
      %v432 = vpack.c.b16 %v427, %v427
      %v434 = vsel %vm357, %v428, 0
      %v437 = vsel %vm357, %v429, 0
      %v440 = vsel %vm357, %v430, 0
      %v443 = vsel %vm357, %v431, 0
      %v446 = vsel %vm357, %v432, 0
      %v449 = vsel %vm373, %v322, 0
      %451 = vmatpush.bf16.msra.mxu0 0
      %452 = vmatpush.bf16.msra.mxu0 0
      %453 = vmatpush.bf16.msra.mxu0 0
      %454 = vmatpush.bf16.msra.mxu0 0
      %455 = vmatpush.bf16.msra.mxu0 0
      %456 = vmatpush.bf16.msra.mxu0 0
      %457 = vmatpush.bf16.msra.mxu0 0
      %458 = vmatpush.bf16.msra.mxu0 %v449
      %459 = vmatmul.bf16.gmra.mxu0 %v434
      %v460 = vpop.f32.mrf.mxu0
      %v461 = vadd.f32 %v387, %v460
      %v462 = vpop.f32.mrf.mxu0
      %v463 = vadd.f32 %v389, %v462
      %464 = vmatmul.bf16.gmra.mxu0 %v437
      %v465 = vpop.f32.mrf.mxu0
      %v466 = vadd.f32 %v392, %v465
      %v467 = vpop.f32.mrf.mxu0
      %v468 = vadd.f32 %v394, %v467
      %469 = vmatmul.bf16.gmra.mxu0 %v440
      %v470 = vpop.f32.mrf.mxu0
      %v471 = vadd.f32 %v397, %v470
      %v472 = vpop.f32.mrf.mxu0
      %v473 = vadd.f32 %v399, %v472
      %474 = vmatmul.bf16.gmra.mxu0 %v443
      %v475 = vpop.f32.mrf.mxu0
      %v476 = vadd.f32 %v402, %v475
      %v477 = vpop.f32.mrf.mxu0
      %v478 = vadd.f32 %v404, %v477
      %479 = vmatmul.bf16.gmra.mxu0 %v446
      %v480 = vpop.f32.mrf.mxu0
      %v481 = vadd.f32 %v407, %v480
      %v482 = vpop.f32.mrf.mxu0
      %483 = vdwg.mxu0
      %v484 = vld [vmem:[%s291] sm:$0xf]
      %v485 = vld [vmem:[%s291 + $0x4] sm:$0xf]
      %v486 = vld [vmem:[%s291 + $0x8] sm:$0xf]
      %v487 = vld [vmem:[%s291 + $0xc] sm:$0xf]
      %v488 = vld [vmem:[%s291 + $0x10] sm:$0xf]
      %v489 = vld [vmem:[%s291 + $0x14] sm:$0xf]
      %v490 = vld [vmem:[%s291 + $0x18] sm:$0xf]
      %v491 = vld [vmem:[%s291 + $0x1c] sm:$0xf]
      %v492 = vld [vmem:[%s291 + $0x20] sm:$0xf]
      %v493 = vld [vmem:[%s291 + $0x24] sm:$0x1]
      %s494 = scalar_lea.vmem %s4, 8
      %v495 = vld [vmem:[%s494] sm:$0xf]
      %v506 = vunpack.c.l.b16 %v484
      %v507 = vunpack.c.l.b16 %v485
      %v508 = vunpack.c.l.b16 %v486
      %v509 = vunpack.c.l.b16 %v487
      %v510 = vunpack.c.l.b16 %v488
      %v511 = vunpack.c.l.b16 %v489
      %v512 = vunpack.c.l.b16 %v490
      %v513 = vunpack.c.l.b16 %v491
      %v514 = vunpack.c.l.b16 %v492
      %v515 = vunpack.c.l.b16 %v493
      %v516 = vpack.c.b16 %v507, %v506
      %v517 = vpack.c.b16 %v509, %v508
      %v518 = vpack.c.b16 %v511, %v510
      %v519 = vpack.c.b16 %v513, %v512
      %v520 = vpack.c.b16 %v515, %v514
      %vm521 = vsmask.f32 7424
      %v523 = vshrl.u32 %v516, 16
      %v525 = vshll.u32 %v516, 16
      %v527 = vrot.slane %v525, 1
      %v528 = vor.u32 %v523, %v527
      %v530 = vshll.u32 %v517, 16
      %v532 = vrot.slane %v530, 1
      %v533 = vsel %vm521, %v528, %v532
      %v534 = vshrl.u32 %v517, 16
      %v536 = vor.u32 %v534, %v532
      %v538 = vshll.u32 %v518, 16
      %v540 = vrot.slane %v538, 1
      %v541 = vsel %vm521, %v536, %v540
      %v542 = vshrl.u32 %v518, 16
      %v544 = vor.u32 %v542, %v540
      %v546 = vshll.u32 %v519, 16
      %v548 = vrot.slane %v546, 1
      %v549 = vsel %vm521, %v544, %v548
      %v550 = vshrl.u32 %v519, 16
      %v552 = vor.u32 %v550, %v548
      %v554 = vshll.u32 %v520, 16
      %v556 = vrot.slane %v554, 1
      %v557 = vsel %vm521, %v552, %v556
      %v558 = vshrl.u32 %v520, 16
      %v560 = vor.u32 %v558, %v556
      %v562 = vsel %vm357, %v533, 0
      %v565 = vsel %vm357, %v541, 0
      %v568 = vsel %vm357, %v549, 0
      %v571 = vsel %vm357, %v557, 0
      %v574 = vsel %vm357, %v560, 0
      %v577 = vsel %vm373, %v495, 0
      %579 = vmatpush.bf16.msra.mxu0 0
      %580 = vmatpush.bf16.msra.mxu0 0
      %581 = vmatpush.bf16.msra.mxu0 0
      %582 = vmatpush.bf16.msra.mxu0 0
      %583 = vmatpush.bf16.msra.mxu0 0
      %584 = vmatpush.bf16.msra.mxu0 0
      %585 = vmatpush.bf16.msra.mxu0 0
      %586 = vmatpush.bf16.msra.mxu0 %v577
      %587 = vmatmul.bf16.gmra.mxu0 %v562
      %v588 = vpop.f32.mrf.mxu0
      %v589 = vadd.f32 0.0, %v588
      %v590 = vpop.f32.mrf.mxu0
      %v591 = vadd.f32 0.0, %v590
      %592 = vmatmul.bf16.gmra.mxu0 %v565
      %v593 = vpop.f32.mrf.mxu0
      %v594 = vadd.f32 0.0, %v593
      %v595 = vpop.f32.mrf.mxu0
      %v596 = vadd.f32 0.0, %v595
      %597 = vmatmul.bf16.gmra.mxu0 %v568
      %v598 = vpop.f32.mrf.mxu0
      %v599 = vadd.f32 0.0, %v598
      %v600 = vpop.f32.mrf.mxu0
      %v601 = vadd.f32 0.0, %v600
      %602 = vmatmul.bf16.gmra.mxu0 %v571
      %v603 = vpop.f32.mrf.mxu0
      %v604 = vadd.f32 0.0, %v603
      %v605 = vpop.f32.mrf.mxu0
      %v606 = vadd.f32 0.0, %v605
      %607 = vmatmul.bf16.gmra.mxu0 %v574
      %v608 = vpop.f32.mrf.mxu0
      %v609 = vadd.f32 0.0, %v608
      %v610 = vpop.f32.mrf.mxu0
      %611 = vdwg.mxu0
      %v612 = vadd.f32 %v461, %v589
      %v613 = vadd.f32 %v463, %v591
      %v614 = vadd.f32 %v466, %v594
      %v615 = vadd.f32 %v468, %v596
      %v616 = vadd.f32 %v471, %v599
      %v617 = vadd.f32 %v473, %v601
      %v618 = vadd.f32 %v476, %v604
      %v619 = vadd.f32 %v478, %v606
      %v620 = vadd.f32 %v481, %v609
      %v621 = vld [vmem:[%s301] sm:$0xf]
      %v622 = vld [vmem:[%s301 + $0x4] sm:$0xf]
      %v623 = vld [vmem:[%s301 + $0x8] sm:$0xf]
      %v624 = vld [vmem:[%s301 + $0xc] sm:$0xf]
      %v625 = vld [vmem:[%s301 + $0x10] sm:$0xf]
      %v626 = vld [vmem:[%s301 + $0x14] sm:$0xf]
      %v627 = vld [vmem:[%s301 + $0x18] sm:$0xf]
      %v628 = vld [vmem:[%s301 + $0x1c] sm:$0xf]
      %v629 = vld [vmem:[%s301 + $0x20] sm:$0xf]
      %s630 = scalar_lea.vmem %s4, 12
      %v631 = vld [vmem:[%s630] sm:$0xf]
      %v641 = vunpack.c.l.b16 %v621
      %v642 = vunpack.c.l.b16 %v622
      %v643 = vunpack.c.l.b16 %v623
      %v644 = vunpack.c.l.b16 %v624
      %v645 = vunpack.c.l.b16 %v625
      %v646 = vunpack.c.l.b16 %v626
      %v647 = vunpack.c.l.b16 %v627
      %v648 = vunpack.c.l.b16 %v628
      %v649 = vunpack.c.l.b16 %v629
      %v650 = vpack.c.b16 %v642, %v641
      %v651 = vpack.c.b16 %v644, %v643
      %v652 = vpack.c.b16 %v646, %v645
      %v653 = vpack.c.b16 %v648, %v647
      %v654 = vpack.c.b16 %v649, %v649
      %v656 = vsel %vm357, %v650, 0
      %v659 = vsel %vm357, %v651, 0
      %v662 = vsel %vm357, %v652, 0
      %v665 = vsel %vm357, %v653, 0
      %v668 = vsel %vm357, %v654, 0
      %v671 = vsel %vm373, %v631, 0
      %673 = vmatpush.bf16.msra.mxu0 0
      %674 = vmatpush.bf16.msra.mxu0 0
      %675 = vmatpush.bf16.msra.mxu0 0
      %676 = vmatpush.bf16.msra.mxu0 0
      %677 = vmatpush.bf16.msra.mxu0 0
      %678 = vmatpush.bf16.msra.mxu0 0
      %679 = vmatpush.bf16.msra.mxu0 0
      %680 = vmatpush.bf16.msra.mxu0 %v671
      %681 = vmatmul.bf16.gmra.mxu0 %v656
      %v682 = vpop.f32.mrf.mxu0
      %v683 = vadd.f32 0.0, %v682
      %v684 = vpop.f32.mrf.mxu0
      %v685 = vadd.f32 0.0, %v684
      %686 = vmatmul.bf16.gmra.mxu0 %v659
      %v687 = vpop.f32.mrf.mxu0
      %v688 = vadd.f32 0.0, %v687
      %v689 = vpop.f32.mrf.mxu0
      %v690 = vadd.f32 0.0, %v689
      %691 = vmatmul.bf16.gmra.mxu0 %v662
      %v692 = vpop.f32.mrf.mxu0
      %v693 = vadd.f32 0.0, %v692
      %v694 = vpop.f32.mrf.mxu0
      %v695 = vadd.f32 0.0, %v694
      %696 = vmatmul.bf16.gmra.mxu0 %v665
      %v697 = vpop.f32.mrf.mxu0
      %v698 = vadd.f32 0.0, %v697
      %v699 = vpop.f32.mrf.mxu0
      %v700 = vadd.f32 0.0, %v699
      %701 = vmatmul.bf16.gmra.mxu0 %v668
      %v702 = vpop.f32.mrf.mxu0
      %v703 = vadd.f32 0.0, %v702
      %v704 = vpop.f32.mrf.mxu0
      %705 = vdwg.mxu0
      %v706 = vadd.f32 %v612, %v683
      %v707 = vadd.f32 %v613, %v685
      %v708 = vadd.f32 %v614, %v688
      %v709 = vadd.f32 %v615, %v690
      %v710 = vadd.f32 %v616, %v693
      %v711 = vadd.f32 %v617, %v695
      %v712 = vadd.f32 %v618, %v698
      %v713 = vadd.f32 %v619, %v700
      %v714 = vadd.f32 %v620, %v703
      %v715 = vld [vmem:[%s306] sm:$0xf]
      %v716 = vld [vmem:[%s306 + $0x4] sm:$0xf]
      %v717 = vld [vmem:[%s306 + $0x8] sm:$0xf]
      %v718 = vld [vmem:[%s306 + $0xc] sm:$0xf]
      %v719 = vld [vmem:[%s306 + $0x10] sm:$0xf]
      %v720 = vld [vmem:[%s306 + $0x14] sm:$0xf]
      %v721 = vld [vmem:[%s306 + $0x18] sm:$0xf]
      %v722 = vld [vmem:[%s306 + $0x1c] sm:$0xf]
      %v723 = vld [vmem:[%s306 + $0x20] sm:$0xf]
      %s724 = scalar_lea.vmem %s4, 16
      %v725 = vld [vmem:[%s724] sm:$0xf]
      %v735 = vunpack.c.l.b16 %v715
      %v736 = vunpack.c.l.b16 %v716
      %v737 = vunpack.c.l.b16 %v717
      %v738 = vunpack.c.l.b16 %v718
      %v739 = vunpack.c.l.b16 %v719
      %v740 = vunpack.c.l.b16 %v720
      %v741 = vunpack.c.l.b16 %v721
      %v742 = vunpack.c.l.b16 %v722
      %v743 = vunpack.c.l.b16 %v723
      %v744 = vpack.c.b16 %v736, %v735
      %v745 = vpack.c.b16 %v738, %v737
      %v746 = vpack.c.b16 %v740, %v739
      %v747 = vpack.c.b16 %v742, %v741
      %v748 = vpack.c.b16 %v743, %v743
      %v750 = vsel %vm357, %v744, 0
      %v753 = vsel %vm357, %v745, 0
      %v756 = vsel %vm357, %v746, 0
      %v759 = vsel %vm357, %v747, 0
      %v762 = vsel %vm357, %v748, 0
      %v765 = vsel %vm373, %v725, 0
      %767 = vmatpush.bf16.msra.mxu0 0
      %768 = vmatpush.bf16.msra.mxu0 0
      %769 = vmatpush.bf16.msra.mxu0 0
      %770 = vmatpush.bf16.msra.mxu0 0
      %771 = vmatpush.bf16.msra.mxu0 0
      %772 = vmatpush.bf16.msra.mxu0 0
      %773 = vmatpush.bf16.msra.mxu0 0
      %774 = vmatpush.bf16.msra.mxu0 %v765
      %775 = vmatmul.bf16.gmra.mxu0 %v750
      %v776 = vpop.f32.mrf.mxu0
      %v777 = vadd.f32 0.0, %v776
      %v778 = vpop.f32.mrf.mxu0
      %v779 = vadd.f32 0.0, %v778
      %780 = vmatmul.bf16.gmra.mxu0 %v753
      %v781 = vpop.f32.mrf.mxu0
      %v782 = vadd.f32 0.0, %v781
      %v783 = vpop.f32.mrf.mxu0
      %v784 = vadd.f32 0.0, %v783
      %785 = vmatmul.bf16.gmra.mxu0 %v756
      %v786 = vpop.f32.mrf.mxu0
      %v787 = vadd.f32 0.0, %v786
      %v788 = vpop.f32.mrf.mxu0
      %v789 = vadd.f32 0.0, %v788
      %790 = vmatmul.bf16.gmra.mxu0 %v759
      %v791 = vpop.f32.mrf.mxu0
      %v792 = vadd.f32 0.0, %v791
      %v793 = vpop.f32.mrf.mxu0
      %v794 = vadd.f32 0.0, %v793
      %795 = vmatmul.bf16.gmra.mxu0 %v762
      %v796 = vpop.f32.mrf.mxu0
      %v797 = vadd.f32 0.0, %v796
      %v798 = vpop.f32.mrf.mxu0
      %799 = vdwg.mxu0
      %v800 = vadd.f32 %v706, %v777
      %v801 = vadd.f32 %v707, %v779
      %v802 = vadd.f32 %v708, %v782
      %v803 = vadd.f32 %v709, %v784
      %v804 = vadd.f32 %v710, %v787
      %v805 = vadd.f32 %v711, %v789
      %v806 = vadd.f32 %v712, %v792
      %v807 = vadd.f32 %v713, %v794
      %v808 = vadd.f32 %v714, %v797
      %v809 = vld [vmem:[%s301] sm:$0xf]
      %v810 = vld [vmem:[%s301 + $0x4] sm:$0xf]
      %v811 = vld [vmem:[%s301 + $0x8] sm:$0xf]
      %v812 = vld [vmem:[%s301 + $0xc] sm:$0xf]
      %v813 = vld [vmem:[%s301 + $0x10] sm:$0xf]
      %v814 = vld [vmem:[%s301 + $0x14] sm:$0xf]
      %v815 = vld [vmem:[%s301 + $0x18] sm:$0xf]
      %v816 = vld [vmem:[%s301 + $0x1c] sm:$0xf]
      %v817 = vld [vmem:[%s301 + $0x20] sm:$0xf]
      %v818 = vld [vmem:[%s301 + $0x24] sm:$0x1]
      %s819 = scalar_lea.vmem %s4, 20
      %v820 = vld [vmem:[%s819] sm:$0xf]
      %v831 = vunpack.c.l.b16 %v809
      %v832 = vunpack.c.l.b16 %v810
      %v833 = vunpack.c.l.b16 %v811
      %v834 = vunpack.c.l.b16 %v812
      %v835 = vunpack.c.l.b16 %v813
      %v836 = vunpack.c.l.b16 %v814
      %v837 = vunpack.c.l.b16 %v815
      %v838 = vunpack.c.l.b16 %v816
      %v839 = vunpack.c.l.b16 %v817
      %v840 = vunpack.c.l.b16 %v818
      %v841 = vpack.c.b16 %v832, %v831
      %v842 = vpack.c.b16 %v834, %v833
      %v843 = vpack.c.b16 %v836, %v835
      %v844 = vpack.c.b16 %v838, %v837
      %v845 = vpack.c.b16 %v840, %v839
      %v847 = vshrl.u32 %v841, 16
      %v849 = vshll.u32 %v841, 16
      %v851 = vrot.slane %v849, 1
      %v852 = vor.u32 %v847, %v851
      %v854 = vshll.u32 %v842, 16
      %v856 = vrot.slane %v854, 1
      %v857 = vsel %vm521, %v852, %v856
      %v858 = vshrl.u32 %v842, 16
      %v860 = vor.u32 %v858, %v856
      %v862 = vshll.u32 %v843, 16
      %v864 = vrot.slane %v862, 1
      %v865 = vsel %vm521, %v860, %v864
      %v866 = vshrl.u32 %v843, 16
      %v868 = vor.u32 %v866, %v864
      %v870 = vshll.u32 %v844, 16
      %v872 = vrot.slane %v870, 1
      %v873 = vsel %vm521, %v868, %v872
      %v874 = vshrl.u32 %v844, 16
      %v876 = vor.u32 %v874, %v872
      %v878 = vshll.u32 %v845, 16
      %v880 = vrot.slane %v878, 1
      %v881 = vsel %vm521, %v876, %v880
      %v882 = vshrl.u32 %v845, 16
      %v884 = vor.u32 %v882, %v880
      %v886 = vsel %vm357, %v857, 0
      %v889 = vsel %vm357, %v865, 0
      %v892 = vsel %vm357, %v873, 0
      %v895 = vsel %vm357, %v881, 0
      %v898 = vsel %vm357, %v884, 0
      %v901 = vsel %vm373, %v820, 0
      %903 = vmatpush.bf16.msra.mxu0 0
      %904 = vmatpush.bf16.msra.mxu0 0
      %905 = vmatpush.bf16.msra.mxu0 0
      %906 = vmatpush.bf16.msra.mxu0 0
      %907 = vmatpush.bf16.msra.mxu0 0
      %908 = vmatpush.bf16.msra.mxu0 0
      %909 = vmatpush.bf16.msra.mxu0 0
      %910 = vmatpush.bf16.msra.mxu0 %v901
      %911 = vmatmul.bf16.gmra.mxu0 %v886
      %v912 = vpop.f32.mrf.mxu0
      %v913 = vadd.f32 0.0, %v912
      %v914 = vpop.f32.mrf.mxu0
      %v915 = vadd.f32 0.0, %v914
      %916 = vmatmul.bf16.gmra.mxu0 %v889
      %v917 = vpop.f32.mrf.mxu0
      %v918 = vadd.f32 0.0, %v917
      %v919 = vpop.f32.mrf.mxu0
      %v920 = vadd.f32 0.0, %v919
      %921 = vmatmul.bf16.gmra.mxu0 %v892
      %v922 = vpop.f32.mrf.mxu0
      %v923 = vadd.f32 0.0, %v922
      %v924 = vpop.f32.mrf.mxu0
      %v925 = vadd.f32 0.0, %v924
      %926 = vmatmul.bf16.gmra.mxu0 %v895
      %v927 = vpop.f32.mrf.mxu0
      %v928 = vadd.f32 0.0, %v927
      %v929 = vpop.f32.mrf.mxu0
      %v930 = vadd.f32 0.0, %v929
      %931 = vmatmul.bf16.gmra.mxu0 %v898
      %v932 = vpop.f32.mrf.mxu0
      %v933 = vadd.f32 0.0, %v932
      %v934 = vpop.f32.mrf.mxu0
      %935 = vdwg.mxu0
      %v936 = vadd.f32 %v800, %v913
      %v937 = vadd.f32 %v801, %v915
      %v938 = vadd.f32 %v802, %v918
      %v939 = vadd.f32 %v803, %v920
      %v940 = vadd.f32 %v804, %v923
      %v941 = vadd.f32 %v805, %v925
      %v942 = vadd.f32 %v806, %v928
      %v943 = vadd.f32 %v807, %v930
      %v944 = vadd.f32 %v808, %v933
      %v945 = vld [vmem:[%s291 + $0x4] sm:$0xf]
      %v946 = vld [vmem:[%s291 + $0x8] sm:$0xf]
      %v947 = vld [vmem:[%s291 + $0xc] sm:$0xf]
      %v948 = vld [vmem:[%s291 + $0x10] sm:$0xf]
      %v949 = vld [vmem:[%s291 + $0x14] sm:$0xf]
      %v950 = vld [vmem:[%s291 + $0x18] sm:$0xf]
      %v951 = vld [vmem:[%s291 + $0x1c] sm:$0xf]
      %v952 = vld [vmem:[%s291 + $0x20] sm:$0xf]
      %v953 = vld [vmem:[%s291 + $0x24] sm:$0xf]
      %v954 = vld [vmem:[%s291 + $0x28] sm:$0x1]
      %s955 = scalar_lea.vmem %s4, 24
      %v956 = vld [vmem:[%s955] sm:$0xf]
      %v967 = vunpack.c.l.b16 %v945
      %v968 = vunpack.c.l.b16 %v946
      %v969 = vunpack.c.l.b16 %v947
      %v970 = vunpack.c.l.b16 %v948
      %v971 = vunpack.c.l.b16 %v949
      %v972 = vunpack.c.l.b16 %v950
      %v973 = vunpack.c.l.b16 %v951
      %v974 = vunpack.c.l.b16 %v952
      %v975 = vunpack.c.l.b16 %v953
      %v976 = vunpack.c.l.b16 %v954
      %v977 = vpack.c.b16 %v968, %v967
      %v978 = vpack.c.b16 %v970, %v969
      %v979 = vpack.c.b16 %v972, %v971
      %v980 = vpack.c.b16 %v974, %v973
      %v981 = vpack.c.b16 %v976, %v975
      %v983 = vshrl.u32 %v977, 16
      %v985 = vshll.u32 %v977, 16
      %v987 = vrot.slane %v985, 1
      %v988 = vor.u32 %v983, %v987
      %v990 = vshll.u32 %v978, 16
      %v992 = vrot.slane %v990, 1
      %v993 = vsel %vm521, %v988, %v992
      %v994 = vshrl.u32 %v978, 16
      %v996 = vor.u32 %v994, %v992
      %v998 = vshll.u32 %v979, 16
      %v1000 = vrot.slane %v998, 1
      %v1001 = vsel %vm521, %v996, %v1000
      %v1002 = vshrl.u32 %v979, 16
      %v1004 = vor.u32 %v1002, %v1000
      %v1006 = vshll.u32 %v980, 16
      %v1008 = vrot.slane %v1006, 1
      %v1009 = vsel %vm521, %v1004, %v1008
      %v1010 = vshrl.u32 %v980, 16
      %v1012 = vor.u32 %v1010, %v1008
      %v1014 = vshll.u32 %v981, 16
      %v1016 = vrot.slane %v1014, 1
      %v1017 = vsel %vm521, %v1012, %v1016
      %v1018 = vshrl.u32 %v981, 16
      %v1020 = vor.u32 %v1018, %v1016
      %v1022 = vsel %vm357, %v993, 0
      %v1025 = vsel %vm357, %v1001, 0
      %v1028 = vsel %vm357, %v1009, 0
      %v1031 = vsel %vm357, %v1017, 0
      %v1034 = vsel %vm357, %v1020, 0
      %v1037 = vsel %vm373, %v956, 0
      %1039 = vmatpush.bf16.msra.mxu0 0
      %1040 = vmatpush.bf16.msra.mxu0 0
      %1041 = vmatpush.bf16.msra.mxu0 0
      %1042 = vmatpush.bf16.msra.mxu0 0
      %1043 = vmatpush.bf16.msra.mxu0 0
      %1044 = vmatpush.bf16.msra.mxu0 0
      %1045 = vmatpush.bf16.msra.mxu0 0
      %1046 = vmatpush.bf16.msra.mxu0 %v1037
      %1047 = vmatmul.bf16.gmra.mxu0 %v1022
      %v1048 = vpop.f32.mrf.mxu0
      %v1049 = vadd.f32 0.0, %v1048
      %v1050 = vpop.f32.mrf.mxu0
      %v1051 = vadd.f32 0.0, %v1050
      %1052 = vmatmul.bf16.gmra.mxu0 %v1025
      %v1053 = vpop.f32.mrf.mxu0
      %v1054 = vadd.f32 0.0, %v1053
      %v1055 = vpop.f32.mrf.mxu0
      %v1056 = vadd.f32 0.0, %v1055
      %1057 = vmatmul.bf16.gmra.mxu0 %v1028
      %v1058 = vpop.f32.mrf.mxu0
      %v1059 = vadd.f32 0.0, %v1058
      %v1060 = vpop.f32.mrf.mxu0
      %v1061 = vadd.f32 0.0, %v1060
      %1062 = vmatmul.bf16.gmra.mxu0 %v1031
      %v1063 = vpop.f32.mrf.mxu0
      %v1064 = vadd.f32 0.0, %v1063
      %v1065 = vpop.f32.mrf.mxu0
      %v1066 = vadd.f32 0.0, %v1065
      %1067 = vmatmul.bf16.gmra.mxu0 %v1034
      %v1068 = vpop.f32.mrf.mxu0
      %v1069 = vadd.f32 0.0, %v1068
      %v1070 = vpop.f32.mrf.mxu0
      %1071 = vdwg.mxu0
      %v1072 = vadd.f32 %v936, %v1049
      %v1073 = vadd.f32 %v937, %v1051
      %v1074 = vadd.f32 %v938, %v1054
      %v1075 = vadd.f32 %v939, %v1056
      %v1076 = vadd.f32 %v940, %v1059
      %v1077 = vadd.f32 %v941, %v1061
      %v1078 = vadd.f32 %v942, %v1064
      %v1079 = vadd.f32 %v943, %v1066
      %v1080 = vadd.f32 %v944, %v1069
      %v1081 = vld [vmem:[%s296 + $0x4] sm:$0xf]
      %v1082 = vld [vmem:[%s296 + $0x8] sm:$0xf]
      %v1083 = vld [vmem:[%s296 + $0xc] sm:$0xf]
      %v1084 = vld [vmem:[%s296 + $0x10] sm:$0xf]
      %v1085 = vld [vmem:[%s296 + $0x14] sm:$0xf]
      %v1086 = vld [vmem:[%s296 + $0x18] sm:$0xf]
      %v1087 = vld [vmem:[%s296 + $0x1c] sm:$0xf]
      %v1088 = vld [vmem:[%s296 + $0x20] sm:$0xf]
      %v1089 = vld [vmem:[%s296 + $0x24] sm:$0xf]
      %v1090 = vld [vmem:[%s296 + $0x28] sm:$0x1]
      %s1091 = scalar_lea.vmem %s4, 28
      %v1092 = vld [vmem:[%s1091] sm:$0xf]
      %v1103 = vunpack.c.l.b16 %v1081
      %v1104 = vunpack.c.l.b16 %v1082
      %v1105 = vunpack.c.l.b16 %v1083
      %v1106 = vunpack.c.l.b16 %v1084
      %v1107 = vunpack.c.l.b16 %v1085
      %v1108 = vunpack.c.l.b16 %v1086
      %v1109 = vunpack.c.l.b16 %v1087
      %v1110 = vunpack.c.l.b16 %v1088
      %v1111 = vunpack.c.l.b16 %v1089
      %v1112 = vunpack.c.l.b16 %v1090
      %v1113 = vpack.c.b16 %v1104, %v1103
      %v1114 = vpack.c.b16 %v1106, %v1105
      %v1115 = vpack.c.b16 %v1108, %v1107
      %v1116 = vpack.c.b16 %v1110, %v1109
      %v1117 = vpack.c.b16 %v1112, %v1111
      %v1119 = vshrl.u32 %v1113, 16
      %v1121 = vshll.u32 %v1113, 16
      %v1123 = vrot.slane %v1121, 1
      %v1124 = vor.u32 %v1119, %v1123
      %v1126 = vshll.u32 %v1114, 16
      %v1128 = vrot.slane %v1126, 1
      %v1129 = vsel %vm521, %v1124, %v1128
      %v1130 = vshrl.u32 %v1114, 16
      %v1132 = vor.u32 %v1130, %v1128
      %v1134 = vshll.u32 %v1115, 16
      %v1136 = vrot.slane %v1134, 1
      %v1137 = vsel %vm521, %v1132, %v1136
      %v1138 = vshrl.u32 %v1115, 16
      %v1140 = vor.u32 %v1138, %v1136
      %v1142 = vshll.u32 %v1116, 16
      %v1144 = vrot.slane %v1142, 1
      %v1145 = vsel %vm521, %v1140, %v1144
      %v1146 = vshrl.u32 %v1116, 16
      %v1148 = vor.u32 %v1146, %v1144
      %v1150 = vshll.u32 %v1117, 16
      %v1152 = vrot.slane %v1150, 1
      %v1153 = vsel %vm521, %v1148, %v1152
      %v1154 = vshrl.u32 %v1117, 16
      %v1156 = vor.u32 %v1154, %v1152
      %v1158 = vsel %vm357, %v1129, 0
      %v1161 = vsel %vm357, %v1137, 0
      %v1164 = vsel %vm357, %v1145, 0
      %v1167 = vsel %vm357, %v1153, 0
      %v1170 = vsel %vm357, %v1156, 0
      %v1173 = vsel %vm373, %v1092, 0
      %1175 = vmatpush.bf16.msra.mxu0 0
      %1176 = vmatpush.bf16.msra.mxu0 0
      %1177 = vmatpush.bf16.msra.mxu0 0
      %1178 = vmatpush.bf16.msra.mxu0 0
      %1179 = vmatpush.bf16.msra.mxu0 0
      %1180 = vmatpush.bf16.msra.mxu0 0
      %1181 = vmatpush.bf16.msra.mxu0 0
      %1182 = vmatpush.bf16.msra.mxu0 %v1173
      %1183 = vmatmul.bf16.gmra.mxu0 %v1158
      %v1184 = vpop.f32.mrf.mxu0
      %v1185 = vadd.f32 0.0, %v1184
      %v1186 = vpop.f32.mrf.mxu0
      %v1187 = vadd.f32 0.0, %v1186
      %1188 = vmatmul.bf16.gmra.mxu0 %v1161
      %v1189 = vpop.f32.mrf.mxu0
      %v1190 = vadd.f32 0.0, %v1189
      %v1191 = vpop.f32.mrf.mxu0
      %v1192 = vadd.f32 0.0, %v1191
      %1193 = vmatmul.bf16.gmra.mxu0 %v1164
      %v1194 = vpop.f32.mrf.mxu0
      %v1195 = vadd.f32 0.0, %v1194
      %v1196 = vpop.f32.mrf.mxu0
      %v1197 = vadd.f32 0.0, %v1196
      %1198 = vmatmul.bf16.gmra.mxu0 %v1167
      %v1199 = vpop.f32.mrf.mxu0
      %v1200 = vadd.f32 0.0, %v1199
      %v1201 = vpop.f32.mrf.mxu0
      %v1202 = vadd.f32 0.0, %v1201
      %1203 = vmatmul.bf16.gmra.mxu0 %v1170
      %v1204 = vpop.f32.mrf.mxu0
      %v1205 = vadd.f32 0.0, %v1204
      %v1206 = vpop.f32.mrf.mxu0
      %1207 = vdwg.mxu0
      %v1208 = vadd.f32 %v1072, %v1185
      %v1209 = vadd.f32 %v1073, %v1187
      %v1210 = vadd.f32 %v1074, %v1190
      %v1211 = vadd.f32 %v1075, %v1192
      %v1212 = vadd.f32 %v1076, %v1195
      %v1213 = vadd.f32 %v1077, %v1197
      %v1214 = vadd.f32 %v1078, %v1200
      %v1215 = vadd.f32 %v1079, %v1202
      %v1216 = vadd.f32 %v1080, %v1205
      %v1217 = vld [vmem:[%s291 + $0x4] sm:$0xe]
      %s1218 = scalar_lea.vmem %s4, 32
      %v1219 = vld [vmem:[%s1218] sm:$0xf]
      %v1221 = vunpack.c.l.b16 %v1217
      %v1222 = vpack.c.b16 %v968, %v1221
      %vm1223 = vcmask 1046528
      %v1224 = vrot.slane %v1222, 1
      %v1225 = vrot.slane %v978, 1
      %v1226 = vsel %vm1223, %v1224, %v1225
      %v1227 = vrot.slane %v979, 1
      %v1228 = vsel %vm1223, %v1225, %v1227
      %v1229 = vrot.slane %v980, 1
      %v1230 = vsel %vm1223, %v1227, %v1229
      %v1231 = vrot.slane %v981, 1
      %v1232 = vsel %vm1223, %v1229, %v1231
      %v1234 = vsel %vm357, %v1226, 0
      %v1237 = vsel %vm357, %v1228, 0
      %v1240 = vsel %vm357, %v1230, 0
      %v1243 = vsel %vm357, %v1232, 0
      %v1246 = vsel %vm357, %v1231, 0
      %v1249 = vsel %vm373, %v1219, 0
      %1251 = vmatpush.bf16.msra.mxu0 0
      %1252 = vmatpush.bf16.msra.mxu0 0
      %1253 = vmatpush.bf16.msra.mxu0 0
      %1254 = vmatpush.bf16.msra.mxu0 0
      %1255 = vmatpush.bf16.msra.mxu0 0
      %1256 = vmatpush.bf16.msra.mxu0 0
      %1257 = vmatpush.bf16.msra.mxu0 0
      %1258 = vmatpush.bf16.msra.mxu0 %v1249
      %1259 = vmatmul.bf16.gmra.mxu0 %v1234
      %v1260 = vpop.f32.mrf.mxu0
      %v1261 = vadd.f32 0.0, %v1260
      %v1262 = vpop.f32.mrf.mxu0
      %v1263 = vadd.f32 0.0, %v1262
      %1264 = vmatmul.bf16.gmra.mxu0 %v1237
      %v1265 = vpop.f32.mrf.mxu0
      %v1266 = vadd.f32 0.0, %v1265
      %v1267 = vpop.f32.mrf.mxu0
      %v1268 = vadd.f32 0.0, %v1267
      %1269 = vmatmul.bf16.gmra.mxu0 %v1240
      %v1270 = vpop.f32.mrf.mxu0
      %v1271 = vadd.f32 0.0, %v1270
      %v1272 = vpop.f32.mrf.mxu0
      %v1273 = vadd.f32 0.0, %v1272
      %1274 = vmatmul.bf16.gmra.mxu0 %v1243
      %v1275 = vpop.f32.mrf.mxu0
      %v1276 = vadd.f32 0.0, %v1275
      %v1277 = vpop.f32.mrf.mxu0
      %v1278 = vadd.f32 0.0, %v1277
      %1279 = vmatmul.bf16.gmra.mxu0 %v1246
      %v1280 = vpop.f32.mrf.mxu0
      %v1281 = vadd.f32 0.0, %v1280
      %v1282 = vpop.f32.mrf.mxu0
      %1283 = vdwg.mxu0
      %v1284 = vadd.f32 %v1208, %v1261
      %v1285 = vadd.f32 %v1209, %v1263
      %v1286 = vadd.f32 %v1210, %v1266
      %v1287 = vadd.f32 %v1211, %v1268
      %v1288 = vadd.f32 %v1212, %v1271
      %v1289 = vadd.f32 %v1213, %v1273
      %v1290 = vadd.f32 %v1214, %v1276
      %v1291 = vadd.f32 %v1215, %v1278
      %v1292 = vadd.f32 %v1216, %v1281
      %v1293 = vld [vmem:[%s5] sm:$0x1]
      %v1295 = vperm.slane %v1293, 0
      %v1297 = vadd.f32 %v1284, %v1295
      %v1298 = vadd.f32 %v1285, %v1295
      %v1299 = vadd.f32 %v1286, %v1295
      %v1300 = vadd.f32 %v1287, %v1295
      %v1301 = vadd.f32 %v1288, %v1295
      %v1302 = vadd.f32 %v1289, %v1295
      %v1303 = vadd.f32 %v1290, %v1295
      %v1304 = vadd.f32 %v1291, %v1295
      %v1305 = vadd.f32 %v1292, %v1295
      %v1306 = vmax.f32 %v1297, 0.0
      %v1307 = vmax.f32 %v1298, 0.0
      %v1308 = vmax.f32 %v1299, 0.0
      %v1309 = vmax.f32 %v1300, 0.0
      %v1310 = vmax.f32 %v1301, 0.0
      %v1311 = vmax.f32 %v1302, 0.0
      %v1312 = vmax.f32 %v1303, 0.0
      %v1313 = vmax.f32 %v1304, 0.0
      %v1314 = vmax.f32 %v1305, 0.0
      %v1315 = vpack.c.bf16 %v1306, %v1306
      %v1316 = vpack.c.bf16 %v1307, %v1307
      %v1317 = vpack.c.bf16 %v1308, %v1308
      %v1318 = vpack.c.bf16 %v1309, %v1309
      %v1319 = vpack.c.bf16 %v1310, %v1310
      %v1320 = vpack.c.bf16 %v1311, %v1311
      %v1321 = vpack.c.bf16 %v1312, %v1312
      %v1322 = vpack.c.bf16 %v1313, %v1313
      %v1323 = vpack.c.bf16 %v1314, %v1314
      %vm1324 = vcmask 60416
      %1325 = vst.msk [vmem:[%s311] sm:$0xf] %vm1324, %v1315
      %1326 = vst.msk [vmem:[%s311 + $0x4] sm:$0xf] %vm1324, %v1316
      %1327 = vst.msk [vmem:[%s311 + $0x8] sm:$0xf] %vm1324, %v1317
      %1328 = vst.msk [vmem:[%s311 + $0xc] sm:$0xf] %vm1324, %v1318
      %1329 = vst.msk [vmem:[%s311 + $0x10] sm:$0xf] %vm1324, %v1319
      %1330 = vst.msk [vmem:[%s311 + $0x14] sm:$0xf] %vm1324, %v1320
      %1331 = vst.msk [vmem:[%s311 + $0x18] sm:$0xf] %vm1324, %v1321
      %1332 = vst.msk [vmem:[%s311 + $0x1c] sm:$0xf] %vm1324, %v1322
      %1333 = vst.msk [vmem:[%s311 + $0x20] sm:$0xf] %vm1324, %v1323
      %p1334 = scmp.lt.s32.totalorder %s17, 1
      %s1335 = scalar_select %p1334, %s17, 1
      %s1336 = smul.addr %s1335, 9
      %s1337 = smul.addr %s1336, 4
      %s1338 = scalar_lea.vmem %s6, %s1337
      // Predicated region
      $region45: #{csfi2_forward.9} parent=43 // pred_check
        %p1339 = pneg %p181
      $region46: #{csfi2_forward.9} parent=43 // pred_check_branch
        %1341 = sbr.rel (%p1339) target = $region48
      $region47: #{csfi2_forward.9} parent=43 // pred_region
        _
      $region48: #{csfi2_forward.9} parent=43 // pred_fallthru
        _
    $region44: #{csfi2_forward.9} parent=5 // pred_fallthru
      _
    %p1342 = scmp.le.s32.totalorder 2, %s12
    // Predicated region
    $region49: #{csfi2_forward.9} parent=5 // pred_check
      %p1343 = pneg %p1342
    $region50: #{csfi2_forward.9} parent=5 // pred_check_branch
      %1345 = sbr.rel (%p1343) target = $region52
    $region51: #{csfi2_forward.9} parent=5 // pred_region
      %s1346 = ssub.s32 %s12, 2
      // Predicated region
      $region53: #{csfi2_forward.9} parent=51 // pred_check
        %p1347 = pneg %p187
      $region54: #{csfi2_forward.9} parent=51 // pred_check_branch
        %1349 = sbr.rel (%p1347) target = $region56
      $region55: #{csfi2_forward.9} parent=51 // pred_region
        %p1350 = scmp.lt.s32.totalorder %s18, 1
        %s1351 = scalar_select %p1350, %s18, 1
        %s1352 = smul.addr %s1351, 9
        %s1353 = smul.addr %s1352, 4
        %s1354 = scalar_lea.vmem %s6, %s1353
      $region56: #{csfi2_forward.9} parent=51 // pred_fallthru
        _
    $region52: #{csfi2_forward.9} parent=5 // pred_fallthru
      _
  $region6: #{csfi2_forward.9} parent=0 // loop_footer
    %s16 = sadd.s32 1, %s12
  $region7: #{csfi2_forward.9} parent=0 // loop_footer_branch
    %11 = sbr.rel target = $region3
  $region8: #{csfi2_forward.9} parent=0 // loop_exit
    _

// kernel: csfi2_forward.10
$region0: #{csfi2_forward.10}
  #allocation0 [shape = 'u32[]', space=smem, size = 0x4, offset = 0x4, fixed_abs, tag = 'smem constant byte address 0x4 - core index']
  #allocation1 [shape = 'u32[72,128]{1,0:T(1,128)}', space=vmem, size = 0x9000, scoped, tag = 'internal scratch']
  %s0 = inlined_call_operand.vmem [shape: bf16[2,110,8], index: 0, kind: input, shape index: {}]
  %s1 = inlined_call_operand.vmem [shape: bf16[2,110,8], index: 1, kind: input, shape index: {}]
  %s2 = inlined_call_operand.vmem [shape: bf16[18,8,8], index: 2, kind: input, shape index: {}]
  %s3 = inlined_call_operand.vmem [shape: f32[1,8], index: 3, kind: input, shape index: {}]
  %s4 = inlined_call_operand.vmem [shape: f32[2,80,8], index: 4, kind: output, shape index: {}]
  %s5 = sld [smem:[#allocation0]]
  $region49: #{csfi2_forward.10} parent=0
    _
  %s7 = ssub.s32 1, %s5
  %s8 = scalar_select 0, %s7, %s5
  loop: start=0, step=1, limit=4
  $region2: #{csfi2_forward.10} parent=0 // loop_pre_header
    _
  $region3: #{csfi2_forward.10} parent=0 // loop_header
    %s10 = sphi 0, %s14
    %p11 = scmp.ge.s32.totalorder %s10, 4
    %s20 = sphi 0, %s22
    %s23 = sphi 0, %s20
    %s24 = sphi 0, %s23
    %s40 = sphi 0, %s24
    %s46 = sphi 0, %s48
    %s49 = sphi 0, %s46
    %s50 = sphi 0, %s49
    %s66 = sphi 0, %s50
    %s70 = sphi 0, %s70
    %s72 = sphi 0, %s70
    %s73 = sphi 0, %s72
    %s87 = sphi 0, %s73
    %s91 = sphi 0, %s91
    %s93 = sphi 0, %s91
    %s94 = sphi 0, %s93
    %s108 = sphi 0, %s94
    %s114 = sphi 0, %s116
    %s117 = sphi 0, %s114
    %s118 = sphi 0, %s117
    %s134 = sphi 0, %s118
  $region4: #{csfi2_forward.10} parent=0 // loop_header_branch
    %13 = sbr.rel (%p11) target = $region8
  $region5: #{csfi2_forward.10} parent=0 // loop_body
    %s15 = ssub.s32 %s10, 1
    %s16 = ssub.s32 %s10, 2
    %s17 = sadd.s32 %s10, 1
    %s18 = ssub.s32 %s10, %s17
    %p19 = scmp.eq.s32.totalorder %s18, 0
    %s21 = sadd.s32 %s20, 1
    %s22 = scalar_select %p19, %s20, %s21
    %p25 = pneg %p19
    %p26 = scmp.eq.s32.totalorder %s10, 1
    %p27 = por %p25, %p26
    %p28 = scmp.ne.s32.totalorder %s20, %s23
    %p29 = scmp.eq.s32.totalorder %s10, 0
    %p30 = por %p28, %p29
    %p31 = scmp.ne.s32.totalorder %s20, %s23
    %p32 = scmp.eq.s32.totalorder %s15, 1
    %p33 = por %p31, %p32
    %p34 = scmp.ne.s32.totalorder %s23, %s24
    %p35 = scmp.eq.s32.totalorder %s15, 0
    %p36 = por %p34, %p35
    %p37 = scmp.ne.s32.totalorder %s23, %s24
    %p38 = scmp.eq.s32.totalorder %s16, 1
    %p39 = por %p37, %p38
    %p41 = scmp.ne.s32.totalorder %s24, %s40
    %p42 = scmp.eq.s32.totalorder %s16, 0
    %p43 = por %p41, %p42
    %s44 = ssub.s32 %s10, %s17
    %p45 = scmp.eq.s32.totalorder %s44, 0
    %s47 = sadd.s32 %s46, 1
    %s48 = scalar_select %p45, %s46, %s47
    %p51 = pneg %p45
    %p52 = scmp.eq.s32.totalorder %s10, 1
    %p53 = por %p51, %p52
    %p54 = scmp.ne.s32.totalorder %s46, %s49
    %p55 = scmp.eq.s32.totalorder %s10, 0
    %p56 = por %p54, %p55
    %p57 = scmp.ne.s32.totalorder %s46, %s49
    %p58 = scmp.eq.s32.totalorder %s15, 1
    %p59 = por %p57, %p58
    %p60 = scmp.ne.s32.totalorder %s49, %s50
    %p61 = scmp.eq.s32.totalorder %s15, 0
    %p62 = por %p60, %p61
    %p63 = scmp.ne.s32.totalorder %s49, %s50
    %p64 = scmp.eq.s32.totalorder %s16, 1
    %p65 = por %p63, %p64
    %p67 = scmp.ne.s32.totalorder %s50, %s66
    %p68 = scmp.eq.s32.totalorder %s16, 0
    %p69 = por %p67, %p68
    %s71 = sadd.s32 %s70, 1
    %p74 = scmp.eq.s32.totalorder %s10, 1
    %p75 = scmp.ne.s32.totalorder %s70, %s72
    %p76 = scmp.eq.s32.totalorder %s10, 0
    %p77 = por %p75, %p76
    %p78 = scmp.ne.s32.totalorder %s70, %s72
    %p79 = scmp.eq.s32.totalorder %s15, 1
    %p80 = por %p78, %p79
    %p81 = scmp.ne.s32.totalorder %s72, %s73
    %p82 = scmp.eq.s32.totalorder %s15, 0
    %p83 = por %p81, %p82
    %p84 = scmp.ne.s32.totalorder %s72, %s73
    %p85 = scmp.eq.s32.totalorder %s16, 1
    %p86 = por %p84, %p85
    %p88 = scmp.ne.s32.totalorder %s73, %s87
    %p89 = scmp.eq.s32.totalorder %s16, 0
    %p90 = por %p88, %p89
    %s92 = sadd.s32 %s91, 1
    %p95 = scmp.eq.s32.totalorder %s10, 1
    %p96 = scmp.ne.s32.totalorder %s91, %s93
    %p97 = scmp.eq.s32.totalorder %s10, 0
    %p98 = por %p96, %p97
    %p99 = scmp.ne.s32.totalorder %s91, %s93
    %p100 = scmp.eq.s32.totalorder %s15, 1
    %p101 = por %p99, %p100
    %p102 = scmp.ne.s32.totalorder %s93, %s94
    %p103 = scmp.eq.s32.totalorder %s15, 0
    %p104 = por %p102, %p103
    %p105 = scmp.ne.s32.totalorder %s93, %s94
    %p106 = scmp.eq.s32.totalorder %s16, 1
    %p107 = por %p105, %p106
    %p109 = scmp.ne.s32.totalorder %s94, %s108
    %p110 = scmp.eq.s32.totalorder %s16, 0
    %p111 = por %p109, %p110
    %s112 = ssub.s32 %s10, %s17
    %p113 = scmp.eq.s32.totalorder %s112, 0
    %s115 = sadd.s32 %s114, 1
    %s116 = scalar_select %p113, %s114, %s115
    %p119 = pneg %p113
    %p120 = scmp.eq.s32.totalorder %s10, 1
    %p121 = por %p119, %p120
    %p122 = scmp.ne.s32.totalorder %s114, %s117
    %p123 = scmp.eq.s32.totalorder %s10, 0
    %p124 = por %p122, %p123
    %p125 = scmp.ne.s32.totalorder %s114, %s117
    %p126 = scmp.eq.s32.totalorder %s15, 1
    %p127 = por %p125, %p126
    %p128 = scmp.ne.s32.totalorder %s117, %s118
    %p129 = scmp.eq.s32.totalorder %s15, 0
    %p130 = por %p128, %p129
    %p131 = scmp.ne.s32.totalorder %s117, %s118
    %p132 = scmp.eq.s32.totalorder %s16, 1
    %p133 = por %p131, %p132
    %p135 = scmp.ne.s32.totalorder %s118, %s134
    %p136 = scmp.eq.s32.totalorder %s16, 0
    %p137 = por %p135, %p136
    %p138 = scmp.le.s32.totalorder 1, %s10
    %p139 = scmp.lt.s32.totalorder %s10, 3
    %p140 = pnand %p138, %p139
    %p141 = pneg %p140
    // Predicated region
    $region9: #{csfi2_forward.10} parent=5 // pred_check
      _
    $region10: #{csfi2_forward.10} parent=5 // pred_check_branch
      %143 = sbr.rel (%p140) target = $region12
    $region11: #{csfi2_forward.10} parent=5 // pred_region
      %s144 = ssub.s32 %s10, 1
      // Predicated region
      $region13: #{csfi2_forward.10} parent=11 // pred_check
        %p145 = pneg %p83
      $region14: #{csfi2_forward.10} parent=11 // pred_check_branch
        %147 = sbr.rel (%p145) target = $region16
      $region15: #{csfi2_forward.10} parent=11 // pred_region
        _
      $region16: #{csfi2_forward.10} parent=11 // pred_fallthru
        _
      // Predicated region
      $region17: #{csfi2_forward.10} parent=11 // pred_check
        %p148 = pneg %p104
      $region18: #{csfi2_forward.10} parent=11 // pred_check_branch
        %150 = sbr.rel (%p148) target = $region20
      $region19: #{csfi2_forward.10} parent=11 // pred_region
        _
      $region20: #{csfi2_forward.10} parent=11 // pred_fallthru
        _
    $region12: #{csfi2_forward.10} parent=5 // pred_fallthru
      _
    %p151 = scmp.lt.s32.totalorder %s10, 2
    // Predicated region
    $region21: #{csfi2_forward.10} parent=5 // pred_check
      %p152 = pneg %p151
    $region22: #{csfi2_forward.10} parent=5 // pred_check_branch
      %154 = sbr.rel (%p152) target = $region24
    $region23: #{csfi2_forward.10} parent=5 // pred_region
      // Predicated region
      $region25: #{csfi2_forward.10} parent=23 // pred_check
        %p155 = pneg %p30
      $region26: #{csfi2_forward.10} parent=23 // pred_check_branch
        %157 = sbr.rel (%p155) target = $region28
      $region27: #{csfi2_forward.10} parent=23 // pred_region
        %p158 = scmp.lt.s32.totalorder %s10, 1
        %s159 = scalar_select %p158, %s10, 1
        %s160 = smul.addr %s159, 14
        %s161 = smul.addr %s160, 4
        %s162 = scalar_lea.vmem %s0, %s161
      $region28: #{csfi2_forward.10} parent=23 // pred_fallthru
        _
      // Predicated region
      $region29: #{csfi2_forward.10} parent=23 // pred_check
        %p163 = pneg %p56
      $region30: #{csfi2_forward.10} parent=23 // pred_check_branch
        %165 = sbr.rel (%p163) target = $region32
      $region31: #{csfi2_forward.10} parent=23 // pred_region
        %p166 = scmp.lt.s32.totalorder %s10, 1
        %s167 = scalar_select %p166, %s10, 1
        %s168 = smul.addr %s167, 14
        %s169 = smul.addr %s168, 4
        %s170 = scalar_lea.vmem %s1, %s169
      $region32: #{csfi2_forward.10} parent=23 // pred_fallthru
        _
    $region24: #{csfi2_forward.10} parent=5 // pred_fallthru
      _
    %p171 = scmp.le.s32.totalorder 1, %s10
    %p172 = scmp.lt.s32.totalorder %s10, 3
    %p173 = pnand %p171, %p172
    %p174 = pneg %p173
    // Predicated region
    $region33: #{csfi2_forward.10} parent=5 // pred_check
      _
    $region34: #{csfi2_forward.10} parent=5 // pred_check_branch
      %176 = sbr.rel (%p173) target = $region36
    $region35: #{csfi2_forward.10} parent=5 // pred_region
      %s177 = ssub.s32 %s10, 1
      %p178 = scmp.lt.s32.totalorder %s15, 1
      %s179 = scalar_select %p178, %s15, 1
      %s180 = smul.addr %s179, 14
      %s181 = smul.addr %s180, 4
      %s182 = scalar_lea.vmem %s0, %s181
      %p183 = pneg %p36
      %p184 = pneg %p33
      %p185 = scmp.lt.s32.totalorder %s15, 1
      %s186 = scalar_select %p185, %s15, 1
      %s187 = smul.addr %s186, 14
      %s188 = smul.addr %s187, 4
      %s189 = scalar_lea.vmem %s1, %s188
      %p190 = pneg %p62
      %p191 = pneg %p59
      %p192 = pneg %p83
      %p193 = pneg %p80
      %p194 = pneg %p104
      %p195 = pneg %p101
      %p196 = pneg %p130
      %p197 = pneg %p127
      %p198 = scmp.lt.s32.totalorder %s15, 1
      %s199 = scalar_select %p198, %s15, 1
      %s200 = smul.addr %s199, 10
      %s201 = smul.addr %s200, 8
      %s202 = scalar_lea.vmem %s4, %s201
      %p203 = scmp.lt.s32.totalorder %s15, 1
      %s204 = scalar_select %p203, %s15, 1
      %s205 = smul.addr %s204, 14
      %s206 = smul.addr %s205, 4
      %s207 = scalar_lea.vmem %s0, %s206
      %p208 = scmp.lt.s32.totalorder %s15, 1
      %s209 = scalar_select %p208, %s15, 1
      %s210 = smul.addr %s209, 14
      %s211 = smul.addr %s210, 4
      %s212 = scalar_lea.vmem %s1, %s211
      %p213 = scmp.lt.s32.totalorder %s15, 1
      %s214 = scalar_select %p213, %s15, 1
      %s215 = smul.addr %s214, 10
      %s216 = smul.addr %s215, 8
      %s217 = scalar_lea.vmem %s4, %s216
      %v219 = vld [vmem:[%s207] sm:$0xf]
      %v220 = vld [vmem:[%s207 + $0x4] sm:$0xf]
      %v221 = vld [vmem:[%s207 + $0x8] sm:$0xf]
      %v222 = vld [vmem:[%s207 + $0xc] sm:$0xf]
      %v223 = vld [vmem:[%s207 + $0x10] sm:$0xf]
      %v224 = vld [vmem:[%s207 + $0x14] sm:$0xf]
      %v225 = vld [vmem:[%s207 + $0x18] sm:$0xf]
      %v226 = vld [vmem:[%s207 + $0x1c] sm:$0xf]
      %v227 = vld [vmem:[%s207 + $0x20] sm:$0xf]
      %v228 = vld [vmem:[%s207 + $0x24] sm:$0xf]
      %v229 = vld [vmem:[%s2] sm:$0xf]
      %v230 = vld [vmem:[%s207 + $0x28] sm:$0x1]
      %s231 = scalar_lea.vmem %s2, 4
      %v232 = vld [vmem:[%s231] sm:$0xf]
      %v244 = vunpack.c.l.b16 %v219
      %v245 = vunpack.c.l.b16 %v220
      %v246 = vunpack.c.l.b16 %v221
      %v247 = vunpack.c.l.b16 %v222
      %v248 = vunpack.c.l.b16 %v223
      %v249 = vunpack.c.l.b16 %v224
      %v250 = vunpack.c.l.b16 %v225
      %v251 = vunpack.c.l.b16 %v226
      %v252 = vunpack.c.l.b16 %v227
      %v253 = vunpack.c.l.b16 %v228
      %v254 = vunpack.c.l.b16 %v230
      %v255 = vpack.c.b16 %v245, %v244
      %v256 = vpack.c.b16 %v247, %v246
      %v257 = vpack.c.b16 %v249, %v248
      %v258 = vpack.c.b16 %v251, %v250
      %v259 = vpack.c.b16 %v253, %v252
      %v260 = vpack.c.b16 %v254, %v254
      %vm261 = vsmask.f32 7424
      %v263 = vshrl.u32 %v255, 16
      %v265 = vshll.u32 %v255, 16
      %v267 = vrot.slane %v265, 1
      %v268 = vor.u32 %v263, %v267
      %v270 = vshll.u32 %v256, 16
      %v272 = vrot.slane %v270, 1
      %v273 = vsel %vm261, %v268, %v272
      %v274 = vshrl.u32 %v256, 16
      %v276 = vor.u32 %v274, %v272
      %v278 = vshll.u32 %v257, 16
      %v280 = vrot.slane %v278, 1
      %v281 = vsel %vm261, %v276, %v280
      %v282 = vshrl.u32 %v257, 16
      %v284 = vor.u32 %v282, %v280
      %v286 = vshll.u32 %v258, 16
      %v288 = vrot.slane %v286, 1
      %v289 = vsel %vm261, %v284, %v288
      %v290 = vshrl.u32 %v258, 16
      %v292 = vor.u32 %v290, %v288
      %v294 = vshll.u32 %v259, 16
      %v296 = vrot.slane %v294, 1
      %v297 = vsel %vm261, %v292, %v296
      %v298 = vshrl.u32 %v259, 16
      %v300 = vor.u32 %v298, %v296
      %v302 = vshll.u32 %v260, 16
      %v304 = vrot.slane %v302, 1
      %v305 = vsel %vm261, %v300, %v304
      %vm306 = vcmask 64512
      %v308 = vsel %vm306, %v273, 0
      %v311 = vsel %vm306, %v281, 0
      %v314 = vsel %vm306, %v289, 0
      %v317 = vsel %vm306, %v297, 0
      %v320 = vsel %vm306, %v305, 0
      %vm322 = vcmask 1043456
      %v324 = vsel %vm322, %v232, 0
      %326 = vmatpush.bf16.msra.mxu0 0
      %327 = vmatpush.bf16.msra.mxu0 0
      %328 = vmatpush.bf16.msra.mxu0 0
      %329 = vmatpush.bf16.msra.mxu0 0
      %330 = vmatpush.bf16.msra.mxu0 0
      %331 = vmatpush.bf16.msra.mxu0 0
      %332 = vmatpush.bf16.msra.mxu0 0
      %333 = vmatpush.bf16.msra.mxu0 %v324
      %334 = vmatmul.bf16.gmra.mxu0 %v308
      %v335 = vpop.f32.mrf.mxu0
      %v336 = vadd.f32 0.0, %v335
      %v337 = vpop.f32.mrf.mxu0
      %v338 = vadd.f32 0.0, %v337
      %339 = vmatmul.bf16.gmra.mxu0 %v311
      %v340 = vpop.f32.mrf.mxu0
      %v341 = vadd.f32 0.0, %v340
      %v342 = vpop.f32.mrf.mxu0
      %v343 = vadd.f32 0.0, %v342
      %344 = vmatmul.bf16.gmra.mxu0 %v314
      %v345 = vpop.f32.mrf.mxu0
      %v346 = vadd.f32 0.0, %v345
      %v347 = vpop.f32.mrf.mxu0
      %v348 = vadd.f32 0.0, %v347
      %349 = vmatmul.bf16.gmra.mxu0 %v317
      %v350 = vpop.f32.mrf.mxu0
      %v351 = vadd.f32 0.0, %v350
      %v352 = vpop.f32.mrf.mxu0
      %v353 = vadd.f32 0.0, %v352
      %354 = vmatmul.bf16.gmra.mxu0 %v320
      %v355 = vpop.f32.mrf.mxu0
      %v356 = vadd.f32 0.0, %v355
      %v357 = vpop.f32.mrf.mxu0
      %v358 = vadd.f32 0.0, %v357
      %359 = vdwg.mxu0
      %v360 = vsel %vm306, %v255, 0
      %v362 = vsel %vm306, %v256, 0
      %v364 = vsel %vm306, %v257, 0
      %v366 = vsel %vm306, %v258, 0
      %v368 = vsel %vm306, %v259, 0
      %v371 = vsel %vm322, %v229, 0
      %373 = vmatpush.bf16.msra.mxu0 0
      %374 = vmatpush.bf16.msra.mxu0 0
      %375 = vmatpush.bf16.msra.mxu0 0
      %376 = vmatpush.bf16.msra.mxu0 0
      %377 = vmatpush.bf16.msra.mxu0 0
      %378 = vmatpush.bf16.msra.mxu0 0
      %379 = vmatpush.bf16.msra.mxu0 0
      %380 = vmatpush.bf16.msra.mxu0 %v371
      %381 = vmatmul.bf16.gmra.mxu0 %v360
      %v382 = vpop.f32.mrf.mxu0
      %v383 = vadd.f32 %v336, %v382
      %v384 = vpop.f32.mrf.mxu0
      %v385 = vadd.f32 %v338, %v384
      %386 = vmatmul.bf16.gmra.mxu0 %v362
      %v387 = vpop.f32.mrf.mxu0
      %v388 = vadd.f32 %v341, %v387
      %v389 = vpop.f32.mrf.mxu0
      %v390 = vadd.f32 %v343, %v389
      %391 = vmatmul.bf16.gmra.mxu0 %v364
      %v392 = vpop.f32.mrf.mxu0
      %v393 = vadd.f32 %v346, %v392
      %v394 = vpop.f32.mrf.mxu0
      %v395 = vadd.f32 %v348, %v394
      %396 = vmatmul.bf16.gmra.mxu0 %v366
      %v397 = vpop.f32.mrf.mxu0
      %v398 = vadd.f32 %v351, %v397
      %v399 = vpop.f32.mrf.mxu0
      %v400 = vadd.f32 %v353, %v399
      %401 = vmatmul.bf16.gmra.mxu0 %v368
      %v402 = vpop.f32.mrf.mxu0
      %v403 = vadd.f32 %v356, %v402
      %v404 = vpop.f32.mrf.mxu0
      %v405 = vadd.f32 %v358, %v404
      %406 = vdwg.mxu0
      %v407 = vld [vmem:[%s207] sm:$0xe]
      %s408 = scalar_lea.vmem %s2, 8
      %v409 = vld [vmem:[%s408] sm:$0xf]
      %v411 = vunpack.c.l.b16 %v407
      %v412 = vpack.c.b16 %v245, %v411
      %vm413 = vcmask 1046528
      %v414 = vrot.slane %v412, 1
      %v415 = vrot.slane %v256, 1
      %v416 = vsel %vm413, %v414, %v415
      %v417 = vrot.slane %v257, 1
      %v418 = vsel %vm413, %v415, %v417
      %v419 = vrot.slane %v258, 1
      %v420 = vsel %vm413, %v417, %v419
      %v421 = vrot.slane %v259, 1
      %v422 = vsel %vm413, %v419, %v421
      %v423 = vrot.slane %v260, 1
      %v424 = vsel %vm413, %v421, %v423
      %v426 = vsel %vm306, %v416, 0
      %v429 = vsel %vm306, %v418, 0
      %v432 = vsel %vm306, %v420, 0
      %v435 = vsel %vm306, %v422, 0
      %v438 = vsel %vm306, %v424, 0
      %v441 = vsel %vm322, %v409, 0
      %443 = vmatpush.bf16.msra.mxu0 0
      %444 = vmatpush.bf16.msra.mxu0 0
      %445 = vmatpush.bf16.msra.mxu0 0
      %446 = vmatpush.bf16.msra.mxu0 0
      %447 = vmatpush.bf16.msra.mxu0 0
      %448 = vmatpush.bf16.msra.mxu0 0
      %449 = vmatpush.bf16.msra.mxu0 0
      %450 = vmatpush.bf16.msra.mxu0 %v441
      %451 = vmatmul.bf16.gmra.mxu0 %v426
      %v452 = vpop.f32.mrf.mxu0
      %v453 = vadd.f32 0.0, %v452
      %v454 = vpop.f32.mrf.mxu0
      %v455 = vadd.f32 0.0, %v454
      %456 = vmatmul.bf16.gmra.mxu0 %v429
      %v457 = vpop.f32.mrf.mxu0
      %v458 = vadd.f32 0.0, %v457
      %v459 = vpop.f32.mrf.mxu0
      %v460 = vadd.f32 0.0, %v459
      %461 = vmatmul.bf16.gmra.mxu0 %v432
      %v462 = vpop.f32.mrf.mxu0
      %v463 = vadd.f32 0.0, %v462
      %v464 = vpop.f32.mrf.mxu0
      %v465 = vadd.f32 0.0, %v464
      %466 = vmatmul.bf16.gmra.mxu0 %v435
      %v467 = vpop.f32.mrf.mxu0
      %v468 = vadd.f32 0.0, %v467
      %v469 = vpop.f32.mrf.mxu0
      %v470 = vadd.f32 0.0, %v469
      %471 = vmatmul.bf16.gmra.mxu0 %v438
      %v472 = vpop.f32.mrf.mxu0
      %v473 = vadd.f32 0.0, %v472
      %v474 = vpop.f32.mrf.mxu0
      %v475 = vadd.f32 0.0, %v474
      %476 = vdwg.mxu0
      %v477 = vadd.f32 %v383, %v453
      %v478 = vadd.f32 %v385, %v455
      %v479 = vadd.f32 %v388, %v458
      %v480 = vadd.f32 %v390, %v460
      %v481 = vadd.f32 %v393, %v463
      %v482 = vadd.f32 %v395, %v465
      %v483 = vadd.f32 %v398, %v468
      %v484 = vadd.f32 %v400, %v470
      %v485 = vadd.f32 %v403, %v473
      %v486 = vadd.f32 %v405, %v475
      %v487 = vld [vmem:[%s207 + $0x4] sm:$0xe]
      %v488 = vld [vmem:[%s207 + $0x8] sm:$0xf]
      %v489 = vld [vmem:[%s207 + $0xc] sm:$0xf]
      %v490 = vld [vmem:[%s207 + $0x10] sm:$0xf]
      %v491 = vld [vmem:[%s207 + $0x14] sm:$0xf]
      %v492 = vld [vmem:[%s207 + $0x18] sm:$0xf]
      %v493 = vld [vmem:[%s207 + $0x1c] sm:$0xf]
      %v494 = vld [vmem:[%s207 + $0x20] sm:$0xf]
      %v495 = vld [vmem:[%s207 + $0x24] sm:$0xf]
      %v496 = vld [vmem:[%s207 + $0x28] sm:$0xf]
      %v497 = vld [vmem:[%s207 + $0x2c] sm:$0x1]
      %s498 = scalar_lea.vmem %s2, 12
      %v499 = vld [vmem:[%s498] sm:$0xf]
      %v511 = vunpack.c.l.b16 %v487
      %v512 = vunpack.c.l.b16 %v488
      %v513 = vunpack.c.l.b16 %v489
      %v514 = vunpack.c.l.b16 %v490
      %v515 = vunpack.c.l.b16 %v491
      %v516 = vunpack.c.l.b16 %v492
      %v517 = vunpack.c.l.b16 %v493
      %v518 = vunpack.c.l.b16 %v494
      %v519 = vunpack.c.l.b16 %v495
      %v520 = vunpack.c.l.b16 %v496
      %v521 = vunpack.c.l.b16 %v497
      %v522 = vpack.c.b16 %v512, %v511
      %v523 = vpack.c.b16 %v514, %v513
      %v524 = vpack.c.b16 %v516, %v515
      %v525 = vpack.c.b16 %v518, %v517
      %v526 = vpack.c.b16 %v520, %v519
      %v527 = vpack.c.b16 %v521, %v521
      %v528 = vrot.slane %v522, 1
      %v529 = vrot.slane %v523, 1
      %v530 = vsel %vm413, %v528, %v529
      %v531 = vrot.slane %v524, 1
      %v532 = vsel %vm413, %v529, %v531
      %v533 = vrot.slane %v525, 1
      %v534 = vsel %vm413, %v531, %v533
      %v535 = vrot.slane %v526, 1
      %v536 = vsel %vm413, %v533, %v535
      %v537 = vrot.slane %v527, 1
      %v538 = vsel %vm413, %v535, %v537
      %v540 = vsel %vm306, %v530, 0
      %v543 = vsel %vm306, %v532, 0
      %v546 = vsel %vm306, %v534, 0
      %v549 = vsel %vm306, %v536, 0
      %v552 = vsel %vm306, %v538, 0
      %v555 = vsel %vm322, %v499, 0
      %557 = vmatpush.bf16.msra.mxu0 0
      %558 = vmatpush.bf16.msra.mxu0 0
      %559 = vmatpush.bf16.msra.mxu0 0
      %560 = vmatpush.bf16.msra.mxu0 0
      %561 = vmatpush.bf16.msra.mxu0 0
      %562 = vmatpush.bf16.msra.mxu0 0
      %563 = vmatpush.bf16.msra.mxu0 0
      %564 = vmatpush.bf16.msra.mxu0 %v555
      %565 = vmatmul.bf16.gmra.mxu0 %v540
      %v566 = vpop.f32.mrf.mxu0
      %v567 = vadd.f32 0.0, %v566
      %v568 = vpop.f32.mrf.mxu0
      %v569 = vadd.f32 0.0, %v568
      %570 = vmatmul.bf16.gmra.mxu0 %v543
      %v571 = vpop.f32.mrf.mxu0
      %v572 = vadd.f32 0.0, %v571
      %v573 = vpop.f32.mrf.mxu0
      %v574 = vadd.f32 0.0, %v573
      %575 = vmatmul.bf16.gmra.mxu0 %v546
      %v576 = vpop.f32.mrf.mxu0
      %v577 = vadd.f32 0.0, %v576
      %v578 = vpop.f32.mrf.mxu0
      %v579 = vadd.f32 0.0, %v578
      %580 = vmatmul.bf16.gmra.mxu0 %v549
      %v581 = vpop.f32.mrf.mxu0
      %v582 = vadd.f32 0.0, %v581
      %v583 = vpop.f32.mrf.mxu0
      %v584 = vadd.f32 0.0, %v583
      %585 = vmatmul.bf16.gmra.mxu0 %v552
      %v586 = vpop.f32.mrf.mxu0
      %v587 = vadd.f32 0.0, %v586
      %v588 = vpop.f32.mrf.mxu0
      %v589 = vadd.f32 0.0, %v588
      %590 = vdwg.mxu0
      %v591 = vadd.f32 %v477, %v567
      %v592 = vadd.f32 %v478, %v569
      %v593 = vadd.f32 %v479, %v572
      %v594 = vadd.f32 %v480, %v574
      %v595 = vadd.f32 %v481, %v577
      %v596 = vadd.f32 %v482, %v579
      %v597 = vadd.f32 %v483, %v582
      %v598 = vadd.f32 %v484, %v584
      %v599 = vadd.f32 %v485, %v587
      %v600 = vadd.f32 %v486, %v589
      %v601 = vld [vmem:[%s207 + $0x2c] sm:$0x3]
      %s602 = scalar_lea.vmem %s2, 16
      %v603 = vld [vmem:[%s602] sm:$0xf]
      %v605 = vunpack.c.l.b16 %v601
      %v606 = vpack.c.b16 %v605, %v605
      %vm607 = vsmask.f32 6400
      %v609 = vshrl.u32 %v522, 16
      %v611 = vrot.slane %v609, 1
      %v612 = vshll.u32 %v522, 16
      %v614 = vrot.slane %v612, 2
      %v615 = vor.u32 %v611, %v614
      %v617 = vshrl.u32 %v523, 16
      %v619 = vrot.slane %v617, 1
      %v620 = vshll.u32 %v523, 16
      %v622 = vrot.slane %v620, 2
      %v623 = vor.u32 %v619, %v622
      %v624 = vsel %vm607, %v615, %v623
      %v626 = vshrl.u32 %v524, 16
      %v628 = vrot.slane %v626, 1
      %v629 = vshll.u32 %v524, 16
      %v631 = vrot.slane %v629, 2
      %v632 = vor.u32 %v628, %v631
      %v633 = vsel %vm607, %v623, %v632
      %v635 = vshrl.u32 %v525, 16
      %v637 = vrot.slane %v635, 1
      %v638 = vshll.u32 %v525, 16
      %v640 = vrot.slane %v638, 2
      %v641 = vor.u32 %v637, %v640
      %v642 = vsel %vm607, %v632, %v641
      %v644 = vshrl.u32 %v526, 16
      %v646 = vrot.slane %v644, 1
      %v647 = vshll.u32 %v526, 16
      %v649 = vrot.slane %v647, 2
      %v650 = vor.u32 %v646, %v649
      %v651 = vsel %vm607, %v641, %v650
      %v653 = vshrl.u32 %v606, 16
      %v655 = vrot.slane %v653, 1
      %v656 = vshll.u32 %v606, 16
      %v658 = vrot.slane %v656, 2
      %v659 = vor.u32 %v655, %v658
      %v660 = vsel %vm607, %v650, %v659
      %v662 = vsel %vm306, %v624, 0
      %v665 = vsel %vm306, %v633, 0
      %v668 = vsel %vm306, %v642, 0
      %v671 = vsel %vm306, %v651, 0
      %v674 = vsel %vm306, %v660, 0
      %v677 = vsel %vm322, %v603, 0
      %679 = vmatpush.bf16.msra.mxu0 0
      %680 = vmatpush.bf16.msra.mxu0 0
      %681 = vmatpush.bf16.msra.mxu0 0
      %682 = vmatpush.bf16.msra.mxu0 0
      %683 = vmatpush.bf16.msra.mxu0 0
      %684 = vmatpush.bf16.msra.mxu0 0
      %685 = vmatpush.bf16.msra.mxu0 0
      %686 = vmatpush.bf16.msra.mxu0 %v677
      %687 = vmatmul.bf16.gmra.mxu0 %v662
      %v688 = vpop.f32.mrf.mxu0
      %v689 = vadd.f32 0.0, %v688
      %v690 = vpop.f32.mrf.mxu0
      %v691 = vadd.f32 0.0, %v690
      %692 = vmatmul.bf16.gmra.mxu0 %v665
      %v693 = vpop.f32.mrf.mxu0
      %v694 = vadd.f32 0.0, %v693
      %v695 = vpop.f32.mrf.mxu0
      %v696 = vadd.f32 0.0, %v695
      %697 = vmatmul.bf16.gmra.mxu0 %v668
      %v698 = vpop.f32.mrf.mxu0
      %v699 = vadd.f32 0.0, %v698
      %v700 = vpop.f32.mrf.mxu0
      %v701 = vadd.f32 0.0, %v700
      %702 = vmatmul.bf16.gmra.mxu0 %v671
      %v703 = vpop.f32.mrf.mxu0
      %v704 = vadd.f32 0.0, %v703
      %v705 = vpop.f32.mrf.mxu0
      %v706 = vadd.f32 0.0, %v705
      %707 = vmatmul.bf16.gmra.mxu0 %v674
      %v708 = vpop.f32.mrf.mxu0
      %v709 = vadd.f32 0.0, %v708
      %v710 = vpop.f32.mrf.mxu0
      %v711 = vadd.f32 0.0, %v710
      %712 = vdwg.mxu0
      %v713 = vadd.f32 %v591, %v689
      %v714 = vadd.f32 %v592, %v691
      %v715 = vadd.f32 %v593, %v694
      %v716 = vadd.f32 %v594, %v696
      %v717 = vadd.f32 %v595, %v699
      %v718 = vadd.f32 %v596, %v701
      %v719 = vadd.f32 %v597, %v704
      %v720 = vadd.f32 %v598, %v706
      %v721 = vadd.f32 %v599, %v709
      %v722 = vadd.f32 %v600, %v711
      %v723 = vld [vmem:[%s207 + $0x4] sm:$0xc]
      %s724 = scalar_lea.vmem %s2, 20
      %v725 = vld [vmem:[%s724] sm:$0xf]
      %v727 = vunpack.c.l.b16 %v723
      %v728 = vpack.c.b16 %v512, %v727
      %vm729 = vcmask 1045504
      %v730 = vrot.slane %v728, 2
      %v731 = vrot.slane %v523, 2
      %v732 = vsel %vm729, %v730, %v731
      %v733 = vrot.slane %v524, 2
      %v734 = vsel %vm729, %v731, %v733
      %v735 = vrot.slane %v525, 2
      %v736 = vsel %vm729, %v733, %v735
      %v737 = vrot.slane %v526, 2
      %v738 = vsel %vm729, %v735, %v737
      %v739 = vrot.slane %v606, 2
      %v740 = vsel %vm729, %v737, %v739
      %v742 = vsel %vm306, %v732, 0
      %v745 = vsel %vm306, %v734, 0
      %v748 = vsel %vm306, %v736, 0
      %v751 = vsel %vm306, %v738, 0
      %v754 = vsel %vm306, %v740, 0
      %v757 = vsel %vm322, %v725, 0
      %759 = vmatpush.bf16.msra.mxu0 0
      %760 = vmatpush.bf16.msra.mxu0 0
      %761 = vmatpush.bf16.msra.mxu0 0
      %762 = vmatpush.bf16.msra.mxu0 0
      %763 = vmatpush.bf16.msra.mxu0 0
      %764 = vmatpush.bf16.msra.mxu0 0
      %765 = vmatpush.bf16.msra.mxu0 0
      %766 = vmatpush.bf16.msra.mxu0 %v757
      %767 = vmatmul.bf16.gmra.mxu0 %v742
      %v768 = vpop.f32.mrf.mxu0
      %v769 = vadd.f32 0.0, %v768
      %v770 = vpop.f32.mrf.mxu0
      %v771 = vadd.f32 0.0, %v770
      %772 = vmatmul.bf16.gmra.mxu0 %v745
      %v773 = vpop.f32.mrf.mxu0
      %v774 = vadd.f32 0.0, %v773
      %v775 = vpop.f32.mrf.mxu0
      %v776 = vadd.f32 0.0, %v775
      %777 = vmatmul.bf16.gmra.mxu0 %v748
      %v778 = vpop.f32.mrf.mxu0
      %v779 = vadd.f32 0.0, %v778
      %v780 = vpop.f32.mrf.mxu0
      %v781 = vadd.f32 0.0, %v780
      %782 = vmatmul.bf16.gmra.mxu0 %v751
      %v783 = vpop.f32.mrf.mxu0
      %v784 = vadd.f32 0.0, %v783
      %v785 = vpop.f32.mrf.mxu0
      %v786 = vadd.f32 0.0, %v785
      %787 = vmatmul.bf16.gmra.mxu0 %v754
      %v788 = vpop.f32.mrf.mxu0
      %v789 = vadd.f32 0.0, %v788
      %v790 = vpop.f32.mrf.mxu0
      %v791 = vadd.f32 0.0, %v790
      %792 = vdwg.mxu0
      %v793 = vadd.f32 %v713, %v769
      %v794 = vadd.f32 %v714, %v771
      %v795 = vadd.f32 %v715, %v774
      %v796 = vadd.f32 %v716, %v776
      %v797 = vadd.f32 %v717, %v779
      %v798 = vadd.f32 %v718, %v781
      %v799 = vadd.f32 %v719, %v784
      %v800 = vadd.f32 %v720, %v786
      %v801 = vadd.f32 %v721, %v789
      %v802 = vadd.f32 %v722, %v791
      %v803 = vld [vmem:[%s207 + $0x8] sm:$0xc]
      %v804 = vld [vmem:[%s207 + $0xc] sm:$0xf]
      %v805 = vld [vmem:[%s207 + $0x10] sm:$0xf]
      %v806 = vld [vmem:[%s207 + $0x14] sm:$0xf]
      %v807 = vld [vmem:[%s207 + $0x18] sm:$0xf]
      %v808 = vld [vmem:[%s207 + $0x1c] sm:$0xf]
      %v809 = vld [vmem:[%s207 + $0x20] sm:$0xf]
      %v810 = vld [vmem:[%s207 + $0x24] sm:$0xf]
      %v811 = vld [vmem:[%s207 + $0x28] sm:$0xf]
      %v812 = vld [vmem:[%s207 + $0x2c] sm:$0xf]
      %v813 = vld [vmem:[%s207 + $0x30] sm:$0x3]
      %s814 = scalar_lea.vmem %s2, 24
      %v815 = vld [vmem:[%s814] sm:$0xf]
      %v827 = vunpack.c.l.b16 %v803
      %v828 = vunpack.c.l.b16 %v804
      %v829 = vunpack.c.l.b16 %v805
      %v830 = vunpack.c.l.b16 %v806
      %v831 = vunpack.c.l.b16 %v807
      %v832 = vunpack.c.l.b16 %v808
      %v833 = vunpack.c.l.b16 %v809
      %v834 = vunpack.c.l.b16 %v810
      %v835 = vunpack.c.l.b16 %v811
      %v836 = vunpack.c.l.b16 %v812
      %v837 = vunpack.c.l.b16 %v813
      %v838 = vpack.c.b16 %v828, %v827
      %v839 = vpack.c.b16 %v830, %v829
      %v840 = vpack.c.b16 %v832, %v831
      %v841 = vpack.c.b16 %v834, %v833
      %v842 = vpack.c.b16 %v836, %v835
      %v843 = vpack.c.b16 %v837, %v837
      %v844 = vrot.slane %v838, 2
      %v845 = vrot.slane %v839, 2
      %v846 = vsel %vm729, %v844, %v845
      %v847 = vrot.slane %v840, 2
      %v848 = vsel %vm729, %v845, %v847
      %v849 = vrot.slane %v841, 2
      %v850 = vsel %vm729, %v847, %v849
      %v851 = vrot.slane %v842, 2
      %v852 = vsel %vm729, %v849, %v851
      %v853 = vrot.slane %v843, 2
      %v854 = vsel %vm729, %v851, %v853
      %v856 = vsel %vm306, %v846, 0
      %v859 = vsel %vm306, %v848, 0
      %v862 = vsel %vm306, %v850, 0
      %v865 = vsel %vm306, %v852, 0
      %v868 = vsel %vm306, %v854, 0
      %v871 = vsel %vm322, %v815, 0
      %873 = vmatpush.bf16.msra.mxu0 0
      %874 = vmatpush.bf16.msra.mxu0 0
      %875 = vmatpush.bf16.msra.mxu0 0
      %876 = vmatpush.bf16.msra.mxu0 0
      %877 = vmatpush.bf16.msra.mxu0 0
      %878 = vmatpush.bf16.msra.mxu0 0
      %879 = vmatpush.bf16.msra.mxu0 0
      %880 = vmatpush.bf16.msra.mxu0 %v871
      %881 = vmatmul.bf16.gmra.mxu0 %v856
      %v882 = vpop.f32.mrf.mxu0
      %v883 = vadd.f32 0.0, %v882
      %v884 = vpop.f32.mrf.mxu0
      %v885 = vadd.f32 0.0, %v884
      %886 = vmatmul.bf16.gmra.mxu0 %v859
      %v887 = vpop.f32.mrf.mxu0
      %v888 = vadd.f32 0.0, %v887
      %v889 = vpop.f32.mrf.mxu0
      %v890 = vadd.f32 0.0, %v889
      %891 = vmatmul.bf16.gmra.mxu0 %v862
      %v892 = vpop.f32.mrf.mxu0
      %v893 = vadd.f32 0.0, %v892
      %v894 = vpop.f32.mrf.mxu0
      %v895 = vadd.f32 0.0, %v894
      %896 = vmatmul.bf16.gmra.mxu0 %v865
      %v897 = vpop.f32.mrf.mxu0
      %v898 = vadd.f32 0.0, %v897
      %v899 = vpop.f32.mrf.mxu0
      %v900 = vadd.f32 0.0, %v899
      %901 = vmatmul.bf16.gmra.mxu0 %v868
      %v902 = vpop.f32.mrf.mxu0
      %v903 = vadd.f32 0.0, %v902
      %v904 = vpop.f32.mrf.mxu0
      %v905 = vadd.f32 0.0, %v904
      %906 = vdwg.mxu0
      %v907 = vadd.f32 %v793, %v883
      %v908 = vadd.f32 %v794, %v885
      %v909 = vadd.f32 %v795, %v888
      %v910 = vadd.f32 %v796, %v890
      %v911 = vadd.f32 %v797, %v893
      %v912 = vadd.f32 %v798, %v895
      %v913 = vadd.f32 %v799, %v898
      %v914 = vadd.f32 %v800, %v900
      %v915 = vadd.f32 %v801, %v903
      %v916 = vadd.f32 %v802, %v905
      %v917 = vld [vmem:[%s207 + $0x30] sm:$0x7]
      %s918 = scalar_lea.vmem %s2, 28
      %v919 = vld [vmem:[%s918] sm:$0xf]
      %v921 = vunpack.c.l.b16 %v917
      %v922 = vpack.c.b16 %v921, %v921
      %vm923 = vsmask.f32 5376
      %v925 = vshrl.u32 %v838, 16
      %v927 = vrot.slane %v925, 2
      %v928 = vshll.u32 %v838, 16
      %v930 = vrot.slane %v928, 3
      %v931 = vor.u32 %v927, %v930
      %v933 = vshrl.u32 %v839, 16
      %v935 = vrot.slane %v933, 2
      %v936 = vshll.u32 %v839, 16
      %v938 = vrot.slane %v936, 3
      %v939 = vor.u32 %v935, %v938
      %v940 = vsel %vm923, %v931, %v939
      %v942 = vshrl.u32 %v840, 16
      %v944 = vrot.slane %v942, 2
      %v945 = vshll.u32 %v840, 16
      %v947 = vrot.slane %v945, 3
      %v948 = vor.u32 %v944, %v947
      %v949 = vsel %vm923, %v939, %v948
      %v951 = vshrl.u32 %v841, 16
      %v953 = vrot.slane %v951, 2
      %v954 = vshll.u32 %v841, 16
      %v956 = vrot.slane %v954, 3
      %v957 = vor.u32 %v953, %v956
      %v958 = vsel %vm923, %v948, %v957
      %v960 = vshrl.u32 %v842, 16
      %v962 = vrot.slane %v960, 2
      %v963 = vshll.u32 %v842, 16
      %v965 = vrot.slane %v963, 3
      %v966 = vor.u32 %v962, %v965
      %v967 = vsel %vm923, %v957, %v966
      %v969 = vshrl.u32 %v922, 16
      %v971 = vrot.slane %v969, 2
      %v972 = vshll.u32 %v922, 16
      %v974 = vrot.slane %v972, 3
      %v975 = vor.u32 %v971, %v974
      %v976 = vsel %vm923, %v966, %v975
      %v978 = vsel %vm306, %v940, 0
      %v981 = vsel %vm306, %v949, 0
      %v984 = vsel %vm306, %v958, 0
      %v987 = vsel %vm306, %v967, 0
      %v990 = vsel %vm306, %v976, 0
      %v993 = vsel %vm322, %v919, 0
      %995 = vmatpush.bf16.msra.mxu0 0
      %996 = vmatpush.bf16.msra.mxu0 0
      %997 = vmatpush.bf16.msra.mxu0 0
      %998 = vmatpush.bf16.msra.mxu0 0
      %999 = vmatpush.bf16.msra.mxu0 0
      %1000 = vmatpush.bf16.msra.mxu0 0
      %1001 = vmatpush.bf16.msra.mxu0 0
      %1002 = vmatpush.bf16.msra.mxu0 %v993
      %1003 = vmatmul.bf16.gmra.mxu0 %v978
      %v1004 = vpop.f32.mrf.mxu0
      %v1005 = vadd.f32 0.0, %v1004
      %v1006 = vpop.f32.mrf.mxu0
      %v1007 = vadd.f32 0.0, %v1006
      %1008 = vmatmul.bf16.gmra.mxu0 %v981
      %v1009 = vpop.f32.mrf.mxu0
      %v1010 = vadd.f32 0.0, %v1009
      %v1011 = vpop.f32.mrf.mxu0
      %v1012 = vadd.f32 0.0, %v1011
      %1013 = vmatmul.bf16.gmra.mxu0 %v984
      %v1014 = vpop.f32.mrf.mxu0
      %v1015 = vadd.f32 0.0, %v1014
      %v1016 = vpop.f32.mrf.mxu0
      %v1017 = vadd.f32 0.0, %v1016
      %1018 = vmatmul.bf16.gmra.mxu0 %v987
      %v1019 = vpop.f32.mrf.mxu0
      %v1020 = vadd.f32 0.0, %v1019
      %v1021 = vpop.f32.mrf.mxu0
      %v1022 = vadd.f32 0.0, %v1021
      %1023 = vmatmul.bf16.gmra.mxu0 %v990
      %v1024 = vpop.f32.mrf.mxu0
      %v1025 = vadd.f32 0.0, %v1024
      %v1026 = vpop.f32.mrf.mxu0
      %v1027 = vadd.f32 0.0, %v1026
      %1028 = vdwg.mxu0
      %v1029 = vadd.f32 %v907, %v1005
      %v1030 = vadd.f32 %v908, %v1007
      %v1031 = vadd.f32 %v909, %v1010
      %v1032 = vadd.f32 %v910, %v1012
      %v1033 = vadd.f32 %v911, %v1015
      %v1034 = vadd.f32 %v912, %v1017
      %v1035 = vadd.f32 %v913, %v1020
      %v1036 = vadd.f32 %v914, %v1022
      %v1037 = vadd.f32 %v915, %v1025
      %v1038 = vadd.f32 %v916, %v1027
      %v1039 = vld [vmem:[%s207 + $0x8] sm:$0x8]
      %s1040 = scalar_lea.vmem %s2, 32
      %v1041 = vld [vmem:[%s1040] sm:$0xf]
      %v1043 = vunpack.c.l.b16 %v1039
      %v1044 = vpack.c.b16 %v828, %v1043
      %vm1045 = vcmask 1044480
      %v1046 = vrot.slane %v1044, 3
      %v1047 = vrot.slane %v839, 3
      %v1048 = vsel %vm1045, %v1046, %v1047
      %v1049 = vrot.slane %v840, 3
      %v1050 = vsel %vm1045, %v1047, %v1049
      %v1051 = vrot.slane %v841, 3
      %v1052 = vsel %vm1045, %v1049, %v1051
      %v1053 = vrot.slane %v842, 3
      %v1054 = vsel %vm1045, %v1051, %v1053
      %v1055 = vrot.slane %v922, 3
      %v1056 = vsel %vm1045, %v1053, %v1055
      %v1058 = vsel %vm306, %v1048, 0
      %v1061 = vsel %vm306, %v1050, 0
      %v1064 = vsel %vm306, %v1052, 0
      %v1067 = vsel %vm306, %v1054, 0
      %v1070 = vsel %vm306, %v1056, 0
      %v1073 = vsel %vm322, %v1041, 0
      %1075 = vmatpush.bf16.msra.mxu0 0
      %1076 = vmatpush.bf16.msra.mxu0 0
      %1077 = vmatpush.bf16.msra.mxu0 0
      %1078 = vmatpush.bf16.msra.mxu0 0
      %1079 = vmatpush.bf16.msra.mxu0 0
      %1080 = vmatpush.bf16.msra.mxu0 0
      %1081 = vmatpush.bf16.msra.mxu0 0
      %1082 = vmatpush.bf16.msra.mxu0 %v1073
      %1083 = vmatmul.bf16.gmra.mxu0 %v1058
      %v1084 = vpop.f32.mrf.mxu0
      %v1085 = vadd.f32 0.0, %v1084
      %v1086 = vpop.f32.mrf.mxu0
      %v1087 = vadd.f32 0.0, %v1086
      %1088 = vmatmul.bf16.gmra.mxu0 %v1061
      %v1089 = vpop.f32.mrf.mxu0
      %v1090 = vadd.f32 0.0, %v1089
      %v1091 = vpop.f32.mrf.mxu0
      %v1092 = vadd.f32 0.0, %v1091
      %1093 = vmatmul.bf16.gmra.mxu0 %v1064
      %v1094 = vpop.f32.mrf.mxu0
      %v1095 = vadd.f32 0.0, %v1094
      %v1096 = vpop.f32.mrf.mxu0
      %v1097 = vadd.f32 0.0, %v1096
      %1098 = vmatmul.bf16.gmra.mxu0 %v1067
      %v1099 = vpop.f32.mrf.mxu0
      %v1100 = vadd.f32 0.0, %v1099
      %v1101 = vpop.f32.mrf.mxu0
      %v1102 = vadd.f32 0.0, %v1101
      %1103 = vmatmul.bf16.gmra.mxu0 %v1070
      %v1104 = vpop.f32.mrf.mxu0
      %v1105 = vadd.f32 0.0, %v1104
      %v1106 = vpop.f32.mrf.mxu0
      %v1107 = vadd.f32 0.0, %v1106
      %1108 = vdwg.mxu0
      %v1109 = vadd.f32 %v1029, %v1085
      %v1110 = vadd.f32 %v1030, %v1087
      %v1111 = vadd.f32 %v1031, %v1090
      %v1112 = vadd.f32 %v1032, %v1092
      %v1113 = vadd.f32 %v1033, %v1095
      %v1114 = vadd.f32 %v1034, %v1097
      %v1115 = vadd.f32 %v1035, %v1100
      %v1116 = vadd.f32 %v1036, %v1102
      %v1117 = vadd.f32 %v1037, %v1105
      %v1118 = vadd.f32 %v1038, %v1107
      %v1119 = vld [vmem:[%s212] sm:$0xf]
      %v1120 = vld [vmem:[%s212 + $0x4] sm:$0xf]
      %v1121 = vld [vmem:[%s212 + $0x8] sm:$0xf]
      %v1122 = vld [vmem:[%s212 + $0xc] sm:$0xf]
      %v1123 = vld [vmem:[%s212 + $0x10] sm:$0xf]
      %v1124 = vld [vmem:[%s212 + $0x14] sm:$0xf]
      %v1125 = vld [vmem:[%s212 + $0x18] sm:$0xf]
      %v1126 = vld [vmem:[%s212 + $0x1c] sm:$0xf]
      %v1127 = vld [vmem:[%s212 + $0x20] sm:$0xf]
      %v1128 = vld [vmem:[%s212 + $0x24] sm:$0xf]
      %s1129 = scalar_lea.vmem %s2, 36
      %v1130 = vld [vmem:[%s1129] sm:$0xf]
      %v1141 = vunpack.c.l.b16 %v1119
      %v1142 = vunpack.c.l.b16 %v1120
      %v1143 = vunpack.c.l.b16 %v1121
      %v1144 = vunpack.c.l.b16 %v1122
      %v1145 = vunpack.c.l.b16 %v1123
      %v1146 = vunpack.c.l.b16 %v1124
      %v1147 = vunpack.c.l.b16 %v1125
      %v1148 = vunpack.c.l.b16 %v1126
      %v1149 = vunpack.c.l.b16 %v1127
      %v1150 = vunpack.c.l.b16 %v1128
      %v1151 = vpack.c.b16 %v1142, %v1141
      %v1152 = vpack.c.b16 %v1144, %v1143
      %v1153 = vpack.c.b16 %v1146, %v1145
      %v1154 = vpack.c.b16 %v1148, %v1147
      %v1155 = vpack.c.b16 %v1150, %v1149
      %v1157 = vsel %vm306, %v1151, 0
      %v1160 = vsel %vm306, %v1152, 0
      %v1163 = vsel %vm306, %v1153, 0
      %v1166 = vsel %vm306, %v1154, 0
      %v1169 = vsel %vm306, %v1155, 0
      %v1172 = vsel %vm322, %v1130, 0
      %1174 = vmatpush.bf16.msra.mxu0 0
      %1175 = vmatpush.bf16.msra.mxu0 0
      %1176 = vmatpush.bf16.msra.mxu0 0
      %1177 = vmatpush.bf16.msra.mxu0 0
      %1178 = vmatpush.bf16.msra.mxu0 0
      %1179 = vmatpush.bf16.msra.mxu0 0
      %1180 = vmatpush.bf16.msra.mxu0 0
      %1181 = vmatpush.bf16.msra.mxu0 %v1172
      %1182 = vmatmul.bf16.gmra.mxu0 %v1157
      %v1183 = vpop.f32.mrf.mxu0
      %v1184 = vadd.f32 0.0, %v1183
      %v1185 = vpop.f32.mrf.mxu0
      %v1186 = vadd.f32 0.0, %v1185
      %1187 = vmatmul.bf16.gmra.mxu0 %v1160
      %v1188 = vpop.f32.mrf.mxu0
      %v1189 = vadd.f32 0.0, %v1188
      %v1190 = vpop.f32.mrf.mxu0
      %v1191 = vadd.f32 0.0, %v1190
      %1192 = vmatmul.bf16.gmra.mxu0 %v1163
      %v1193 = vpop.f32.mrf.mxu0
      %v1194 = vadd.f32 0.0, %v1193
      %v1195 = vpop.f32.mrf.mxu0
      %v1196 = vadd.f32 0.0, %v1195
      %1197 = vmatmul.bf16.gmra.mxu0 %v1166
      %v1198 = vpop.f32.mrf.mxu0
      %v1199 = vadd.f32 0.0, %v1198
      %v1200 = vpop.f32.mrf.mxu0
      %v1201 = vadd.f32 0.0, %v1200
      %1202 = vmatmul.bf16.gmra.mxu0 %v1169
      %v1203 = vpop.f32.mrf.mxu0
      %v1204 = vadd.f32 0.0, %v1203
      %v1205 = vpop.f32.mrf.mxu0
      %v1206 = vadd.f32 0.0, %v1205
      %1207 = vdwg.mxu0
      %v1208 = vadd.f32 %v1109, %v1184
      %v1209 = vadd.f32 %v1110, %v1186
      %v1210 = vadd.f32 %v1111, %v1189
      %v1211 = vadd.f32 %v1112, %v1191
      %v1212 = vadd.f32 %v1113, %v1194
      %v1213 = vadd.f32 %v1114, %v1196
      %v1214 = vadd.f32 %v1115, %v1199
      %v1215 = vadd.f32 %v1116, %v1201
      %v1216 = vadd.f32 %v1117, %v1204
      %v1217 = vadd.f32 %v1118, %v1206
      %v1218 = vld [vmem:[%s212] sm:$0xf]
      %v1219 = vld [vmem:[%s212 + $0x4] sm:$0xf]
      %v1220 = vld [vmem:[%s212 + $0x8] sm:$0xf]
      %v1221 = vld [vmem:[%s212 + $0xc] sm:$0xf]
      %v1222 = vld [vmem:[%s212 + $0x10] sm:$0xf]
      %v1223 = vld [vmem:[%s212 + $0x14] sm:$0xf]
      %v1224 = vld [vmem:[%s212 + $0x18] sm:$0xf]
      %v1225 = vld [vmem:[%s212 + $0x1c] sm:$0xf]
      %v1226 = vld [vmem:[%s212 + $0x20] sm:$0xf]
      %v1227 = vld [vmem:[%s212 + $0x24] sm:$0xf]
      %v1228 = vld [vmem:[%s212 + $0x28] sm:$0x1]
      %s1229 = scalar_lea.vmem %s2, 40
      %v1230 = vld [vmem:[%s1229] sm:$0xf]
      %v1242 = vunpack.c.l.b16 %v1218
      %v1243 = vunpack.c.l.b16 %v1219
      %v1244 = vunpack.c.l.b16 %v1220
      %v1245 = vunpack.c.l.b16 %v1221
      %v1246 = vunpack.c.l.b16 %v1222
      %v1247 = vunpack.c.l.b16 %v1223
      %v1248 = vunpack.c.l.b16 %v1224
      %v1249 = vunpack.c.l.b16 %v1225
      %v1250 = vunpack.c.l.b16 %v1226
      %v1251 = vunpack.c.l.b16 %v1227
      %v1252 = vunpack.c.l.b16 %v1228
      %v1253 = vpack.c.b16 %v1243, %v1242
      %v1254 = vpack.c.b16 %v1245, %v1244
      %v1255 = vpack.c.b16 %v1247, %v1246
      %v1256 = vpack.c.b16 %v1249, %v1248
      %v1257 = vpack.c.b16 %v1251, %v1250
      %v1258 = vpack.c.b16 %v1252, %v1252
      %v1260 = vshrl.u32 %v1253, 16
      %v1262 = vshll.u32 %v1253, 16
      %v1264 = vrot.slane %v1262, 1
      %v1265 = vor.u32 %v1260, %v1264
      %v1267 = vshll.u32 %v1254, 16
      %v1269 = vrot.slane %v1267, 1
      %v1270 = vsel %vm261, %v1265, %v1269
      %v1271 = vshrl.u32 %v1254, 16
      %v1273 = vor.u32 %v1271, %v1269
      %v1275 = vshll.u32 %v1255, 16
      %v1277 = vrot.slane %v1275, 1
      %v1278 = vsel %vm261, %v1273, %v1277
      %v1279 = vshrl.u32 %v1255, 16
      %v1281 = vor.u32 %v1279, %v1277
      %v1283 = vshll.u32 %v1256, 16
      %v1285 = vrot.slane %v1283, 1
      %v1286 = vsel %vm261, %v1281, %v1285
      %v1287 = vshrl.u32 %v1256, 16
      %v1289 = vor.u32 %v1287, %v1285
      %v1291 = vshll.u32 %v1257, 16
      %v1293 = vrot.slane %v1291, 1
      %v1294 = vsel %vm261, %v1289, %v1293
      %v1295 = vshrl.u32 %v1257, 16
      %v1297 = vor.u32 %v1295, %v1293
      %v1299 = vshll.u32 %v1258, 16
      %v1301 = vrot.slane %v1299, 1
      %v1302 = vsel %vm261, %v1297, %v1301
      %v1304 = vsel %vm306, %v1270, 0
      %v1307 = vsel %vm306, %v1278, 0
      %v1310 = vsel %vm306, %v1286, 0
      %v1313 = vsel %vm306, %v1294, 0
      %v1316 = vsel %vm306, %v1302, 0
      %v1319 = vsel %vm322, %v1230, 0
      %1321 = vmatpush.bf16.msra.mxu0 0
      %1322 = vmatpush.bf16.msra.mxu0 0
      %1323 = vmatpush.bf16.msra.mxu0 0
      %1324 = vmatpush.bf16.msra.mxu0 0
      %1325 = vmatpush.bf16.msra.mxu0 0
      %1326 = vmatpush.bf16.msra.mxu0 0
      %1327 = vmatpush.bf16.msra.mxu0 0
      %1328 = vmatpush.bf16.msra.mxu0 %v1319
      %1329 = vmatmul.bf16.gmra.mxu0 %v1304
      %v1330 = vpop.f32.mrf.mxu0
      %v1331 = vadd.f32 0.0, %v1330
      %v1332 = vpop.f32.mrf.mxu0
      %v1333 = vadd.f32 0.0, %v1332
      %1334 = vmatmul.bf16.gmra.mxu0 %v1307
      %v1335 = vpop.f32.mrf.mxu0
      %v1336 = vadd.f32 0.0, %v1335
      %v1337 = vpop.f32.mrf.mxu0
      %v1338 = vadd.f32 0.0, %v1337
      %1339 = vmatmul.bf16.gmra.mxu0 %v1310
      %v1340 = vpop.f32.mrf.mxu0
      %v1341 = vadd.f32 0.0, %v1340
      %v1342 = vpop.f32.mrf.mxu0
      %v1343 = vadd.f32 0.0, %v1342
      %1344 = vmatmul.bf16.gmra.mxu0 %v1313
      %v1345 = vpop.f32.mrf.mxu0
      %v1346 = vadd.f32 0.0, %v1345
      %v1347 = vpop.f32.mrf.mxu0
      %v1348 = vadd.f32 0.0, %v1347
      %1349 = vmatmul.bf16.gmra.mxu0 %v1316
      %v1350 = vpop.f32.mrf.mxu0
      %v1351 = vadd.f32 0.0, %v1350
      %v1352 = vpop.f32.mrf.mxu0
      %v1353 = vadd.f32 0.0, %v1352
      %1354 = vdwg.mxu0
      %v1355 = vadd.f32 %v1208, %v1331
      %v1356 = vadd.f32 %v1209, %v1333
      %v1357 = vadd.f32 %v1210, %v1336
      %v1358 = vadd.f32 %v1211, %v1338
      %v1359 = vadd.f32 %v1212, %v1341
      %v1360 = vadd.f32 %v1213, %v1343
      %v1361 = vadd.f32 %v1214, %v1346
      %v1362 = vadd.f32 %v1215, %v1348
      %v1363 = vadd.f32 %v1216, %v1351
      %v1364 = vadd.f32 %v1217, %v1353
      %v1365 = vld [vmem:[%s212] sm:$0xe]
      %s1366 = scalar_lea.vmem %s2, 44
      %v1367 = vld [vmem:[%s1366] sm:$0xf]
      %v1369 = vunpack.c.l.b16 %v1365
      %v1370 = vpack.c.b16 %v1243, %v1369
      %v1371 = vrot.slane %v1370, 1
      %v1372 = vrot.slane %v1254, 1
      %v1373 = vsel %vm413, %v1371, %v1372
      %v1374 = vrot.slane %v1255, 1
      %v1375 = vsel %vm413, %v1372, %v1374
      %v1376 = vrot.slane %v1256, 1
      %v1377 = vsel %vm413, %v1374, %v1376
      %v1378 = vrot.slane %v1257, 1
      %v1379 = vsel %vm413, %v1376, %v1378
      %v1380 = vrot.slane %v1258, 1
      %v1381 = vsel %vm413, %v1378, %v1380
      %v1383 = vsel %vm306, %v1373, 0
      %v1386 = vsel %vm306, %v1375, 0
      %v1389 = vsel %vm306, %v1377, 0
      %v1392 = vsel %vm306, %v1379, 0
      %v1395 = vsel %vm306, %v1381, 0
      %v1398 = vsel %vm322, %v1367, 0
      %1400 = vmatpush.bf16.msra.mxu0 0
      %1401 = vmatpush.bf16.msra.mxu0 0
      %1402 = vmatpush.bf16.msra.mxu0 0
      %1403 = vmatpush.bf16.msra.mxu0 0
      %1404 = vmatpush.bf16.msra.mxu0 0
      %1405 = vmatpush.bf16.msra.mxu0 0
      %1406 = vmatpush.bf16.msra.mxu0 0
      %1407 = vmatpush.bf16.msra.mxu0 %v1398
      %1408 = vmatmul.bf16.gmra.mxu0 %v1383
      %v1409 = vpop.f32.mrf.mxu0
      %v1410 = vadd.f32 0.0, %v1409
      %v1411 = vpop.f32.mrf.mxu0
      %v1412 = vadd.f32 0.0, %v1411
      %1413 = vmatmul.bf16.gmra.mxu0 %v1386
      %v1414 = vpop.f32.mrf.mxu0
      %v1415 = vadd.f32 0.0, %v1414
      %v1416 = vpop.f32.mrf.mxu0
      %v1417 = vadd.f32 0.0, %v1416
      %1418 = vmatmul.bf16.gmra.mxu0 %v1389
      %v1419 = vpop.f32.mrf.mxu0
      %v1420 = vadd.f32 0.0, %v1419
      %v1421 = vpop.f32.mrf.mxu0
      %v1422 = vadd.f32 0.0, %v1421
      %1423 = vmatmul.bf16.gmra.mxu0 %v1392
      %v1424 = vpop.f32.mrf.mxu0
      %v1425 = vadd.f32 0.0, %v1424
      %v1426 = vpop.f32.mrf.mxu0
      %v1427 = vadd.f32 0.0, %v1426
      %1428 = vmatmul.bf16.gmra.mxu0 %v1395
      %v1429 = vpop.f32.mrf.mxu0
      %v1430 = vadd.f32 0.0, %v1429
      %v1431 = vpop.f32.mrf.mxu0
      %v1432 = vadd.f32 0.0, %v1431
      %1433 = vdwg.mxu0
      %v1434 = vadd.f32 %v1355, %v1410
      %v1435 = vadd.f32 %v1356, %v1412
      %v1436 = vadd.f32 %v1357, %v1415
      %v1437 = vadd.f32 %v1358, %v1417
      %v1438 = vadd.f32 %v1359, %v1420
      %v1439 = vadd.f32 %v1360, %v1422
      %v1440 = vadd.f32 %v1361, %v1425
      %v1441 = vadd.f32 %v1362, %v1427
      %v1442 = vadd.f32 %v1363, %v1430
      %v1443 = vadd.f32 %v1364, %v1432
      %v1444 = vld [vmem:[%s212 + $0x4] sm:$0xe]
      %v1445 = vld [vmem:[%s212 + $0x8] sm:$0xf]
      %v1446 = vld [vmem:[%s212 + $0xc] sm:$0xf]
      %v1447 = vld [vmem:[%s212 + $0x10] sm:$0xf]
      %v1448 = vld [vmem:[%s212 + $0x14] sm:$0xf]
      %v1449 = vld [vmem:[%s212 + $0x18] sm:$0xf]
      %v1450 = vld [vmem:[%s212 + $0x1c] sm:$0xf]
      %v1451 = vld [vmem:[%s212 + $0x20] sm:$0xf]
      %v1452 = vld [vmem:[%s212 + $0x24] sm:$0xf]
      %v1453 = vld [vmem:[%s212 + $0x28] sm:$0xf]
      %v1454 = vld [vmem:[%s212 + $0x2c] sm:$0x1]
      %s1455 = scalar_lea.vmem %s2, 48
      %v1456 = vld [vmem:[%s1455] sm:$0xf]
      %v1468 = vunpack.c.l.b16 %v1444
      %v1469 = vunpack.c.l.b16 %v1445
      %v1470 = vunpack.c.l.b16 %v1446
      %v1471 = vunpack.c.l.b16 %v1447
      %v1472 = vunpack.c.l.b16 %v1448
      %v1473 = vunpack.c.l.b16 %v1449
      %v1474 = vunpack.c.l.b16 %v1450
      %v1475 = vunpack.c.l.b16 %v1451
      %v1476 = vunpack.c.l.b16 %v1452
      %v1477 = vunpack.c.l.b16 %v1453
      %v1478 = vunpack.c.l.b16 %v1454
      %v1479 = vpack.c.b16 %v1469, %v1468
      %v1480 = vpack.c.b16 %v1471, %v1470
      %v1481 = vpack.c.b16 %v1473, %v1472
      %v1482 = vpack.c.b16 %v1475, %v1474
      %v1483 = vpack.c.b16 %v1477, %v1476
      %v1484 = vpack.c.b16 %v1478, %v1478
      %v1485 = vrot.slane %v1479, 1
      %v1486 = vrot.slane %v1480, 1
      %v1487 = vsel %vm413, %v1485, %v1486
      %v1488 = vrot.slane %v1481, 1
      %v1489 = vsel %vm413, %v1486, %v1488
      %v1490 = vrot.slane %v1482, 1
      %v1491 = vsel %vm413, %v1488, %v1490
      %v1492 = vrot.slane %v1483, 1
      %v1493 = vsel %vm413, %v1490, %v1492
      %v1494 = vrot.slane %v1484, 1
      %v1495 = vsel %vm413, %v1492, %v1494
      %v1497 = vsel %vm306, %v1487, 0
      %v1500 = vsel %vm306, %v1489, 0
      %v1503 = vsel %vm306, %v1491, 0
      %v1506 = vsel %vm306, %v1493, 0
      %v1509 = vsel %vm306, %v1495, 0
      %v1512 = vsel %vm322, %v1456, 0
      %1514 = vmatpush.bf16.msra.mxu0 0
      %1515 = vmatpush.bf16.msra.mxu0 0
      %1516 = vmatpush.bf16.msra.mxu0 0
      %1517 = vmatpush.bf16.msra.mxu0 0
      %1518 = vmatpush.bf16.msra.mxu0 0
      %1519 = vmatpush.bf16.msra.mxu0 0
      %1520 = vmatpush.bf16.msra.mxu0 0
      %1521 = vmatpush.bf16.msra.mxu0 %v1512
      %1522 = vmatmul.bf16.gmra.mxu0 %v1497
      %v1523 = vpop.f32.mrf.mxu0
      %v1524 = vadd.f32 0.0, %v1523
      %v1525 = vpop.f32.mrf.mxu0
      %v1526 = vadd.f32 0.0, %v1525
      %1527 = vmatmul.bf16.gmra.mxu0 %v1500
      %v1528 = vpop.f32.mrf.mxu0
      %v1529 = vadd.f32 0.0, %v1528
      %v1530 = vpop.f32.mrf.mxu0
      %v1531 = vadd.f32 0.0, %v1530
      %1532 = vmatmul.bf16.gmra.mxu0 %v1503
      %v1533 = vpop.f32.mrf.mxu0
      %v1534 = vadd.f32 0.0, %v1533
      %v1535 = vpop.f32.mrf.mxu0
      %v1536 = vadd.f32 0.0, %v1535
      %1537 = vmatmul.bf16.gmra.mxu0 %v1506
      %v1538 = vpop.f32.mrf.mxu0
      %v1539 = vadd.f32 0.0, %v1538
      %v1540 = vpop.f32.mrf.mxu0
      %v1541 = vadd.f32 0.0, %v1540
      %1542 = vmatmul.bf16.gmra.mxu0 %v1509
      %v1543 = vpop.f32.mrf.mxu0
      %v1544 = vadd.f32 0.0, %v1543
      %v1545 = vpop.f32.mrf.mxu0
      %v1546 = vadd.f32 0.0, %v1545
      %1547 = vdwg.mxu0
      %v1548 = vadd.f32 %v1434, %v1524
      %v1549 = vadd.f32 %v1435, %v1526
      %v1550 = vadd.f32 %v1436, %v1529
      %v1551 = vadd.f32 %v1437, %v1531
      %v1552 = vadd.f32 %v1438, %v1534
      %v1553 = vadd.f32 %v1439, %v1536
      %v1554 = vadd.f32 %v1440, %v1539
      %v1555 = vadd.f32 %v1441, %v1541
      %v1556 = vadd.f32 %v1442, %v1544
      %v1557 = vadd.f32 %v1443, %v1546
      %v1558 = vld [vmem:[%s212 + $0x2c] sm:$0x3]
      %s1559 = scalar_lea.vmem %s2, 52
      %v1560 = vld [vmem:[%s1559] sm:$0xf]
      %v1562 = vunpack.c.l.b16 %v1558
      %v1563 = vpack.c.b16 %v1562, %v1562
      %v1565 = vshrl.u32 %v1479, 16
      %v1567 = vrot.slane %v1565, 1
      %v1568 = vshll.u32 %v1479, 16
      %v1570 = vrot.slane %v1568, 2
      %v1571 = vor.u32 %v1567, %v1570
      %v1573 = vshrl.u32 %v1480, 16
      %v1575 = vrot.slane %v1573, 1
      %v1576 = vshll.u32 %v1480, 16
      %v1578 = vrot.slane %v1576, 2
      %v1579 = vor.u32 %v1575, %v1578
      %v1580 = vsel %vm607, %v1571, %v1579
      %v1582 = vshrl.u32 %v1481, 16
      %v1584 = vrot.slane %v1582, 1
      %v1585 = vshll.u32 %v1481, 16
      %v1587 = vrot.slane %v1585, 2
      %v1588 = vor.u32 %v1584, %v1587
      %v1589 = vsel %vm607, %v1579, %v1588
      %v1591 = vshrl.u32 %v1482, 16
      %v1593 = vrot.slane %v1591, 1
      %v1594 = vshll.u32 %v1482, 16
      %v1596 = vrot.slane %v1594, 2
      %v1597 = vor.u32 %v1593, %v1596
      %v1598 = vsel %vm607, %v1588, %v1597
      %v1600 = vshrl.u32 %v1483, 16
      %v1602 = vrot.slane %v1600, 1
      %v1603 = vshll.u32 %v1483, 16
      %v1605 = vrot.slane %v1603, 2
      %v1606 = vor.u32 %v1602, %v1605
      %v1607 = vsel %vm607, %v1597, %v1606
      %v1609 = vshrl.u32 %v1563, 16
      %v1611 = vrot.slane %v1609, 1
      %v1612 = vshll.u32 %v1563, 16
      %v1614 = vrot.slane %v1612, 2
      %v1615 = vor.u32 %v1611, %v1614
      %v1616 = vsel %vm607, %v1606, %v1615
      %v1618 = vsel %vm306, %v1580, 0
      %v1621 = vsel %vm306, %v1589, 0
      %v1624 = vsel %vm306, %v1598, 0
      %v1627 = vsel %vm306, %v1607, 0
      %v1630 = vsel %vm306, %v1616, 0
      %v1633 = vsel %vm322, %v1560, 0
      %1635 = vmatpush.bf16.msra.mxu0 0
      %1636 = vmatpush.bf16.msra.mxu0 0
      %1637 = vmatpush.bf16.msra.mxu0 0
      %1638 = vmatpush.bf16.msra.mxu0 0
      %1639 = vmatpush.bf16.msra.mxu0 0
      %1640 = vmatpush.bf16.msra.mxu0 0
      %1641 = vmatpush.bf16.msra.mxu0 0
      %1642 = vmatpush.bf16.msra.mxu0 %v1633
      %1643 = vmatmul.bf16.gmra.mxu0 %v1618
      %v1644 = vpop.f32.mrf.mxu0
      %v1645 = vadd.f32 0.0, %v1644
      %v1646 = vpop.f32.mrf.mxu0
      %v1647 = vadd.f32 0.0, %v1646
      %1648 = vmatmul.bf16.gmra.mxu0 %v1621
      %v1649 = vpop.f32.mrf.mxu0
      %v1650 = vadd.f32 0.0, %v1649
      %v1651 = vpop.f32.mrf.mxu0
      %v1652 = vadd.f32 0.0, %v1651
      %1653 = vmatmul.bf16.gmra.mxu0 %v1624
      %v1654 = vpop.f32.mrf.mxu0
      %v1655 = vadd.f32 0.0, %v1654
      %v1656 = vpop.f32.mrf.mxu0
      %v1657 = vadd.f32 0.0, %v1656
      %1658 = vmatmul.bf16.gmra.mxu0 %v1627
      %v1659 = vpop.f32.mrf.mxu0
      %v1660 = vadd.f32 0.0, %v1659
      %v1661 = vpop.f32.mrf.mxu0
      %v1662 = vadd.f32 0.0, %v1661
      %1663 = vmatmul.bf16.gmra.mxu0 %v1630
      %v1664 = vpop.f32.mrf.mxu0
      %v1665 = vadd.f32 0.0, %v1664
      %v1666 = vpop.f32.mrf.mxu0
      %v1667 = vadd.f32 0.0, %v1666
      %1668 = vdwg.mxu0
      %v1669 = vadd.f32 %v1548, %v1645
      %v1670 = vadd.f32 %v1549, %v1647
      %v1671 = vadd.f32 %v1550, %v1650
      %v1672 = vadd.f32 %v1551, %v1652
      %v1673 = vadd.f32 %v1552, %v1655
      %v1674 = vadd.f32 %v1553, %v1657
      %v1675 = vadd.f32 %v1554, %v1660
      %v1676 = vadd.f32 %v1555, %v1662
      %v1677 = vadd.f32 %v1556, %v1665
      %v1678 = vadd.f32 %v1557, %v1667
      %v1679 = vld [vmem:[%s212 + $0x4] sm:$0xc]
      %s1680 = scalar_lea.vmem %s2, 56
      %v1681 = vld [vmem:[%s1680] sm:$0xf]
      %v1683 = vunpack.c.l.b16 %v1679
      %v1684 = vpack.c.b16 %v1469, %v1683
      %v1685 = vrot.slane %v1684, 2
      %v1686 = vrot.slane %v1480, 2
      %v1687 = vsel %vm729, %v1685, %v1686
      %v1688 = vrot.slane %v1481, 2
      %v1689 = vsel %vm729, %v1686, %v1688
      %v1690 = vrot.slane %v1482, 2
      %v1691 = vsel %vm729, %v1688, %v1690
      %v1692 = vrot.slane %v1483, 2
      %v1693 = vsel %vm729, %v1690, %v1692
      %v1694 = vrot.slane %v1563, 2
      %v1695 = vsel %vm729, %v1692, %v1694
      %v1697 = vsel %vm306, %v1687, 0
      %v1700 = vsel %vm306, %v1689, 0
      %v1703 = vsel %vm306, %v1691, 0
      %v1706 = vsel %vm306, %v1693, 0
      %v1709 = vsel %vm306, %v1695, 0
      %v1712 = vsel %vm322, %v1681, 0
      %1714 = vmatpush.bf16.msra.mxu0 0
      %1715 = vmatpush.bf16.msra.mxu0 0
      %1716 = vmatpush.bf16.msra.mxu0 0
      %1717 = vmatpush.bf16.msra.mxu0 0
      %1718 = vmatpush.bf16.msra.mxu0 0
      %1719 = vmatpush.bf16.msra.mxu0 0
      %1720 = vmatpush.bf16.msra.mxu0 0
      %1721 = vmatpush.bf16.msra.mxu0 %v1712
      %1722 = vmatmul.bf16.gmra.mxu0 %v1697
      %v1723 = vpop.f32.mrf.mxu0
      %v1724 = vadd.f32 0.0, %v1723
      %v1725 = vpop.f32.mrf.mxu0
      %v1726 = vadd.f32 0.0, %v1725
      %1727 = vmatmul.bf16.gmra.mxu0 %v1700
      %v1728 = vpop.f32.mrf.mxu0
      %v1729 = vadd.f32 0.0, %v1728
      %v1730 = vpop.f32.mrf.mxu0
      %v1731 = vadd.f32 0.0, %v1730
      %1732 = vmatmul.bf16.gmra.mxu0 %v1703
      %v1733 = vpop.f32.mrf.mxu0
      %v1734 = vadd.f32 0.0, %v1733
      %v1735 = vpop.f32.mrf.mxu0
      %v1736 = vadd.f32 0.0, %v1735
      %1737 = vmatmul.bf16.gmra.mxu0 %v1706
      %v1738 = vpop.f32.mrf.mxu0
      %v1739 = vadd.f32 0.0, %v1738
      %v1740 = vpop.f32.mrf.mxu0
      %v1741 = vadd.f32 0.0, %v1740
      %1742 = vmatmul.bf16.gmra.mxu0 %v1709
      %v1743 = vpop.f32.mrf.mxu0
      %v1744 = vadd.f32 0.0, %v1743
      %v1745 = vpop.f32.mrf.mxu0
      %v1746 = vadd.f32 0.0, %v1745
      %1747 = vdwg.mxu0
      %v1748 = vadd.f32 %v1669, %v1724
      %v1749 = vadd.f32 %v1670, %v1726
      %v1750 = vadd.f32 %v1671, %v1729
      %v1751 = vadd.f32 %v1672, %v1731
      %v1752 = vadd.f32 %v1673, %v1734
      %v1753 = vadd.f32 %v1674, %v1736
      %v1754 = vadd.f32 %v1675, %v1739
      %v1755 = vadd.f32 %v1676, %v1741
      %v1756 = vadd.f32 %v1677, %v1744
      %v1757 = vadd.f32 %v1678, %v1746
      %v1758 = vld [vmem:[%s212 + $0x8] sm:$0xc]
      %v1759 = vld [vmem:[%s212 + $0xc] sm:$0xf]
      %v1760 = vld [vmem:[%s212 + $0x10] sm:$0xf]
      %v1761 = vld [vmem:[%s212 + $0x14] sm:$0xf]
      %v1762 = vld [vmem:[%s212 + $0x18] sm:$0xf]
      %v1763 = vld [vmem:[%s212 + $0x1c] sm:$0xf]
      %v1764 = vld [vmem:[%s212 + $0x20] sm:$0xf]
      %v1765 = vld [vmem:[%s212 + $0x24] sm:$0xf]
      %v1766 = vld [vmem:[%s212 + $0x28] sm:$0xf]
      %v1767 = vld [vmem:[%s212 + $0x2c] sm:$0xf]
      %v1768 = vld [vmem:[%s212 + $0x30] sm:$0x3]
      %s1769 = scalar_lea.vmem %s2, 60
      %v1770 = vld [vmem:[%s1769] sm:$0xf]
      %v1782 = vunpack.c.l.b16 %v1758
      %v1783 = vunpack.c.l.b16 %v1759
      %v1784 = vunpack.c.l.b16 %v1760
      %v1785 = vunpack.c.l.b16 %v1761
      %v1786 = vunpack.c.l.b16 %v1762
      %v1787 = vunpack.c.l.b16 %v1763
      %v1788 = vunpack.c.l.b16 %v1764
      %v1789 = vunpack.c.l.b16 %v1765
      %v1790 = vunpack.c.l.b16 %v1766
      %v1791 = vunpack.c.l.b16 %v1767
      %v1792 = vunpack.c.l.b16 %v1768
      %v1793 = vpack.c.b16 %v1783, %v1782
      %v1794 = vpack.c.b16 %v1785, %v1784
      %v1795 = vpack.c.b16 %v1787, %v1786
      %v1796 = vpack.c.b16 %v1789, %v1788
      %v1797 = vpack.c.b16 %v1791, %v1790
      %v1798 = vpack.c.b16 %v1792, %v1792
      %v1799 = vrot.slane %v1793, 2
      %v1800 = vrot.slane %v1794, 2
      %v1801 = vsel %vm729, %v1799, %v1800
      %v1802 = vrot.slane %v1795, 2
      %v1803 = vsel %vm729, %v1800, %v1802
      %v1804 = vrot.slane %v1796, 2
      %v1805 = vsel %vm729, %v1802, %v1804
      %v1806 = vrot.slane %v1797, 2
      %v1807 = vsel %vm729, %v1804, %v1806
      %v1808 = vrot.slane %v1798, 2
      %v1809 = vsel %vm729, %v1806, %v1808
      %v1811 = vsel %vm306, %v1801, 0
      %v1814 = vsel %vm306, %v1803, 0
      %v1817 = vsel %vm306, %v1805, 0
      %v1820 = vsel %vm306, %v1807, 0
      %v1823 = vsel %vm306, %v1809, 0
      %v1826 = vsel %vm322, %v1770, 0
      %1828 = vmatpush.bf16.msra.mxu0 0
      %1829 = vmatpush.bf16.msra.mxu0 0
      %1830 = vmatpush.bf16.msra.mxu0 0
      %1831 = vmatpush.bf16.msra.mxu0 0
      %1832 = vmatpush.bf16.msra.mxu0 0
      %1833 = vmatpush.bf16.msra.mxu0 0
      %1834 = vmatpush.bf16.msra.mxu0 0
      %1835 = vmatpush.bf16.msra.mxu0 %v1826
      %1836 = vmatmul.bf16.gmra.mxu0 %v1811
      %v1837 = vpop.f32.mrf.mxu0
      %v1838 = vadd.f32 0.0, %v1837
      %v1839 = vpop.f32.mrf.mxu0
      %v1840 = vadd.f32 0.0, %v1839
      %1841 = vmatmul.bf16.gmra.mxu0 %v1814
      %v1842 = vpop.f32.mrf.mxu0
      %v1843 = vadd.f32 0.0, %v1842
      %v1844 = vpop.f32.mrf.mxu0
      %v1845 = vadd.f32 0.0, %v1844
      %1846 = vmatmul.bf16.gmra.mxu0 %v1817
      %v1847 = vpop.f32.mrf.mxu0
      %v1848 = vadd.f32 0.0, %v1847
      %v1849 = vpop.f32.mrf.mxu0
      %v1850 = vadd.f32 0.0, %v1849
      %1851 = vmatmul.bf16.gmra.mxu0 %v1820
      %v1852 = vpop.f32.mrf.mxu0
      %v1853 = vadd.f32 0.0, %v1852
      %v1854 = vpop.f32.mrf.mxu0
      %v1855 = vadd.f32 0.0, %v1854
      %1856 = vmatmul.bf16.gmra.mxu0 %v1823
      %v1857 = vpop.f32.mrf.mxu0
      %v1858 = vadd.f32 0.0, %v1857
      %v1859 = vpop.f32.mrf.mxu0
      %v1860 = vadd.f32 0.0, %v1859
      %1861 = vdwg.mxu0
      %v1862 = vadd.f32 %v1748, %v1838
      %v1863 = vadd.f32 %v1749, %v1840
      %v1864 = vadd.f32 %v1750, %v1843
      %v1865 = vadd.f32 %v1751, %v1845
      %v1866 = vadd.f32 %v1752, %v1848
      %v1867 = vadd.f32 %v1753, %v1850
      %v1868 = vadd.f32 %v1754, %v1853
      %v1869 = vadd.f32 %v1755, %v1855
      %v1870 = vadd.f32 %v1756, %v1858
      %v1871 = vadd.f32 %v1757, %v1860
      %v1872 = vld [vmem:[%s212 + $0x30] sm:$0x7]
      %s1873 = scalar_lea.vmem %s2, 64
      %v1874 = vld [vmem:[%s1873] sm:$0xf]
      %v1876 = vunpack.c.l.b16 %v1872
      %v1877 = vpack.c.b16 %v1876, %v1876
      %v1879 = vshrl.u32 %v1793, 16
      %v1881 = vrot.slane %v1879, 2
      %v1882 = vshll.u32 %v1793, 16
      %v1884 = vrot.slane %v1882, 3
      %v1885 = vor.u32 %v1881, %v1884
      %v1887 = vshrl.u32 %v1794, 16
      %v1889 = vrot.slane %v1887, 2
      %v1890 = vshll.u32 %v1794, 16
      %v1892 = vrot.slane %v1890, 3
      %v1893 = vor.u32 %v1889, %v1892
      %v1894 = vsel %vm923, %v1885, %v1893
      %v1896 = vshrl.u32 %v1795, 16
      %v1898 = vrot.slane %v1896, 2
      %v1899 = vshll.u32 %v1795, 16
      %v1901 = vrot.slane %v1899, 3
      %v1902 = vor.u32 %v1898, %v1901
      %v1903 = vsel %vm923, %v1893, %v1902
      %v1905 = vshrl.u32 %v1796, 16
      %v1907 = vrot.slane %v1905, 2
      %v1908 = vshll.u32 %v1796, 16
      %v1910 = vrot.slane %v1908, 3
      %v1911 = vor.u32 %v1907, %v1910
      %v1912 = vsel %vm923, %v1902, %v1911
      %v1914 = vshrl.u32 %v1797, 16
      %v1916 = vrot.slane %v1914, 2
      %v1917 = vshll.u32 %v1797, 16
      %v1919 = vrot.slane %v1917, 3
      %v1920 = vor.u32 %v1916, %v1919
      %v1921 = vsel %vm923, %v1911, %v1920
      %v1923 = vshrl.u32 %v1877, 16
      %v1925 = vrot.slane %v1923, 2
      %v1926 = vshll.u32 %v1877, 16
      %v1928 = vrot.slane %v1926, 3
      %v1929 = vor.u32 %v1925, %v1928
      %v1930 = vsel %vm923, %v1920, %v1929
      %v1932 = vsel %vm306, %v1894, 0
      %v1935 = vsel %vm306, %v1903, 0
      %v1938 = vsel %vm306, %v1912, 0
      %v1941 = vsel %vm306, %v1921, 0
      %v1944 = vsel %vm306, %v1930, 0
      %v1947 = vsel %vm322, %v1874, 0
      %1949 = vmatpush.bf16.msra.mxu0 0
      %1950 = vmatpush.bf16.msra.mxu0 0
      %1951 = vmatpush.bf16.msra.mxu0 0
      %1952 = vmatpush.bf16.msra.mxu0 0
      %1953 = vmatpush.bf16.msra.mxu0 0
      %1954 = vmatpush.bf16.msra.mxu0 0
      %1955 = vmatpush.bf16.msra.mxu0 0
      %1956 = vmatpush.bf16.msra.mxu0 %v1947
      %1957 = vmatmul.bf16.gmra.mxu0 %v1932
      %v1958 = vpop.f32.mrf.mxu0
      %v1959 = vadd.f32 0.0, %v1958
      %v1960 = vpop.f32.mrf.mxu0
      %v1961 = vadd.f32 0.0, %v1960
      %1962 = vmatmul.bf16.gmra.mxu0 %v1935
      %v1963 = vpop.f32.mrf.mxu0
      %v1964 = vadd.f32 0.0, %v1963
      %v1965 = vpop.f32.mrf.mxu0
      %v1966 = vadd.f32 0.0, %v1965
      %1967 = vmatmul.bf16.gmra.mxu0 %v1938
      %v1968 = vpop.f32.mrf.mxu0
      %v1969 = vadd.f32 0.0, %v1968
      %v1970 = vpop.f32.mrf.mxu0
      %v1971 = vadd.f32 0.0, %v1970
      %1972 = vmatmul.bf16.gmra.mxu0 %v1941
      %v1973 = vpop.f32.mrf.mxu0
      %v1974 = vadd.f32 0.0, %v1973
      %v1975 = vpop.f32.mrf.mxu0
      %v1976 = vadd.f32 0.0, %v1975
      %1977 = vmatmul.bf16.gmra.mxu0 %v1944
      %v1978 = vpop.f32.mrf.mxu0
      %v1979 = vadd.f32 0.0, %v1978
      %v1980 = vpop.f32.mrf.mxu0
      %v1981 = vadd.f32 0.0, %v1980
      %1982 = vdwg.mxu0
      %v1983 = vadd.f32 %v1862, %v1959
      %v1984 = vadd.f32 %v1863, %v1961
      %v1985 = vadd.f32 %v1864, %v1964
      %v1986 = vadd.f32 %v1865, %v1966
      %v1987 = vadd.f32 %v1866, %v1969
      %v1988 = vadd.f32 %v1867, %v1971
      %v1989 = vadd.f32 %v1868, %v1974
      %v1990 = vadd.f32 %v1869, %v1976
      %v1991 = vadd.f32 %v1870, %v1979
      %v1992 = vadd.f32 %v1871, %v1981
      %v1993 = vld [vmem:[%s212 + $0x8] sm:$0x8]
      %s1994 = scalar_lea.vmem %s2, 68
      %v1995 = vld [vmem:[%s1994] sm:$0xf]
      %v1997 = vunpack.c.l.b16 %v1993
      %v1998 = vpack.c.b16 %v1783, %v1997
      %v1999 = vrot.slane %v1998, 3
      %v2000 = vrot.slane %v1794, 3
      %v2001 = vsel %vm1045, %v1999, %v2000
      %v2002 = vrot.slane %v1795, 3
      %v2003 = vsel %vm1045, %v2000, %v2002
      %v2004 = vrot.slane %v1796, 3
      %v2005 = vsel %vm1045, %v2002, %v2004
      %v2006 = vrot.slane %v1797, 3
      %v2007 = vsel %vm1045, %v2004, %v2006
      %v2008 = vrot.slane %v1877, 3
      %v2009 = vsel %vm1045, %v2006, %v2008
      %v2011 = vsel %vm306, %v2001, 0
      %v2014 = vsel %vm306, %v2003, 0
      %v2017 = vsel %vm306, %v2005, 0
      %v2020 = vsel %vm306, %v2007, 0
      %v2023 = vsel %vm306, %v2009, 0
      %v2026 = vsel %vm322, %v1995, 0
      %2028 = vmatpush.bf16.msra.mxu0 0
      %2029 = vmatpush.bf16.msra.mxu0 0
      %2030 = vmatpush.bf16.msra.mxu0 0
      %2031 = vmatpush.bf16.msra.mxu0 0
      %2032 = vmatpush.bf16.msra.mxu0 0
      %2033 = vmatpush.bf16.msra.mxu0 0
      %2034 = vmatpush.bf16.msra.mxu0 0
      %2035 = vmatpush.bf16.msra.mxu0 %v2026
      %2036 = vmatmul.bf16.gmra.mxu0 %v2011
      %v2037 = vpop.f32.mrf.mxu0
      %v2038 = vadd.f32 0.0, %v2037
      %v2039 = vpop.f32.mrf.mxu0
      %v2040 = vadd.f32 0.0, %v2039
      %2041 = vmatmul.bf16.gmra.mxu0 %v2014
      %v2042 = vpop.f32.mrf.mxu0
      %v2043 = vadd.f32 0.0, %v2042
      %v2044 = vpop.f32.mrf.mxu0
      %v2045 = vadd.f32 0.0, %v2044
      %2046 = vmatmul.bf16.gmra.mxu0 %v2017
      %v2047 = vpop.f32.mrf.mxu0
      %v2048 = vadd.f32 0.0, %v2047
      %v2049 = vpop.f32.mrf.mxu0
      %v2050 = vadd.f32 0.0, %v2049
      %2051 = vmatmul.bf16.gmra.mxu0 %v2020
      %v2052 = vpop.f32.mrf.mxu0
      %v2053 = vadd.f32 0.0, %v2052
      %v2054 = vpop.f32.mrf.mxu0
      %v2055 = vadd.f32 0.0, %v2054
      %2056 = vmatmul.bf16.gmra.mxu0 %v2023
      %v2057 = vpop.f32.mrf.mxu0
      %v2058 = vadd.f32 0.0, %v2057
      %v2059 = vpop.f32.mrf.mxu0
      %v2060 = vadd.f32 0.0, %v2059
      %2061 = vdwg.mxu0
      %v2062 = vadd.f32 %v1983, %v2038
      %v2063 = vadd.f32 %v1984, %v2040
      %v2064 = vadd.f32 %v1985, %v2043
      %v2065 = vadd.f32 %v1986, %v2045
      %v2066 = vadd.f32 %v1987, %v2048
      %v2067 = vadd.f32 %v1988, %v2050
      %v2068 = vadd.f32 %v1989, %v2053
      %v2069 = vadd.f32 %v1990, %v2055
      %v2070 = vadd.f32 %v1991, %v2058
      %v2071 = vadd.f32 %v1992, %v2060
      %v2072 = vld [vmem:[%s3] sm:$0x1]
      %v2074 = vperm.slane %v2072, 0
      %v2076 = vadd.f32 %v2062, %v2074
      %v2077 = vadd.f32 %v2063, %v2074
      %v2078 = vadd.f32 %v2064, %v2074
      %v2079 = vadd.f32 %v2065, %v2074
      %v2080 = vadd.f32 %v2066, %v2074
      %v2081 = vadd.f32 %v2067, %v2074
      %v2082 = vadd.f32 %v2068, %v2074
      %v2083 = vadd.f32 %v2069, %v2074
      %v2084 = vadd.f32 %v2070, %v2074
      %v2085 = vadd.f32 %v2071, %v2074
      %v2086 = vmax.f32 %v2076, 0.0
      %v2087 = vmax.f32 %v2077, 0.0
      %v2088 = vmax.f32 %v2078, 0.0
      %v2089 = vmax.f32 %v2079, 0.0
      %v2090 = vmax.f32 %v2080, 0.0
      %v2091 = vmax.f32 %v2081, 0.0
      %v2092 = vmax.f32 %v2082, 0.0
      %v2093 = vmax.f32 %v2083, 0.0
      %v2094 = vmax.f32 %v2084, 0.0
      %v2095 = vmax.f32 %v2085, 0.0
      %2096 = vst.msk [vmem:[%s217] sm:$0xff] %vm306, %v2086
      %2097 = vst.msk [vmem:[%s217 + $0x8] sm:$0xff] %vm306, %v2087
      %2098 = vst.msk [vmem:[%s217 + $0x10] sm:$0xff] %vm306, %v2088
      %2099 = vst.msk [vmem:[%s217 + $0x18] sm:$0xff] %vm306, %v2089
      %2100 = vst.msk [vmem:[%s217 + $0x20] sm:$0xff] %vm306, %v2090
      %2101 = vst.msk [vmem:[%s217 + $0x28] sm:$0xff] %vm306, %v2091
      %2102 = vst.msk [vmem:[%s217 + $0x30] sm:$0xff] %vm306, %v2092
      %2103 = vst.msk [vmem:[%s217 + $0x38] sm:$0xff] %vm306, %v2093
      %2104 = vst.msk [vmem:[%s217 + $0x40] sm:$0xff] %vm306, %v2094
      %2105 = vst.msk [vmem:[%s217 + $0x48] sm:$0xff] %vm306, %v2095
      %p2106 = scmp.lt.s32.totalorder %s15, 1
      %s2107 = scalar_select %p2106, %s15, 1
      %s2108 = smul.addr %s2107, 10
      %s2109 = smul.addr %s2108, 8
      %s2110 = scalar_lea.vmem %s4, %s2109
      // Predicated region
      $region37: #{csfi2_forward.10} parent=35 // pred_check
        %p2111 = pneg %p127
      $region38: #{csfi2_forward.10} parent=35 // pred_check_branch
        %2113 = sbr.rel (%p2111) target = $region40
      $region39: #{csfi2_forward.10} parent=35 // pred_region
        _
      $region40: #{csfi2_forward.10} parent=35 // pred_fallthru
        _
    $region36: #{csfi2_forward.10} parent=5 // pred_fallthru
      _
    %p2114 = scmp.le.s32.totalorder 2, %s10
    // Predicated region
    $region41: #{csfi2_forward.10} parent=5 // pred_check
      %p2115 = pneg %p2114
    $region42: #{csfi2_forward.10} parent=5 // pred_check_branch
      %2117 = sbr.rel (%p2115) target = $region44
    $region43: #{csfi2_forward.10} parent=5 // pred_region
      %s2118 = ssub.s32 %s10, 2
      // Predicated region
      $region45: #{csfi2_forward.10} parent=43 // pred_check
        %p2119 = pneg %p133
      $region46: #{csfi2_forward.10} parent=43 // pred_check_branch
        %2121 = sbr.rel (%p2119) target = $region48
      $region47: #{csfi2_forward.10} parent=43 // pred_region
        %p2122 = scmp.lt.s32.totalorder %s16, 1
        %s2123 = scalar_select %p2122, %s16, 1
        %s2124 = smul.addr %s2123, 10
        %s2125 = smul.addr %s2124, 8
        %s2126 = scalar_lea.vmem %s4, %s2125
      $region48: #{csfi2_forward.10} parent=43 // pred_fallthru
        _
    $region44: #{csfi2_forward.10} parent=5 // pred_fallthru
      _
  $region6: #{csfi2_forward.10} parent=0 // loop_footer
    %s14 = sadd.s32 1, %s10
  $region7: #{csfi2_forward.10} parent=0 // loop_footer_branch
    %9 = sbr.rel target = $region3
  $region8: #{csfi2_forward.10} parent=0 // loop_exit
    _

// kernel: csfi2_forward.11
$region0: #{csfi2_forward.11}
  #allocation0 [shape = 'u32[]', space=smem, size = 0x4, offset = 0x4, fixed_abs, tag = 'smem constant byte address 0x4 - core index']
  #allocation1 [shape = 'u32[72,128]{1,0:T(1,128)}', space=vmem, size = 0x9000, scoped, tag = 'internal scratch']
  %s0 = inlined_call_operand.vmem [shape: bf16[2,342,8], index: 0, kind: input, shape index: {}]
  %s1 = inlined_call_operand.vmem [shape: bf16[2,342,8], index: 1, kind: input, shape index: {}]
  %s2 = inlined_call_operand.vmem [shape: bf16[18,8,8], index: 2, kind: input, shape index: {}]
  %s3 = inlined_call_operand.vmem [shape: f32[1,8], index: 3, kind: input, shape index: {}]
  %s4 = inlined_call_operand.vmem [shape: f32[2,288,8], index: 4, kind: output, shape index: {}]
  %s5 = sld [smem:[#allocation0]]
  $region49: #{csfi2_forward.11} parent=0
    _
  %s7 = ssub.s32 1, %s5
  %s8 = scalar_select 0, %s7, %s5
  loop: start=0, step=1, limit=4
  $region2: #{csfi2_forward.11} parent=0 // loop_pre_header
    _
  $region3: #{csfi2_forward.11} parent=0 // loop_header
    %s10 = sphi 0, %s14
    %p11 = scmp.ge.s32.totalorder %s10, 4
    %s20 = sphi 0, %s22
    %s23 = sphi 0, %s20
    %s24 = sphi 0, %s23
    %s40 = sphi 0, %s24
    %s46 = sphi 0, %s48
    %s49 = sphi 0, %s46
    %s50 = sphi 0, %s49
    %s66 = sphi 0, %s50
    %s70 = sphi 0, %s70
    %s72 = sphi 0, %s70
    %s73 = sphi 0, %s72
    %s87 = sphi 0, %s73
    %s91 = sphi 0, %s91
    %s93 = sphi 0, %s91
    %s94 = sphi 0, %s93
    %s108 = sphi 0, %s94
    %s114 = sphi 0, %s116
    %s117 = sphi 0, %s114
    %s118 = sphi 0, %s117
    %s134 = sphi 0, %s118
  $region4: #{csfi2_forward.11} parent=0 // loop_header_branch
    %13 = sbr.rel (%p11) target = $region8
  $region5: #{csfi2_forward.11} parent=0 // loop_body
    %s15 = ssub.s32 %s10, 1
    %s16 = ssub.s32 %s10, 2
    %s17 = sadd.s32 %s10, 1
    %s18 = ssub.s32 %s10, %s17
    %p19 = scmp.eq.s32.totalorder %s18, 0
    %s21 = sadd.s32 %s20, 1
    %s22 = scalar_select %p19, %s20, %s21
    %p25 = pneg %p19
    %p26 = scmp.eq.s32.totalorder %s10, 1
    %p27 = por %p25, %p26
    %p28 = scmp.ne.s32.totalorder %s20, %s23
    %p29 = scmp.eq.s32.totalorder %s10, 0
    %p30 = por %p28, %p29
    %p31 = scmp.ne.s32.totalorder %s20, %s23
    %p32 = scmp.eq.s32.totalorder %s15, 1
    %p33 = por %p31, %p32
    %p34 = scmp.ne.s32.totalorder %s23, %s24
    %p35 = scmp.eq.s32.totalorder %s15, 0
    %p36 = por %p34, %p35
    %p37 = scmp.ne.s32.totalorder %s23, %s24
    %p38 = scmp.eq.s32.totalorder %s16, 1
    %p39 = por %p37, %p38
    %p41 = scmp.ne.s32.totalorder %s24, %s40
    %p42 = scmp.eq.s32.totalorder %s16, 0
    %p43 = por %p41, %p42
    %s44 = ssub.s32 %s10, %s17
    %p45 = scmp.eq.s32.totalorder %s44, 0
    %s47 = sadd.s32 %s46, 1
    %s48 = scalar_select %p45, %s46, %s47
    %p51 = pneg %p45
    %p52 = scmp.eq.s32.totalorder %s10, 1
    %p53 = por %p51, %p52
    %p54 = scmp.ne.s32.totalorder %s46, %s49
    %p55 = scmp.eq.s32.totalorder %s10, 0
    %p56 = por %p54, %p55
    %p57 = scmp.ne.s32.totalorder %s46, %s49
    %p58 = scmp.eq.s32.totalorder %s15, 1
    %p59 = por %p57, %p58
    %p60 = scmp.ne.s32.totalorder %s49, %s50
    %p61 = scmp.eq.s32.totalorder %s15, 0
    %p62 = por %p60, %p61
    %p63 = scmp.ne.s32.totalorder %s49, %s50
    %p64 = scmp.eq.s32.totalorder %s16, 1
    %p65 = por %p63, %p64
    %p67 = scmp.ne.s32.totalorder %s50, %s66
    %p68 = scmp.eq.s32.totalorder %s16, 0
    %p69 = por %p67, %p68
    %s71 = sadd.s32 %s70, 1
    %p74 = scmp.eq.s32.totalorder %s10, 1
    %p75 = scmp.ne.s32.totalorder %s70, %s72
    %p76 = scmp.eq.s32.totalorder %s10, 0
    %p77 = por %p75, %p76
    %p78 = scmp.ne.s32.totalorder %s70, %s72
    %p79 = scmp.eq.s32.totalorder %s15, 1
    %p80 = por %p78, %p79
    %p81 = scmp.ne.s32.totalorder %s72, %s73
    %p82 = scmp.eq.s32.totalorder %s15, 0
    %p83 = por %p81, %p82
    %p84 = scmp.ne.s32.totalorder %s72, %s73
    %p85 = scmp.eq.s32.totalorder %s16, 1
    %p86 = por %p84, %p85
    %p88 = scmp.ne.s32.totalorder %s73, %s87
    %p89 = scmp.eq.s32.totalorder %s16, 0
    %p90 = por %p88, %p89
    %s92 = sadd.s32 %s91, 1
    %p95 = scmp.eq.s32.totalorder %s10, 1
    %p96 = scmp.ne.s32.totalorder %s91, %s93
    %p97 = scmp.eq.s32.totalorder %s10, 0
    %p98 = por %p96, %p97
    %p99 = scmp.ne.s32.totalorder %s91, %s93
    %p100 = scmp.eq.s32.totalorder %s15, 1
    %p101 = por %p99, %p100
    %p102 = scmp.ne.s32.totalorder %s93, %s94
    %p103 = scmp.eq.s32.totalorder %s15, 0
    %p104 = por %p102, %p103
    %p105 = scmp.ne.s32.totalorder %s93, %s94
    %p106 = scmp.eq.s32.totalorder %s16, 1
    %p107 = por %p105, %p106
    %p109 = scmp.ne.s32.totalorder %s94, %s108
    %p110 = scmp.eq.s32.totalorder %s16, 0
    %p111 = por %p109, %p110
    %s112 = ssub.s32 %s10, %s17
    %p113 = scmp.eq.s32.totalorder %s112, 0
    %s115 = sadd.s32 %s114, 1
    %s116 = scalar_select %p113, %s114, %s115
    %p119 = pneg %p113
    %p120 = scmp.eq.s32.totalorder %s10, 1
    %p121 = por %p119, %p120
    %p122 = scmp.ne.s32.totalorder %s114, %s117
    %p123 = scmp.eq.s32.totalorder %s10, 0
    %p124 = por %p122, %p123
    %p125 = scmp.ne.s32.totalorder %s114, %s117
    %p126 = scmp.eq.s32.totalorder %s15, 1
    %p127 = por %p125, %p126
    %p128 = scmp.ne.s32.totalorder %s117, %s118
    %p129 = scmp.eq.s32.totalorder %s15, 0
    %p130 = por %p128, %p129
    %p131 = scmp.ne.s32.totalorder %s117, %s118
    %p132 = scmp.eq.s32.totalorder %s16, 1
    %p133 = por %p131, %p132
    %p135 = scmp.ne.s32.totalorder %s118, %s134
    %p136 = scmp.eq.s32.totalorder %s16, 0
    %p137 = por %p135, %p136
    %p138 = scmp.le.s32.totalorder 1, %s10
    %p139 = scmp.lt.s32.totalorder %s10, 3
    %p140 = pnand %p138, %p139
    %p141 = pneg %p140
    // Predicated region
    $region9: #{csfi2_forward.11} parent=5 // pred_check
      _
    $region10: #{csfi2_forward.11} parent=5 // pred_check_branch
      %143 = sbr.rel (%p140) target = $region12
    $region11: #{csfi2_forward.11} parent=5 // pred_region
      %s144 = ssub.s32 %s10, 1
      // Predicated region
      $region13: #{csfi2_forward.11} parent=11 // pred_check
        %p145 = pneg %p83
      $region14: #{csfi2_forward.11} parent=11 // pred_check_branch
        %147 = sbr.rel (%p145) target = $region16
      $region15: #{csfi2_forward.11} parent=11 // pred_region
        _
      $region16: #{csfi2_forward.11} parent=11 // pred_fallthru
        _
      // Predicated region
      $region17: #{csfi2_forward.11} parent=11 // pred_check
        %p148 = pneg %p104
      $region18: #{csfi2_forward.11} parent=11 // pred_check_branch
        %150 = sbr.rel (%p148) target = $region20
      $region19: #{csfi2_forward.11} parent=11 // pred_region
        _
      $region20: #{csfi2_forward.11} parent=11 // pred_fallthru
        _
    $region12: #{csfi2_forward.11} parent=5 // pred_fallthru
      _
    %p151 = scmp.lt.s32.totalorder %s10, 2
    // Predicated region
    $region21: #{csfi2_forward.11} parent=5 // pred_check
      %p152 = pneg %p151
    $region22: #{csfi2_forward.11} parent=5 // pred_check_branch
      %154 = sbr.rel (%p152) target = $region24
    $region23: #{csfi2_forward.11} parent=5 // pred_region
      // Predicated region
      $region25: #{csfi2_forward.11} parent=23 // pred_check
        %p155 = pneg %p30
      $region26: #{csfi2_forward.11} parent=23 // pred_check_branch
        %157 = sbr.rel (%p155) target = $region28
      $region27: #{csfi2_forward.11} parent=23 // pred_region
        %p158 = scmp.lt.s32.totalorder %s10, 1
        %s159 = scalar_select %p158, %s10, 1
        %s160 = smul.addr %s159, 43
        %s161 = smul.addr %s160, 4
        %s162 = scalar_lea.vmem %s0, %s161
      $region28: #{csfi2_forward.11} parent=23 // pred_fallthru
        _
      // Predicated region
      $region29: #{csfi2_forward.11} parent=23 // pred_check
        %p163 = pneg %p56
      $region30: #{csfi2_forward.11} parent=23 // pred_check_branch
        %165 = sbr.rel (%p163) target = $region32
      $region31: #{csfi2_forward.11} parent=23 // pred_region
        %p166 = scmp.lt.s32.totalorder %s10, 1
        %s167 = scalar_select %p166, %s10, 1
        %s168 = smul.addr %s167, 43
        %s169 = smul.addr %s168, 4
        %s170 = scalar_lea.vmem %s1, %s169
      $region32: #{csfi2_forward.11} parent=23 // pred_fallthru
        _
    $region24: #{csfi2_forward.11} parent=5 // pred_fallthru
      _
    %p171 = scmp.le.s32.totalorder 1, %s10
    %p172 = scmp.lt.s32.totalorder %s10, 3
    %p173 = pnand %p171, %p172
    %p174 = pneg %p173
    // Predicated region
    $region33: #{csfi2_forward.11} parent=5 // pred_check
      _
    $region34: #{csfi2_forward.11} parent=5 // pred_check_branch
      %176 = sbr.rel (%p173) target = $region36
    $region35: #{csfi2_forward.11} parent=5 // pred_region
      %s177 = ssub.s32 %s10, 1
      %p178 = scmp.lt.s32.totalorder %s15, 1
      %s179 = scalar_select %p178, %s15, 1
      %s180 = smul.addr %s179, 43
      %s181 = smul.addr %s180, 4
      %s182 = scalar_lea.vmem %s0, %s181
      %p183 = pneg %p36
      %p184 = pneg %p33
      %p185 = scmp.lt.s32.totalorder %s15, 1
      %s186 = scalar_select %p185, %s15, 1
      %s187 = smul.addr %s186, 43
      %s188 = smul.addr %s187, 4
      %s189 = scalar_lea.vmem %s1, %s188
      %p190 = pneg %p62
      %p191 = pneg %p59
      %p192 = pneg %p83
      %p193 = pneg %p80
      %p194 = pneg %p104
      %p195 = pneg %p101
      %p196 = pneg %p130
      %p197 = pneg %p127
      %p198 = scmp.lt.s32.totalorder %s15, 1
      %s199 = scalar_select %p198, %s15, 1
      %s200 = smul.addr %s199, 36
      %s201 = smul.addr %s200, 8
      %s202 = scalar_lea.vmem %s4, %s201
      %p203 = scmp.lt.s32.totalorder %s15, 1
      %s204 = scalar_select %p203, %s15, 1
      %s205 = smul.addr %s204, 43
      %s206 = smul.addr %s205, 4
      %s207 = scalar_lea.vmem %s0, %s206
      %p208 = scmp.lt.s32.totalorder %s15, 1
      %s209 = scalar_select %p208, %s15, 1
      %s210 = smul.addr %s209, 43
      %s211 = smul.addr %s210, 4
      %s212 = scalar_lea.vmem %s1, %s211
      %p213 = scmp.lt.s32.totalorder %s15, 1
      %s214 = scalar_select %p213, %s15, 1
      %s215 = smul.addr %s214, 36
      %s216 = smul.addr %s215, 8
      %s217 = scalar_lea.vmem %s4, %s216
      %v219 = vld [vmem:[%s207] sm:$0xf]
      %v220 = vld [vmem:[%s207 + $0x4] sm:$0xf]
      %v221 = vld [vmem:[%s207 + $0x8] sm:$0xf]
      %v222 = vld [vmem:[%s207 + $0xc] sm:$0xf]
      %v223 = vld [vmem:[%s207 + $0x10] sm:$0xf]
      %v224 = vld [vmem:[%s207 + $0x14] sm:$0xf]
      %v225 = vld [vmem:[%s207 + $0x18] sm:$0xf]
      %v226 = vld [vmem:[%s207 + $0x1c] sm:$0xf]
      %v227 = vld [vmem:[%s207 + $0x20] sm:$0xf]
      %v228 = vld [vmem:[%s207 + $0x24] sm:$0xf]
      %v229 = vld [vmem:[%s207 + $0x28] sm:$0xf]
      %v230 = vld [vmem:[%s207 + $0x2c] sm:$0xf]
      %v231 = vld [vmem:[%s207 + $0x30] sm:$0xf]
      %v232 = vld [vmem:[%s207 + $0x34] sm:$0xf]
      %v233 = vld [vmem:[%s207 + $0x38] sm:$0xf]
      %v234 = vld [vmem:[%s207 + $0x3c] sm:$0xf]
      %v235 = vld [vmem:[%s207 + $0x40] sm:$0xf]
      %v236 = vld [vmem:[%s207 + $0x44] sm:$0xf]
      %v237 = vld [vmem:[%s207 + $0x48] sm:$0xf]
      %v238 = vld [vmem:[%s207 + $0x4c] sm:$0xf]
      %v239 = vld [vmem:[%s207 + $0x50] sm:$0xf]
      %v240 = vld [vmem:[%s207 + $0x54] sm:$0xf]
      %v241 = vld [vmem:[%s207 + $0x58] sm:$0xf]
      %v242 = vld [vmem:[%s207 + $0x5c] sm:$0xf]
      %v243 = vld [vmem:[%s207 + $0x60] sm:$0xf]
      %v244 = vld [vmem:[%s207 + $0x64] sm:$0xf]
      %v245 = vld [vmem:[%s207 + $0x68] sm:$0xf]
      %v246 = vld [vmem:[%s207 + $0x6c] sm:$0xf]
      %v247 = vld [vmem:[%s207 + $0x70] sm:$0xf]
      %v248 = vld [vmem:[%s207 + $0x74] sm:$0xf]
      %v249 = vld [vmem:[%s207 + $0x78] sm:$0xf]
      %v250 = vld [vmem:[%s207 + $0x7c] sm:$0xf]
      %v251 = vld [vmem:[%s207 + $0x80] sm:$0xf]
      %v252 = vld [vmem:[%s207 + $0x84] sm:$0xf]
      %v253 = vld [vmem:[%s207 + $0x88] sm:$0xf]
      %v254 = vld [vmem:[%s207 + $0x8c] sm:$0xf]
      %v255 = vld [vmem:[%s2] sm:$0xf]
      %v256 = vld [vmem:[%s207 + $0x90] sm:$0x1]
      %s257 = scalar_lea.vmem %s2, 4
      %v258 = vld [vmem:[%s257] sm:$0xf]
      %v296 = vunpack.c.l.b16 %v219
      %v297 = vunpack.c.l.b16 %v220
      %v298 = vunpack.c.l.b16 %v221
      %v299 = vunpack.c.l.b16 %v222
      %v300 = vunpack.c.l.b16 %v223
      %v301 = vunpack.c.l.b16 %v224
      %v302 = vunpack.c.l.b16 %v225
      %v303 = vunpack.c.l.b16 %v226
      %v304 = vunpack.c.l.b16 %v227
      %v305 = vunpack.c.l.b16 %v228
      %v306 = vunpack.c.l.b16 %v229
      %v307 = vunpack.c.l.b16 %v230
      %v308 = vunpack.c.l.b16 %v231
      %v309 = vunpack.c.l.b16 %v232
      %v310 = vunpack.c.l.b16 %v233
      %v311 = vunpack.c.l.b16 %v234
      %v312 = vunpack.c.l.b16 %v235
      %v313 = vunpack.c.l.b16 %v236
      %v314 = vunpack.c.l.b16 %v237
      %v315 = vunpack.c.l.b16 %v238
      %v316 = vunpack.c.l.b16 %v239
      %v317 = vunpack.c.l.b16 %v240
      %v318 = vunpack.c.l.b16 %v241
      %v319 = vunpack.c.l.b16 %v242
      %v320 = vunpack.c.l.b16 %v243
      %v321 = vunpack.c.l.b16 %v244
      %v322 = vunpack.c.l.b16 %v245
      %v323 = vunpack.c.l.b16 %v246
      %v324 = vunpack.c.l.b16 %v247
      %v325 = vunpack.c.l.b16 %v248
      %v326 = vunpack.c.l.b16 %v249
      %v327 = vunpack.c.l.b16 %v250
      %v328 = vunpack.c.l.b16 %v251
      %v329 = vunpack.c.l.b16 %v252
      %v330 = vunpack.c.l.b16 %v253
      %v331 = vunpack.c.l.b16 %v254
      %v332 = vunpack.c.l.b16 %v256
      %v333 = vpack.c.b16 %v297, %v296
      %v334 = vpack.c.b16 %v299, %v298
      %v335 = vpack.c.b16 %v301, %v300
      %v336 = vpack.c.b16 %v303, %v302
      %v337 = vpack.c.b16 %v305, %v304
      %v338 = vpack.c.b16 %v307, %v306
      %v339 = vpack.c.b16 %v309, %v308
      %v340 = vpack.c.b16 %v311, %v310
      %v341 = vpack.c.b16 %v313, %v312
      %v342 = vpack.c.b16 %v315, %v314
      %v343 = vpack.c.b16 %v317, %v316
      %v344 = vpack.c.b16 %v319, %v318
      %v345 = vpack.c.b16 %v321, %v320
      %v346 = vpack.c.b16 %v323, %v322
      %v347 = vpack.c.b16 %v325, %v324
      %v348 = vpack.c.b16 %v327, %v326
      %v349 = vpack.c.b16 %v329, %v328
      %v350 = vpack.c.b16 %v331, %v330
      %v351 = vpack.c.b16 %v332, %v332
      %vm352 = vsmask.f32 7424
      %v354 = vshrl.u32 %v333, 16
      %v356 = vshll.u32 %v333, 16
      %v358 = vrot.slane %v356, 1
      %v359 = vor.u32 %v354, %v358
      %v361 = vshll.u32 %v334, 16
      %v363 = vrot.slane %v361, 1
      %v364 = vsel %vm352, %v359, %v363
      %v365 = vshrl.u32 %v334, 16
      %v367 = vor.u32 %v365, %v363
      %v369 = vshll.u32 %v335, 16
      %v371 = vrot.slane %v369, 1
      %v372 = vsel %vm352, %v367, %v371
      %v373 = vshrl.u32 %v335, 16
      %v375 = vor.u32 %v373, %v371
      %v377 = vshll.u32 %v336, 16
      %v379 = vrot.slane %v377, 1
      %v380 = vsel %vm352, %v375, %v379
      %v381 = vshrl.u32 %v336, 16
      %v383 = vor.u32 %v381, %v379
      %v385 = vshll.u32 %v337, 16
      %v387 = vrot.slane %v385, 1
      %v388 = vsel %vm352, %v383, %v387
      %v389 = vshrl.u32 %v337, 16
      %v391 = vor.u32 %v389, %v387
      %v393 = vshll.u32 %v338, 16
      %v395 = vrot.slane %v393, 1
      %v396 = vsel %vm352, %v391, %v395
      %v397 = vshrl.u32 %v338, 16
      %v399 = vor.u32 %v397, %v395
      %v401 = vshll.u32 %v339, 16
      %v403 = vrot.slane %v401, 1
      %v404 = vsel %vm352, %v399, %v403
      %v405 = vshrl.u32 %v339, 16
      %v407 = vor.u32 %v405, %v403
      %v409 = vshll.u32 %v340, 16
      %v411 = vrot.slane %v409, 1
      %v412 = vsel %vm352, %v407, %v411
      %v413 = vshrl.u32 %v340, 16
      %v415 = vor.u32 %v413, %v411
      %v417 = vshll.u32 %v341, 16
      %v419 = vrot.slane %v417, 1
      %v420 = vsel %vm352, %v415, %v419
      %v421 = vshrl.u32 %v341, 16
      %v423 = vor.u32 %v421, %v419
      %v425 = vshll.u32 %v342, 16
      %v427 = vrot.slane %v425, 1
      %v428 = vsel %vm352, %v423, %v427
      %v429 = vshrl.u32 %v342, 16
      %v431 = vor.u32 %v429, %v427
      %v433 = vshll.u32 %v343, 16
      %v435 = vrot.slane %v433, 1
      %v436 = vsel %vm352, %v431, %v435
      %v437 = vshrl.u32 %v343, 16
      %v439 = vor.u32 %v437, %v435
      %v441 = vshll.u32 %v344, 16
      %v443 = vrot.slane %v441, 1
      %v444 = vsel %vm352, %v439, %v443
      %v445 = vshrl.u32 %v344, 16
      %v447 = vor.u32 %v445, %v443
      %v449 = vshll.u32 %v345, 16
      %v451 = vrot.slane %v449, 1
      %v452 = vsel %vm352, %v447, %v451
      %v453 = vshrl.u32 %v345, 16
      %v455 = vor.u32 %v453, %v451
      %v457 = vshll.u32 %v346, 16
      %v459 = vrot.slane %v457, 1
      %v460 = vsel %vm352, %v455, %v459
      %v461 = vshrl.u32 %v346, 16
      %v463 = vor.u32 %v461, %v459
      %v465 = vshll.u32 %v347, 16
      %v467 = vrot.slane %v465, 1
      %v468 = vsel %vm352, %v463, %v467
      %v469 = vshrl.u32 %v347, 16
      %v471 = vor.u32 %v469, %v467
      %v473 = vshll.u32 %v348, 16
      %v475 = vrot.slane %v473, 1
      %v476 = vsel %vm352, %v471, %v475
      %v477 = vshrl.u32 %v348, 16
      %v479 = vor.u32 %v477, %v475
      %v481 = vshll.u32 %v349, 16
      %v483 = vrot.slane %v481, 1
      %v484 = vsel %vm352, %v479, %v483
      %v485 = vshrl.u32 %v349, 16
      %v487 = vor.u32 %v485, %v483
      %v489 = vshll.u32 %v350, 16
      %v491 = vrot.slane %v489, 1
      %v492 = vsel %vm352, %v487, %v491
      %v493 = vshrl.u32 %v350, 16
      %v495 = vor.u32 %v493, %v491
      %v497 = vshll.u32 %v351, 16
      %v499 = vrot.slane %v497, 1
      %v500 = vsel %vm352, %v495, %v499
      %vm501 = vcmask 64512
      %v503 = vsel %vm501, %v364, 0
      %v506 = vsel %vm501, %v372, 0
      %v509 = vsel %vm501, %v380, 0
      %v512 = vsel %vm501, %v388, 0
      %v515 = vsel %vm501, %v396, 0
      %v518 = vsel %vm501, %v404, 0
      %v521 = vsel %vm501, %v412, 0
      %v524 = vsel %vm501, %v420, 0
      %v527 = vsel %vm501, %v428, 0
      %v530 = vsel %vm501, %v436, 0
      %v533 = vsel %vm501, %v444, 0
      %v536 = vsel %vm501, %v452, 0
      %v539 = vsel %vm501, %v460, 0
      %v542 = vsel %vm501, %v468, 0
      %v545 = vsel %vm501, %v476, 0
      %v548 = vsel %vm501, %v484, 0
      %v551 = vsel %vm501, %v492, 0
      %v554 = vsel %vm501, %v500, 0
      %vm556 = vcmask 1043456
      %v558 = vsel %vm556, %v258, 0
      %560 = vmatpush.bf16.msra.mxu0 0
      %561 = vmatpush.bf16.msra.mxu0 0
      %562 = vmatpush.bf16.msra.mxu0 0
      %563 = vmatpush.bf16.msra.mxu0 0
      %564 = vmatpush.bf16.msra.mxu0 0
      %565 = vmatpush.bf16.msra.mxu0 0
      %566 = vmatpush.bf16.msra.mxu0 0
      %567 = vmatpush.bf16.msra.mxu0 %v558
      %568 = vmatmul.bf16.gmra.mxu0 %v503
      %v569 = vpop.f32.mrf.mxu0
      %v570 = vadd.f32 0.0, %v569
      %v571 = vpop.f32.mrf.mxu0
      %v572 = vadd.f32 0.0, %v571
      %573 = vmatmul.bf16.gmra.mxu0 %v506
      %v574 = vpop.f32.mrf.mxu0
      %v575 = vadd.f32 0.0, %v574
      %v576 = vpop.f32.mrf.mxu0
      %v577 = vadd.f32 0.0, %v576
      %578 = vmatmul.bf16.gmra.mxu0 %v509
      %v579 = vpop.f32.mrf.mxu0
      %v580 = vadd.f32 0.0, %v579
      %v581 = vpop.f32.mrf.mxu0
      %v582 = vadd.f32 0.0, %v581
      %583 = vmatmul.bf16.gmra.mxu0 %v512
      %v584 = vpop.f32.mrf.mxu0
      %v585 = vadd.f32 0.0, %v584
      %v586 = vpop.f32.mrf.mxu0
      %v587 = vadd.f32 0.0, %v586
      %588 = vmatmul.bf16.gmra.mxu0 %v515
      %v589 = vpop.f32.mrf.mxu0
      %v590 = vadd.f32 0.0, %v589
      %v591 = vpop.f32.mrf.mxu0
      %v592 = vadd.f32 0.0, %v591
      %593 = vmatmul.bf16.gmra.mxu0 %v518
      %v594 = vpop.f32.mrf.mxu0
      %v595 = vadd.f32 0.0, %v594
      %v596 = vpop.f32.mrf.mxu0
      %v597 = vadd.f32 0.0, %v596
      %598 = vmatmul.bf16.gmra.mxu0 %v521
      %v599 = vpop.f32.mrf.mxu0
      %v600 = vadd.f32 0.0, %v599
      %v601 = vpop.f32.mrf.mxu0
      %v602 = vadd.f32 0.0, %v601
      %603 = vmatmul.bf16.gmra.mxu0 %v524
      %v604 = vpop.f32.mrf.mxu0
      %v605 = vadd.f32 0.0, %v604
      %v606 = vpop.f32.mrf.mxu0
      %v607 = vadd.f32 0.0, %v606
      %608 = vmatmul.bf16.gmra.mxu0 %v527
      %v609 = vpop.f32.mrf.mxu0
      %v610 = vadd.f32 0.0, %v609
      %v611 = vpop.f32.mrf.mxu0
      %v612 = vadd.f32 0.0, %v611
      %613 = vmatmul.bf16.gmra.mxu0 %v530
      %v614 = vpop.f32.mrf.mxu0
      %v615 = vadd.f32 0.0, %v614
      %v616 = vpop.f32.mrf.mxu0
      %v617 = vadd.f32 0.0, %v616
      %618 = vmatmul.bf16.gmra.mxu0 %v533
      %v619 = vpop.f32.mrf.mxu0
      %v620 = vadd.f32 0.0, %v619
      %v621 = vpop.f32.mrf.mxu0
      %v622 = vadd.f32 0.0, %v621
      %623 = vmatmul.bf16.gmra.mxu0 %v536
      %v624 = vpop.f32.mrf.mxu0
      %v625 = vadd.f32 0.0, %v624
      %v626 = vpop.f32.mrf.mxu0
      %v627 = vadd.f32 0.0, %v626
      %628 = vmatmul.bf16.gmra.mxu0 %v539
      %v629 = vpop.f32.mrf.mxu0
      %v630 = vadd.f32 0.0, %v629
      %v631 = vpop.f32.mrf.mxu0
      %v632 = vadd.f32 0.0, %v631
      %633 = vmatmul.bf16.gmra.mxu0 %v542
      %v634 = vpop.f32.mrf.mxu0
      %v635 = vadd.f32 0.0, %v634
      %v636 = vpop.f32.mrf.mxu0
      %v637 = vadd.f32 0.0, %v636
      %638 = vmatmul.bf16.gmra.mxu0 %v545
      %v639 = vpop.f32.mrf.mxu0
      %v640 = vadd.f32 0.0, %v639
      %v641 = vpop.f32.mrf.mxu0
      %v642 = vadd.f32 0.0, %v641
      %643 = vmatmul.bf16.gmra.mxu0 %v548
      %v644 = vpop.f32.mrf.mxu0
      %v645 = vadd.f32 0.0, %v644
      %v646 = vpop.f32.mrf.mxu0
      %v647 = vadd.f32 0.0, %v646
      %648 = vmatmul.bf16.gmra.mxu0 %v551
      %v649 = vpop.f32.mrf.mxu0
      %v650 = vadd.f32 0.0, %v649
      %v651 = vpop.f32.mrf.mxu0
      %v652 = vadd.f32 0.0, %v651
      %653 = vmatmul.bf16.gmra.mxu0 %v554
      %v654 = vpop.f32.mrf.mxu0
      %v655 = vadd.f32 0.0, %v654
      %v656 = vpop.f32.mrf.mxu0
      %v657 = vadd.f32 0.0, %v656
      %658 = vdwg.mxu0
      %v659 = vsel %vm501, %v333, 0
      %v661 = vsel %vm501, %v334, 0
      %v663 = vsel %vm501, %v335, 0
      %v665 = vsel %vm501, %v336, 0
      %v667 = vsel %vm501, %v337, 0
      %v669 = vsel %vm501, %v338, 0
      %v671 = vsel %vm501, %v339, 0
      %v673 = vsel %vm501, %v340, 0
      %v675 = vsel %vm501, %v341, 0
      %v677 = vsel %vm501, %v342, 0
      %v679 = vsel %vm501, %v343, 0
      %v681 = vsel %vm501, %v344, 0
      %v683 = vsel %vm501, %v345, 0
      %v685 = vsel %vm501, %v346, 0
      %v687 = vsel %vm501, %v347, 0
      %v689 = vsel %vm501, %v348, 0
      %v691 = vsel %vm501, %v349, 0
      %v693 = vsel %vm501, %v350, 0
      %v696 = vsel %vm556, %v255, 0
      %698 = vmatpush.bf16.msra.mxu0 0
      %699 = vmatpush.bf16.msra.mxu0 0
      %700 = vmatpush.bf16.msra.mxu0 0
      %701 = vmatpush.bf16.msra.mxu0 0
      %702 = vmatpush.bf16.msra.mxu0 0
      %703 = vmatpush.bf16.msra.mxu0 0
      %704 = vmatpush.bf16.msra.mxu0 0
      %705 = vmatpush.bf16.msra.mxu0 %v696
      %706 = vmatmul.bf16.gmra.mxu0 %v659
      %v707 = vpop.f32.mrf.mxu0
      %v708 = vadd.f32 %v570, %v707
      %v709 = vpop.f32.mrf.mxu0
      %v710 = vadd.f32 %v572, %v709
      %711 = vmatmul.bf16.gmra.mxu0 %v661
      %v712 = vpop.f32.mrf.mxu0
      %v713 = vadd.f32 %v575, %v712
      %v714 = vpop.f32.mrf.mxu0
      %v715 = vadd.f32 %v577, %v714
      %716 = vmatmul.bf16.gmra.mxu0 %v663
      %v717 = vpop.f32.mrf.mxu0
      %v718 = vadd.f32 %v580, %v717
      %v719 = vpop.f32.mrf.mxu0
      %v720 = vadd.f32 %v582, %v719
      %721 = vmatmul.bf16.gmra.mxu0 %v665
      %v722 = vpop.f32.mrf.mxu0
      %v723 = vadd.f32 %v585, %v722
      %v724 = vpop.f32.mrf.mxu0
      %v725 = vadd.f32 %v587, %v724
      %726 = vmatmul.bf16.gmra.mxu0 %v667
      %v727 = vpop.f32.mrf.mxu0
      %v728 = vadd.f32 %v590, %v727
      %v729 = vpop.f32.mrf.mxu0
      %v730 = vadd.f32 %v592, %v729
      %731 = vmatmul.bf16.gmra.mxu0 %v669
      %v732 = vpop.f32.mrf.mxu0
      %v733 = vadd.f32 %v595, %v732
      %v734 = vpop.f32.mrf.mxu0
      %v735 = vadd.f32 %v597, %v734
      %736 = vmatmul.bf16.gmra.mxu0 %v671
      %v737 = vpop.f32.mrf.mxu0
      %v738 = vadd.f32 %v600, %v737
      %v739 = vpop.f32.mrf.mxu0
      %v740 = vadd.f32 %v602, %v739
      %741 = vmatmul.bf16.gmra.mxu0 %v673
      %v742 = vpop.f32.mrf.mxu0
      %v743 = vadd.f32 %v605, %v742
      %v744 = vpop.f32.mrf.mxu0
      %v745 = vadd.f32 %v607, %v744
      %746 = vmatmul.bf16.gmra.mxu0 %v675
      %v747 = vpop.f32.mrf.mxu0
      %v748 = vadd.f32 %v610, %v747
      %v749 = vpop.f32.mrf.mxu0
      %v750 = vadd.f32 %v612, %v749
      %751 = vmatmul.bf16.gmra.mxu0 %v677
      %v752 = vpop.f32.mrf.mxu0
      %v753 = vadd.f32 %v615, %v752
      %v754 = vpop.f32.mrf.mxu0
      %v755 = vadd.f32 %v617, %v754
      %756 = vmatmul.bf16.gmra.mxu0 %v679
      %v757 = vpop.f32.mrf.mxu0
      %v758 = vadd.f32 %v620, %v757
      %v759 = vpop.f32.mrf.mxu0
      %v760 = vadd.f32 %v622, %v759
      %761 = vmatmul.bf16.gmra.mxu0 %v681
      %v762 = vpop.f32.mrf.mxu0
      %v763 = vadd.f32 %v625, %v762
      %v764 = vpop.f32.mrf.mxu0
      %v765 = vadd.f32 %v627, %v764
      %766 = vmatmul.bf16.gmra.mxu0 %v683
      %v767 = vpop.f32.mrf.mxu0
      %v768 = vadd.f32 %v630, %v767
      %v769 = vpop.f32.mrf.mxu0
      %v770 = vadd.f32 %v632, %v769
      %771 = vmatmul.bf16.gmra.mxu0 %v685
      %v772 = vpop.f32.mrf.mxu0
      %v773 = vadd.f32 %v635, %v772
      %v774 = vpop.f32.mrf.mxu0
      %v775 = vadd.f32 %v637, %v774
      %776 = vmatmul.bf16.gmra.mxu0 %v687
      %v777 = vpop.f32.mrf.mxu0
      %v778 = vadd.f32 %v640, %v777
      %v779 = vpop.f32.mrf.mxu0
      %v780 = vadd.f32 %v642, %v779
      %781 = vmatmul.bf16.gmra.mxu0 %v689
      %v782 = vpop.f32.mrf.mxu0
      %v783 = vadd.f32 %v645, %v782
      %v784 = vpop.f32.mrf.mxu0
      %v785 = vadd.f32 %v647, %v784
      %786 = vmatmul.bf16.gmra.mxu0 %v691
      %v787 = vpop.f32.mrf.mxu0
      %v788 = vadd.f32 %v650, %v787
      %v789 = vpop.f32.mrf.mxu0
      %v790 = vadd.f32 %v652, %v789
      %791 = vmatmul.bf16.gmra.mxu0 %v693
      %v792 = vpop.f32.mrf.mxu0
      %v793 = vadd.f32 %v655, %v792
      %v794 = vpop.f32.mrf.mxu0
      %v795 = vadd.f32 %v657, %v794
      %796 = vdwg.mxu0
      %v797 = vld [vmem:[%s207] sm:$0xe]
      %s798 = scalar_lea.vmem %s2, 8
      %v799 = vld [vmem:[%s798] sm:$0xf]
      %v801 = vunpack.c.l.b16 %v797
      %v802 = vpack.c.b16 %v297, %v801
      %vm803 = vcmask 1046528
      %v804 = vrot.slane %v802, 1
      %v805 = vrot.slane %v334, 1
      %v806 = vsel %vm803, %v804, %v805
      %v807 = vrot.slane %v335, 1
      %v808 = vsel %vm803, %v805, %v807
      %v809 = vrot.slane %v336, 1
      %v810 = vsel %vm803, %v807, %v809
      %v811 = vrot.slane %v337, 1
      %v812 = vsel %vm803, %v809, %v811
      %v813 = vrot.slane %v338, 1
      %v814 = vsel %vm803, %v811, %v813
      %v815 = vrot.slane %v339, 1
      %v816 = vsel %vm803, %v813, %v815
      %v817 = vrot.slane %v340, 1
      %v818 = vsel %vm803, %v815, %v817
      %v819 = vrot.slane %v341, 1
      %v820 = vsel %vm803, %v817, %v819
      %v821 = vrot.slane %v342, 1
      %v822 = vsel %vm803, %v819, %v821
      %v823 = vrot.slane %v343, 1
      %v824 = vsel %vm803, %v821, %v823
      %v825 = vrot.slane %v344, 1
      %v826 = vsel %vm803, %v823, %v825
      %v827 = vrot.slane %v345, 1
      %v828 = vsel %vm803, %v825, %v827
      %v829 = vrot.slane %v346, 1
      %v830 = vsel %vm803, %v827, %v829
      %v831 = vrot.slane %v347, 1
      %v832 = vsel %vm803, %v829, %v831
      %v833 = vrot.slane %v348, 1
      %v834 = vsel %vm803, %v831, %v833
      %v835 = vrot.slane %v349, 1
      %v836 = vsel %vm803, %v833, %v835
      %v837 = vrot.slane %v350, 1
      %v838 = vsel %vm803, %v835, %v837
      %v839 = vrot.slane %v351, 1
      %v840 = vsel %vm803, %v837, %v839
      %v842 = vsel %vm501, %v806, 0
      %v845 = vsel %vm501, %v808, 0
      %v848 = vsel %vm501, %v810, 0
      %v851 = vsel %vm501, %v812, 0
      %v854 = vsel %vm501, %v814, 0
      %v857 = vsel %vm501, %v816, 0
      %v860 = vsel %vm501, %v818, 0
      %v863 = vsel %vm501, %v820, 0
      %v866 = vsel %vm501, %v822, 0
      %v869 = vsel %vm501, %v824, 0
      %v872 = vsel %vm501, %v826, 0
      %v875 = vsel %vm501, %v828, 0
      %v878 = vsel %vm501, %v830, 0
      %v881 = vsel %vm501, %v832, 0
      %v884 = vsel %vm501, %v834, 0
      %v887 = vsel %vm501, %v836, 0
      %v890 = vsel %vm501, %v838, 0
      %v893 = vsel %vm501, %v840, 0
      %v896 = vsel %vm556, %v799, 0
      %898 = vmatpush.bf16.msra.mxu0 0
      %899 = vmatpush.bf16.msra.mxu0 0
      %900 = vmatpush.bf16.msra.mxu0 0
      %901 = vmatpush.bf16.msra.mxu0 0
      %902 = vmatpush.bf16.msra.mxu0 0
      %903 = vmatpush.bf16.msra.mxu0 0
      %904 = vmatpush.bf16.msra.mxu0 0
      %905 = vmatpush.bf16.msra.mxu0 %v896
      %906 = vmatmul.bf16.gmra.mxu0 %v842
      %v907 = vpop.f32.mrf.mxu0
      %v908 = vadd.f32 0.0, %v907
      %v909 = vpop.f32.mrf.mxu0
      %v910 = vadd.f32 0.0, %v909
      %911 = vmatmul.bf16.gmra.mxu0 %v845
      %v912 = vpop.f32.mrf.mxu0
      %v913 = vadd.f32 0.0, %v912
      %v914 = vpop.f32.mrf.mxu0
      %v915 = vadd.f32 0.0, %v914
      %916 = vmatmul.bf16.gmra.mxu0 %v848
      %v917 = vpop.f32.mrf.mxu0
      %v918 = vadd.f32 0.0, %v917
      %v919 = vpop.f32.mrf.mxu0
      %v920 = vadd.f32 0.0, %v919
      %921 = vmatmul.bf16.gmra.mxu0 %v851
      %v922 = vpop.f32.mrf.mxu0
      %v923 = vadd.f32 0.0, %v922
      %v924 = vpop.f32.mrf.mxu0
      %v925 = vadd.f32 0.0, %v924
      %926 = vmatmul.bf16.gmra.mxu0 %v854
      %v927 = vpop.f32.mrf.mxu0
      %v928 = vadd.f32 0.0, %v927
      %v929 = vpop.f32.mrf.mxu0
      %v930 = vadd.f32 0.0, %v929
      %931 = vmatmul.bf16.gmra.mxu0 %v857
      %v932 = vpop.f32.mrf.mxu0
      %v933 = vadd.f32 0.0, %v932
      %v934 = vpop.f32.mrf.mxu0
      %v935 = vadd.f32 0.0, %v934
      %936 = vmatmul.bf16.gmra.mxu0 %v860
      %v937 = vpop.f32.mrf.mxu0
      %v938 = vadd.f32 0.0, %v937
      %v939 = vpop.f32.mrf.mxu0
      %v940 = vadd.f32 0.0, %v939
      %941 = vmatmul.bf16.gmra.mxu0 %v863
      %v942 = vpop.f32.mrf.mxu0
      %v943 = vadd.f32 0.0, %v942
      %v944 = vpop.f32.mrf.mxu0
      %v945 = vadd.f32 0.0, %v944
      %946 = vmatmul.bf16.gmra.mxu0 %v866
      %v947 = vpop.f32.mrf.mxu0
      %v948 = vadd.f32 0.0, %v947
      %v949 = vpop.f32.mrf.mxu0
      %v950 = vadd.f32 0.0, %v949
      %951 = vmatmul.bf16.gmra.mxu0 %v869
      %v952 = vpop.f32.mrf.mxu0
      %v953 = vadd.f32 0.0, %v952
      %v954 = vpop.f32.mrf.mxu0
      %v955 = vadd.f32 0.0, %v954
      %956 = vmatmul.bf16.gmra.mxu0 %v872
      %v957 = vpop.f32.mrf.mxu0
      %v958 = vadd.f32 0.0, %v957
      %v959 = vpop.f32.mrf.mxu0
      %v960 = vadd.f32 0.0, %v959
      %961 = vmatmul.bf16.gmra.mxu0 %v875
      %v962 = vpop.f32.mrf.mxu0
      %v963 = vadd.f32 0.0, %v962
      %v964 = vpop.f32.mrf.mxu0
      %v965 = vadd.f32 0.0, %v964
      %966 = vmatmul.bf16.gmra.mxu0 %v878
      %v967 = vpop.f32.mrf.mxu0
      %v968 = vadd.f32 0.0, %v967
      %v969 = vpop.f32.mrf.mxu0
      %v970 = vadd.f32 0.0, %v969
      %971 = vmatmul.bf16.gmra.mxu0 %v881
      %v972 = vpop.f32.mrf.mxu0
      %v973 = vadd.f32 0.0, %v972
      %v974 = vpop.f32.mrf.mxu0
      %v975 = vadd.f32 0.0, %v974
      %976 = vmatmul.bf16.gmra.mxu0 %v884
      %v977 = vpop.f32.mrf.mxu0
      %v978 = vadd.f32 0.0, %v977
      %v979 = vpop.f32.mrf.mxu0
      %v980 = vadd.f32 0.0, %v979
      %981 = vmatmul.bf16.gmra.mxu0 %v887
      %v982 = vpop.f32.mrf.mxu0
      %v983 = vadd.f32 0.0, %v982
      %v984 = vpop.f32.mrf.mxu0
      %v985 = vadd.f32 0.0, %v984
      %986 = vmatmul.bf16.gmra.mxu0 %v890
      %v987 = vpop.f32.mrf.mxu0
      %v988 = vadd.f32 0.0, %v987
      %v989 = vpop.f32.mrf.mxu0
      %v990 = vadd.f32 0.0, %v989
      %991 = vmatmul.bf16.gmra.mxu0 %v893
      %v992 = vpop.f32.mrf.mxu0
      %v993 = vadd.f32 0.0, %v992
      %v994 = vpop.f32.mrf.mxu0
      %v995 = vadd.f32 0.0, %v994
      %996 = vdwg.mxu0
      %v997 = vadd.f32 %v708, %v908
      %v998 = vadd.f32 %v710, %v910
      %v999 = vadd.f32 %v713, %v913
      %v1000 = vadd.f32 %v715, %v915
      %v1001 = vadd.f32 %v718, %v918
      %v1002 = vadd.f32 %v720, %v920
      %v1003 = vadd.f32 %v723, %v923
      %v1004 = vadd.f32 %v725, %v925
      %v1005 = vadd.f32 %v728, %v928
      %v1006 = vadd.f32 %v730, %v930
      %v1007 = vadd.f32 %v733, %v933
      %v1008 = vadd.f32 %v735, %v935
      %v1009 = vadd.f32 %v738, %v938
      %v1010 = vadd.f32 %v740, %v940
      %v1011 = vadd.f32 %v743, %v943
      %v1012 = vadd.f32 %v745, %v945
      %v1013 = vadd.f32 %v748, %v948
      %v1014 = vadd.f32 %v750, %v950
      %v1015 = vadd.f32 %v753, %v953
      %v1016 = vadd.f32 %v755, %v955
      %v1017 = vadd.f32 %v758, %v958
      %v1018 = vadd.f32 %v760, %v960
      %v1019 = vadd.f32 %v763, %v963
      %v1020 = vadd.f32 %v765, %v965
      %v1021 = vadd.f32 %v768, %v968
      %v1022 = vadd.f32 %v770, %v970
      %v1023 = vadd.f32 %v773, %v973
      %v1024 = vadd.f32 %v775, %v975
      %v1025 = vadd.f32 %v778, %v978
      %v1026 = vadd.f32 %v780, %v980
      %v1027 = vadd.f32 %v783, %v983
      %v1028 = vadd.f32 %v785, %v985
      %v1029 = vadd.f32 %v788, %v988
      %v1030 = vadd.f32 %v790, %v990
      %v1031 = vadd.f32 %v793, %v993
      %v1032 = vadd.f32 %v795, %v995
      %v1033 = vld [vmem:[%s207 + $0x8] sm:$0xe]
      %v1034 = vld [vmem:[%s207 + $0xc] sm:$0xf]
      %v1035 = vld [vmem:[%s207 + $0x10] sm:$0xf]
      %v1036 = vld [vmem:[%s207 + $0x14] sm:$0xf]
      %v1037 = vld [vmem:[%s207 + $0x18] sm:$0xf]
      %v1038 = vld [vmem:[%s207 + $0x1c] sm:$0xf]
      %v1039 = vld [vmem:[%s207 + $0x20] sm:$0xf]
      %v1040 = vld [vmem:[%s207 + $0x24] sm:$0xf]
      %v1041 = vld [vmem:[%s207 + $0x28] sm:$0xf]
      %v1042 = vld [vmem:[%s207 + $0x2c] sm:$0xf]
      %v1043 = vld [vmem:[%s207 + $0x30] sm:$0xf]
      %v1044 = vld [vmem:[%s207 + $0x34] sm:$0xf]
      %v1045 = vld [vmem:[%s207 + $0x38] sm:$0xf]
      %v1046 = vld [vmem:[%s207 + $0x3c] sm:$0xf]
      %v1047 = vld [vmem:[%s207 + $0x40] sm:$0xf]
      %v1048 = vld [vmem:[%s207 + $0x44] sm:$0xf]
      %v1049 = vld [vmem:[%s207 + $0x48] sm:$0xf]
      %v1050 = vld [vmem:[%s207 + $0x4c] sm:$0xf]
      %v1051 = vld [vmem:[%s207 + $0x50] sm:$0xf]
      %v1052 = vld [vmem:[%s207 + $0x54] sm:$0xf]
      %v1053 = vld [vmem:[%s207 + $0x58] sm:$0xf]
      %v1054 = vld [vmem:[%s207 + $0x5c] sm:$0xf]
      %v1055 = vld [vmem:[%s207 + $0x60] sm:$0xf]
      %v1056 = vld [vmem:[%s207 + $0x64] sm:$0xf]
      %v1057 = vld [vmem:[%s207 + $0x68] sm:$0xf]
      %v1058 = vld [vmem:[%s207 + $0x6c] sm:$0xf]
      %v1059 = vld [vmem:[%s207 + $0x70] sm:$0xf]
      %v1060 = vld [vmem:[%s207 + $0x74] sm:$0xf]
      %v1061 = vld [vmem:[%s207 + $0x78] sm:$0xf]
      %v1062 = vld [vmem:[%s207 + $0x7c] sm:$0xf]
      %v1063 = vld [vmem:[%s207 + $0x80] sm:$0xf]
      %v1064 = vld [vmem:[%s207 + $0x84] sm:$0xf]
      %v1065 = vld [vmem:[%s207 + $0x88] sm:$0xf]
      %v1066 = vld [vmem:[%s207 + $0x8c] sm:$0xf]
      %v1067 = vld [vmem:[%s207 + $0x90] sm:$0xf]
      %v1068 = vld [vmem:[%s207 + $0x94] sm:$0xf]
      %v1069 = vld [vmem:[%s207 + $0x98] sm:$0x1]
      %s1070 = scalar_lea.vmem %s2, 12
      %v1071 = vld [vmem:[%s1070] sm:$0xf]
      %v1109 = vunpack.c.l.b16 %v1033
      %v1110 = vunpack.c.l.b16 %v1034
      %v1111 = vunpack.c.l.b16 %v1035
      %v1112 = vunpack.c.l.b16 %v1036
      %v1113 = vunpack.c.l.b16 %v1037
      %v1114 = vunpack.c.l.b16 %v1038
      %v1115 = vunpack.c.l.b16 %v1039
      %v1116 = vunpack.c.l.b16 %v1040
      %v1117 = vunpack.c.l.b16 %v1041
      %v1118 = vunpack.c.l.b16 %v1042
      %v1119 = vunpack.c.l.b16 %v1043
      %v1120 = vunpack.c.l.b16 %v1044
      %v1121 = vunpack.c.l.b16 %v1045
      %v1122 = vunpack.c.l.b16 %v1046
      %v1123 = vunpack.c.l.b16 %v1047
      %v1124 = vunpack.c.l.b16 %v1048
      %v1125 = vunpack.c.l.b16 %v1049
      %v1126 = vunpack.c.l.b16 %v1050
      %v1127 = vunpack.c.l.b16 %v1051
      %v1128 = vunpack.c.l.b16 %v1052
      %v1129 = vunpack.c.l.b16 %v1053
      %v1130 = vunpack.c.l.b16 %v1054
      %v1131 = vunpack.c.l.b16 %v1055
      %v1132 = vunpack.c.l.b16 %v1056
      %v1133 = vunpack.c.l.b16 %v1057
      %v1134 = vunpack.c.l.b16 %v1058
      %v1135 = vunpack.c.l.b16 %v1059
      %v1136 = vunpack.c.l.b16 %v1060
      %v1137 = vunpack.c.l.b16 %v1061
      %v1138 = vunpack.c.l.b16 %v1062
      %v1139 = vunpack.c.l.b16 %v1063
      %v1140 = vunpack.c.l.b16 %v1064
      %v1141 = vunpack.c.l.b16 %v1065
      %v1142 = vunpack.c.l.b16 %v1066
      %v1143 = vunpack.c.l.b16 %v1067
      %v1144 = vunpack.c.l.b16 %v1068
      %v1145 = vunpack.c.l.b16 %v1069
      %v1146 = vpack.c.b16 %v1110, %v1109
      %v1147 = vpack.c.b16 %v1112, %v1111
      %v1148 = vpack.c.b16 %v1114, %v1113
      %v1149 = vpack.c.b16 %v1116, %v1115
      %v1150 = vpack.c.b16 %v1118, %v1117
      %v1151 = vpack.c.b16 %v1120, %v1119
      %v1152 = vpack.c.b16 %v1122, %v1121
      %v1153 = vpack.c.b16 %v1124, %v1123
      %v1154 = vpack.c.b16 %v1126, %v1125
      %v1155 = vpack.c.b16 %v1128, %v1127
      %v1156 = vpack.c.b16 %v1130, %v1129
      %v1157 = vpack.c.b16 %v1132, %v1131
      %v1158 = vpack.c.b16 %v1134, %v1133
      %v1159 = vpack.c.b16 %v1136, %v1135
      %v1160 = vpack.c.b16 %v1138, %v1137
      %v1161 = vpack.c.b16 %v1140, %v1139
      %v1162 = vpack.c.b16 %v1142, %v1141
      %v1163 = vpack.c.b16 %v1144, %v1143
      %v1164 = vpack.c.b16 %v1145, %v1145
      %v1165 = vrot.slane %v1146, 1
      %v1166 = vrot.slane %v1147, 1
      %v1167 = vsel %vm803, %v1165, %v1166
      %v1168 = vrot.slane %v1148, 1
      %v1169 = vsel %vm803, %v1166, %v1168
      %v1170 = vrot.slane %v1149, 1
      %v1171 = vsel %vm803, %v1168, %v1170
      %v1172 = vrot.slane %v1150, 1
      %v1173 = vsel %vm803, %v1170, %v1172
      %v1174 = vrot.slane %v1151, 1
      %v1175 = vsel %vm803, %v1172, %v1174
      %v1176 = vrot.slane %v1152, 1
      %v1177 = vsel %vm803, %v1174, %v1176
      %v1178 = vrot.slane %v1153, 1
      %v1179 = vsel %vm803, %v1176, %v1178
      %v1180 = vrot.slane %v1154, 1
      %v1181 = vsel %vm803, %v1178, %v1180
      %v1182 = vrot.slane %v1155, 1
      %v1183 = vsel %vm803, %v1180, %v1182
      %v1184 = vrot.slane %v1156, 1
      %v1185 = vsel %vm803, %v1182, %v1184
      %v1186 = vrot.slane %v1157, 1
      %v1187 = vsel %vm803, %v1184, %v1186
      %v1188 = vrot.slane %v1158, 1
      %v1189 = vsel %vm803, %v1186, %v1188
      %v1190 = vrot.slane %v1159, 1
      %v1191 = vsel %vm803, %v1188, %v1190
      %v1192 = vrot.slane %v1160, 1
      %v1193 = vsel %vm803, %v1190, %v1192
      %v1194 = vrot.slane %v1161, 1
      %v1195 = vsel %vm803, %v1192, %v1194
      %v1196 = vrot.slane %v1162, 1
      %v1197 = vsel %vm803, %v1194, %v1196
      %v1198 = vrot.slane %v1163, 1
      %v1199 = vsel %vm803, %v1196, %v1198
      %v1200 = vrot.slane %v1164, 1
      %v1201 = vsel %vm803, %v1198, %v1200
      %v1203 = vsel %vm501, %v1167, 0
      %v1206 = vsel %vm501, %v1169, 0
      %v1209 = vsel %vm501, %v1171, 0
      %v1212 = vsel %vm501, %v1173, 0
      %v1215 = vsel %vm501, %v1175, 0
      %v1218 = vsel %vm501, %v1177, 0
      %v1221 = vsel %vm501, %v1179, 0
      %v1224 = vsel %vm501, %v1181, 0
      %v1227 = vsel %vm501, %v1183, 0
      %v1230 = vsel %vm501, %v1185, 0
      %v1233 = vsel %vm501, %v1187, 0
      %v1236 = vsel %vm501, %v1189, 0
      %v1239 = vsel %vm501, %v1191, 0
      %v1242 = vsel %vm501, %v1193, 0
      %v1245 = vsel %vm501, %v1195, 0
      %v1248 = vsel %vm501, %v1197, 0
      %v1251 = vsel %vm501, %v1199, 0
      %v1254 = vsel %vm501, %v1201, 0
      %v1257 = vsel %vm556, %v1071, 0
      %1259 = vmatpush.bf16.msra.mxu0 0
      %1260 = vmatpush.bf16.msra.mxu0 0
      %1261 = vmatpush.bf16.msra.mxu0 0
      %1262 = vmatpush.bf16.msra.mxu0 0
      %1263 = vmatpush.bf16.msra.mxu0 0
      %1264 = vmatpush.bf16.msra.mxu0 0
      %1265 = vmatpush.bf16.msra.mxu0 0
      %1266 = vmatpush.bf16.msra.mxu0 %v1257
      %1267 = vmatmul.bf16.gmra.mxu0 %v1203
      %v1268 = vpop.f32.mrf.mxu0
      %v1269 = vadd.f32 0.0, %v1268
      %v1270 = vpop.f32.mrf.mxu0
      %v1271 = vadd.f32 0.0, %v1270
      %1272 = vmatmul.bf16.gmra.mxu0 %v1206
      %v1273 = vpop.f32.mrf.mxu0
      %v1274 = vadd.f32 0.0, %v1273
      %v1275 = vpop.f32.mrf.mxu0
      %v1276 = vadd.f32 0.0, %v1275
      %1277 = vmatmul.bf16.gmra.mxu0 %v1209
      %v1278 = vpop.f32.mrf.mxu0
      %v1279 = vadd.f32 0.0, %v1278
      %v1280 = vpop.f32.mrf.mxu0
      %v1281 = vadd.f32 0.0, %v1280
      %1282 = vmatmul.bf16.gmra.mxu0 %v1212
      %v1283 = vpop.f32.mrf.mxu0
      %v1284 = vadd.f32 0.0, %v1283
      %v1285 = vpop.f32.mrf.mxu0
      %v1286 = vadd.f32 0.0, %v1285
      %1287 = vmatmul.bf16.gmra.mxu0 %v1215
      %v1288 = vpop.f32.mrf.mxu0
      %v1289 = vadd.f32 0.0, %v1288
      %v1290 = vpop.f32.mrf.mxu0
      %v1291 = vadd.f32 0.0, %v1290
      %1292 = vmatmul.bf16.gmra.mxu0 %v1218
      %v1293 = vpop.f32.mrf.mxu0
      %v1294 = vadd.f32 0.0, %v1293
      %v1295 = vpop.f32.mrf.mxu0
      %v1296 = vadd.f32 0.0, %v1295
      %1297 = vmatmul.bf16.gmra.mxu0 %v1221
      %v1298 = vpop.f32.mrf.mxu0
      %v1299 = vadd.f32 0.0, %v1298
      %v1300 = vpop.f32.mrf.mxu0
      %v1301 = vadd.f32 0.0, %v1300
      %1302 = vmatmul.bf16.gmra.mxu0 %v1224
      %v1303 = vpop.f32.mrf.mxu0
      %v1304 = vadd.f32 0.0, %v1303
      %v1305 = vpop.f32.mrf.mxu0
      %v1306 = vadd.f32 0.0, %v1305
      %1307 = vmatmul.bf16.gmra.mxu0 %v1227
      %v1308 = vpop.f32.mrf.mxu0
      %v1309 = vadd.f32 0.0, %v1308
      %v1310 = vpop.f32.mrf.mxu0
      %v1311 = vadd.f32 0.0, %v1310
      %1312 = vmatmul.bf16.gmra.mxu0 %v1230
      %v1313 = vpop.f32.mrf.mxu0
      %v1314 = vadd.f32 0.0, %v1313
      %v1315 = vpop.f32.mrf.mxu0
      %v1316 = vadd.f32 0.0, %v1315
      %1317 = vmatmul.bf16.gmra.mxu0 %v1233
      %v1318 = vpop.f32.mrf.mxu0
      %v1319 = vadd.f32 0.0, %v1318
      %v1320 = vpop.f32.mrf.mxu0
      %v1321 = vadd.f32 0.0, %v1320
      %1322 = vmatmul.bf16.gmra.mxu0 %v1236
      %v1323 = vpop.f32.mrf.mxu0
      %v1324 = vadd.f32 0.0, %v1323
      %v1325 = vpop.f32.mrf.mxu0
      %v1326 = vadd.f32 0.0, %v1325
      %1327 = vmatmul.bf16.gmra.mxu0 %v1239
      %v1328 = vpop.f32.mrf.mxu0
      %v1329 = vadd.f32 0.0, %v1328
      %v1330 = vpop.f32.mrf.mxu0
      %v1331 = vadd.f32 0.0, %v1330
      %1332 = vmatmul.bf16.gmra.mxu0 %v1242
      %v1333 = vpop.f32.mrf.mxu0
      %v1334 = vadd.f32 0.0, %v1333
      %v1335 = vpop.f32.mrf.mxu0
      %v1336 = vadd.f32 0.0, %v1335
      %1337 = vmatmul.bf16.gmra.mxu0 %v1245
      %v1338 = vpop.f32.mrf.mxu0
      %v1339 = vadd.f32 0.0, %v1338
      %v1340 = vpop.f32.mrf.mxu0
      %v1341 = vadd.f32 0.0, %v1340
      %1342 = vmatmul.bf16.gmra.mxu0 %v1248
      %v1343 = vpop.f32.mrf.mxu0
      %v1344 = vadd.f32 0.0, %v1343
      %v1345 = vpop.f32.mrf.mxu0
      %v1346 = vadd.f32 0.0, %v1345
      %1347 = vmatmul.bf16.gmra.mxu0 %v1251
      %v1348 = vpop.f32.mrf.mxu0
      %v1349 = vadd.f32 0.0, %v1348
      %v1350 = vpop.f32.mrf.mxu0
      %v1351 = vadd.f32 0.0, %v1350
      %1352 = vmatmul.bf16.gmra.mxu0 %v1254
      %v1353 = vpop.f32.mrf.mxu0
      %v1354 = vadd.f32 0.0, %v1353
      %v1355 = vpop.f32.mrf.mxu0
      %v1356 = vadd.f32 0.0, %v1355
      %1357 = vdwg.mxu0
      %v1358 = vadd.f32 %v997, %v1269
      %v1359 = vadd.f32 %v998, %v1271
      %v1360 = vadd.f32 %v999, %v1274
      %v1361 = vadd.f32 %v1000, %v1276
      %v1362 = vadd.f32 %v1001, %v1279
      %v1363 = vadd.f32 %v1002, %v1281
      %v1364 = vadd.f32 %v1003, %v1284
      %v1365 = vadd.f32 %v1004, %v1286
      %v1366 = vadd.f32 %v1005, %v1289
      %v1367 = vadd.f32 %v1006, %v1291
      %v1368 = vadd.f32 %v1007, %v1294
      %v1369 = vadd.f32 %v1008, %v1296
      %v1370 = vadd.f32 %v1009, %v1299
      %v1371 = vadd.f32 %v1010, %v1301
      %v1372 = vadd.f32 %v1011, %v1304
      %v1373 = vadd.f32 %v1012, %v1306
      %v1374 = vadd.f32 %v1013, %v1309
      %v1375 = vadd.f32 %v1014, %v1311
      %v1376 = vadd.f32 %v1015, %v1314
      %v1377 = vadd.f32 %v1016, %v1316
      %v1378 = vadd.f32 %v1017, %v1319
      %v1379 = vadd.f32 %v1018, %v1321
      %v1380 = vadd.f32 %v1019, %v1324
      %v1381 = vadd.f32 %v1020, %v1326
      %v1382 = vadd.f32 %v1021, %v1329
      %v1383 = vadd.f32 %v1022, %v1331
      %v1384 = vadd.f32 %v1023, %v1334
      %v1385 = vadd.f32 %v1024, %v1336
      %v1386 = vadd.f32 %v1025, %v1339
      %v1387 = vadd.f32 %v1026, %v1341
      %v1388 = vadd.f32 %v1027, %v1344
      %v1389 = vadd.f32 %v1028, %v1346
      %v1390 = vadd.f32 %v1029, %v1349
      %v1391 = vadd.f32 %v1030, %v1351
      %v1392 = vadd.f32 %v1031, %v1354
      %v1393 = vadd.f32 %v1032, %v1356
      %v1394 = vld [vmem:[%s207 + $0x98] sm:$0x3]
      %s1395 = scalar_lea.vmem %s2, 16
      %v1396 = vld [vmem:[%s1395] sm:$0xf]
      %v1398 = vunpack.c.l.b16 %v1394
      %v1399 = vpack.c.b16 %v1398, %v1398
      %vm1400 = vsmask.f32 6400
      %v1402 = vshrl.u32 %v1146, 16
      %v1404 = vrot.slane %v1402, 1
      %v1405 = vshll.u32 %v1146, 16
      %v1407 = vrot.slane %v1405, 2
      %v1408 = vor.u32 %v1404, %v1407
      %v1410 = vshrl.u32 %v1147, 16
      %v1412 = vrot.slane %v1410, 1
      %v1413 = vshll.u32 %v1147, 16
      %v1415 = vrot.slane %v1413, 2
      %v1416 = vor.u32 %v1412, %v1415
      %v1417 = vsel %vm1400, %v1408, %v1416
      %v1419 = vshrl.u32 %v1148, 16
      %v1421 = vrot.slane %v1419, 1
      %v1422 = vshll.u32 %v1148, 16
      %v1424 = vrot.slane %v1422, 2
      %v1425 = vor.u32 %v1421, %v1424
      %v1426 = vsel %vm1400, %v1416, %v1425
      %v1428 = vshrl.u32 %v1149, 16
      %v1430 = vrot.slane %v1428, 1
      %v1431 = vshll.u32 %v1149, 16
      %v1433 = vrot.slane %v1431, 2
      %v1434 = vor.u32 %v1430, %v1433
      %v1435 = vsel %vm1400, %v1425, %v1434
      %v1437 = vshrl.u32 %v1150, 16
      %v1439 = vrot.slane %v1437, 1
      %v1440 = vshll.u32 %v1150, 16
      %v1442 = vrot.slane %v1440, 2
      %v1443 = vor.u32 %v1439, %v1442
      %v1444 = vsel %vm1400, %v1434, %v1443
      %v1446 = vshrl.u32 %v1151, 16
      %v1448 = vrot.slane %v1446, 1
      %v1449 = vshll.u32 %v1151, 16
      %v1451 = vrot.slane %v1449, 2
      %v1452 = vor.u32 %v1448, %v1451
      %v1453 = vsel %vm1400, %v1443, %v1452
      %v1455 = vshrl.u32 %v1152, 16
      %v1457 = vrot.slane %v1455, 1
      %v1458 = vshll.u32 %v1152, 16
      %v1460 = vrot.slane %v1458, 2
      %v1461 = vor.u32 %v1457, %v1460
      %v1462 = vsel %vm1400, %v1452, %v1461
      %v1464 = vshrl.u32 %v1153, 16
      %v1466 = vrot.slane %v1464, 1
      %v1467 = vshll.u32 %v1153, 16
      %v1469 = vrot.slane %v1467, 2
      %v1470 = vor.u32 %v1466, %v1469
      %v1471 = vsel %vm1400, %v1461, %v1470
      %v1473 = vshrl.u32 %v1154, 16
      %v1475 = vrot.slane %v1473, 1
      %v1476 = vshll.u32 %v1154, 16
      %v1478 = vrot.slane %v1476, 2
      %v1479 = vor.u32 %v1475, %v1478
      %v1480 = vsel %vm1400, %v1470, %v1479
      %v1482 = vshrl.u32 %v1155, 16
      %v1484 = vrot.slane %v1482, 1
      %v1485 = vshll.u32 %v1155, 16
      %v1487 = vrot.slane %v1485, 2
      %v1488 = vor.u32 %v1484, %v1487
      %v1489 = vsel %vm1400, %v1479, %v1488
      %v1491 = vshrl.u32 %v1156, 16
      %v1493 = vrot.slane %v1491, 1
      %v1494 = vshll.u32 %v1156, 16
      %v1496 = vrot.slane %v1494, 2
      %v1497 = vor.u32 %v1493, %v1496
      %v1498 = vsel %vm1400, %v1488, %v1497
      %v1500 = vshrl.u32 %v1157, 16
      %v1502 = vrot.slane %v1500, 1
      %v1503 = vshll.u32 %v1157, 16
      %v1505 = vrot.slane %v1503, 2
      %v1506 = vor.u32 %v1502, %v1505
      %v1507 = vsel %vm1400, %v1497, %v1506
      %v1509 = vshrl.u32 %v1158, 16
      %v1511 = vrot.slane %v1509, 1
      %v1512 = vshll.u32 %v1158, 16
      %v1514 = vrot.slane %v1512, 2
      %v1515 = vor.u32 %v1511, %v1514
      %v1516 = vsel %vm1400, %v1506, %v1515
      %v1518 = vshrl.u32 %v1159, 16
      %v1520 = vrot.slane %v1518, 1
      %v1521 = vshll.u32 %v1159, 16
      %v1523 = vrot.slane %v1521, 2
      %v1524 = vor.u32 %v1520, %v1523
      %v1525 = vsel %vm1400, %v1515, %v1524
      %v1527 = vshrl.u32 %v1160, 16
      %v1529 = vrot.slane %v1527, 1
      %v1530 = vshll.u32 %v1160, 16
      %v1532 = vrot.slane %v1530, 2
      %v1533 = vor.u32 %v1529, %v1532
      %v1534 = vsel %vm1400, %v1524, %v1533
      %v1536 = vshrl.u32 %v1161, 16
      %v1538 = vrot.slane %v1536, 1
      %v1539 = vshll.u32 %v1161, 16
      %v1541 = vrot.slane %v1539, 2
      %v1542 = vor.u32 %v1538, %v1541
      %v1543 = vsel %vm1400, %v1533, %v1542
      %v1545 = vshrl.u32 %v1162, 16
      %v1547 = vrot.slane %v1545, 1
      %v1548 = vshll.u32 %v1162, 16
      %v1550 = vrot.slane %v1548, 2
      %v1551 = vor.u32 %v1547, %v1550
      %v1552 = vsel %vm1400, %v1542, %v1551
      %v1554 = vshrl.u32 %v1163, 16
      %v1556 = vrot.slane %v1554, 1
      %v1557 = vshll.u32 %v1163, 16
      %v1559 = vrot.slane %v1557, 2
      %v1560 = vor.u32 %v1556, %v1559
      %v1561 = vsel %vm1400, %v1551, %v1560
      %v1563 = vshrl.u32 %v1399, 16
      %v1565 = vrot.slane %v1563, 1
      %v1566 = vshll.u32 %v1399, 16
      %v1568 = vrot.slane %v1566, 2
      %v1569 = vor.u32 %v1565, %v1568
      %v1570 = vsel %vm1400, %v1560, %v1569
      %v1572 = vsel %vm501, %v1417, 0
      %v1575 = vsel %vm501, %v1426, 0
      %v1578 = vsel %vm501, %v1435, 0
      %v1581 = vsel %vm501, %v1444, 0
      %v1584 = vsel %vm501, %v1453, 0
      %v1587 = vsel %vm501, %v1462, 0
      %v1590 = vsel %vm501, %v1471, 0
      %v1593 = vsel %vm501, %v1480, 0
      %v1596 = vsel %vm501, %v1489, 0
      %v1599 = vsel %vm501, %v1498, 0
      %v1602 = vsel %vm501, %v1507, 0
      %v1605 = vsel %vm501, %v1516, 0
      %v1608 = vsel %vm501, %v1525, 0
      %v1611 = vsel %vm501, %v1534, 0
      %v1614 = vsel %vm501, %v1543, 0
      %v1617 = vsel %vm501, %v1552, 0
      %v1620 = vsel %vm501, %v1561, 0
      %v1623 = vsel %vm501, %v1570, 0
      %v1626 = vsel %vm556, %v1396, 0
      %1628 = vmatpush.bf16.msra.mxu0 0
      %1629 = vmatpush.bf16.msra.mxu0 0
      %1630 = vmatpush.bf16.msra.mxu0 0
      %1631 = vmatpush.bf16.msra.mxu0 0
      %1632 = vmatpush.bf16.msra.mxu0 0
      %1633 = vmatpush.bf16.msra.mxu0 0
      %1634 = vmatpush.bf16.msra.mxu0 0
      %1635 = vmatpush.bf16.msra.mxu0 %v1626
      %1636 = vmatmul.bf16.gmra.mxu0 %v1572
      %v1637 = vpop.f32.mrf.mxu0
      %v1638 = vadd.f32 0.0, %v1637
      %v1639 = vpop.f32.mrf.mxu0
      %v1640 = vadd.f32 0.0, %v1639
      %1641 = vmatmul.bf16.gmra.mxu0 %v1575
      %v1642 = vpop.f32.mrf.mxu0
      %v1643 = vadd.f32 0.0, %v1642
      %v1644 = vpop.f32.mrf.mxu0
      %v1645 = vadd.f32 0.0, %v1644
      %1646 = vmatmul.bf16.gmra.mxu0 %v1578
      %v1647 = vpop.f32.mrf.mxu0
      %v1648 = vadd.f32 0.0, %v1647
      %v1649 = vpop.f32.mrf.mxu0
      %v1650 = vadd.f32 0.0, %v1649
      %1651 = vmatmul.bf16.gmra.mxu0 %v1581
      %v1652 = vpop.f32.mrf.mxu0
      %v1653 = vadd.f32 0.0, %v1652
      %v1654 = vpop.f32.mrf.mxu0
      %v1655 = vadd.f32 0.0, %v1654
      %1656 = vmatmul.bf16.gmra.mxu0 %v1584
      %v1657 = vpop.f32.mrf.mxu0
      %v1658 = vadd.f32 0.0, %v1657
      %v1659 = vpop.f32.mrf.mxu0
      %v1660 = vadd.f32 0.0, %v1659
      %1661 = vmatmul.bf16.gmra.mxu0 %v1587
      %v1662 = vpop.f32.mrf.mxu0
      %v1663 = vadd.f32 0.0, %v1662
      %v1664 = vpop.f32.mrf.mxu0
      %v1665 = vadd.f32 0.0, %v1664
      %1666 = vmatmul.bf16.gmra.mxu0 %v1590
      %v1667 = vpop.f32.mrf.mxu0
      %v1668 = vadd.f32 0.0, %v1667
      %v1669 = vpop.f32.mrf.mxu0
      %v1670 = vadd.f32 0.0, %v1669
      %1671 = vmatmul.bf16.gmra.mxu0 %v1593
      %v1672 = vpop.f32.mrf.mxu0
      %v1673 = vadd.f32 0.0, %v1672
      %v1674 = vpop.f32.mrf.mxu0
      %v1675 = vadd.f32 0.0, %v1674
      %1676 = vmatmul.bf16.gmra.mxu0 %v1596
      %v1677 = vpop.f32.mrf.mxu0
      %v1678 = vadd.f32 0.0, %v1677
      %v1679 = vpop.f32.mrf.mxu0
      %v1680 = vadd.f32 0.0, %v1679
      %1681 = vmatmul.bf16.gmra.mxu0 %v1599
      %v1682 = vpop.f32.mrf.mxu0
      %v1683 = vadd.f32 0.0, %v1682
      %v1684 = vpop.f32.mrf.mxu0
      %v1685 = vadd.f32 0.0, %v1684
      %1686 = vmatmul.bf16.gmra.mxu0 %v1602
      %v1687 = vpop.f32.mrf.mxu0
      %v1688 = vadd.f32 0.0, %v1687
      %v1689 = vpop.f32.mrf.mxu0
      %v1690 = vadd.f32 0.0, %v1689
      %1691 = vmatmul.bf16.gmra.mxu0 %v1605
      %v1692 = vpop.f32.mrf.mxu0
      %v1693 = vadd.f32 0.0, %v1692
      %v1694 = vpop.f32.mrf.mxu0
      %v1695 = vadd.f32 0.0, %v1694
      %1696 = vmatmul.bf16.gmra.mxu0 %v1608
      %v1697 = vpop.f32.mrf.mxu0
      %v1698 = vadd.f32 0.0, %v1697
      %v1699 = vpop.f32.mrf.mxu0
      %v1700 = vadd.f32 0.0, %v1699
      %1701 = vmatmul.bf16.gmra.mxu0 %v1611
      %v1702 = vpop.f32.mrf.mxu0
      %v1703 = vadd.f32 0.0, %v1702
      %v1704 = vpop.f32.mrf.mxu0
      %v1705 = vadd.f32 0.0, %v1704
      %1706 = vmatmul.bf16.gmra.mxu0 %v1614
      %v1707 = vpop.f32.mrf.mxu0
      %v1708 = vadd.f32 0.0, %v1707
      %v1709 = vpop.f32.mrf.mxu0
      %v1710 = vadd.f32 0.0, %v1709
      %1711 = vmatmul.bf16.gmra.mxu0 %v1617
      %v1712 = vpop.f32.mrf.mxu0
      %v1713 = vadd.f32 0.0, %v1712
      %v1714 = vpop.f32.mrf.mxu0
      %v1715 = vadd.f32 0.0, %v1714
      %1716 = vmatmul.bf16.gmra.mxu0 %v1620
      %v1717 = vpop.f32.mrf.mxu0
      %v1718 = vadd.f32 0.0, %v1717
      %v1719 = vpop.f32.mrf.mxu0
      %v1720 = vadd.f32 0.0, %v1719
      %1721 = vmatmul.bf16.gmra.mxu0 %v1623
      %v1722 = vpop.f32.mrf.mxu0
      %v1723 = vadd.f32 0.0, %v1722
      %v1724 = vpop.f32.mrf.mxu0
      %v1725 = vadd.f32 0.0, %v1724
      %1726 = vdwg.mxu0
      %v1727 = vadd.f32 %v1358, %v1638
      %v1728 = vadd.f32 %v1359, %v1640
      %v1729 = vadd.f32 %v1360, %v1643
      %v1730 = vadd.f32 %v1361, %v1645
      %v1731 = vadd.f32 %v1362, %v1648
      %v1732 = vadd.f32 %v1363, %v1650
      %v1733 = vadd.f32 %v1364, %v1653
      %v1734 = vadd.f32 %v1365, %v1655
      %v1735 = vadd.f32 %v1366, %v1658
      %v1736 = vadd.f32 %v1367, %v1660
      %v1737 = vadd.f32 %v1368, %v1663
      %v1738 = vadd.f32 %v1369, %v1665
      %v1739 = vadd.f32 %v1370, %v1668
      %v1740 = vadd.f32 %v1371, %v1670
      %v1741 = vadd.f32 %v1372, %v1673
      %v1742 = vadd.f32 %v1373, %v1675
      %v1743 = vadd.f32 %v1374, %v1678
      %v1744 = vadd.f32 %v1375, %v1680
      %v1745 = vadd.f32 %v1376, %v1683
      %v1746 = vadd.f32 %v1377, %v1685
      %v1747 = vadd.f32 %v1378, %v1688
      %v1748 = vadd.f32 %v1379, %v1690
      %v1749 = vadd.f32 %v1380, %v1693
      %v1750 = vadd.f32 %v1381, %v1695
      %v1751 = vadd.f32 %v1382, %v1698
      %v1752 = vadd.f32 %v1383, %v1700
      %v1753 = vadd.f32 %v1384, %v1703
      %v1754 = vadd.f32 %v1385, %v1705
      %v1755 = vadd.f32 %v1386, %v1708
      %v1756 = vadd.f32 %v1387, %v1710
      %v1757 = vadd.f32 %v1388, %v1713
      %v1758 = vadd.f32 %v1389, %v1715
      %v1759 = vadd.f32 %v1390, %v1718
      %v1760 = vadd.f32 %v1391, %v1720
      %v1761 = vadd.f32 %v1392, %v1723
      %v1762 = vadd.f32 %v1393, %v1725
      %v1763 = vld [vmem:[%s207 + $0x8] sm:$0xc]
      %s1764 = scalar_lea.vmem %s2, 20
      %v1765 = vld [vmem:[%s1764] sm:$0xf]
      %v1767 = vunpack.c.l.b16 %v1763
      %v1768 = vpack.c.b16 %v1110, %v1767
      %vm1769 = vcmask 1045504
      %v1770 = vrot.slane %v1768, 2
      %v1771 = vrot.slane %v1147, 2
      %v1772 = vsel %vm1769, %v1770, %v1771
      %v1773 = vrot.slane %v1148, 2
      %v1774 = vsel %vm1769, %v1771, %v1773
      %v1775 = vrot.slane %v1149, 2
      %v1776 = vsel %vm1769, %v1773, %v1775
      %v1777 = vrot.slane %v1150, 2
      %v1778 = vsel %vm1769, %v1775, %v1777
      %v1779 = vrot.slane %v1151, 2
      %v1780 = vsel %vm1769, %v1777, %v1779
      %v1781 = vrot.slane %v1152, 2
      %v1782 = vsel %vm1769, %v1779, %v1781
      %v1783 = vrot.slane %v1153, 2
      %v1784 = vsel %vm1769, %v1781, %v1783
      %v1785 = vrot.slane %v1154, 2
      %v1786 = vsel %vm1769, %v1783, %v1785
      %v1787 = vrot.slane %v1155, 2
      %v1788 = vsel %vm1769, %v1785, %v1787
      %v1789 = vrot.slane %v1156, 2
      %v1790 = vsel %vm1769, %v1787, %v1789
      %v1791 = vrot.slane %v1157, 2
      %v1792 = vsel %vm1769, %v1789, %v1791
      %v1793 = vrot.slane %v1158, 2
      %v1794 = vsel %vm1769, %v1791, %v1793
      %v1795 = vrot.slane %v1159, 2
      %v1796 = vsel %vm1769, %v1793, %v1795
      %v1797 = vrot.slane %v1160, 2
      %v1798 = vsel %vm1769, %v1795, %v1797
      %v1799 = vrot.slane %v1161, 2
      %v1800 = vsel %vm1769, %v1797, %v1799
      %v1801 = vrot.slane %v1162, 2
      %v1802 = vsel %vm1769, %v1799, %v1801
      %v1803 = vrot.slane %v1163, 2
      %v1804 = vsel %vm1769, %v1801, %v1803
      %v1805 = vrot.slane %v1399, 2
      %v1806 = vsel %vm1769, %v1803, %v1805
      %v1808 = vsel %vm501, %v1772, 0
      %v1811 = vsel %vm501, %v1774, 0
      %v1814 = vsel %vm501, %v1776, 0
      %v1817 = vsel %vm501, %v1778, 0
      %v1820 = vsel %vm501, %v1780, 0
      %v1823 = vsel %vm501, %v1782, 0
      %v1826 = vsel %vm501, %v1784, 0
      %v1829 = vsel %vm501, %v1786, 0
      %v1832 = vsel %vm501, %v1788, 0
      %v1835 = vsel %vm501, %v1790, 0
      %v1838 = vsel %vm501, %v1792, 0
      %v1841 = vsel %vm501, %v1794, 0
      %v1844 = vsel %vm501, %v1796, 0
      %v1847 = vsel %vm501, %v1798, 0
      %v1850 = vsel %vm501, %v1800, 0
      %v1853 = vsel %vm501, %v1802, 0
      %v1856 = vsel %vm501, %v1804, 0
      %v1859 = vsel %vm501, %v1806, 0
      %v1862 = vsel %vm556, %v1765, 0
      %1864 = vmatpush.bf16.msra.mxu0 0
      %1865 = vmatpush.bf16.msra.mxu0 0
      %1866 = vmatpush.bf16.msra.mxu0 0
      %1867 = vmatpush.bf16.msra.mxu0 0
      %1868 = vmatpush.bf16.msra.mxu0 0
      %1869 = vmatpush.bf16.msra.mxu0 0
      %1870 = vmatpush.bf16.msra.mxu0 0
      %1871 = vmatpush.bf16.msra.mxu0 %v1862
      %1872 = vmatmul.bf16.gmra.mxu0 %v1808
      %v1873 = vpop.f32.mrf.mxu0
      %v1874 = vadd.f32 0.0, %v1873
      %v1875 = vpop.f32.mrf.mxu0
      %v1876 = vadd.f32 0.0, %v1875
      %1877 = vmatmul.bf16.gmra.mxu0 %v1811
      %v1878 = vpop.f32.mrf.mxu0
      %v1879 = vadd.f32 0.0, %v1878
      %v1880 = vpop.f32.mrf.mxu0
      %v1881 = vadd.f32 0.0, %v1880
      %1882 = vmatmul.bf16.gmra.mxu0 %v1814
      %v1883 = vpop.f32.mrf.mxu0
      %v1884 = vadd.f32 0.0, %v1883
      %v1885 = vpop.f32.mrf.mxu0
      %v1886 = vadd.f32 0.0, %v1885
      %1887 = vmatmul.bf16.gmra.mxu0 %v1817
      %v1888 = vpop.f32.mrf.mxu0
      %v1889 = vadd.f32 0.0, %v1888
      %v1890 = vpop.f32.mrf.mxu0
      %v1891 = vadd.f32 0.0, %v1890
      %1892 = vmatmul.bf16.gmra.mxu0 %v1820
      %v1893 = vpop.f32.mrf.mxu0
      %v1894 = vadd.f32 0.0, %v1893
      %v1895 = vpop.f32.mrf.mxu0
      %v1896 = vadd.f32 0.0, %v1895
      %1897 = vmatmul.bf16.gmra.mxu0 %v1823
      %v1898 = vpop.f32.mrf.mxu0
      %v1899 = vadd.f32 0.0, %v1898
      %v1900 = vpop.f32.mrf.mxu0
      %v1901 = vadd.f32 0.0, %v1900
      %1902 = vmatmul.bf16.gmra.mxu0 %v1826
      %v1903 = vpop.f32.mrf.mxu0
      %v1904 = vadd.f32 0.0, %v1903
      %v1905 = vpop.f32.mrf.mxu0
      %v1906 = vadd.f32 0.0, %v1905
      %1907 = vmatmul.bf16.gmra.mxu0 %v1829
      %v1908 = vpop.f32.mrf.mxu0
      %v1909 = vadd.f32 0.0, %v1908
      %v1910 = vpop.f32.mrf.mxu0
      %v1911 = vadd.f32 0.0, %v1910
      %1912 = vmatmul.bf16.gmra.mxu0 %v1832
      %v1913 = vpop.f32.mrf.mxu0
      %v1914 = vadd.f32 0.0, %v1913
      %v1915 = vpop.f32.mrf.mxu0
      %v1916 = vadd.f32 0.0, %v1915
      %1917 = vmatmul.bf16.gmra.mxu0 %v1835
      %v1918 = vpop.f32.mrf.mxu0
      %v1919 = vadd.f32 0.0, %v1918
      %v1920 = vpop.f32.mrf.mxu0
      %v1921 = vadd.f32 0.0, %v1920
      %1922 = vmatmul.bf16.gmra.mxu0 %v1838
      %v1923 = vpop.f32.mrf.mxu0
      %v1924 = vadd.f32 0.0, %v1923
      %v1925 = vpop.f32.mrf.mxu0
      %v1926 = vadd.f32 0.0, %v1925
      %1927 = vmatmul.bf16.gmra.mxu0 %v1841
      %v1928 = vpop.f32.mrf.mxu0
      %v1929 = vadd.f32 0.0, %v1928
      %v1930 = vpop.f32.mrf.mxu0
      %v1931 = vadd.f32 0.0, %v1930
      %1932 = vmatmul.bf16.gmra.mxu0 %v1844
      %v1933 = vpop.f32.mrf.mxu0
      %v1934 = vadd.f32 0.0, %v1933
      %v1935 = vpop.f32.mrf.mxu0
      %v1936 = vadd.f32 0.0, %v1935
      %1937 = vmatmul.bf16.gmra.mxu0 %v1847
      %v1938 = vpop.f32.mrf.mxu0
      %v1939 = vadd.f32 0.0, %v1938
      %v1940 = vpop.f32.mrf.mxu0
      %v1941 = vadd.f32 0.0, %v1940
      %1942 = vmatmul.bf16.gmra.mxu0 %v1850
      %v1943 = vpop.f32.mrf.mxu0
      %v1944 = vadd.f32 0.0, %v1943
      %v1945 = vpop.f32.mrf.mxu0
      %v1946 = vadd.f32 0.0, %v1945
      %1947 = vmatmul.bf16.gmra.mxu0 %v1853
      %v1948 = vpop.f32.mrf.mxu0
      %v1949 = vadd.f32 0.0, %v1948
      %v1950 = vpop.f32.mrf.mxu0
      %v1951 = vadd.f32 0.0, %v1950
      %1952 = vmatmul.bf16.gmra.mxu0 %v1856
      %v1953 = vpop.f32.mrf.mxu0
      %v1954 = vadd.f32 0.0, %v1953
      %v1955 = vpop.f32.mrf.mxu0
      %v1956 = vadd.f32 0.0, %v1955
      %1957 = vmatmul.bf16.gmra.mxu0 %v1859
      %v1958 = vpop.f32.mrf.mxu0
      %v1959 = vadd.f32 0.0, %v1958
      %v1960 = vpop.f32.mrf.mxu0
      %v1961 = vadd.f32 0.0, %v1960
      %1962 = vdwg.mxu0
      %v1963 = vadd.f32 %v1727, %v1874
      %v1964 = vadd.f32 %v1728, %v1876
      %v1965 = vadd.f32 %v1729, %v1879
      %v1966 = vadd.f32 %v1730, %v1881
      %v1967 = vadd.f32 %v1731, %v1884
      %v1968 = vadd.f32 %v1732, %v1886
      %v1969 = vadd.f32 %v1733, %v1889
      %v1970 = vadd.f32 %v1734, %v1891
      %v1971 = vadd.f32 %v1735, %v1894
      %v1972 = vadd.f32 %v1736, %v1896
      %v1973 = vadd.f32 %v1737, %v1899
      %v1974 = vadd.f32 %v1738, %v1901
      %v1975 = vadd.f32 %v1739, %v1904
      %v1976 = vadd.f32 %v1740, %v1906
      %v1977 = vadd.f32 %v1741, %v1909
      %v1978 = vadd.f32 %v1742, %v1911
      %v1979 = vadd.f32 %v1743, %v1914
      %v1980 = vadd.f32 %v1744, %v1916
      %v1981 = vadd.f32 %v1745, %v1919
      %v1982 = vadd.f32 %v1746, %v1921
      %v1983 = vadd.f32 %v1747, %v1924
      %v1984 = vadd.f32 %v1748, %v1926
      %v1985 = vadd.f32 %v1749, %v1929
      %v1986 = vadd.f32 %v1750, %v1931
      %v1987 = vadd.f32 %v1751, %v1934
      %v1988 = vadd.f32 %v1752, %v1936
      %v1989 = vadd.f32 %v1753, %v1939
      %v1990 = vadd.f32 %v1754, %v1941
      %v1991 = vadd.f32 %v1755, %v1944
      %v1992 = vadd.f32 %v1756, %v1946
      %v1993 = vadd.f32 %v1757, %v1949
      %v1994 = vadd.f32 %v1758, %v1951
      %v1995 = vadd.f32 %v1759, %v1954
      %v1996 = vadd.f32 %v1760, %v1956
      %v1997 = vadd.f32 %v1761, %v1959
      %v1998 = vadd.f32 %v1762, %v1961
      %v1999 = vld [vmem:[%s207 + $0x10] sm:$0xc]
      %v2000 = vld [vmem:[%s207 + $0x14] sm:$0xf]
      %v2001 = vld [vmem:[%s207 + $0x18] sm:$0xf]
      %v2002 = vld [vmem:[%s207 + $0x1c] sm:$0xf]
      %v2003 = vld [vmem:[%s207 + $0x20] sm:$0xf]
      %v2004 = vld [vmem:[%s207 + $0x24] sm:$0xf]
      %v2005 = vld [vmem:[%s207 + $0x28] sm:$0xf]
      %v2006 = vld [vmem:[%s207 + $0x2c] sm:$0xf]
      %v2007 = vld [vmem:[%s207 + $0x30] sm:$0xf]
      %v2008 = vld [vmem:[%s207 + $0x34] sm:$0xf]
      %v2009 = vld [vmem:[%s207 + $0x38] sm:$0xf]
      %v2010 = vld [vmem:[%s207 + $0x3c] sm:$0xf]
      %v2011 = vld [vmem:[%s207 + $0x40] sm:$0xf]
      %v2012 = vld [vmem:[%s207 + $0x44] sm:$0xf]
      %v2013 = vld [vmem:[%s207 + $0x48] sm:$0xf]
      %v2014 = vld [vmem:[%s207 + $0x4c] sm:$0xf]
      %v2015 = vld [vmem:[%s207 + $0x50] sm:$0xf]
      %v2016 = vld [vmem:[%s207 + $0x54] sm:$0xf]
      %v2017 = vld [vmem:[%s207 + $0x58] sm:$0xf]
      %v2018 = vld [vmem:[%s207 + $0x5c] sm:$0xf]
      %v2019 = vld [vmem:[%s207 + $0x60] sm:$0xf]
      %v2020 = vld [vmem:[%s207 + $0x64] sm:$0xf]
      %v2021 = vld [vmem:[%s207 + $0x68] sm:$0xf]
      %v2022 = vld [vmem:[%s207 + $0x6c] sm:$0xf]
      %v2023 = vld [vmem:[%s207 + $0x70] sm:$0xf]
      %v2024 = vld [vmem:[%s207 + $0x74] sm:$0xf]
      %v2025 = vld [vmem:[%s207 + $0x78] sm:$0xf]
      %v2026 = vld [vmem:[%s207 + $0x7c] sm:$0xf]
      %v2027 = vld [vmem:[%s207 + $0x80] sm:$0xf]
      %v2028 = vld [vmem:[%s207 + $0x84] sm:$0xf]
      %v2029 = vld [vmem:[%s207 + $0x88] sm:$0xf]
      %v2030 = vld [vmem:[%s207 + $0x8c] sm:$0xf]
      %v2031 = vld [vmem:[%s207 + $0x90] sm:$0xf]
      %v2032 = vld [vmem:[%s207 + $0x94] sm:$0xf]
      %v2033 = vld [vmem:[%s207 + $0x98] sm:$0xf]
      %v2034 = vld [vmem:[%s207 + $0x9c] sm:$0xf]
      %v2035 = vld [vmem:[%s207 + $0xa0] sm:$0x3]
      %s2036 = scalar_lea.vmem %s2, 24
      %v2037 = vld [vmem:[%s2036] sm:$0xf]
      %v2075 = vunpack.c.l.b16 %v1999
      %v2076 = vunpack.c.l.b16 %v2000
      %v2077 = vunpack.c.l.b16 %v2001
      %v2078 = vunpack.c.l.b16 %v2002
      %v2079 = vunpack.c.l.b16 %v2003
      %v2080 = vunpack.c.l.b16 %v2004
      %v2081 = vunpack.c.l.b16 %v2005
      %v2082 = vunpack.c.l.b16 %v2006
      %v2083 = vunpack.c.l.b16 %v2007
      %v2084 = vunpack.c.l.b16 %v2008
      %v2085 = vunpack.c.l.b16 %v2009
      %v2086 = vunpack.c.l.b16 %v2010
      %v2087 = vunpack.c.l.b16 %v2011
      %v2088 = vunpack.c.l.b16 %v2012
      %v2089 = vunpack.c.l.b16 %v2013
      %v2090 = vunpack.c.l.b16 %v2014
      %v2091 = vunpack.c.l.b16 %v2015
      %v2092 = vunpack.c.l.b16 %v2016
      %v2093 = vunpack.c.l.b16 %v2017
      %v2094 = vunpack.c.l.b16 %v2018
      %v2095 = vunpack.c.l.b16 %v2019
      %v2096 = vunpack.c.l.b16 %v2020
      %v2097 = vunpack.c.l.b16 %v2021
      %v2098 = vunpack.c.l.b16 %v2022
      %v2099 = vunpack.c.l.b16 %v2023
      %v2100 = vunpack.c.l.b16 %v2024
      %v2101 = vunpack.c.l.b16 %v2025
      %v2102 = vunpack.c.l.b16 %v2026
      %v2103 = vunpack.c.l.b16 %v2027
      %v2104 = vunpack.c.l.b16 %v2028
      %v2105 = vunpack.c.l.b16 %v2029
      %v2106 = vunpack.c.l.b16 %v2030
      %v2107 = vunpack.c.l.b16 %v2031
      %v2108 = vunpack.c.l.b16 %v2032
      %v2109 = vunpack.c.l.b16 %v2033
      %v2110 = vunpack.c.l.b16 %v2034
      %v2111 = vunpack.c.l.b16 %v2035
      %v2112 = vpack.c.b16 %v2076, %v2075
      %v2113 = vpack.c.b16 %v2078, %v2077
      %v2114 = vpack.c.b16 %v2080, %v2079
      %v2115 = vpack.c.b16 %v2082, %v2081
      %v2116 = vpack.c.b16 %v2084, %v2083
      %v2117 = vpack.c.b16 %v2086, %v2085
      %v2118 = vpack.c.b16 %v2088, %v2087
      %v2119 = vpack.c.b16 %v2090, %v2089
      %v2120 = vpack.c.b16 %v2092, %v2091
      %v2121 = vpack.c.b16 %v2094, %v2093
      %v2122 = vpack.c.b16 %v2096, %v2095
      %v2123 = vpack.c.b16 %v2098, %v2097
      %v2124 = vpack.c.b16 %v2100, %v2099
      %v2125 = vpack.c.b16 %v2102, %v2101
      %v2126 = vpack.c.b16 %v2104, %v2103
      %v2127 = vpack.c.b16 %v2106, %v2105
      %v2128 = vpack.c.b16 %v2108, %v2107
      %v2129 = vpack.c.b16 %v2110, %v2109
      %v2130 = vpack.c.b16 %v2111, %v2111
      %v2131 = vrot.slane %v2112, 2
      %v2132 = vrot.slane %v2113, 2
      %v2133 = vsel %vm1769, %v2131, %v2132
      %v2134 = vrot.slane %v2114, 2
      %v2135 = vsel %vm1769, %v2132, %v2134
      %v2136 = vrot.slane %v2115, 2
      %v2137 = vsel %vm1769, %v2134, %v2136
      %v2138 = vrot.slane %v2116, 2
      %v2139 = vsel %vm1769, %v2136, %v2138
      %v2140 = vrot.slane %v2117, 2
      %v2141 = vsel %vm1769, %v2138, %v2140
      %v2142 = vrot.slane %v2118, 2
      %v2143 = vsel %vm1769, %v2140, %v2142
      %v2144 = vrot.slane %v2119, 2
      %v2145 = vsel %vm1769, %v2142, %v2144
      %v2146 = vrot.slane %v2120, 2
      %v2147 = vsel %vm1769, %v2144, %v2146
      %v2148 = vrot.slane %v2121, 2
      %v2149 = vsel %vm1769, %v2146, %v2148
      %v2150 = vrot.slane %v2122, 2
      %v2151 = vsel %vm1769, %v2148, %v2150
      %v2152 = vrot.slane %v2123, 2
      %v2153 = vsel %vm1769, %v2150, %v2152
      %v2154 = vrot.slane %v2124, 2
      %v2155 = vsel %vm1769, %v2152, %v2154
      %v2156 = vrot.slane %v2125, 2
      %v2157 = vsel %vm1769, %v2154, %v2156
      %v2158 = vrot.slane %v2126, 2
      %v2159 = vsel %vm1769, %v2156, %v2158
      %v2160 = vrot.slane %v2127, 2
      %v2161 = vsel %vm1769, %v2158, %v2160
      %v2162 = vrot.slane %v2128, 2
      %v2163 = vsel %vm1769, %v2160, %v2162
      %v2164 = vrot.slane %v2129, 2
      %v2165 = vsel %vm1769, %v2162, %v2164
      %v2166 = vrot.slane %v2130, 2
      %v2167 = vsel %vm1769, %v2164, %v2166
      %v2169 = vsel %vm501, %v2133, 0
      %v2172 = vsel %vm501, %v2135, 0
      %v2175 = vsel %vm501, %v2137, 0
      %v2178 = vsel %vm501, %v2139, 0
      %v2181 = vsel %vm501, %v2141, 0
      %v2184 = vsel %vm501, %v2143, 0
      %v2187 = vsel %vm501, %v2145, 0
      %v2190 = vsel %vm501, %v2147, 0
      %v2193 = vsel %vm501, %v2149, 0
      %v2196 = vsel %vm501, %v2151, 0
      %v2199 = vsel %vm501, %v2153, 0
      %v2202 = vsel %vm501, %v2155, 0
      %v2205 = vsel %vm501, %v2157, 0
      %v2208 = vsel %vm501, %v2159, 0
      %v2211 = vsel %vm501, %v2161, 0
      %v2214 = vsel %vm501, %v2163, 0
      %v2217 = vsel %vm501, %v2165, 0
      %v2220 = vsel %vm501, %v2167, 0
      %v2223 = vsel %vm556, %v2037, 0
      %2225 = vmatpush.bf16.msra.mxu0 0
      %2226 = vmatpush.bf16.msra.mxu0 0
      %2227 = vmatpush.bf16.msra.mxu0 0
      %2228 = vmatpush.bf16.msra.mxu0 0
      %2229 = vmatpush.bf16.msra.mxu0 0
      %2230 = vmatpush.bf16.msra.mxu0 0
      %2231 = vmatpush.bf16.msra.mxu0 0
      %2232 = vmatpush.bf16.msra.mxu0 %v2223
      %2233 = vmatmul.bf16.gmra.mxu0 %v2169
      %v2234 = vpop.f32.mrf.mxu0
      %v2235 = vadd.f32 0.0, %v2234
      %v2236 = vpop.f32.mrf.mxu0
      %v2237 = vadd.f32 0.0, %v2236
      %2238 = vmatmul.bf16.gmra.mxu0 %v2172
      %v2239 = vpop.f32.mrf.mxu0
      %v2240 = vadd.f32 0.0, %v2239
      %v2241 = vpop.f32.mrf.mxu0
      %v2242 = vadd.f32 0.0, %v2241
      %2243 = vmatmul.bf16.gmra.mxu0 %v2175
      %v2244 = vpop.f32.mrf.mxu0
      %v2245 = vadd.f32 0.0, %v2244
      %v2246 = vpop.f32.mrf.mxu0
      %v2247 = vadd.f32 0.0, %v2246
      %2248 = vmatmul.bf16.gmra.mxu0 %v2178
      %v2249 = vpop.f32.mrf.mxu0
      %v2250 = vadd.f32 0.0, %v2249
      %v2251 = vpop.f32.mrf.mxu0
      %v2252 = vadd.f32 0.0, %v2251
      %2253 = vmatmul.bf16.gmra.mxu0 %v2181
      %v2254 = vpop.f32.mrf.mxu0
      %v2255 = vadd.f32 0.0, %v2254
      %v2256 = vpop.f32.mrf.mxu0
      %v2257 = vadd.f32 0.0, %v2256
      %2258 = vmatmul.bf16.gmra.mxu0 %v2184
      %v2259 = vpop.f32.mrf.mxu0
      %v2260 = vadd.f32 0.0, %v2259
      %v2261 = vpop.f32.mrf.mxu0
      %v2262 = vadd.f32 0.0, %v2261
      %2263 = vmatmul.bf16.gmra.mxu0 %v2187
      %v2264 = vpop.f32.mrf.mxu0
      %v2265 = vadd.f32 0.0, %v2264
      %v2266 = vpop.f32.mrf.mxu0
      %v2267 = vadd.f32 0.0, %v2266
      %2268 = vmatmul.bf16.gmra.mxu0 %v2190
      %v2269 = vpop.f32.mrf.mxu0
      %v2270 = vadd.f32 0.0, %v2269
      %v2271 = vpop.f32.mrf.mxu0
      %v2272 = vadd.f32 0.0, %v2271
      %2273 = vmatmul.bf16.gmra.mxu0 %v2193
      %v2274 = vpop.f32.mrf.mxu0
      %v2275 = vadd.f32 0.0, %v2274
      %v2276 = vpop.f32.mrf.mxu0
      %v2277 = vadd.f32 0.0, %v2276
      %2278 = vmatmul.bf16.gmra.mxu0 %v2196
      %v2279 = vpop.f32.mrf.mxu0
      %v2280 = vadd.f32 0.0, %v2279
      %v2281 = vpop.f32.mrf.mxu0
      %v2282 = vadd.f32 0.0, %v2281
      %2283 = vmatmul.bf16.gmra.mxu0 %v2199
      %v2284 = vpop.f32.mrf.mxu0
      %v2285 = vadd.f32 0.0, %v2284
      %v2286 = vpop.f32.mrf.mxu0
      %v2287 = vadd.f32 0.0, %v2286
      %2288 = vmatmul.bf16.gmra.mxu0 %v2202
      %v2289 = vpop.f32.mrf.mxu0
      %v2290 = vadd.f32 0.0, %v2289
      %v2291 = vpop.f32.mrf.mxu0
      %v2292 = vadd.f32 0.0, %v2291
      %2293 = vmatmul.bf16.gmra.mxu0 %v2205
      %v2294 = vpop.f32.mrf.mxu0
      %v2295 = vadd.f32 0.0, %v2294
      %v2296 = vpop.f32.mrf.mxu0
      %v2297 = vadd.f32 0.0, %v2296
      %2298 = vmatmul.bf16.gmra.mxu0 %v2208
      %v2299 = vpop.f32.mrf.mxu0
      %v2300 = vadd.f32 0.0, %v2299
      %v2301 = vpop.f32.mrf.mxu0
      %v2302 = vadd.f32 0.0, %v2301
      %2303 = vmatmul.bf16.gmra.mxu0 %v2211
      %v2304 = vpop.f32.mrf.mxu0
      %v2305 = vadd.f32 0.0, %v2304
      %v2306 = vpop.f32.mrf.mxu0
      %v2307 = vadd.f32 0.0, %v2306
      %2308 = vmatmul.bf16.gmra.mxu0 %v2214
      %v2309 = vpop.f32.mrf.mxu0
      %v2310 = vadd.f32 0.0, %v2309
      %v2311 = vpop.f32.mrf.mxu0
      %v2312 = vadd.f32 0.0, %v2311
      %2313 = vmatmul.bf16.gmra.mxu0 %v2217
      %v2314 = vpop.f32.mrf.mxu0
      %v2315 = vadd.f32 0.0, %v2314
      %v2316 = vpop.f32.mrf.mxu0
      %v2317 = vadd.f32 0.0, %v2316
      %2318 = vmatmul.bf16.gmra.mxu0 %v2220
      %v2319 = vpop.f32.mrf.mxu0
      %v2320 = vadd.f32 0.0, %v2319
      %v2321 = vpop.f32.mrf.mxu0
      %v2322 = vadd.f32 0.0, %v2321
      %2323 = vdwg.mxu0
      %v2324 = vadd.f32 %v1963, %v2235
      %v2325 = vadd.f32 %v1964, %v2237
      %v2326 = vadd.f32 %v1965, %v2240
      %v2327 = vadd.f32 %v1966, %v2242
      %v2328 = vadd.f32 %v1967, %v2245
      %v2329 = vadd.f32 %v1968, %v2247
      %v2330 = vadd.f32 %v1969, %v2250
      %v2331 = vadd.f32 %v1970, %v2252
      %v2332 = vadd.f32 %v1971, %v2255
      %v2333 = vadd.f32 %v1972, %v2257
      %v2334 = vadd.f32 %v1973, %v2260
      %v2335 = vadd.f32 %v1974, %v2262
      %v2336 = vadd.f32 %v1975, %v2265
      %v2337 = vadd.f32 %v1976, %v2267
      %v2338 = vadd.f32 %v1977, %v2270
      %v2339 = vadd.f32 %v1978, %v2272
      %v2340 = vadd.f32 %v1979, %v2275
      %v2341 = vadd.f32 %v1980, %v2277
      %v2342 = vadd.f32 %v1981, %v2280
      %v2343 = vadd.f32 %v1982, %v2282
      %v2344 = vadd.f32 %v1983, %v2285
      %v2345 = vadd.f32 %v1984, %v2287
      %v2346 = vadd.f32 %v1985, %v2290
      %v2347 = vadd.f32 %v1986, %v2292
      %v2348 = vadd.f32 %v1987, %v2295
      %v2349 = vadd.f32 %v1988, %v2297
      %v2350 = vadd.f32 %v1989, %v2300
      %v2351 = vadd.f32 %v1990, %v2302
      %v2352 = vadd.f32 %v1991, %v2305
      %v2353 = vadd.f32 %v1992, %v2307
      %v2354 = vadd.f32 %v1993, %v2310
      %v2355 = vadd.f32 %v1994, %v2312
      %v2356 = vadd.f32 %v1995, %v2315
      %v2357 = vadd.f32 %v1996, %v2317
      %v2358 = vadd.f32 %v1997, %v2320
      %v2359 = vadd.f32 %v1998, %v2322
      %v2360 = vld [vmem:[%s207 + $0xa0] sm:$0x7]
      %s2361 = scalar_lea.vmem %s2, 28
      %v2362 = vld [vmem:[%s2361] sm:$0xf]
      %v2364 = vunpack.c.l.b16 %v2360
      %v2365 = vpack.c.b16 %v2364, %v2364
      %vm2366 = vsmask.f32 5376
      %v2368 = vshrl.u32 %v2112, 16
      %v2370 = vrot.slane %v2368, 2
      %v2371 = vshll.u32 %v2112, 16
      %v2373 = vrot.slane %v2371, 3
      %v2374 = vor.u32 %v2370, %v2373
      %v2376 = vshrl.u32 %v2113, 16
      %v2378 = vrot.slane %v2376, 2
      %v2379 = vshll.u32 %v2113, 16
      %v2381 = vrot.slane %v2379, 3
      %v2382 = vor.u32 %v2378, %v2381
      %v2383 = vsel %vm2366, %v2374, %v2382
      %v2385 = vshrl.u32 %v2114, 16
      %v2387 = vrot.slane %v2385, 2
      %v2388 = vshll.u32 %v2114, 16
      %v2390 = vrot.slane %v2388, 3
      %v2391 = vor.u32 %v2387, %v2390
      %v2392 = vsel %vm2366, %v2382, %v2391
      %v2394 = vshrl.u32 %v2115, 16
      %v2396 = vrot.slane %v2394, 2
      %v2397 = vshll.u32 %v2115, 16
      %v2399 = vrot.slane %v2397, 3
      %v2400 = vor.u32 %v2396, %v2399
      %v2401 = vsel %vm2366, %v2391, %v2400
      %v2403 = vshrl.u32 %v2116, 16
      %v2405 = vrot.slane %v2403, 2
      %v2406 = vshll.u32 %v2116, 16
      %v2408 = vrot.slane %v2406, 3
      %v2409 = vor.u32 %v2405, %v2408
      %v2410 = vsel %vm2366, %v2400, %v2409
      %v2412 = vshrl.u32 %v2117, 16
      %v2414 = vrot.slane %v2412, 2
      %v2415 = vshll.u32 %v2117, 16
      %v2417 = vrot.slane %v2415, 3
      %v2418 = vor.u32 %v2414, %v2417
      %v2419 = vsel %vm2366, %v2409, %v2418
      %v2421 = vshrl.u32 %v2118, 16
      %v2423 = vrot.slane %v2421, 2
      %v2424 = vshll.u32 %v2118, 16
      %v2426 = vrot.slane %v2424, 3
      %v2427 = vor.u32 %v2423, %v2426
      %v2428 = vsel %vm2366, %v2418, %v2427
      %v2430 = vshrl.u32 %v2119, 16
      %v2432 = vrot.slane %v2430, 2
      %v2433 = vshll.u32 %v2119, 16
      %v2435 = vrot.slane %v2433, 3
      %v2436 = vor.u32 %v2432, %v2435
      %v2437 = vsel %vm2366, %v2427, %v2436
      %v2439 = vshrl.u32 %v2120, 16
      %v2441 = vrot.slane %v2439, 2
      %v2442 = vshll.u32 %v2120, 16
      %v2444 = vrot.slane %v2442, 3
      %v2445 = vor.u32 %v2441, %v2444
      %v2446 = vsel %vm2366, %v2436, %v2445
      %v2448 = vshrl.u32 %v2121, 16
      %v2450 = vrot.slane %v2448, 2
      %v2451 = vshll.u32 %v2121, 16
      %v2453 = vrot.slane %v2451, 3
      %v2454 = vor.u32 %v2450, %v2453
      %v2455 = vsel %vm2366, %v2445, %v2454
      %v2457 = vshrl.u32 %v2122, 16
      %v2459 = vrot.slane %v2457, 2
      %v2460 = vshll.u32 %v2122, 16
      %v2462 = vrot.slane %v2460, 3
      %v2463 = vor.u32 %v2459, %v2462
      %v2464 = vsel %vm2366, %v2454, %v2463
      %v2466 = vshrl.u32 %v2123, 16
      %v2468 = vrot.slane %v2466, 2
      %v2469 = vshll.u32 %v2123, 16
      %v2471 = vrot.slane %v2469, 3
      %v2472 = vor.u32 %v2468, %v2471
      %v2473 = vsel %vm2366, %v2463, %v2472
      %v2475 = vshrl.u32 %v2124, 16
      %v2477 = vrot.slane %v2475, 2
      %v2478 = vshll.u32 %v2124, 16
      %v2480 = vrot.slane %v2478, 3
      %v2481 = vor.u32 %v2477, %v2480
      %v2482 = vsel %vm2366, %v2472, %v2481
      %v2484 = vshrl.u32 %v2125, 16
      %v2486 = vrot.slane %v2484, 2
      %v2487 = vshll.u32 %v2125, 16
      %v2489 = vrot.slane %v2487, 3
      %v2490 = vor.u32 %v2486, %v2489
      %v2491 = vsel %vm2366, %v2481, %v2490
      %v2493 = vshrl.u32 %v2126, 16
      %v2495 = vrot.slane %v2493, 2
      %v2496 = vshll.u32 %v2126, 16
      %v2498 = vrot.slane %v2496, 3
      %v2499 = vor.u32 %v2495, %v2498
      %v2500 = vsel %vm2366, %v2490, %v2499
      %v2502 = vshrl.u32 %v2127, 16
      %v2504 = vrot.slane %v2502, 2
      %v2505 = vshll.u32 %v2127, 16
      %v2507 = vrot.slane %v2505, 3
      %v2508 = vor.u32 %v2504, %v2507
      %v2509 = vsel %vm2366, %v2499, %v2508
      %v2511 = vshrl.u32 %v2128, 16
      %v2513 = vrot.slane %v2511, 2
      %v2514 = vshll.u32 %v2128, 16
      %v2516 = vrot.slane %v2514, 3
      %v2517 = vor.u32 %v2513, %v2516
      %v2518 = vsel %vm2366, %v2508, %v2517
      %v2520 = vshrl.u32 %v2129, 16
      %v2522 = vrot.slane %v2520, 2
      %v2523 = vshll.u32 %v2129, 16
      %v2525 = vrot.slane %v2523, 3
      %v2526 = vor.u32 %v2522, %v2525
      %v2527 = vsel %vm2366, %v2517, %v2526
      %v2529 = vshrl.u32 %v2365, 16
      %v2531 = vrot.slane %v2529, 2
      %v2532 = vshll.u32 %v2365, 16
      %v2534 = vrot.slane %v2532, 3
      %v2535 = vor.u32 %v2531, %v2534
      %v2536 = vsel %vm2366, %v2526, %v2535
      %v2538 = vsel %vm501, %v2383, 0
      %v2541 = vsel %vm501, %v2392, 0
      %v2544 = vsel %vm501, %v2401, 0
      %v2547 = vsel %vm501, %v2410, 0
      %v2550 = vsel %vm501, %v2419, 0
      %v2553 = vsel %vm501, %v2428, 0
      %v2556 = vsel %vm501, %v2437, 0
      %v2559 = vsel %vm501, %v2446, 0
      %v2562 = vsel %vm501, %v2455, 0
      %v2565 = vsel %vm501, %v2464, 0
      %v2568 = vsel %vm501, %v2473, 0
      %v2571 = vsel %vm501, %v2482, 0
      %v2574 = vsel %vm501, %v2491, 0
      %v2577 = vsel %vm501, %v2500, 0
      %v2580 = vsel %vm501, %v2509, 0
      %v2583 = vsel %vm501, %v2518, 0
      %v2586 = vsel %vm501, %v2527, 0
      %v2589 = vsel %vm501, %v2536, 0
      %v2592 = vsel %vm556, %v2362, 0
      %2594 = vmatpush.bf16.msra.mxu0 0
      %2595 = vmatpush.bf16.msra.mxu0 0
      %2596 = vmatpush.bf16.msra.mxu0 0
      %2597 = vmatpush.bf16.msra.mxu0 0
      %2598 = vmatpush.bf16.msra.mxu0 0
      %2599 = vmatpush.bf16.msra.mxu0 0
      %2600 = vmatpush.bf16.msra.mxu0 0
      %2601 = vmatpush.bf16.msra.mxu0 %v2592
      %2602 = vmatmul.bf16.gmra.mxu0 %v2538
      %v2603 = vpop.f32.mrf.mxu0
      %v2604 = vadd.f32 0.0, %v2603
      %v2605 = vpop.f32.mrf.mxu0
      %v2606 = vadd.f32 0.0, %v2605
      %2607 = vmatmul.bf16.gmra.mxu0 %v2541
      %v2608 = vpop.f32.mrf.mxu0
      %v2609 = vadd.f32 0.0, %v2608
      %v2610 = vpop.f32.mrf.mxu0
      %v2611 = vadd.f32 0.0, %v2610
      %2612 = vmatmul.bf16.gmra.mxu0 %v2544
      %v2613 = vpop.f32.mrf.mxu0
      %v2614 = vadd.f32 0.0, %v2613
      %v2615 = vpop.f32.mrf.mxu0
      %v2616 = vadd.f32 0.0, %v2615
      %2617 = vmatmul.bf16.gmra.mxu0 %v2547
      %v2618 = vpop.f32.mrf.mxu0
      %v2619 = vadd.f32 0.0, %v2618
      %v2620 = vpop.f32.mrf.mxu0
      %v2621 = vadd.f32 0.0, %v2620
      %2622 = vmatmul.bf16.gmra.mxu0 %v2550
      %v2623 = vpop.f32.mrf.mxu0
      %v2624 = vadd.f32 0.0, %v2623
      %v2625 = vpop.f32.mrf.mxu0
      %v2626 = vadd.f32 0.0, %v2625
      %2627 = vmatmul.bf16.gmra.mxu0 %v2553
      %v2628 = vpop.f32.mrf.mxu0
      %v2629 = vadd.f32 0.0, %v2628
      %v2630 = vpop.f32.mrf.mxu0
      %v2631 = vadd.f32 0.0, %v2630
      %2632 = vmatmul.bf16.gmra.mxu0 %v2556
      %v2633 = vpop.f32.mrf.mxu0
      %v2634 = vadd.f32 0.0, %v2633
      %v2635 = vpop.f32.mrf.mxu0
      %v2636 = vadd.f32 0.0, %v2635
      %2637 = vmatmul.bf16.gmra.mxu0 %v2559
      %v2638 = vpop.f32.mrf.mxu0
      %v2639 = vadd.f32 0.0, %v2638
      %v2640 = vpop.f32.mrf.mxu0
      %v2641 = vadd.f32 0.0, %v2640
      %2642 = vmatmul.bf16.gmra.mxu0 %v2562
      %v2643 = vpop.f32.mrf.mxu0
      %v2644 = vadd.f32 0.0, %v2643
      %v2645 = vpop.f32.mrf.mxu0
      %v2646 = vadd.f32 0.0, %v2645
      %2647 = vmatmul.bf16.gmra.mxu0 %v2565
      %v2648 = vpop.f32.mrf.mxu0
      %v2649 = vadd.f32 0.0, %v2648
      %v2650 = vpop.f32.mrf.mxu0
      %v2651 = vadd.f32 0.0, %v2650
      %2652 = vmatmul.bf16.gmra.mxu0 %v2568
      %v2653 = vpop.f32.mrf.mxu0
      %v2654 = vadd.f32 0.0, %v2653
      %v2655 = vpop.f32.mrf.mxu0
      %v2656 = vadd.f32 0.0, %v2655
      %2657 = vmatmul.bf16.gmra.mxu0 %v2571
      %v2658 = vpop.f32.mrf.mxu0
      %v2659 = vadd.f32 0.0, %v2658
      %v2660 = vpop.f32.mrf.mxu0
      %v2661 = vadd.f32 0.0, %v2660
      %2662 = vmatmul.bf16.gmra.mxu0 %v2574
      %v2663 = vpop.f32.mrf.mxu0
      %v2664 = vadd.f32 0.0, %v2663
      %v2665 = vpop.f32.mrf.mxu0
      %v2666 = vadd.f32 0.0, %v2665
      %2667 = vmatmul.bf16.gmra.mxu0 %v2577
      %v2668 = vpop.f32.mrf.mxu0
      %v2669 = vadd.f32 0.0, %v2668
      %v2670 = vpop.f32.mrf.mxu0
      %v2671 = vadd.f32 0.0, %v2670
      %2672 = vmatmul.bf16.gmra.mxu0 %v2580
      %v2673 = vpop.f32.mrf.mxu0
      %v2674 = vadd.f32 0.0, %v2673
      %v2675 = vpop.f32.mrf.mxu0
      %v2676 = vadd.f32 0.0, %v2675
      %2677 = vmatmul.bf16.gmra.mxu0 %v2583
      %v2678 = vpop.f32.mrf.mxu0
      %v2679 = vadd.f32 0.0, %v2678
      %v2680 = vpop.f32.mrf.mxu0
      %v2681 = vadd.f32 0.0, %v2680
      %2682 = vmatmul.bf16.gmra.mxu0 %v2586
      %v2683 = vpop.f32.mrf.mxu0
      %v2684 = vadd.f32 0.0, %v2683
      %v2685 = vpop.f32.mrf.mxu0
      %v2686 = vadd.f32 0.0, %v2685
      %2687 = vmatmul.bf16.gmra.mxu0 %v2589
      %v2688 = vpop.f32.mrf.mxu0
      %v2689 = vadd.f32 0.0, %v2688
      %v2690 = vpop.f32.mrf.mxu0
      %v2691 = vadd.f32 0.0, %v2690
      %2692 = vdwg.mxu0
      %v2693 = vadd.f32 %v2324, %v2604
      %v2694 = vadd.f32 %v2325, %v2606
      %v2695 = vadd.f32 %v2326, %v2609
      %v2696 = vadd.f32 %v2327, %v2611
      %v2697 = vadd.f32 %v2328, %v2614
      %v2698 = vadd.f32 %v2329, %v2616
      %v2699 = vadd.f32 %v2330, %v2619
      %v2700 = vadd.f32 %v2331, %v2621
      %v2701 = vadd.f32 %v2332, %v2624
      %v2702 = vadd.f32 %v2333, %v2626
      %v2703 = vadd.f32 %v2334, %v2629
      %v2704 = vadd.f32 %v2335, %v2631
      %v2705 = vadd.f32 %v2336, %v2634
      %v2706 = vadd.f32 %v2337, %v2636
      %v2707 = vadd.f32 %v2338, %v2639
      %v2708 = vadd.f32 %v2339, %v2641
      %v2709 = vadd.f32 %v2340, %v2644
      %v2710 = vadd.f32 %v2341, %v2646
      %v2711 = vadd.f32 %v2342, %v2649
      %v2712 = vadd.f32 %v2343, %v2651
      %v2713 = vadd.f32 %v2344, %v2654
      %v2714 = vadd.f32 %v2345, %v2656
      %v2715 = vadd.f32 %v2346, %v2659
      %v2716 = vadd.f32 %v2347, %v2661
      %v2717 = vadd.f32 %v2348, %v2664
      %v2718 = vadd.f32 %v2349, %v2666
      %v2719 = vadd.f32 %v2350, %v2669
      %v2720 = vadd.f32 %v2351, %v2671
      %v2721 = vadd.f32 %v2352, %v2674
      %v2722 = vadd.f32 %v2353, %v2676
      %v2723 = vadd.f32 %v2354, %v2679
      %v2724 = vadd.f32 %v2355, %v2681
      %v2725 = vadd.f32 %v2356, %v2684
      %v2726 = vadd.f32 %v2357, %v2686
      %v2727 = vadd.f32 %v2358, %v2689
      %v2728 = vadd.f32 %v2359, %v2691
      %v2729 = vld [vmem:[%s207 + $0x10] sm:$0x8]
      %s2730 = scalar_lea.vmem %s2, 32
      %v2731 = vld [vmem:[%s2730] sm:$0xf]
      %v2733 = vunpack.c.l.b16 %v2729
      %v2734 = vpack.c.b16 %v2076, %v2733
      %vm2735 = vcmask 1044480
      %v2736 = vrot.slane %v2734, 3
      %v2737 = vrot.slane %v2113, 3
      %v2738 = vsel %vm2735, %v2736, %v2737
      %v2739 = vrot.slane %v2114, 3
      %v2740 = vsel %vm2735, %v2737, %v2739
      %v2741 = vrot.slane %v2115, 3
      %v2742 = vsel %vm2735, %v2739, %v2741
      %v2743 = vrot.slane %v2116, 3
      %v2744 = vsel %vm2735, %v2741, %v2743
      %v2745 = vrot.slane %v2117, 3
      %v2746 = vsel %vm2735, %v2743, %v2745
      %v2747 = vrot.slane %v2118, 3
      %v2748 = vsel %vm2735, %v2745, %v2747
      %v2749 = vrot.slane %v2119, 3
      %v2750 = vsel %vm2735, %v2747, %v2749
      %v2751 = vrot.slane %v2120, 3
      %v2752 = vsel %vm2735, %v2749, %v2751
      %v2753 = vrot.slane %v2121, 3
      %v2754 = vsel %vm2735, %v2751, %v2753
      %v2755 = vrot.slane %v2122, 3
      %v2756 = vsel %vm2735, %v2753, %v2755
      %v2757 = vrot.slane %v2123, 3
      %v2758 = vsel %vm2735, %v2755, %v2757
      %v2759 = vrot.slane %v2124, 3
      %v2760 = vsel %vm2735, %v2757, %v2759
      %v2761 = vrot.slane %v2125, 3
      %v2762 = vsel %vm2735, %v2759, %v2761
      %v2763 = vrot.slane %v2126, 3
      %v2764 = vsel %vm2735, %v2761, %v2763
      %v2765 = vrot.slane %v2127, 3
      %v2766 = vsel %vm2735, %v2763, %v2765
      %v2767 = vrot.slane %v2128, 3
      %v2768 = vsel %vm2735, %v2765, %v2767
      %v2769 = vrot.slane %v2129, 3
      %v2770 = vsel %vm2735, %v2767, %v2769
      %v2771 = vrot.slane %v2365, 3
      %v2772 = vsel %vm2735, %v2769, %v2771
      %v2774 = vsel %vm501, %v2738, 0
      %v2777 = vsel %vm501, %v2740, 0
      %v2780 = vsel %vm501, %v2742, 0
      %v2783 = vsel %vm501, %v2744, 0
      %v2786 = vsel %vm501, %v2746, 0
      %v2789 = vsel %vm501, %v2748, 0
      %v2792 = vsel %vm501, %v2750, 0
      %v2795 = vsel %vm501, %v2752, 0
      %v2798 = vsel %vm501, %v2754, 0
      %v2801 = vsel %vm501, %v2756, 0
      %v2804 = vsel %vm501, %v2758, 0
      %v2807 = vsel %vm501, %v2760, 0
      %v2810 = vsel %vm501, %v2762, 0
      %v2813 = vsel %vm501, %v2764, 0
      %v2816 = vsel %vm501, %v2766, 0
      %v2819 = vsel %vm501, %v2768, 0
      %v2822 = vsel %vm501, %v2770, 0
      %v2825 = vsel %vm501, %v2772, 0
      %v2828 = vsel %vm556, %v2731, 0
      %2830 = vmatpush.bf16.msra.mxu0 0
      %2831 = vmatpush.bf16.msra.mxu0 0
      %2832 = vmatpush.bf16.msra.mxu0 0
      %2833 = vmatpush.bf16.msra.mxu0 0
      %2834 = vmatpush.bf16.msra.mxu0 0
      %2835 = vmatpush.bf16.msra.mxu0 0
      %2836 = vmatpush.bf16.msra.mxu0 0
      %2837 = vmatpush.bf16.msra.mxu0 %v2828
      %2838 = vmatmul.bf16.gmra.mxu0 %v2774
      %v2839 = vpop.f32.mrf.mxu0
      %v2840 = vadd.f32 0.0, %v2839
      %v2841 = vpop.f32.mrf.mxu0
      %v2842 = vadd.f32 0.0, %v2841
      %2843 = vmatmul.bf16.gmra.mxu0 %v2777
      %v2844 = vpop.f32.mrf.mxu0
      %v2845 = vadd.f32 0.0, %v2844
      %v2846 = vpop.f32.mrf.mxu0
      %v2847 = vadd.f32 0.0, %v2846
      %2848 = vmatmul.bf16.gmra.mxu0 %v2780
      %v2849 = vpop.f32.mrf.mxu0
      %v2850 = vadd.f32 0.0, %v2849
      %v2851 = vpop.f32.mrf.mxu0
      %v2852 = vadd.f32 0.0, %v2851
      %2853 = vmatmul.bf16.gmra.mxu0 %v2783
      %v2854 = vpop.f32.mrf.mxu0
      %v2855 = vadd.f32 0.0, %v2854
      %v2856 = vpop.f32.mrf.mxu0
      %v2857 = vadd.f32 0.0, %v2856
      %2858 = vmatmul.bf16.gmra.mxu0 %v2786
      %v2859 = vpop.f32.mrf.mxu0
      %v2860 = vadd.f32 0.0, %v2859
      %v2861 = vpop.f32.mrf.mxu0
      %v2862 = vadd.f32 0.0, %v2861
      %2863 = vmatmul.bf16.gmra.mxu0 %v2789
      %v2864 = vpop.f32.mrf.mxu0
      %v2865 = vadd.f32 0.0, %v2864
      %v2866 = vpop.f32.mrf.mxu0
      %v2867 = vadd.f32 0.0, %v2866
      %2868 = vmatmul.bf16.gmra.mxu0 %v2792
      %v2869 = vpop.f32.mrf.mxu0
      %v2870 = vadd.f32 0.0, %v2869
      %v2871 = vpop.f32.mrf.mxu0
      %v2872 = vadd.f32 0.0, %v2871
      %2873 = vmatmul.bf16.gmra.mxu0 %v2795
      %v2874 = vpop.f32.mrf.mxu0
      %v2875 = vadd.f32 0.0, %v2874
      %v2876 = vpop.f32.mrf.mxu0
      %v2877 = vadd.f32 0.0, %v2876
      %2878 = vmatmul.bf16.gmra.mxu0 %v2798
      %v2879 = vpop.f32.mrf.mxu0
      %v2880 = vadd.f32 0.0, %v2879
      %v2881 = vpop.f32.mrf.mxu0
      %v2882 = vadd.f32 0.0, %v2881
      %2883 = vmatmul.bf16.gmra.mxu0 %v2801
      %v2884 = vpop.f32.mrf.mxu0
      %v2885 = vadd.f32 0.0, %v2884
      %v2886 = vpop.f32.mrf.mxu0
      %v2887 = vadd.f32 0.0, %v2886
      %2888 = vmatmul.bf16.gmra.mxu0 %v2804
      %v2889 = vpop.f32.mrf.mxu0
      %v2890 = vadd.f32 0.0, %v2889
      %v2891 = vpop.f32.mrf.mxu0
      %v2892 = vadd.f32 0.0, %v2891
      %2893 = vmatmul.bf16.gmra.mxu0 %v2807
      %v2894 = vpop.f32.mrf.mxu0
      %v2895 = vadd.f32 0.0, %v2894
      %v2896 = vpop.f32.mrf.mxu0
      %v2897 = vadd.f32 0.0, %v2896
      %2898 = vmatmul.bf16.gmra.mxu0 %v2810
      %v2899 = vpop.f32.mrf.mxu0
      %v2900 = vadd.f32 0.0, %v2899
      %v2901 = vpop.f32.mrf.mxu0
      %v2902 = vadd.f32 0.0, %v2901
      %2903 = vmatmul.bf16.gmra.mxu0 %v2813
      %v2904 = vpop.f32.mrf.mxu0
      %v2905 = vadd.f32 0.0, %v2904
      %v2906 = vpop.f32.mrf.mxu0
      %v2907 = vadd.f32 0.0, %v2906
      %2908 = vmatmul.bf16.gmra.mxu0 %v2816
      %v2909 = vpop.f32.mrf.mxu0
      %v2910 = vadd.f32 0.0, %v2909
      %v2911 = vpop.f32.mrf.mxu0
      %v2912 = vadd.f32 0.0, %v2911
      %2913 = vmatmul.bf16.gmra.mxu0 %v2819
      %v2914 = vpop.f32.mrf.mxu0
      %v2915 = vadd.f32 0.0, %v2914
      %v2916 = vpop.f32.mrf.mxu0
      %v2917 = vadd.f32 0.0, %v2916
      %2918 = vmatmul.bf16.gmra.mxu0 %v2822
      %v2919 = vpop.f32.mrf.mxu0
      %v2920 = vadd.f32 0.0, %v2919
      %v2921 = vpop.f32.mrf.mxu0
      %v2922 = vadd.f32 0.0, %v2921
      %2923 = vmatmul.bf16.gmra.mxu0 %v2825
      %v2924 = vpop.f32.mrf.mxu0
      %v2925 = vadd.f32 0.0, %v2924
      %v2926 = vpop.f32.mrf.mxu0
      %v2927 = vadd.f32 0.0, %v2926
      %2928 = vdwg.mxu0
      %v2929 = vadd.f32 %v2693, %v2840
      %v2930 = vadd.f32 %v2694, %v2842
      %v2931 = vadd.f32 %v2695, %v2845
      %v2932 = vadd.f32 %v2696, %v2847
      %v2933 = vadd.f32 %v2697, %v2850
      %v2934 = vadd.f32 %v2698, %v2852
      %v2935 = vadd.f32 %v2699, %v2855
      %v2936 = vadd.f32 %v2700, %v2857
      %v2937 = vadd.f32 %v2701, %v2860
      %v2938 = vadd.f32 %v2702, %v2862
      %v2939 = vadd.f32 %v2703, %v2865
      %v2940 = vadd.f32 %v2704, %v2867
      %v2941 = vadd.f32 %v2705, %v2870
      %v2942 = vadd.f32 %v2706, %v2872
      %v2943 = vadd.f32 %v2707, %v2875
      %v2944 = vadd.f32 %v2708, %v2877
      %v2945 = vadd.f32 %v2709, %v2880
      %v2946 = vadd.f32 %v2710, %v2882
      %v2947 = vadd.f32 %v2711, %v2885
      %v2948 = vadd.f32 %v2712, %v2887
      %v2949 = vadd.f32 %v2713, %v2890
      %v2950 = vadd.f32 %v2714, %v2892
      %v2951 = vadd.f32 %v2715, %v2895
      %v2952 = vadd.f32 %v2716, %v2897
      %v2953 = vadd.f32 %v2717, %v2900
      %v2954 = vadd.f32 %v2718, %v2902
      %v2955 = vadd.f32 %v2719, %v2905
      %v2956 = vadd.f32 %v2720, %v2907
      %v2957 = vadd.f32 %v2721, %v2910
      %v2958 = vadd.f32 %v2722, %v2912
      %v2959 = vadd.f32 %v2723, %v2915
      %v2960 = vadd.f32 %v2724, %v2917
      %v2961 = vadd.f32 %v2725, %v2920
      %v2962 = vadd.f32 %v2726, %v2922
      %v2963 = vadd.f32 %v2727, %v2925
      %v2964 = vadd.f32 %v2728, %v2927
      %v2965 = vld [vmem:[%s212] sm:$0xf]
      %v2966 = vld [vmem:[%s212 + $0x4] sm:$0xf]
      %v2967 = vld [vmem:[%s212 + $0x8] sm:$0xf]
      %v2968 = vld [vmem:[%s212 + $0xc] sm:$0xf]
      %v2969 = vld [vmem:[%s212 + $0x10] sm:$0xf]
      %v2970 = vld [vmem:[%s212 + $0x14] sm:$0xf]
      %v2971 = vld [vmem:[%s212 + $0x18] sm:$0xf]
      %v2972 = vld [vmem:[%s212 + $0x1c] sm:$0xf]
      %v2973 = vld [vmem:[%s212 + $0x20] sm:$0xf]
      %v2974 = vld [vmem:[%s212 + $0x24] sm:$0xf]
      %v2975 = vld [vmem:[%s212 + $0x28] sm:$0xf]
      %v2976 = vld [vmem:[%s212 + $0x2c] sm:$0xf]
      %v2977 = vld [vmem:[%s212 + $0x30] sm:$0xf]
      %v2978 = vld [vmem:[%s212 + $0x34] sm:$0xf]
      %v2979 = vld [vmem:[%s212 + $0x38] sm:$0xf]
      %v2980 = vld [vmem:[%s212 + $0x3c] sm:$0xf]
      %v2981 = vld [vmem:[%s212 + $0x40] sm:$0xf]
      %v2982 = vld [vmem:[%s212 + $0x44] sm:$0xf]
      %v2983 = vld [vmem:[%s212 + $0x48] sm:$0xf]
      %v2984 = vld [vmem:[%s212 + $0x4c] sm:$0xf]
      %v2985 = vld [vmem:[%s212 + $0x50] sm:$0xf]
      %v2986 = vld [vmem:[%s212 + $0x54] sm:$0xf]
      %v2987 = vld [vmem:[%s212 + $0x58] sm:$0xf]
      %v2988 = vld [vmem:[%s212 + $0x5c] sm:$0xf]
      %v2989 = vld [vmem:[%s212 + $0x60] sm:$0xf]
      %v2990 = vld [vmem:[%s212 + $0x64] sm:$0xf]
      %v2991 = vld [vmem:[%s212 + $0x68] sm:$0xf]
      %v2992 = vld [vmem:[%s212 + $0x6c] sm:$0xf]
      %v2993 = vld [vmem:[%s212 + $0x70] sm:$0xf]
      %v2994 = vld [vmem:[%s212 + $0x74] sm:$0xf]
      %v2995 = vld [vmem:[%s212 + $0x78] sm:$0xf]
      %v2996 = vld [vmem:[%s212 + $0x7c] sm:$0xf]
      %v2997 = vld [vmem:[%s212 + $0x80] sm:$0xf]
      %v2998 = vld [vmem:[%s212 + $0x84] sm:$0xf]
      %v2999 = vld [vmem:[%s212 + $0x88] sm:$0xf]
      %v3000 = vld [vmem:[%s212 + $0x8c] sm:$0xf]
      %s3001 = scalar_lea.vmem %s2, 36
      %v3002 = vld [vmem:[%s3001] sm:$0xf]
      %v3039 = vunpack.c.l.b16 %v2965
      %v3040 = vunpack.c.l.b16 %v2966
      %v3041 = vunpack.c.l.b16 %v2967
      %v3042 = vunpack.c.l.b16 %v2968
      %v3043 = vunpack.c.l.b16 %v2969
      %v3044 = vunpack.c.l.b16 %v2970
      %v3045 = vunpack.c.l.b16 %v2971
      %v3046 = vunpack.c.l.b16 %v2972
      %v3047 = vunpack.c.l.b16 %v2973
      %v3048 = vunpack.c.l.b16 %v2974
      %v3049 = vunpack.c.l.b16 %v2975
      %v3050 = vunpack.c.l.b16 %v2976
      %v3051 = vunpack.c.l.b16 %v2977
      %v3052 = vunpack.c.l.b16 %v2978
      %v3053 = vunpack.c.l.b16 %v2979
      %v3054 = vunpack.c.l.b16 %v2980
      %v3055 = vunpack.c.l.b16 %v2981
      %v3056 = vunpack.c.l.b16 %v2982
      %v3057 = vunpack.c.l.b16 %v2983
      %v3058 = vunpack.c.l.b16 %v2984
      %v3059 = vunpack.c.l.b16 %v2985
      %v3060 = vunpack.c.l.b16 %v2986
      %v3061 = vunpack.c.l.b16 %v2987
      %v3062 = vunpack.c.l.b16 %v2988
      %v3063 = vunpack.c.l.b16 %v2989
      %v3064 = vunpack.c.l.b16 %v2990
      %v3065 = vunpack.c.l.b16 %v2991
      %v3066 = vunpack.c.l.b16 %v2992
      %v3067 = vunpack.c.l.b16 %v2993
      %v3068 = vunpack.c.l.b16 %v2994
      %v3069 = vunpack.c.l.b16 %v2995
      %v3070 = vunpack.c.l.b16 %v2996
      %v3071 = vunpack.c.l.b16 %v2997
      %v3072 = vunpack.c.l.b16 %v2998
      %v3073 = vunpack.c.l.b16 %v2999
      %v3074 = vunpack.c.l.b16 %v3000
      %v3075 = vpack.c.b16 %v3040, %v3039
      %v3076 = vpack.c.b16 %v3042, %v3041
      %v3077 = vpack.c.b16 %v3044, %v3043
      %v3078 = vpack.c.b16 %v3046, %v3045
      %v3079 = vpack.c.b16 %v3048, %v3047
      %v3080 = vpack.c.b16 %v3050, %v3049
      %v3081 = vpack.c.b16 %v3052, %v3051
      %v3082 = vpack.c.b16 %v3054, %v3053
      %v3083 = vpack.c.b16 %v3056, %v3055
      %v3084 = vpack.c.b16 %v3058, %v3057
      %v3085 = vpack.c.b16 %v3060, %v3059
      %v3086 = vpack.c.b16 %v3062, %v3061
      %v3087 = vpack.c.b16 %v3064, %v3063
      %v3088 = vpack.c.b16 %v3066, %v3065
      %v3089 = vpack.c.b16 %v3068, %v3067
      %v3090 = vpack.c.b16 %v3070, %v3069
      %v3091 = vpack.c.b16 %v3072, %v3071
      %v3092 = vpack.c.b16 %v3074, %v3073
      %v3094 = vsel %vm501, %v3075, 0
      %v3097 = vsel %vm501, %v3076, 0
      %v3100 = vsel %vm501, %v3077, 0
      %v3103 = vsel %vm501, %v3078, 0
      %v3106 = vsel %vm501, %v3079, 0
      %v3109 = vsel %vm501, %v3080, 0
      %v3112 = vsel %vm501, %v3081, 0
      %v3115 = vsel %vm501, %v3082, 0
      %v3118 = vsel %vm501, %v3083, 0
      %v3121 = vsel %vm501, %v3084, 0
      %v3124 = vsel %vm501, %v3085, 0
      %v3127 = vsel %vm501, %v3086, 0
      %v3130 = vsel %vm501, %v3087, 0
      %v3133 = vsel %vm501, %v3088, 0
      %v3136 = vsel %vm501, %v3089, 0
      %v3139 = vsel %vm501, %v3090, 0
      %v3142 = vsel %vm501, %v3091, 0
      %v3145 = vsel %vm501, %v3092, 0
      %v3148 = vsel %vm556, %v3002, 0
      %3150 = vmatpush.bf16.msra.mxu0 0
      %3151 = vmatpush.bf16.msra.mxu0 0
      %3152 = vmatpush.bf16.msra.mxu0 0
      %3153 = vmatpush.bf16.msra.mxu0 0
      %3154 = vmatpush.bf16.msra.mxu0 0
      %3155 = vmatpush.bf16.msra.mxu0 0
      %3156 = vmatpush.bf16.msra.mxu0 0
      %3157 = vmatpush.bf16.msra.mxu0 %v3148
      %3158 = vmatmul.bf16.gmra.mxu0 %v3094
      %v3159 = vpop.f32.mrf.mxu0
      %v3160 = vadd.f32 0.0, %v3159
      %v3161 = vpop.f32.mrf.mxu0
      %v3162 = vadd.f32 0.0, %v3161
      %3163 = vmatmul.bf16.gmra.mxu0 %v3097
      %v3164 = vpop.f32.mrf.mxu0
      %v3165 = vadd.f32 0.0, %v3164
      %v3166 = vpop.f32.mrf.mxu0
      %v3167 = vadd.f32 0.0, %v3166
      %3168 = vmatmul.bf16.gmra.mxu0 %v3100
      %v3169 = vpop.f32.mrf.mxu0
      %v3170 = vadd.f32 0.0, %v3169
      %v3171 = vpop.f32.mrf.mxu0
      %v3172 = vadd.f32 0.0, %v3171
      %3173 = vmatmul.bf16.gmra.mxu0 %v3103
      %v3174 = vpop.f32.mrf.mxu0
      %v3175 = vadd.f32 0.0, %v3174
      %v3176 = vpop.f32.mrf.mxu0
      %v3177 = vadd.f32 0.0, %v3176
      %3178 = vmatmul.bf16.gmra.mxu0 %v3106
      %v3179 = vpop.f32.mrf.mxu0
      %v3180 = vadd.f32 0.0, %v3179
      %v3181 = vpop.f32.mrf.mxu0
      %v3182 = vadd.f32 0.0, %v3181
      %3183 = vmatmul.bf16.gmra.mxu0 %v3109
      %v3184 = vpop.f32.mrf.mxu0
      %v3185 = vadd.f32 0.0, %v3184
      %v3186 = vpop.f32.mrf.mxu0
      %v3187 = vadd.f32 0.0, %v3186
      %3188 = vmatmul.bf16.gmra.mxu0 %v3112
      %v3189 = vpop.f32.mrf.mxu0
      %v3190 = vadd.f32 0.0, %v3189
      %v3191 = vpop.f32.mrf.mxu0
      %v3192 = vadd.f32 0.0, %v3191
      %3193 = vmatmul.bf16.gmra.mxu0 %v3115
      %v3194 = vpop.f32.mrf.mxu0
      %v3195 = vadd.f32 0.0, %v3194
      %v3196 = vpop.f32.mrf.mxu0
      %v3197 = vadd.f32 0.0, %v3196
      %3198 = vmatmul.bf16.gmra.mxu0 %v3118
      %v3199 = vpop.f32.mrf.mxu0
      %v3200 = vadd.f32 0.0, %v3199
      %v3201 = vpop.f32.mrf.mxu0
      %v3202 = vadd.f32 0.0, %v3201
      %3203 = vmatmul.bf16.gmra.mxu0 %v3121
      %v3204 = vpop.f32.mrf.mxu0
      %v3205 = vadd.f32 0.0, %v3204
      %v3206 = vpop.f32.mrf.mxu0
      %v3207 = vadd.f32 0.0, %v3206
      %3208 = vmatmul.bf16.gmra.mxu0 %v3124
      %v3209 = vpop.f32.mrf.mxu0
      %v3210 = vadd.f32 0.0, %v3209
      %v3211 = vpop.f32.mrf.mxu0
      %v3212 = vadd.f32 0.0, %v3211
      %3213 = vmatmul.bf16.gmra.mxu0 %v3127
      %v3214 = vpop.f32.mrf.mxu0
      %v3215 = vadd.f32 0.0, %v3214
      %v3216 = vpop.f32.mrf.mxu0
      %v3217 = vadd.f32 0.0, %v3216
      %3218 = vmatmul.bf16.gmra.mxu0 %v3130
      %v3219 = vpop.f32.mrf.mxu0
      %v3220 = vadd.f32 0.0, %v3219
      %v3221 = vpop.f32.mrf.mxu0
      %v3222 = vadd.f32 0.0, %v3221
      %3223 = vmatmul.bf16.gmra.mxu0 %v3133
      %v3224 = vpop.f32.mrf.mxu0
      %v3225 = vadd.f32 0.0, %v3224
      %v3226 = vpop.f32.mrf.mxu0
      %v3227 = vadd.f32 0.0, %v3226
      %3228 = vmatmul.bf16.gmra.mxu0 %v3136
      %v3229 = vpop.f32.mrf.mxu0
      %v3230 = vadd.f32 0.0, %v3229
      %v3231 = vpop.f32.mrf.mxu0
      %v3232 = vadd.f32 0.0, %v3231
      %3233 = vmatmul.bf16.gmra.mxu0 %v3139
      %v3234 = vpop.f32.mrf.mxu0
      %v3235 = vadd.f32 0.0, %v3234
      %v3236 = vpop.f32.mrf.mxu0
      %v3237 = vadd.f32 0.0, %v3236
      %3238 = vmatmul.bf16.gmra.mxu0 %v3142
      %v3239 = vpop.f32.mrf.mxu0
      %v3240 = vadd.f32 0.0, %v3239
      %v3241 = vpop.f32.mrf.mxu0
      %v3242 = vadd.f32 0.0, %v3241
      %3243 = vmatmul.bf16.gmra.mxu0 %v3145
      %v3244 = vpop.f32.mrf.mxu0
      %v3245 = vadd.f32 0.0, %v3244
      %v3246 = vpop.f32.mrf.mxu0
      %v3247 = vadd.f32 0.0, %v3246
      %3248 = vdwg.mxu0
      %v3249 = vadd.f32 %v2929, %v3160
      %v3250 = vadd.f32 %v2930, %v3162
      %v3251 = vadd.f32 %v2931, %v3165
      %v3252 = vadd.f32 %v2932, %v3167
      %v3253 = vadd.f32 %v2933, %v3170
      %v3254 = vadd.f32 %v2934, %v3172
      %v3255 = vadd.f32 %v2935, %v3175
      %v3256 = vadd.f32 %v2936, %v3177
      %v3257 = vadd.f32 %v2937, %v3180
      %v3258 = vadd.f32 %v2938, %v3182
      %v3259 = vadd.f32 %v2939, %v3185
      %v3260 = vadd.f32 %v2940, %v3187
      %v3261 = vadd.f32 %v2941, %v3190
      %v3262 = vadd.f32 %v2942, %v3192
      %v3263 = vadd.f32 %v2943, %v3195
      %v3264 = vadd.f32 %v2944, %v3197
      %v3265 = vadd.f32 %v2945, %v3200
      %v3266 = vadd.f32 %v2946, %v3202
      %v3267 = vadd.f32 %v2947, %v3205
      %v3268 = vadd.f32 %v2948, %v3207
      %v3269 = vadd.f32 %v2949, %v3210
      %v3270 = vadd.f32 %v2950, %v3212
      %v3271 = vadd.f32 %v2951, %v3215
      %v3272 = vadd.f32 %v2952, %v3217
      %v3273 = vadd.f32 %v2953, %v3220
      %v3274 = vadd.f32 %v2954, %v3222
      %v3275 = vadd.f32 %v2955, %v3225
      %v3276 = vadd.f32 %v2956, %v3227
      %v3277 = vadd.f32 %v2957, %v3230
      %v3278 = vadd.f32 %v2958, %v3232
      %v3279 = vadd.f32 %v2959, %v3235
      %v3280 = vadd.f32 %v2960, %v3237
      %v3281 = vadd.f32 %v2961, %v3240
      %v3282 = vadd.f32 %v2962, %v3242
      %v3283 = vadd.f32 %v2963, %v3245
      %v3284 = vadd.f32 %v2964, %v3247
      %v3285 = vld [vmem:[%s212] sm:$0xf]
      %v3286 = vld [vmem:[%s212 + $0x4] sm:$0xf]
      %v3287 = vld [vmem:[%s212 + $0x8] sm:$0xf]
      %v3288 = vld [vmem:[%s212 + $0xc] sm:$0xf]
      %v3289 = vld [vmem:[%s212 + $0x10] sm:$0xf]
      %v3290 = vld [vmem:[%s212 + $0x14] sm:$0xf]
      %v3291 = vld [vmem:[%s212 + $0x18] sm:$0xf]
      %v3292 = vld [vmem:[%s212 + $0x1c] sm:$0xf]
      %v3293 = vld [vmem:[%s212 + $0x20] sm:$0xf]
      %v3294 = vld [vmem:[%s212 + $0x24] sm:$0xf]
      %v3295 = vld [vmem:[%s212 + $0x28] sm:$0xf]
      %v3296 = vld [vmem:[%s212 + $0x2c] sm:$0xf]
      %v3297 = vld [vmem:[%s212 + $0x30] sm:$0xf]
      %v3298 = vld [vmem:[%s212 + $0x34] sm:$0xf]
      %v3299 = vld [vmem:[%s212 + $0x38] sm:$0xf]
      %v3300 = vld [vmem:[%s212 + $0x3c] sm:$0xf]
      %v3301 = vld [vmem:[%s212 + $0x40] sm:$0xf]
      %v3302 = vld [vmem:[%s212 + $0x44] sm:$0xf]
      %v3303 = vld [vmem:[%s212 + $0x48] sm:$0xf]
      %v3304 = vld [vmem:[%s212 + $0x4c] sm:$0xf]
      %v3305 = vld [vmem:[%s212 + $0x50] sm:$0xf]
      %v3306 = vld [vmem:[%s212 + $0x54] sm:$0xf]
      %v3307 = vld [vmem:[%s212 + $0x58] sm:$0xf]
      %v3308 = vld [vmem:[%s212 + $0x5c] sm:$0xf]
      %v3309 = vld [vmem:[%s212 + $0x60] sm:$0xf]
      %v3310 = vld [vmem:[%s212 + $0x64] sm:$0xf]
      %v3311 = vld [vmem:[%s212 + $0x68] sm:$0xf]
      %v3312 = vld [vmem:[%s212 + $0x6c] sm:$0xf]
      %v3313 = vld [vmem:[%s212 + $0x70] sm:$0xf]
      %v3314 = vld [vmem:[%s212 + $0x74] sm:$0xf]
      %v3315 = vld [vmem:[%s212 + $0x78] sm:$0xf]
      %v3316 = vld [vmem:[%s212 + $0x7c] sm:$0xf]
      %v3317 = vld [vmem:[%s212 + $0x80] sm:$0xf]
      %v3318 = vld [vmem:[%s212 + $0x84] sm:$0xf]
      %v3319 = vld [vmem:[%s212 + $0x88] sm:$0xf]
      %v3320 = vld [vmem:[%s212 + $0x8c] sm:$0xf]
      %v3321 = vld [vmem:[%s212 + $0x90] sm:$0x1]
      %s3322 = scalar_lea.vmem %s2, 40
      %v3323 = vld [vmem:[%s3322] sm:$0xf]
      %v3361 = vunpack.c.l.b16 %v3285
      %v3362 = vunpack.c.l.b16 %v3286
      %v3363 = vunpack.c.l.b16 %v3287
      %v3364 = vunpack.c.l.b16 %v3288
      %v3365 = vunpack.c.l.b16 %v3289
      %v3366 = vunpack.c.l.b16 %v3290
      %v3367 = vunpack.c.l.b16 %v3291
      %v3368 = vunpack.c.l.b16 %v3292
      %v3369 = vunpack.c.l.b16 %v3293
      %v3370 = vunpack.c.l.b16 %v3294
      %v3371 = vunpack.c.l.b16 %v3295
      %v3372 = vunpack.c.l.b16 %v3296
      %v3373 = vunpack.c.l.b16 %v3297
      %v3374 = vunpack.c.l.b16 %v3298
      %v3375 = vunpack.c.l.b16 %v3299
      %v3376 = vunpack.c.l.b16 %v3300
      %v3377 = vunpack.c.l.b16 %v3301
      %v3378 = vunpack.c.l.b16 %v3302
      %v3379 = vunpack.c.l.b16 %v3303
      %v3380 = vunpack.c.l.b16 %v3304
      %v3381 = vunpack.c.l.b16 %v3305
      %v3382 = vunpack.c.l.b16 %v3306
      %v3383 = vunpack.c.l.b16 %v3307
      %v3384 = vunpack.c.l.b16 %v3308
      %v3385 = vunpack.c.l.b16 %v3309
      %v3386 = vunpack.c.l.b16 %v3310
      %v3387 = vunpack.c.l.b16 %v3311
      %v3388 = vunpack.c.l.b16 %v3312
      %v3389 = vunpack.c.l.b16 %v3313
      %v3390 = vunpack.c.l.b16 %v3314
      %v3391 = vunpack.c.l.b16 %v3315
      %v3392 = vunpack.c.l.b16 %v3316
      %v3393 = vunpack.c.l.b16 %v3317
      %v3394 = vunpack.c.l.b16 %v3318
      %v3395 = vunpack.c.l.b16 %v3319
      %v3396 = vunpack.c.l.b16 %v3320
      %v3397 = vunpack.c.l.b16 %v3321
      %v3398 = vpack.c.b16 %v3362, %v3361
      %v3399 = vpack.c.b16 %v3364, %v3363
      %v3400 = vpack.c.b16 %v3366, %v3365
      %v3401 = vpack.c.b16 %v3368, %v3367
      %v3402 = vpack.c.b16 %v3370, %v3369
      %v3403 = vpack.c.b16 %v3372, %v3371
      %v3404 = vpack.c.b16 %v3374, %v3373
      %v3405 = vpack.c.b16 %v3376, %v3375
      %v3406 = vpack.c.b16 %v3378, %v3377
      %v3407 = vpack.c.b16 %v3380, %v3379
      %v3408 = vpack.c.b16 %v3382, %v3381
      %v3409 = vpack.c.b16 %v3384, %v3383
      %v3410 = vpack.c.b16 %v3386, %v3385
      %v3411 = vpack.c.b16 %v3388, %v3387
      %v3412 = vpack.c.b16 %v3390, %v3389
      %v3413 = vpack.c.b16 %v3392, %v3391
      %v3414 = vpack.c.b16 %v3394, %v3393
      %v3415 = vpack.c.b16 %v3396, %v3395
      %v3416 = vpack.c.b16 %v3397, %v3397
      %v3418 = vshrl.u32 %v3398, 16
      %v3420 = vshll.u32 %v3398, 16
      %v3422 = vrot.slane %v3420, 1
      %v3423 = vor.u32 %v3418, %v3422
      %v3425 = vshll.u32 %v3399, 16
      %v3427 = vrot.slane %v3425, 1
      %v3428 = vsel %vm352, %v3423, %v3427
      %v3429 = vshrl.u32 %v3399, 16
      %v3431 = vor.u32 %v3429, %v3427
      %v3433 = vshll.u32 %v3400, 16
      %v3435 = vrot.slane %v3433, 1
      %v3436 = vsel %vm352, %v3431, %v3435
      %v3437 = vshrl.u32 %v3400, 16
      %v3439 = vor.u32 %v3437, %v3435
      %v3441 = vshll.u32 %v3401, 16
      %v3443 = vrot.slane %v3441, 1
      %v3444 = vsel %vm352, %v3439, %v3443
      %v3445 = vshrl.u32 %v3401, 16
      %v3447 = vor.u32 %v3445, %v3443
      %v3449 = vshll.u32 %v3402, 16
      %v3451 = vrot.slane %v3449, 1
      %v3452 = vsel %vm352, %v3447, %v3451
      %v3453 = vshrl.u32 %v3402, 16
      %v3455 = vor.u32 %v3453, %v3451
      %v3457 = vshll.u32 %v3403, 16
      %v3459 = vrot.slane %v3457, 1
      %v3460 = vsel %vm352, %v3455, %v3459
      %v3461 = vshrl.u32 %v3403, 16
      %v3463 = vor.u32 %v3461, %v3459
      %v3465 = vshll.u32 %v3404, 16
      %v3467 = vrot.slane %v3465, 1
      %v3468 = vsel %vm352, %v3463, %v3467
      %v3469 = vshrl.u32 %v3404, 16
      %v3471 = vor.u32 %v3469, %v3467
      %v3473 = vshll.u32 %v3405, 16
      %v3475 = vrot.slane %v3473, 1
      %v3476 = vsel %vm352, %v3471, %v3475
      %v3477 = vshrl.u32 %v3405, 16
      %v3479 = vor.u32 %v3477, %v3475
      %v3481 = vshll.u32 %v3406, 16
      %v3483 = vrot.slane %v3481, 1
      %v3484 = vsel %vm352, %v3479, %v3483
      %v3485 = vshrl.u32 %v3406, 16
      %v3487 = vor.u32 %v3485, %v3483
      %v3489 = vshll.u32 %v3407, 16
      %v3491 = vrot.slane %v3489, 1
      %v3492 = vsel %vm352, %v3487, %v3491
      %v3493 = vshrl.u32 %v3407, 16
      %v3495 = vor.u32 %v3493, %v3491
      %v3497 = vshll.u32 %v3408, 16
      %v3499 = vrot.slane %v3497, 1
      %v3500 = vsel %vm352, %v3495, %v3499
      %v3501 = vshrl.u32 %v3408, 16
      %v3503 = vor.u32 %v3501, %v3499
      %v3505 = vshll.u32 %v3409, 16
      %v3507 = vrot.slane %v3505, 1
      %v3508 = vsel %vm352, %v3503, %v3507
      %v3509 = vshrl.u32 %v3409, 16
      %v3511 = vor.u32 %v3509, %v3507
      %v3513 = vshll.u32 %v3410, 16
      %v3515 = vrot.slane %v3513, 1
      %v3516 = vsel %vm352, %v3511, %v3515
      %v3517 = vshrl.u32 %v3410, 16
      %v3519 = vor.u32 %v3517, %v3515
      %v3521 = vshll.u32 %v3411, 16
      %v3523 = vrot.slane %v3521, 1
      %v3524 = vsel %vm352, %v3519, %v3523
      %v3525 = vshrl.u32 %v3411, 16
      %v3527 = vor.u32 %v3525, %v3523
      %v3529 = vshll.u32 %v3412, 16
      %v3531 = vrot.slane %v3529, 1
      %v3532 = vsel %vm352, %v3527, %v3531
      %v3533 = vshrl.u32 %v3412, 16
      %v3535 = vor.u32 %v3533, %v3531
      %v3537 = vshll.u32 %v3413, 16
      %v3539 = vrot.slane %v3537, 1
      %v3540 = vsel %vm352, %v3535, %v3539
      %v3541 = vshrl.u32 %v3413, 16
      %v3543 = vor.u32 %v3541, %v3539
      %v3545 = vshll.u32 %v3414, 16
      %v3547 = vrot.slane %v3545, 1
      %v3548 = vsel %vm352, %v3543, %v3547
      %v3549 = vshrl.u32 %v3414, 16
      %v3551 = vor.u32 %v3549, %v3547
      %v3553 = vshll.u32 %v3415, 16
      %v3555 = vrot.slane %v3553, 1
      %v3556 = vsel %vm352, %v3551, %v3555
      %v3557 = vshrl.u32 %v3415, 16
      %v3559 = vor.u32 %v3557, %v3555
      %v3561 = vshll.u32 %v3416, 16
      %v3563 = vrot.slane %v3561, 1
      %v3564 = vsel %vm352, %v3559, %v3563
      %v3566 = vsel %vm501, %v3428, 0
      %v3569 = vsel %vm501, %v3436, 0
      %v3572 = vsel %vm501, %v3444, 0
      %v3575 = vsel %vm501, %v3452, 0
      %v3578 = vsel %vm501, %v3460, 0
      %v3581 = vsel %vm501, %v3468, 0
      %v3584 = vsel %vm501, %v3476, 0
      %v3587 = vsel %vm501, %v3484, 0
      %v3590 = vsel %vm501, %v3492, 0
      %v3593 = vsel %vm501, %v3500, 0
      %v3596 = vsel %vm501, %v3508, 0
      %v3599 = vsel %vm501, %v3516, 0
      %v3602 = vsel %vm501, %v3524, 0
      %v3605 = vsel %vm501, %v3532, 0
      %v3608 = vsel %vm501, %v3540, 0
      %v3611 = vsel %vm501, %v3548, 0
      %v3614 = vsel %vm501, %v3556, 0
      %v3617 = vsel %vm501, %v3564, 0
      %v3620 = vsel %vm556, %v3323, 0
      %3622 = vmatpush.bf16.msra.mxu0 0
      %3623 = vmatpush.bf16.msra.mxu0 0
      %3624 = vmatpush.bf16.msra.mxu0 0
      %3625 = vmatpush.bf16.msra.mxu0 0
      %3626 = vmatpush.bf16.msra.mxu0 0
      %3627 = vmatpush.bf16.msra.mxu0 0
      %3628 = vmatpush.bf16.msra.mxu0 0
      %3629 = vmatpush.bf16.msra.mxu0 %v3620
      %3630 = vmatmul.bf16.gmra.mxu0 %v3566
      %v3631 = vpop.f32.mrf.mxu0
      %v3632 = vadd.f32 0.0, %v3631
      %v3633 = vpop.f32.mrf.mxu0
      %v3634 = vadd.f32 0.0, %v3633
      %3635 = vmatmul.bf16.gmra.mxu0 %v3569
      %v3636 = vpop.f32.mrf.mxu0
      %v3637 = vadd.f32 0.0, %v3636
      %v3638 = vpop.f32.mrf.mxu0
      %v3639 = vadd.f32 0.0, %v3638
      %3640 = vmatmul.bf16.gmra.mxu0 %v3572
      %v3641 = vpop.f32.mrf.mxu0
      %v3642 = vadd.f32 0.0, %v3641
      %v3643 = vpop.f32.mrf.mxu0
      %v3644 = vadd.f32 0.0, %v3643
      %3645 = vmatmul.bf16.gmra.mxu0 %v3575
      %v3646 = vpop.f32.mrf.mxu0
      %v3647 = vadd.f32 0.0, %v3646
      %v3648 = vpop.f32.mrf.mxu0
      %v3649 = vadd.f32 0.0, %v3648
      %3650 = vmatmul.bf16.gmra.mxu0 %v3578
      %v3651 = vpop.f32.mrf.mxu0
      %v3652 = vadd.f32 0.0, %v3651
      %v3653 = vpop.f32.mrf.mxu0
      %v3654 = vadd.f32 0.0, %v3653
      %3655 = vmatmul.bf16.gmra.mxu0 %v3581
      %v3656 = vpop.f32.mrf.mxu0
      %v3657 = vadd.f32 0.0, %v3656
      %v3658 = vpop.f32.mrf.mxu0
      %v3659 = vadd.f32 0.0, %v3658
      %3660 = vmatmul.bf16.gmra.mxu0 %v3584
      %v3661 = vpop.f32.mrf.mxu0
      %v3662 = vadd.f32 0.0, %v3661
      %v3663 = vpop.f32.mrf.mxu0
      %v3664 = vadd.f32 0.0, %v3663
      %3665 = vmatmul.bf16.gmra.mxu0 %v3587
      %v3666 = vpop.f32.mrf.mxu0
      %v3667 = vadd.f32 0.0, %v3666
      %v3668 = vpop.f32.mrf.mxu0
      %v3669 = vadd.f32 0.0, %v3668
      %3670 = vmatmul.bf16.gmra.mxu0 %v3590
      %v3671 = vpop.f32.mrf.mxu0
      %v3672 = vadd.f32 0.0, %v3671
      %v3673 = vpop.f32.mrf.mxu0
      %v3674 = vadd.f32 0.0, %v3673
      %3675 = vmatmul.bf16.gmra.mxu0 %v3593
      %v3676 = vpop.f32.mrf.mxu0
      %v3677 = vadd.f32 0.0, %v3676
      %v3678 = vpop.f32.mrf.mxu0
      %v3679 = vadd.f32 0.0, %v3678
      %3680 = vmatmul.bf16.gmra.mxu0 %v3596
      %v3681 = vpop.f32.mrf.mxu0
      %v3682 = vadd.f32 0.0, %v3681
      %v3683 = vpop.f32.mrf.mxu0
      %v3684 = vadd.f32 0.0, %v3683
      %3685 = vmatmul.bf16.gmra.mxu0 %v3599
      %v3686 = vpop.f32.mrf.mxu0
      %v3687 = vadd.f32 0.0, %v3686
      %v3688 = vpop.f32.mrf.mxu0
      %v3689 = vadd.f32 0.0, %v3688
      %3690 = vmatmul.bf16.gmra.mxu0 %v3602
      %v3691 = vpop.f32.mrf.mxu0
      %v3692 = vadd.f32 0.0, %v3691
      %v3693 = vpop.f32.mrf.mxu0
      %v3694 = vadd.f32 0.0, %v3693
      %3695 = vmatmul.bf16.gmra.mxu0 %v3605
      %v3696 = vpop.f32.mrf.mxu0
      %v3697 = vadd.f32 0.0, %v3696
      %v3698 = vpop.f32.mrf.mxu0
      %v3699 = vadd.f32 0.0, %v3698
      %3700 = vmatmul.bf16.gmra.mxu0 %v3608
      %v3701 = vpop.f32.mrf.mxu0
      %v3702 = vadd.f32 0.0, %v3701
      %v3703 = vpop.f32.mrf.mxu0
      %v3704 = vadd.f32 0.0, %v3703
      %3705 = vmatmul.bf16.gmra.mxu0 %v3611
      %v3706 = vpop.f32.mrf.mxu0
      %v3707 = vadd.f32 0.0, %v3706
      %v3708 = vpop.f32.mrf.mxu0
      %v3709 = vadd.f32 0.0, %v3708
      %3710 = vmatmul.bf16.gmra.mxu0 %v3614
      %v3711 = vpop.f32.mrf.mxu0
      %v3712 = vadd.f32 0.0, %v3711
      %v3713 = vpop.f32.mrf.mxu0
      %v3714 = vadd.f32 0.0, %v3713
      %3715 = vmatmul.bf16.gmra.mxu0 %v3617
      %v3716 = vpop.f32.mrf.mxu0
      %v3717 = vadd.f32 0.0, %v3716
      %v3718 = vpop.f32.mrf.mxu0
      %v3719 = vadd.f32 0.0, %v3718
      %3720 = vdwg.mxu0
      %v3721 = vadd.f32 %v3249, %v3632
      %v3722 = vadd.f32 %v3250, %v3634
      %v3723 = vadd.f32 %v3251, %v3637
      %v3724 = vadd.f32 %v3252, %v3639
      %v3725 = vadd.f32 %v3253, %v3642
      %v3726 = vadd.f32 %v3254, %v3644
      %v3727 = vadd.f32 %v3255, %v3647
      %v3728 = vadd.f32 %v3256, %v3649
      %v3729 = vadd.f32 %v3257, %v3652
      %v3730 = vadd.f32 %v3258, %v3654
      %v3731 = vadd.f32 %v3259, %v3657
      %v3732 = vadd.f32 %v3260, %v3659
      %v3733 = vadd.f32 %v3261, %v3662
      %v3734 = vadd.f32 %v3262, %v3664
      %v3735 = vadd.f32 %v3263, %v3667
      %v3736 = vadd.f32 %v3264, %v3669
      %v3737 = vadd.f32 %v3265, %v3672
      %v3738 = vadd.f32 %v3266, %v3674
      %v3739 = vadd.f32 %v3267, %v3677
      %v3740 = vadd.f32 %v3268, %v3679
      %v3741 = vadd.f32 %v3269, %v3682
      %v3742 = vadd.f32 %v3270, %v3684
      %v3743 = vadd.f32 %v3271, %v3687
      %v3744 = vadd.f32 %v3272, %v3689
      %v3745 = vadd.f32 %v3273, %v3692
      %v3746 = vadd.f32 %v3274, %v3694
      %v3747 = vadd.f32 %v3275, %v3697
      %v3748 = vadd.f32 %v3276, %v3699
      %v3749 = vadd.f32 %v3277, %v3702
      %v3750 = vadd.f32 %v3278, %v3704
      %v3751 = vadd.f32 %v3279, %v3707
      %v3752 = vadd.f32 %v3280, %v3709
      %v3753 = vadd.f32 %v3281, %v3712
      %v3754 = vadd.f32 %v3282, %v3714
      %v3755 = vadd.f32 %v3283, %v3717
      %v3756 = vadd.f32 %v3284, %v3719
      %v3757 = vld [vmem:[%s212] sm:$0xe]
      %s3758 = scalar_lea.vmem %s2, 44
      %v3759 = vld [vmem:[%s3758] sm:$0xf]
      %v3761 = vunpack.c.l.b16 %v3757
      %v3762 = vpack.c.b16 %v3362, %v3761
      %v3763 = vrot.slane %v3762, 1
      %v3764 = vrot.slane %v3399, 1
      %v3765 = vsel %vm803, %v3763, %v3764
      %v3766 = vrot.slane %v3400, 1
      %v3767 = vsel %vm803, %v3764, %v3766
      %v3768 = vrot.slane %v3401, 1
      %v3769 = vsel %vm803, %v3766, %v3768
      %v3770 = vrot.slane %v3402, 1
      %v3771 = vsel %vm803, %v3768, %v3770
      %v3772 = vrot.slane %v3403, 1
      %v3773 = vsel %vm803, %v3770, %v3772
      %v3774 = vrot.slane %v3404, 1
      %v3775 = vsel %vm803, %v3772, %v3774
      %v3776 = vrot.slane %v3405, 1
      %v3777 = vsel %vm803, %v3774, %v3776
      %v3778 = vrot.slane %v3406, 1
      %v3779 = vsel %vm803, %v3776, %v3778
      %v3780 = vrot.slane %v3407, 1
      %v3781 = vsel %vm803, %v3778, %v3780
      %v3782 = vrot.slane %v3408, 1
      %v3783 = vsel %vm803, %v3780, %v3782
      %v3784 = vrot.slane %v3409, 1
      %v3785 = vsel %vm803, %v3782, %v3784
      %v3786 = vrot.slane %v3410, 1
      %v3787 = vsel %vm803, %v3784, %v3786
      %v3788 = vrot.slane %v3411, 1
      %v3789 = vsel %vm803, %v3786, %v3788
      %v3790 = vrot.slane %v3412, 1
      %v3791 = vsel %vm803, %v3788, %v3790
      %v3792 = vrot.slane %v3413, 1
      %v3793 = vsel %vm803, %v3790, %v3792
      %v3794 = vrot.slane %v3414, 1
      %v3795 = vsel %vm803, %v3792, %v3794
      %v3796 = vrot.slane %v3415, 1
      %v3797 = vsel %vm803, %v3794, %v3796
      %v3798 = vrot.slane %v3416, 1
      %v3799 = vsel %vm803, %v3796, %v3798
      %v3801 = vsel %vm501, %v3765, 0
      %v3804 = vsel %vm501, %v3767, 0
      %v3807 = vsel %vm501, %v3769, 0
      %v3810 = vsel %vm501, %v3771, 0
      %v3813 = vsel %vm501, %v3773, 0
      %v3816 = vsel %vm501, %v3775, 0
      %v3819 = vsel %vm501, %v3777, 0
      %v3822 = vsel %vm501, %v3779, 0
      %v3825 = vsel %vm501, %v3781, 0
      %v3828 = vsel %vm501, %v3783, 0
      %v3831 = vsel %vm501, %v3785, 0
      %v3834 = vsel %vm501, %v3787, 0
      %v3837 = vsel %vm501, %v3789, 0
      %v3840 = vsel %vm501, %v3791, 0
      %v3843 = vsel %vm501, %v3793, 0
      %v3846 = vsel %vm501, %v3795, 0
      %v3849 = vsel %vm501, %v3797, 0
      %v3852 = vsel %vm501, %v3799, 0
      %v3855 = vsel %vm556, %v3759, 0
      %3857 = vmatpush.bf16.msra.mxu0 0
      %3858 = vmatpush.bf16.msra.mxu0 0
      %3859 = vmatpush.bf16.msra.mxu0 0
      %3860 = vmatpush.bf16.msra.mxu0 0
      %3861 = vmatpush.bf16.msra.mxu0 0
      %3862 = vmatpush.bf16.msra.mxu0 0
      %3863 = vmatpush.bf16.msra.mxu0 0
      %3864 = vmatpush.bf16.msra.mxu0 %v3855
      %3865 = vmatmul.bf16.gmra.mxu0 %v3801
      %v3866 = vpop.f32.mrf.mxu0
      %v3867 = vadd.f32 0.0, %v3866
      %v3868 = vpop.f32.mrf.mxu0
      %v3869 = vadd.f32 0.0, %v3868
      %3870 = vmatmul.bf16.gmra.mxu0 %v3804
      %v3871 = vpop.f32.mrf.mxu0
      %v3872 = vadd.f32 0.0, %v3871
      %v3873 = vpop.f32.mrf.mxu0
      %v3874 = vadd.f32 0.0, %v3873
      %3875 = vmatmul.bf16.gmra.mxu0 %v3807
      %v3876 = vpop.f32.mrf.mxu0
      %v3877 = vadd.f32 0.0, %v3876
      %v3878 = vpop.f32.mrf.mxu0
      %v3879 = vadd.f32 0.0, %v3878
      %3880 = vmatmul.bf16.gmra.mxu0 %v3810
      %v3881 = vpop.f32.mrf.mxu0
      %v3882 = vadd.f32 0.0, %v3881
      %v3883 = vpop.f32.mrf.mxu0
      %v3884 = vadd.f32 0.0, %v3883
      %3885 = vmatmul.bf16.gmra.mxu0 %v3813
      %v3886 = vpop.f32.mrf.mxu0
      %v3887 = vadd.f32 0.0, %v3886
      %v3888 = vpop.f32.mrf.mxu0
      %v3889 = vadd.f32 0.0, %v3888
      %3890 = vmatmul.bf16.gmra.mxu0 %v3816
      %v3891 = vpop.f32.mrf.mxu0
      %v3892 = vadd.f32 0.0, %v3891
      %v3893 = vpop.f32.mrf.mxu0
      %v3894 = vadd.f32 0.0, %v3893
      %3895 = vmatmul.bf16.gmra.mxu0 %v3819
      %v3896 = vpop.f32.mrf.mxu0
      %v3897 = vadd.f32 0.0, %v3896
      %v3898 = vpop.f32.mrf.mxu0
      %v3899 = vadd.f32 0.0, %v3898
      %3900 = vmatmul.bf16.gmra.mxu0 %v3822
      %v3901 = vpop.f32.mrf.mxu0
      %v3902 = vadd.f32 0.0, %v3901
      %v3903 = vpop.f32.mrf.mxu0
      %v3904 = vadd.f32 0.0, %v3903
      %3905 = vmatmul.bf16.gmra.mxu0 %v3825
      %v3906 = vpop.f32.mrf.mxu0
      %v3907 = vadd.f32 0.0, %v3906
      %v3908 = vpop.f32.mrf.mxu0
      %v3909 = vadd.f32 0.0, %v3908
      %3910 = vmatmul.bf16.gmra.mxu0 %v3828
      %v3911 = vpop.f32.mrf.mxu0
      %v3912 = vadd.f32 0.0, %v3911
      %v3913 = vpop.f32.mrf.mxu0
      %v3914 = vadd.f32 0.0, %v3913
      %3915 = vmatmul.bf16.gmra.mxu0 %v3831
      %v3916 = vpop.f32.mrf.mxu0
      %v3917 = vadd.f32 0.0, %v3916
      %v3918 = vpop.f32.mrf.mxu0
      %v3919 = vadd.f32 0.0, %v3918
      %3920 = vmatmul.bf16.gmra.mxu0 %v3834
      %v3921 = vpop.f32.mrf.mxu0
      %v3922 = vadd.f32 0.0, %v3921
      %v3923 = vpop.f32.mrf.mxu0
      %v3924 = vadd.f32 0.0, %v3923
      %3925 = vmatmul.bf16.gmra.mxu0 %v3837
      %v3926 = vpop.f32.mrf.mxu0
      %v3927 = vadd.f32 0.0, %v3926
      %v3928 = vpop.f32.mrf.mxu0
      %v3929 = vadd.f32 0.0, %v3928
      %3930 = vmatmul.bf16.gmra.mxu0 %v3840
      %v3931 = vpop.f32.mrf.mxu0
      %v3932 = vadd.f32 0.0, %v3931
      %v3933 = vpop.f32.mrf.mxu0
      %v3934 = vadd.f32 0.0, %v3933
      %3935 = vmatmul.bf16.gmra.mxu0 %v3843
      %v3936 = vpop.f32.mrf.mxu0
      %v3937 = vadd.f32 0.0, %v3936
      %v3938 = vpop.f32.mrf.mxu0
      %v3939 = vadd.f32 0.0, %v3938
      %3940 = vmatmul.bf16.gmra.mxu0 %v3846
      %v3941 = vpop.f32.mrf.mxu0
      %v3942 = vadd.f32 0.0, %v3941
      %v3943 = vpop.f32.mrf.mxu0
      %v3944 = vadd.f32 0.0, %v3943
      %3945 = vmatmul.bf16.gmra.mxu0 %v3849
      %v3946 = vpop.f32.mrf.mxu0
      %v3947 = vadd.f32 0.0, %v3946
      %v3948 = vpop.f32.mrf.mxu0
      %v3949 = vadd.f32 0.0, %v3948
      %3950 = vmatmul.bf16.gmra.mxu0 %v3852
      %v3951 = vpop.f32.mrf.mxu0
      %v3952 = vadd.f32 0.0, %v3951
      %v3953 = vpop.f32.mrf.mxu0
      %v3954 = vadd.f32 0.0, %v3953
      %3955 = vdwg.mxu0
      %v3956 = vadd.f32 %v3721, %v3867
      %v3957 = vadd.f32 %v3722, %v3869
      %v3958 = vadd.f32 %v3723, %v3872
      %v3959 = vadd.f32 %v3724, %v3874
      %v3960 = vadd.f32 %v3725, %v3877
      %v3961 = vadd.f32 %v3726, %v3879
      %v3962 = vadd.f32 %v3727, %v3882
      %v3963 = vadd.f32 %v3728, %v3884
      %v3964 = vadd.f32 %v3729, %v3887
      %v3965 = vadd.f32 %v3730, %v3889
      %v3966 = vadd.f32 %v3731, %v3892
      %v3967 = vadd.f32 %v3732, %v3894
      %v3968 = vadd.f32 %v3733, %v3897
      %v3969 = vadd.f32 %v3734, %v3899
      %v3970 = vadd.f32 %v3735, %v3902
      %v3971 = vadd.f32 %v3736, %v3904
      %v3972 = vadd.f32 %v3737, %v3907
      %v3973 = vadd.f32 %v3738, %v3909
      %v3974 = vadd.f32 %v3739, %v3912
      %v3975 = vadd.f32 %v3740, %v3914
      %v3976 = vadd.f32 %v3741, %v3917
      %v3977 = vadd.f32 %v3742, %v3919
      %v3978 = vadd.f32 %v3743, %v3922
      %v3979 = vadd.f32 %v3744, %v3924
      %v3980 = vadd.f32 %v3745, %v3927
      %v3981 = vadd.f32 %v3746, %v3929
      %v3982 = vadd.f32 %v3747, %v3932
      %v3983 = vadd.f32 %v3748, %v3934
      %v3984 = vadd.f32 %v3749, %v3937
      %v3985 = vadd.f32 %v3750, %v3939
      %v3986 = vadd.f32 %v3751, %v3942
      %v3987 = vadd.f32 %v3752, %v3944
      %v3988 = vadd.f32 %v3753, %v3947
      %v3989 = vadd.f32 %v3754, %v3949
      %v3990 = vadd.f32 %v3755, %v3952
      %v3991 = vadd.f32 %v3756, %v3954
      %v3992 = vld [vmem:[%s212 + $0x8] sm:$0xe]
      %v3993 = vld [vmem:[%s212 + $0xc] sm:$0xf]
      %v3994 = vld [vmem:[%s212 + $0x10] sm:$0xf]
      %v3995 = vld [vmem:[%s212 + $0x14] sm:$0xf]
      %v3996 = vld [vmem:[%s212 + $0x18] sm:$0xf]
      %v3997 = vld [vmem:[%s212 + $0x1c] sm:$0xf]
      %v3998 = vld [vmem:[%s212 + $0x20] sm:$0xf]
      %v3999 = vld [vmem:[%s212 + $0x24] sm:$0xf]
      %v4000 = vld [vmem:[%s212 + $0x28] sm:$0xf]
      %v4001 = vld [vmem:[%s212 + $0x2c] sm:$0xf]
      %v4002 = vld [vmem:[%s212 + $0x30] sm:$0xf]
      %v4003 = vld [vmem:[%s212 + $0x34] sm:$0xf]
      %v4004 = vld [vmem:[%s212 + $0x38] sm:$0xf]
      %v4005 = vld [vmem:[%s212 + $0x3c] sm:$0xf]
      %v4006 = vld [vmem:[%s212 + $0x40] sm:$0xf]
      %v4007 = vld [vmem:[%s212 + $0x44] sm:$0xf]
      %v4008 = vld [vmem:[%s212 + $0x48] sm:$0xf]
      %v4009 = vld [vmem:[%s212 + $0x4c] sm:$0xf]
      %v4010 = vld [vmem:[%s212 + $0x50] sm:$0xf]
      %v4011 = vld [vmem:[%s212 + $0x54] sm:$0xf]
      %v4012 = vld [vmem:[%s212 + $0x58] sm:$0xf]
      %v4013 = vld [vmem:[%s212 + $0x5c] sm:$0xf]
      %v4014 = vld [vmem:[%s212 + $0x60] sm:$0xf]
      %v4015 = vld [vmem:[%s212 + $0x64] sm:$0xf]
      %v4016 = vld [vmem:[%s212 + $0x68] sm:$0xf]
      %v4017 = vld [vmem:[%s212 + $0x6c] sm:$0xf]
      %v4018 = vld [vmem:[%s212 + $0x70] sm:$0xf]
      %v4019 = vld [vmem:[%s212 + $0x74] sm:$0xf]
      %v4020 = vld [vmem:[%s212 + $0x78] sm:$0xf]
      %v4021 = vld [vmem:[%s212 + $0x7c] sm:$0xf]
      %v4022 = vld [vmem:[%s212 + $0x80] sm:$0xf]
      %v4023 = vld [vmem:[%s212 + $0x84] sm:$0xf]
      %v4024 = vld [vmem:[%s212 + $0x88] sm:$0xf]
      %v4025 = vld [vmem:[%s212 + $0x8c] sm:$0xf]
      %v4026 = vld [vmem:[%s212 + $0x90] sm:$0xf]
      %v4027 = vld [vmem:[%s212 + $0x94] sm:$0xf]
      %v4028 = vld [vmem:[%s212 + $0x98] sm:$0x1]
      %s4029 = scalar_lea.vmem %s2, 48
      %v4030 = vld [vmem:[%s4029] sm:$0xf]
      %v4068 = vunpack.c.l.b16 %v3992
      %v4069 = vunpack.c.l.b16 %v3993
      %v4070 = vunpack.c.l.b16 %v3994
      %v4071 = vunpack.c.l.b16 %v3995
      %v4072 = vunpack.c.l.b16 %v3996
      %v4073 = vunpack.c.l.b16 %v3997
      %v4074 = vunpack.c.l.b16 %v3998
      %v4075 = vunpack.c.l.b16 %v3999
      %v4076 = vunpack.c.l.b16 %v4000
      %v4077 = vunpack.c.l.b16 %v4001
      %v4078 = vunpack.c.l.b16 %v4002
      %v4079 = vunpack.c.l.b16 %v4003
      %v4080 = vunpack.c.l.b16 %v4004
      %v4081 = vunpack.c.l.b16 %v4005
      %v4082 = vunpack.c.l.b16 %v4006
      %v4083 = vunpack.c.l.b16 %v4007
      %v4084 = vunpack.c.l.b16 %v4008
      %v4085 = vunpack.c.l.b16 %v4009
      %v4086 = vunpack.c.l.b16 %v4010
      %v4087 = vunpack.c.l.b16 %v4011
      %v4088 = vunpack.c.l.b16 %v4012
      %v4089 = vunpack.c.l.b16 %v4013
      %v4090 = vunpack.c.l.b16 %v4014
      %v4091 = vunpack.c.l.b16 %v4015
      %v4092 = vunpack.c.l.b16 %v4016
      %v4093 = vunpack.c.l.b16 %v4017
      %v4094 = vunpack.c.l.b16 %v4018
      %v4095 = vunpack.c.l.b16 %v4019
      %v4096 = vunpack.c.l.b16 %v4020
      %v4097 = vunpack.c.l.b16 %v4021
      %v4098 = vunpack.c.l.b16 %v4022
      %v4099 = vunpack.c.l.b16 %v4023
      %v4100 = vunpack.c.l.b16 %v4024
      %v4101 = vunpack.c.l.b16 %v4025
      %v4102 = vunpack.c.l.b16 %v4026
      %v4103 = vunpack.c.l.b16 %v4027
      %v4104 = vunpack.c.l.b16 %v4028
      %v4105 = vpack.c.b16 %v4069, %v4068
      %v4106 = vpack.c.b16 %v4071, %v4070
      %v4107 = vpack.c.b16 %v4073, %v4072
      %v4108 = vpack.c.b16 %v4075, %v4074
      %v4109 = vpack.c.b16 %v4077, %v4076
      %v4110 = vpack.c.b16 %v4079, %v4078
      %v4111 = vpack.c.b16 %v4081, %v4080
      %v4112 = vpack.c.b16 %v4083, %v4082
      %v4113 = vpack.c.b16 %v4085, %v4084
      %v4114 = vpack.c.b16 %v4087, %v4086
      %v4115 = vpack.c.b16 %v4089, %v4088
      %v4116 = vpack.c.b16 %v4091, %v4090
      %v4117 = vpack.c.b16 %v4093, %v4092
      %v4118 = vpack.c.b16 %v4095, %v4094
      %v4119 = vpack.c.b16 %v4097, %v4096
      %v4120 = vpack.c.b16 %v4099, %v4098
      %v4121 = vpack.c.b16 %v4101, %v4100
      %v4122 = vpack.c.b16 %v4103, %v4102
      %v4123 = vpack.c.b16 %v4104, %v4104
      %v4124 = vrot.slane %v4105, 1
      %v4125 = vrot.slane %v4106, 1
      %v4126 = vsel %vm803, %v4124, %v4125
      %v4127 = vrot.slane %v4107, 1
      %v4128 = vsel %vm803, %v4125, %v4127
      %v4129 = vrot.slane %v4108, 1
      %v4130 = vsel %vm803, %v4127, %v4129
      %v4131 = vrot.slane %v4109, 1
      %v4132 = vsel %vm803, %v4129, %v4131
      %v4133 = vrot.slane %v4110, 1
      %v4134 = vsel %vm803, %v4131, %v4133
      %v4135 = vrot.slane %v4111, 1
      %v4136 = vsel %vm803, %v4133, %v4135
      %v4137 = vrot.slane %v4112, 1
      %v4138 = vsel %vm803, %v4135, %v4137
      %v4139 = vrot.slane %v4113, 1
      %v4140 = vsel %vm803, %v4137, %v4139
      %v4141 = vrot.slane %v4114, 1
      %v4142 = vsel %vm803, %v4139, %v4141
      %v4143 = vrot.slane %v4115, 1
      %v4144 = vsel %vm803, %v4141, %v4143
      %v4145 = vrot.slane %v4116, 1
      %v4146 = vsel %vm803, %v4143, %v4145
      %v4147 = vrot.slane %v4117, 1
      %v4148 = vsel %vm803, %v4145, %v4147
      %v4149 = vrot.slane %v4118, 1
      %v4150 = vsel %vm803, %v4147, %v4149
      %v4151 = vrot.slane %v4119, 1
      %v4152 = vsel %vm803, %v4149, %v4151
      %v4153 = vrot.slane %v4120, 1
      %v4154 = vsel %vm803, %v4151, %v4153
      %v4155 = vrot.slane %v4121, 1
      %v4156 = vsel %vm803, %v4153, %v4155
      %v4157 = vrot.slane %v4122, 1
      %v4158 = vsel %vm803, %v4155, %v4157
      %v4159 = vrot.slane %v4123, 1
      %v4160 = vsel %vm803, %v4157, %v4159
      %v4162 = vsel %vm501, %v4126, 0
      %v4165 = vsel %vm501, %v4128, 0
      %v4168 = vsel %vm501, %v4130, 0
      %v4171 = vsel %vm501, %v4132, 0
      %v4174 = vsel %vm501, %v4134, 0
      %v4177 = vsel %vm501, %v4136, 0
      %v4180 = vsel %vm501, %v4138, 0
      %v4183 = vsel %vm501, %v4140, 0
      %v4186 = vsel %vm501, %v4142, 0
      %v4189 = vsel %vm501, %v4144, 0
      %v4192 = vsel %vm501, %v4146, 0
      %v4195 = vsel %vm501, %v4148, 0
      %v4198 = vsel %vm501, %v4150, 0
      %v4201 = vsel %vm501, %v4152, 0
      %v4204 = vsel %vm501, %v4154, 0
      %v4207 = vsel %vm501, %v4156, 0
      %v4210 = vsel %vm501, %v4158, 0
      %v4213 = vsel %vm501, %v4160, 0
      %v4216 = vsel %vm556, %v4030, 0
      %4218 = vmatpush.bf16.msra.mxu0 0
      %4219 = vmatpush.bf16.msra.mxu0 0
      %4220 = vmatpush.bf16.msra.mxu0 0
      %4221 = vmatpush.bf16.msra.mxu0 0
      %4222 = vmatpush.bf16.msra.mxu0 0
      %4223 = vmatpush.bf16.msra.mxu0 0
      %4224 = vmatpush.bf16.msra.mxu0 0
      %4225 = vmatpush.bf16.msra.mxu0 %v4216
      %4226 = vmatmul.bf16.gmra.mxu0 %v4162
      %v4227 = vpop.f32.mrf.mxu0
      %v4228 = vadd.f32 0.0, %v4227
      %v4229 = vpop.f32.mrf.mxu0
      %v4230 = vadd.f32 0.0, %v4229
      %4231 = vmatmul.bf16.gmra.mxu0 %v4165
      %v4232 = vpop.f32.mrf.mxu0
      %v4233 = vadd.f32 0.0, %v4232
      %v4234 = vpop.f32.mrf.mxu0
      %v4235 = vadd.f32 0.0, %v4234
      %4236 = vmatmul.bf16.gmra.mxu0 %v4168
      %v4237 = vpop.f32.mrf.mxu0
      %v4238 = vadd.f32 0.0, %v4237
      %v4239 = vpop.f32.mrf.mxu0
      %v4240 = vadd.f32 0.0, %v4239
      %4241 = vmatmul.bf16.gmra.mxu0 %v4171
      %v4242 = vpop.f32.mrf.mxu0
      %v4243 = vadd.f32 0.0, %v4242
      %v4244 = vpop.f32.mrf.mxu0
      %v4245 = vadd.f32 0.0, %v4244
      %4246 = vmatmul.bf16.gmra.mxu0 %v4174
      %v4247 = vpop.f32.mrf.mxu0
      %v4248 = vadd.f32 0.0, %v4247
      %v4249 = vpop.f32.mrf.mxu0
      %v4250 = vadd.f32 0.0, %v4249
      %4251 = vmatmul.bf16.gmra.mxu0 %v4177
      %v4252 = vpop.f32.mrf.mxu0
      %v4253 = vadd.f32 0.0, %v4252
      %v4254 = vpop.f32.mrf.mxu0
      %v4255 = vadd.f32 0.0, %v4254
      %4256 = vmatmul.bf16.gmra.mxu0 %v4180
      %v4257 = vpop.f32.mrf.mxu0
      %v4258 = vadd.f32 0.0, %v4257
      %v4259 = vpop.f32.mrf.mxu0
      %v4260 = vadd.f32 0.0, %v4259
      %4261 = vmatmul.bf16.gmra.mxu0 %v4183
      %v4262 = vpop.f32.mrf.mxu0
      %v4263 = vadd.f32 0.0, %v4262
      %v4264 = vpop.f32.mrf.mxu0
      %v4265 = vadd.f32 0.0, %v4264
      %4266 = vmatmul.bf16.gmra.mxu0 %v4186
      %v4267 = vpop.f32.mrf.mxu0
      %v4268 = vadd.f32 0.0, %v4267
      %v4269 = vpop.f32.mrf.mxu0
      %v4270 = vadd.f32 0.0, %v4269
      %4271 = vmatmul.bf16.gmra.mxu0 %v4189
      %v4272 = vpop.f32.mrf.mxu0
      %v4273 = vadd.f32 0.0, %v4272
      %v4274 = vpop.f32.mrf.mxu0
      %v4275 = vadd.f32 0.0, %v4274
      %4276 = vmatmul.bf16.gmra.mxu0 %v4192
      %v4277 = vpop.f32.mrf.mxu0
      %v4278 = vadd.f32 0.0, %v4277
      %v4279 = vpop.f32.mrf.mxu0
      %v4280 = vadd.f32 0.0, %v4279
      %4281 = vmatmul.bf16.gmra.mxu0 %v4195
      %v4282 = vpop.f32.mrf.mxu0
      %v4283 = vadd.f32 0.0, %v4282
      %v4284 = vpop.f32.mrf.mxu0
      %v4285 = vadd.f32 0.0, %v4284
      %4286 = vmatmul.bf16.gmra.mxu0 %v4198
      %v4287 = vpop.f32.mrf.mxu0
      %v4288 = vadd.f32 0.0, %v4287
      %v4289 = vpop.f32.mrf.mxu0
      %v4290 = vadd.f32 0.0, %v4289
      %4291 = vmatmul.bf16.gmra.mxu0 %v4201
      %v4292 = vpop.f32.mrf.mxu0
      %v4293 = vadd.f32 0.0, %v4292
      %v4294 = vpop.f32.mrf.mxu0
      %v4295 = vadd.f32 0.0, %v4294
      %4296 = vmatmul.bf16.gmra.mxu0 %v4204
      %v4297 = vpop.f32.mrf.mxu0
      %v4298 = vadd.f32 0.0, %v4297
      %v4299 = vpop.f32.mrf.mxu0
      %v4300 = vadd.f32 0.0, %v4299
      %4301 = vmatmul.bf16.gmra.mxu0 %v4207
      %v4302 = vpop.f32.mrf.mxu0
      %v4303 = vadd.f32 0.0, %v4302
      %v4304 = vpop.f32.mrf.mxu0
      %v4305 = vadd.f32 0.0, %v4304
      %4306 = vmatmul.bf16.gmra.mxu0 %v4210
      %v4307 = vpop.f32.mrf.mxu0
      %v4308 = vadd.f32 0.0, %v4307
      %v4309 = vpop.f32.mrf.mxu0
      %v4310 = vadd.f32 0.0, %v4309
      %4311 = vmatmul.bf16.gmra.mxu0 %v4213
      %v4312 = vpop.f32.mrf.mxu0
      %v4313 = vadd.f32 0.0, %v4312
      %v4314 = vpop.f32.mrf.mxu0
      %v4315 = vadd.f32 0.0, %v4314
      %4316 = vdwg.mxu0
      %v4317 = vadd.f32 %v3956, %v4228
      %v4318 = vadd.f32 %v3957, %v4230
      %v4319 = vadd.f32 %v3958, %v4233
      %v4320 = vadd.f32 %v3959, %v4235
      %v4321 = vadd.f32 %v3960, %v4238
      %v4322 = vadd.f32 %v3961, %v4240
      %v4323 = vadd.f32 %v3962, %v4243
      %v4324 = vadd.f32 %v3963, %v4245
      %v4325 = vadd.f32 %v3964, %v4248
      %v4326 = vadd.f32 %v3965, %v4250
      %v4327 = vadd.f32 %v3966, %v4253
      %v4328 = vadd.f32 %v3967, %v4255
      %v4329 = vadd.f32 %v3968, %v4258
      %v4330 = vadd.f32 %v3969, %v4260
      %v4331 = vadd.f32 %v3970, %v4263
      %v4332 = vadd.f32 %v3971, %v4265
      %v4333 = vadd.f32 %v3972, %v4268
      %v4334 = vadd.f32 %v3973, %v4270
      %v4335 = vadd.f32 %v3974, %v4273
      %v4336 = vadd.f32 %v3975, %v4275
      %v4337 = vadd.f32 %v3976, %v4278
      %v4338 = vadd.f32 %v3977, %v4280
      %v4339 = vadd.f32 %v3978, %v4283
      %v4340 = vadd.f32 %v3979, %v4285
      %v4341 = vadd.f32 %v3980, %v4288
      %v4342 = vadd.f32 %v3981, %v4290
      %v4343 = vadd.f32 %v3982, %v4293
      %v4344 = vadd.f32 %v3983, %v4295
      %v4345 = vadd.f32 %v3984, %v4298
      %v4346 = vadd.f32 %v3985, %v4300
      %v4347 = vadd.f32 %v3986, %v4303
      %v4348 = vadd.f32 %v3987, %v4305
      %v4349 = vadd.f32 %v3988, %v4308
      %v4350 = vadd.f32 %v3989, %v4310
      %v4351 = vadd.f32 %v3990, %v4313
      %v4352 = vadd.f32 %v3991, %v4315
      %v4353 = vld [vmem:[%s212 + $0x98] sm:$0x3]
      %s4354 = scalar_lea.vmem %s2, 52
      %v4355 = vld [vmem:[%s4354] sm:$0xf]
      %v4357 = vunpack.c.l.b16 %v4353
      %v4358 = vpack.c.b16 %v4357, %v4357
      %v4360 = vshrl.u32 %v4105, 16
      %v4362 = vrot.slane %v4360, 1
      %v4363 = vshll.u32 %v4105, 16
      %v4365 = vrot.slane %v4363, 2
      %v4366 = vor.u32 %v4362, %v4365
      %v4368 = vshrl.u32 %v4106, 16
      %v4370 = vrot.slane %v4368, 1
      %v4371 = vshll.u32 %v4106, 16
      %v4373 = vrot.slane %v4371, 2
      %v4374 = vor.u32 %v4370, %v4373
      %v4375 = vsel %vm1400, %v4366, %v4374
      %v4377 = vshrl.u32 %v4107, 16
      %v4379 = vrot.slane %v4377, 1
      %v4380 = vshll.u32 %v4107, 16
      %v4382 = vrot.slane %v4380, 2
      %v4383 = vor.u32 %v4379, %v4382
      %v4384 = vsel %vm1400, %v4374, %v4383
      %v4386 = vshrl.u32 %v4108, 16
      %v4388 = vrot.slane %v4386, 1
      %v4389 = vshll.u32 %v4108, 16
      %v4391 = vrot.slane %v4389, 2
      %v4392 = vor.u32 %v4388, %v4391
      %v4393 = vsel %vm1400, %v4383, %v4392
      %v4395 = vshrl.u32 %v4109, 16
      %v4397 = vrot.slane %v4395, 1
      %v4398 = vshll.u32 %v4109, 16
      %v4400 = vrot.slane %v4398, 2
      %v4401 = vor.u32 %v4397, %v4400
      %v4402 = vsel %vm1400, %v4392, %v4401
      %v4404 = vshrl.u32 %v4110, 16
      %v4406 = vrot.slane %v4404, 1
      %v4407 = vshll.u32 %v4110, 16
      %v4409 = vrot.slane %v4407, 2
      %v4410 = vor.u32 %v4406, %v4409
      %v4411 = vsel %vm1400, %v4401, %v4410
      %v4413 = vshrl.u32 %v4111, 16
      %v4415 = vrot.slane %v4413, 1
      %v4416 = vshll.u32 %v4111, 16
      %v4418 = vrot.slane %v4416, 2
      %v4419 = vor.u32 %v4415, %v4418
      %v4420 = vsel %vm1400, %v4410, %v4419
      %v4422 = vshrl.u32 %v4112, 16
      %v4424 = vrot.slane %v4422, 1
      %v4425 = vshll.u32 %v4112, 16
      %v4427 = vrot.slane %v4425, 2
      %v4428 = vor.u32 %v4424, %v4427
      %v4429 = vsel %vm1400, %v4419, %v4428
      %v4431 = vshrl.u32 %v4113, 16
      %v4433 = vrot.slane %v4431, 1
      %v4434 = vshll.u32 %v4113, 16
      %v4436 = vrot.slane %v4434, 2
      %v4437 = vor.u32 %v4433, %v4436
      %v4438 = vsel %vm1400, %v4428, %v4437
      %v4440 = vshrl.u32 %v4114, 16
      %v4442 = vrot.slane %v4440, 1
      %v4443 = vshll.u32 %v4114, 16
      %v4445 = vrot.slane %v4443, 2
      %v4446 = vor.u32 %v4442, %v4445
      %v4447 = vsel %vm1400, %v4437, %v4446
      %v4449 = vshrl.u32 %v4115, 16
      %v4451 = vrot.slane %v4449, 1
      %v4452 = vshll.u32 %v4115, 16
      %v4454 = vrot.slane %v4452, 2
      %v4455 = vor.u32 %v4451, %v4454
      %v4456 = vsel %vm1400, %v4446, %v4455
      %v4458 = vshrl.u32 %v4116, 16
      %v4460 = vrot.slane %v4458, 1
      %v4461 = vshll.u32 %v4116, 16
      %v4463 = vrot.slane %v4461, 2
      %v4464 = vor.u32 %v4460, %v4463
      %v4465 = vsel %vm1400, %v4455, %v4464
      %v4467 = vshrl.u32 %v4117, 16
      %v4469 = vrot.slane %v4467, 1
      %v4470 = vshll.u32 %v4117, 16
      %v4472 = vrot.slane %v4470, 2
      %v4473 = vor.u32 %v4469, %v4472
      %v4474 = vsel %vm1400, %v4464, %v4473
      %v4476 = vshrl.u32 %v4118, 16
      %v4478 = vrot.slane %v4476, 1
      %v4479 = vshll.u32 %v4118, 16
      %v4481 = vrot.slane %v4479, 2
      %v4482 = vor.u32 %v4478, %v4481
      %v4483 = vsel %vm1400, %v4473, %v4482
      %v4485 = vshrl.u32 %v4119, 16
      %v4487 = vrot.slane %v4485, 1
      %v4488 = vshll.u32 %v4119, 16
      %v4490 = vrot.slane %v4488, 2
      %v4491 = vor.u32 %v4487, %v4490
      %v4492 = vsel %vm1400, %v4482, %v4491
      %v4494 = vshrl.u32 %v4120, 16
      %v4496 = vrot.slane %v4494, 1
      %v4497 = vshll.u32 %v4120, 16
      %v4499 = vrot.slane %v4497, 2
      %v4500 = vor.u32 %v4496, %v4499
      %v4501 = vsel %vm1400, %v4491, %v4500
      %v4503 = vshrl.u32 %v4121, 16
      %v4505 = vrot.slane %v4503, 1
      %v4506 = vshll.u32 %v4121, 16
      %v4508 = vrot.slane %v4506, 2
      %v4509 = vor.u32 %v4505, %v4508
      %v4510 = vsel %vm1400, %v4500, %v4509
      %v4512 = vshrl.u32 %v4122, 16
      %v4514 = vrot.slane %v4512, 1
      %v4515 = vshll.u32 %v4122, 16
      %v4517 = vrot.slane %v4515, 2
      %v4518 = vor.u32 %v4514, %v4517
      %v4519 = vsel %vm1400, %v4509, %v4518
      %v4521 = vshrl.u32 %v4358, 16
      %v4523 = vrot.slane %v4521, 1
      %v4524 = vshll.u32 %v4358, 16
      %v4526 = vrot.slane %v4524, 2
      %v4527 = vor.u32 %v4523, %v4526
      %v4528 = vsel %vm1400, %v4518, %v4527
      %v4530 = vsel %vm501, %v4375, 0
      %v4533 = vsel %vm501, %v4384, 0
      %v4536 = vsel %vm501, %v4393, 0
      %v4539 = vsel %vm501, %v4402, 0
      %v4542 = vsel %vm501, %v4411, 0
      %v4545 = vsel %vm501, %v4420, 0
      %v4548 = vsel %vm501, %v4429, 0
      %v4551 = vsel %vm501, %v4438, 0
      %v4554 = vsel %vm501, %v4447, 0
      %v4557 = vsel %vm501, %v4456, 0
      %v4560 = vsel %vm501, %v4465, 0
      %v4563 = vsel %vm501, %v4474, 0
      %v4566 = vsel %vm501, %v4483, 0
      %v4569 = vsel %vm501, %v4492, 0
      %v4572 = vsel %vm501, %v4501, 0
      %v4575 = vsel %vm501, %v4510, 0
      %v4578 = vsel %vm501, %v4519, 0
      %v4581 = vsel %vm501, %v4528, 0
      %v4584 = vsel %vm556, %v4355, 0
      %4586 = vmatpush.bf16.msra.mxu0 0
      %4587 = vmatpush.bf16.msra.mxu0 0
      %4588 = vmatpush.bf16.msra.mxu0 0
      %4589 = vmatpush.bf16.msra.mxu0 0
      %4590 = vmatpush.bf16.msra.mxu0 0
      %4591 = vmatpush.bf16.msra.mxu0 0
      %4592 = vmatpush.bf16.msra.mxu0 0
      %4593 = vmatpush.bf16.msra.mxu0 %v4584
      %4594 = vmatmul.bf16.gmra.mxu0 %v4530
      %v4595 = vpop.f32.mrf.mxu0
      %v4596 = vadd.f32 0.0, %v4595
      %v4597 = vpop.f32.mrf.mxu0
      %v4598 = vadd.f32 0.0, %v4597
      %4599 = vmatmul.bf16.gmra.mxu0 %v4533
      %v4600 = vpop.f32.mrf.mxu0
      %v4601 = vadd.f32 0.0, %v4600
      %v4602 = vpop.f32.mrf.mxu0
      %v4603 = vadd.f32 0.0, %v4602
      %4604 = vmatmul.bf16.gmra.mxu0 %v4536
      %v4605 = vpop.f32.mrf.mxu0
      %v4606 = vadd.f32 0.0, %v4605
      %v4607 = vpop.f32.mrf.mxu0
      %v4608 = vadd.f32 0.0, %v4607
      %4609 = vmatmul.bf16.gmra.mxu0 %v4539
      %v4610 = vpop.f32.mrf.mxu0
      %v4611 = vadd.f32 0.0, %v4610
      %v4612 = vpop.f32.mrf.mxu0
      %v4613 = vadd.f32 0.0, %v4612
      %4614 = vmatmul.bf16.gmra.mxu0 %v4542
      %v4615 = vpop.f32.mrf.mxu0
      %v4616 = vadd.f32 0.0, %v4615
      %v4617 = vpop.f32.mrf.mxu0
      %v4618 = vadd.f32 0.0, %v4617
      %4619 = vmatmul.bf16.gmra.mxu0 %v4545
      %v4620 = vpop.f32.mrf.mxu0
      %v4621 = vadd.f32 0.0, %v4620
      %v4622 = vpop.f32.mrf.mxu0
      %v4623 = vadd.f32 0.0, %v4622
      %4624 = vmatmul.bf16.gmra.mxu0 %v4548
      %v4625 = vpop.f32.mrf.mxu0
      %v4626 = vadd.f32 0.0, %v4625
      %v4627 = vpop.f32.mrf.mxu0
      %v4628 = vadd.f32 0.0, %v4627
      %4629 = vmatmul.bf16.gmra.mxu0 %v4551
      %v4630 = vpop.f32.mrf.mxu0
      %v4631 = vadd.f32 0.0, %v4630
      %v4632 = vpop.f32.mrf.mxu0
      %v4633 = vadd.f32 0.0, %v4632
      %4634 = vmatmul.bf16.gmra.mxu0 %v4554
      %v4635 = vpop.f32.mrf.mxu0
      %v4636 = vadd.f32 0.0, %v4635
      %v4637 = vpop.f32.mrf.mxu0
      %v4638 = vadd.f32 0.0, %v4637
      %4639 = vmatmul.bf16.gmra.mxu0 %v4557
      %v4640 = vpop.f32.mrf.mxu0
      %v4641 = vadd.f32 0.0, %v4640
      %v4642 = vpop.f32.mrf.mxu0
      %v4643 = vadd.f32 0.0, %v4642
      %4644 = vmatmul.bf16.gmra.mxu0 %v4560
      %v4645 = vpop.f32.mrf.mxu0
      %v4646 = vadd.f32 0.0, %v4645
      %v4647 = vpop.f32.mrf.mxu0
      %v4648 = vadd.f32 0.0, %v4647
      %4649 = vmatmul.bf16.gmra.mxu0 %v4563
      %v4650 = vpop.f32.mrf.mxu0
      %v4651 = vadd.f32 0.0, %v4650
      %v4652 = vpop.f32.mrf.mxu0
      %v4653 = vadd.f32 0.0, %v4652
      %4654 = vmatmul.bf16.gmra.mxu0 %v4566
      %v4655 = vpop.f32.mrf.mxu0
      %v4656 = vadd.f32 0.0, %v4655
      %v4657 = vpop.f32.mrf.mxu0
      %v4658 = vadd.f32 0.0, %v4657
      %4659 = vmatmul.bf16.gmra.mxu0 %v4569
      %v4660 = vpop.f32.mrf.mxu0
      %v4661 = vadd.f32 0.0, %v4660
      %v4662 = vpop.f32.mrf.mxu0
      %v4663 = vadd.f32 0.0, %v4662
      %4664 = vmatmul.bf16.gmra.mxu0 %v4572
      %v4665 = vpop.f32.mrf.mxu0
      %v4666 = vadd.f32 0.0, %v4665
      %v4667 = vpop.f32.mrf.mxu0
      %v4668 = vadd.f32 0.0, %v4667
      %4669 = vmatmul.bf16.gmra.mxu0 %v4575
      %v4670 = vpop.f32.mrf.mxu0
      %v4671 = vadd.f32 0.0, %v4670
      %v4672 = vpop.f32.mrf.mxu0
      %v4673 = vadd.f32 0.0, %v4672
      %4674 = vmatmul.bf16.gmra.mxu0 %v4578
      %v4675 = vpop.f32.mrf.mxu0
      %v4676 = vadd.f32 0.0, %v4675
      %v4677 = vpop.f32.mrf.mxu0
      %v4678 = vadd.f32 0.0, %v4677
      %4679 = vmatmul.bf16.gmra.mxu0 %v4581
      %v4680 = vpop.f32.mrf.mxu0
      %v4681 = vadd.f32 0.0, %v4680
      %v4682 = vpop.f32.mrf.mxu0
      %v4683 = vadd.f32 0.0, %v4682
      %4684 = vdwg.mxu0
      %v4685 = vadd.f32 %v4317, %v4596
      %v4686 = vadd.f32 %v4318, %v4598
      %v4687 = vadd.f32 %v4319, %v4601
      %v4688 = vadd.f32 %v4320, %v4603
      %v4689 = vadd.f32 %v4321, %v4606
      %v4690 = vadd.f32 %v4322, %v4608
      %v4691 = vadd.f32 %v4323, %v4611
      %v4692 = vadd.f32 %v4324, %v4613
      %v4693 = vadd.f32 %v4325, %v4616
      %v4694 = vadd.f32 %v4326, %v4618
      %v4695 = vadd.f32 %v4327, %v4621
      %v4696 = vadd.f32 %v4328, %v4623
      %v4697 = vadd.f32 %v4329, %v4626
      %v4698 = vadd.f32 %v4330, %v4628
      %v4699 = vadd.f32 %v4331, %v4631
      %v4700 = vadd.f32 %v4332, %v4633
      %v4701 = vadd.f32 %v4333, %v4636
      %v4702 = vadd.f32 %v4334, %v4638
      %v4703 = vadd.f32 %v4335, %v4641
      %v4704 = vadd.f32 %v4336, %v4643
      %v4705 = vadd.f32 %v4337, %v4646
      %v4706 = vadd.f32 %v4338, %v4648
      %v4707 = vadd.f32 %v4339, %v4651
      %v4708 = vadd.f32 %v4340, %v4653
      %v4709 = vadd.f32 %v4341, %v4656
      %v4710 = vadd.f32 %v4342, %v4658
      %v4711 = vadd.f32 %v4343, %v4661
      %v4712 = vadd.f32 %v4344, %v4663
      %v4713 = vadd.f32 %v4345, %v4666
      %v4714 = vadd.f32 %v4346, %v4668
      %v4715 = vadd.f32 %v4347, %v4671
      %v4716 = vadd.f32 %v4348, %v4673
      %v4717 = vadd.f32 %v4349, %v4676
      %v4718 = vadd.f32 %v4350, %v4678
      %v4719 = vadd.f32 %v4351, %v4681
      %v4720 = vadd.f32 %v4352, %v4683
      %v4721 = vld [vmem:[%s212 + $0x8] sm:$0xc]
      %s4722 = scalar_lea.vmem %s2, 56
      %v4723 = vld [vmem:[%s4722] sm:$0xf]
      %v4725 = vunpack.c.l.b16 %v4721
      %v4726 = vpack.c.b16 %v4069, %v4725
      %v4727 = vrot.slane %v4726, 2
      %v4728 = vrot.slane %v4106, 2
      %v4729 = vsel %vm1769, %v4727, %v4728
      %v4730 = vrot.slane %v4107, 2
      %v4731 = vsel %vm1769, %v4728, %v4730
      %v4732 = vrot.slane %v4108, 2
      %v4733 = vsel %vm1769, %v4730, %v4732
      %v4734 = vrot.slane %v4109, 2
      %v4735 = vsel %vm1769, %v4732, %v4734
      %v4736 = vrot.slane %v4110, 2
      %v4737 = vsel %vm1769, %v4734, %v4736
      %v4738 = vrot.slane %v4111, 2
      %v4739 = vsel %vm1769, %v4736, %v4738
      %v4740 = vrot.slane %v4112, 2
      %v4741 = vsel %vm1769, %v4738, %v4740
      %v4742 = vrot.slane %v4113, 2
      %v4743 = vsel %vm1769, %v4740, %v4742
      %v4744 = vrot.slane %v4114, 2
      %v4745 = vsel %vm1769, %v4742, %v4744
      %v4746 = vrot.slane %v4115, 2
      %v4747 = vsel %vm1769, %v4744, %v4746
      %v4748 = vrot.slane %v4116, 2
      %v4749 = vsel %vm1769, %v4746, %v4748
      %v4750 = vrot.slane %v4117, 2
      %v4751 = vsel %vm1769, %v4748, %v4750
      %v4752 = vrot.slane %v4118, 2
      %v4753 = vsel %vm1769, %v4750, %v4752
      %v4754 = vrot.slane %v4119, 2
      %v4755 = vsel %vm1769, %v4752, %v4754
      %v4756 = vrot.slane %v4120, 2
      %v4757 = vsel %vm1769, %v4754, %v4756
      %v4758 = vrot.slane %v4121, 2
      %v4759 = vsel %vm1769, %v4756, %v4758
      %v4760 = vrot.slane %v4122, 2
      %v4761 = vsel %vm1769, %v4758, %v4760
      %v4762 = vrot.slane %v4358, 2
      %v4763 = vsel %vm1769, %v4760, %v4762
      %v4765 = vsel %vm501, %v4729, 0
      %v4768 = vsel %vm501, %v4731, 0
      %v4771 = vsel %vm501, %v4733, 0
      %v4774 = vsel %vm501, %v4735, 0
      %v4777 = vsel %vm501, %v4737, 0
      %v4780 = vsel %vm501, %v4739, 0
      %v4783 = vsel %vm501, %v4741, 0
      %v4786 = vsel %vm501, %v4743, 0
      %v4789 = vsel %vm501, %v4745, 0
      %v4792 = vsel %vm501, %v4747, 0
      %v4795 = vsel %vm501, %v4749, 0
      %v4798 = vsel %vm501, %v4751, 0
      %v4801 = vsel %vm501, %v4753, 0
      %v4804 = vsel %vm501, %v4755, 0
      %v4807 = vsel %vm501, %v4757, 0
      %v4810 = vsel %vm501, %v4759, 0
      %v4813 = vsel %vm501, %v4761, 0
      %v4816 = vsel %vm501, %v4763, 0
      %v4819 = vsel %vm556, %v4723, 0
      %4821 = vmatpush.bf16.msra.mxu0 0
      %4822 = vmatpush.bf16.msra.mxu0 0
      %4823 = vmatpush.bf16.msra.mxu0 0
      %4824 = vmatpush.bf16.msra.mxu0 0
      %4825 = vmatpush.bf16.msra.mxu0 0
      %4826 = vmatpush.bf16.msra.mxu0 0
      %4827 = vmatpush.bf16.msra.mxu0 0
      %4828 = vmatpush.bf16.msra.mxu0 %v4819
      %4829 = vmatmul.bf16.gmra.mxu0 %v4765
      %v4830 = vpop.f32.mrf.mxu0
      %v4831 = vadd.f32 0.0, %v4830
      %v4832 = vpop.f32.mrf.mxu0
      %v4833 = vadd.f32 0.0, %v4832
      %4834 = vmatmul.bf16.gmra.mxu0 %v4768
      %v4835 = vpop.f32.mrf.mxu0
      %v4836 = vadd.f32 0.0, %v4835
      %v4837 = vpop.f32.mrf.mxu0
      %v4838 = vadd.f32 0.0, %v4837
      %4839 = vmatmul.bf16.gmra.mxu0 %v4771
      %v4840 = vpop.f32.mrf.mxu0
      %v4841 = vadd.f32 0.0, %v4840
      %v4842 = vpop.f32.mrf.mxu0
      %v4843 = vadd.f32 0.0, %v4842
      %4844 = vmatmul.bf16.gmra.mxu0 %v4774
      %v4845 = vpop.f32.mrf.mxu0
      %v4846 = vadd.f32 0.0, %v4845
      %v4847 = vpop.f32.mrf.mxu0
      %v4848 = vadd.f32 0.0, %v4847
      %4849 = vmatmul.bf16.gmra.mxu0 %v4777
      %v4850 = vpop.f32.mrf.mxu0
      %v4851 = vadd.f32 0.0, %v4850
      %v4852 = vpop.f32.mrf.mxu0
      %v4853 = vadd.f32 0.0, %v4852
      %4854 = vmatmul.bf16.gmra.mxu0 %v4780
      %v4855 = vpop.f32.mrf.mxu0
      %v4856 = vadd.f32 0.0, %v4855
      %v4857 = vpop.f32.mrf.mxu0
      %v4858 = vadd.f32 0.0, %v4857
      %4859 = vmatmul.bf16.gmra.mxu0 %v4783
      %v4860 = vpop.f32.mrf.mxu0
      %v4861 = vadd.f32 0.0, %v4860
      %v4862 = vpop.f32.mrf.mxu0
      %v4863 = vadd.f32 0.0, %v4862
      %4864 = vmatmul.bf16.gmra.mxu0 %v4786
      %v4865 = vpop.f32.mrf.mxu0
      %v4866 = vadd.f32 0.0, %v4865
      %v4867 = vpop.f32.mrf.mxu0
      %v4868 = vadd.f32 0.0, %v4867
      %4869 = vmatmul.bf16.gmra.mxu0 %v4789
      %v4870 = vpop.f32.mrf.mxu0
      %v4871 = vadd.f32 0.0, %v4870
      %v4872 = vpop.f32.mrf.mxu0
      %v4873 = vadd.f32 0.0, %v4872
      %4874 = vmatmul.bf16.gmra.mxu0 %v4792
      %v4875 = vpop.f32.mrf.mxu0
      %v4876 = vadd.f32 0.0, %v4875
      %v4877 = vpop.f32.mrf.mxu0
      %v4878 = vadd.f32 0.0, %v4877
      %4879 = vmatmul.bf16.gmra.mxu0 %v4795
      %v4880 = vpop.f32.mrf.mxu0
      %v4881 = vadd.f32 0.0, %v4880
      %v4882 = vpop.f32.mrf.mxu0
      %v4883 = vadd.f32 0.0, %v4882
      %4884 = vmatmul.bf16.gmra.mxu0 %v4798
      %v4885 = vpop.f32.mrf.mxu0
      %v4886 = vadd.f32 0.0, %v4885
      %v4887 = vpop.f32.mrf.mxu0
      %v4888 = vadd.f32 0.0, %v4887
      %4889 = vmatmul.bf16.gmra.mxu0 %v4801
      %v4890 = vpop.f32.mrf.mxu0
      %v4891 = vadd.f32 0.0, %v4890
      %v4892 = vpop.f32.mrf.mxu0
      %v4893 = vadd.f32 0.0, %v4892
      %4894 = vmatmul.bf16.gmra.mxu0 %v4804
      %v4895 = vpop.f32.mrf.mxu0
      %v4896 = vadd.f32 0.0, %v4895
      %v4897 = vpop.f32.mrf.mxu0
      %v4898 = vadd.f32 0.0, %v4897
      %4899 = vmatmul.bf16.gmra.mxu0 %v4807
      %v4900 = vpop.f32.mrf.mxu0
      %v4901 = vadd.f32 0.0, %v4900
      %v4902 = vpop.f32.mrf.mxu0
      %v4903 = vadd.f32 0.0, %v4902
      %4904 = vmatmul.bf16.gmra.mxu0 %v4810
      %v4905 = vpop.f32.mrf.mxu0
      %v4906 = vadd.f32 0.0, %v4905
      %v4907 = vpop.f32.mrf.mxu0
      %v4908 = vadd.f32 0.0, %v4907
      %4909 = vmatmul.bf16.gmra.mxu0 %v4813
      %v4910 = vpop.f32.mrf.mxu0
      %v4911 = vadd.f32 0.0, %v4910
      %v4912 = vpop.f32.mrf.mxu0
      %v4913 = vadd.f32 0.0, %v4912
      %4914 = vmatmul.bf16.gmra.mxu0 %v4816
      %v4915 = vpop.f32.mrf.mxu0
      %v4916 = vadd.f32 0.0, %v4915
      %v4917 = vpop.f32.mrf.mxu0
      %v4918 = vadd.f32 0.0, %v4917
      %4919 = vdwg.mxu0
      %v4920 = vadd.f32 %v4685, %v4831
      %v4921 = vadd.f32 %v4686, %v4833
      %v4922 = vadd.f32 %v4687, %v4836
      %v4923 = vadd.f32 %v4688, %v4838
      %v4924 = vadd.f32 %v4689, %v4841
      %v4925 = vadd.f32 %v4690, %v4843
      %v4926 = vadd.f32 %v4691, %v4846
      %v4927 = vadd.f32 %v4692, %v4848
      %v4928 = vadd.f32 %v4693, %v4851
      %v4929 = vadd.f32 %v4694, %v4853
      %v4930 = vadd.f32 %v4695, %v4856
      %v4931 = vadd.f32 %v4696, %v4858
      %v4932 = vadd.f32 %v4697, %v4861
      %v4933 = vadd.f32 %v4698, %v4863
      %v4934 = vadd.f32 %v4699, %v4866
      %v4935 = vadd.f32 %v4700, %v4868
      %v4936 = vadd.f32 %v4701, %v4871
      %v4937 = vadd.f32 %v4702, %v4873
      %v4938 = vadd.f32 %v4703, %v4876
      %v4939 = vadd.f32 %v4704, %v4878
      %v4940 = vadd.f32 %v4705, %v4881
      %v4941 = vadd.f32 %v4706, %v4883
      %v4942 = vadd.f32 %v4707, %v4886
      %v4943 = vadd.f32 %v4708, %v4888
      %v4944 = vadd.f32 %v4709, %v4891
      %v4945 = vadd.f32 %v4710, %v4893
      %v4946 = vadd.f32 %v4711, %v4896
      %v4947 = vadd.f32 %v4712, %v4898
      %v4948 = vadd.f32 %v4713, %v4901
      %v4949 = vadd.f32 %v4714, %v4903
      %v4950 = vadd.f32 %v4715, %v4906
      %v4951 = vadd.f32 %v4716, %v4908
      %v4952 = vadd.f32 %v4717, %v4911
      %v4953 = vadd.f32 %v4718, %v4913
      %v4954 = vadd.f32 %v4719, %v4916
      %v4955 = vadd.f32 %v4720, %v4918
      %v4956 = vld [vmem:[%s212 + $0x10] sm:$0xc]
      %v4957 = vld [vmem:[%s212 + $0x14] sm:$0xf]
      %v4958 = vld [vmem:[%s212 + $0x18] sm:$0xf]
      %v4959 = vld [vmem:[%s212 + $0x1c] sm:$0xf]
      %v4960 = vld [vmem:[%s212 + $0x20] sm:$0xf]
      %v4961 = vld [vmem:[%s212 + $0x24] sm:$0xf]
      %v4962 = vld [vmem:[%s212 + $0x28] sm:$0xf]
      %v4963 = vld [vmem:[%s212 + $0x2c] sm:$0xf]
      %v4964 = vld [vmem:[%s212 + $0x30] sm:$0xf]
      %v4965 = vld [vmem:[%s212 + $0x34] sm:$0xf]
      %v4966 = vld [vmem:[%s212 + $0x38] sm:$0xf]
      %v4967 = vld [vmem:[%s212 + $0x3c] sm:$0xf]
      %v4968 = vld [vmem:[%s212 + $0x40] sm:$0xf]
      %v4969 = vld [vmem:[%s212 + $0x44] sm:$0xf]
      %v4970 = vld [vmem:[%s212 + $0x48] sm:$0xf]
      %v4971 = vld [vmem:[%s212 + $0x4c] sm:$0xf]
      %v4972 = vld [vmem:[%s212 + $0x50] sm:$0xf]
      %v4973 = vld [vmem:[%s212 + $0x54] sm:$0xf]
      %v4974 = vld [vmem:[%s212 + $0x58] sm:$0xf]
      %v4975 = vld [vmem:[%s212 + $0x5c] sm:$0xf]
      %v4976 = vld [vmem:[%s212 + $0x60] sm:$0xf]
      %v4977 = vld [vmem:[%s212 + $0x64] sm:$0xf]
      %v4978 = vld [vmem:[%s212 + $0x68] sm:$0xf]
      %v4979 = vld [vmem:[%s212 + $0x6c] sm:$0xf]
      %v4980 = vld [vmem:[%s212 + $0x70] sm:$0xf]
      %v4981 = vld [vmem:[%s212 + $0x74] sm:$0xf]
      %v4982 = vld [vmem:[%s212 + $0x78] sm:$0xf]
      %v4983 = vld [vmem:[%s212 + $0x7c] sm:$0xf]
      %v4984 = vld [vmem:[%s212 + $0x80] sm:$0xf]
      %v4985 = vld [vmem:[%s212 + $0x84] sm:$0xf]
      %v4986 = vld [vmem:[%s212 + $0x88] sm:$0xf]
      %v4987 = vld [vmem:[%s212 + $0x8c] sm:$0xf]
      %v4988 = vld [vmem:[%s212 + $0x90] sm:$0xf]
      %v4989 = vld [vmem:[%s212 + $0x94] sm:$0xf]
      %v4990 = vld [vmem:[%s212 + $0x98] sm:$0xf]
      %v4991 = vld [vmem:[%s212 + $0x9c] sm:$0xf]
      %v4992 = vld [vmem:[%s212 + $0xa0] sm:$0x3]
      %s4993 = scalar_lea.vmem %s2, 60
      %v4994 = vld [vmem:[%s4993] sm:$0xf]
      %v5032 = vunpack.c.l.b16 %v4956
      %v5033 = vunpack.c.l.b16 %v4957
      %v5034 = vunpack.c.l.b16 %v4958
      %v5035 = vunpack.c.l.b16 %v4959
      %v5036 = vunpack.c.l.b16 %v4960
      %v5037 = vunpack.c.l.b16 %v4961
      %v5038 = vunpack.c.l.b16 %v4962
      %v5039 = vunpack.c.l.b16 %v4963
      %v5040 = vunpack.c.l.b16 %v4964
      %v5041 = vunpack.c.l.b16 %v4965
      %v5042 = vunpack.c.l.b16 %v4966
      %v5043 = vunpack.c.l.b16 %v4967
      %v5044 = vunpack.c.l.b16 %v4968
      %v5045 = vunpack.c.l.b16 %v4969
      %v5046 = vunpack.c.l.b16 %v4970
      %v5047 = vunpack.c.l.b16 %v4971
      %v5048 = vunpack.c.l.b16 %v4972
      %v5049 = vunpack.c.l.b16 %v4973
      %v5050 = vunpack.c.l.b16 %v4974
      %v5051 = vunpack.c.l.b16 %v4975
      %v5052 = vunpack.c.l.b16 %v4976
      %v5053 = vunpack.c.l.b16 %v4977
      %v5054 = vunpack.c.l.b16 %v4978
      %v5055 = vunpack.c.l.b16 %v4979
      %v5056 = vunpack.c.l.b16 %v4980
      %v5057 = vunpack.c.l.b16 %v4981
      %v5058 = vunpack.c.l.b16 %v4982
      %v5059 = vunpack.c.l.b16 %v4983
      %v5060 = vunpack.c.l.b16 %v4984
      %v5061 = vunpack.c.l.b16 %v4985
      %v5062 = vunpack.c.l.b16 %v4986
      %v5063 = vunpack.c.l.b16 %v4987
      %v5064 = vunpack.c.l.b16 %v4988
      %v5065 = vunpack.c.l.b16 %v4989
      %v5066 = vunpack.c.l.b16 %v4990
      %v5067 = vunpack.c.l.b16 %v4991
      %v5068 = vunpack.c.l.b16 %v4992
      %v5069 = vpack.c.b16 %v5033, %v5032
      %v5070 = vpack.c.b16 %v5035, %v5034
      %v5071 = vpack.c.b16 %v5037, %v5036
      %v5072 = vpack.c.b16 %v5039, %v5038
      %v5073 = vpack.c.b16 %v5041, %v5040
      %v5074 = vpack.c.b16 %v5043, %v5042
      %v5075 = vpack.c.b16 %v5045, %v5044
      %v5076 = vpack.c.b16 %v5047, %v5046
      %v5077 = vpack.c.b16 %v5049, %v5048
      %v5078 = vpack.c.b16 %v5051, %v5050
      %v5079 = vpack.c.b16 %v5053, %v5052
      %v5080 = vpack.c.b16 %v5055, %v5054
      %v5081 = vpack.c.b16 %v5057, %v5056
      %v5082 = vpack.c.b16 %v5059, %v5058
      %v5083 = vpack.c.b16 %v5061, %v5060
      %v5084 = vpack.c.b16 %v5063, %v5062
      %v5085 = vpack.c.b16 %v5065, %v5064
      %v5086 = vpack.c.b16 %v5067, %v5066
      %v5087 = vpack.c.b16 %v5068, %v5068
      %v5088 = vrot.slane %v5069, 2
      %v5089 = vrot.slane %v5070, 2
      %v5090 = vsel %vm1769, %v5088, %v5089
      %v5091 = vrot.slane %v5071, 2
      %v5092 = vsel %vm1769, %v5089, %v5091
      %v5093 = vrot.slane %v5072, 2
      %v5094 = vsel %vm1769, %v5091, %v5093
      %v5095 = vrot.slane %v5073, 2
      %v5096 = vsel %vm1769, %v5093, %v5095
      %v5097 = vrot.slane %v5074, 2
      %v5098 = vsel %vm1769, %v5095, %v5097
      %v5099 = vrot.slane %v5075, 2
      %v5100 = vsel %vm1769, %v5097, %v5099
      %v5101 = vrot.slane %v5076, 2
      %v5102 = vsel %vm1769, %v5099, %v5101
      %v5103 = vrot.slane %v5077, 2
      %v5104 = vsel %vm1769, %v5101, %v5103
      %v5105 = vrot.slane %v5078, 2
      %v5106 = vsel %vm1769, %v5103, %v5105
      %v5107 = vrot.slane %v5079, 2
      %v5108 = vsel %vm1769, %v5105, %v5107
      %v5109 = vrot.slane %v5080, 2
      %v5110 = vsel %vm1769, %v5107, %v5109
      %v5111 = vrot.slane %v5081, 2
      %v5112 = vsel %vm1769, %v5109, %v5111
      %v5113 = vrot.slane %v5082, 2
      %v5114 = vsel %vm1769, %v5111, %v5113
      %v5115 = vrot.slane %v5083, 2
      %v5116 = vsel %vm1769, %v5113, %v5115
      %v5117 = vrot.slane %v5084, 2
      %v5118 = vsel %vm1769, %v5115, %v5117
      %v5119 = vrot.slane %v5085, 2
      %v5120 = vsel %vm1769, %v5117, %v5119
      %v5121 = vrot.slane %v5086, 2
      %v5122 = vsel %vm1769, %v5119, %v5121
      %v5123 = vrot.slane %v5087, 2
      %v5124 = vsel %vm1769, %v5121, %v5123
      %v5126 = vsel %vm501, %v5090, 0
      %v5129 = vsel %vm501, %v5092, 0
      %v5132 = vsel %vm501, %v5094, 0
      %v5135 = vsel %vm501, %v5096, 0
      %v5138 = vsel %vm501, %v5098, 0
      %v5141 = vsel %vm501, %v5100, 0
      %v5144 = vsel %vm501, %v5102, 0
      %v5147 = vsel %vm501, %v5104, 0
      %v5150 = vsel %vm501, %v5106, 0
      %v5153 = vsel %vm501, %v5108, 0
      %v5156 = vsel %vm501, %v5110, 0
      %v5159 = vsel %vm501, %v5112, 0
      %v5162 = vsel %vm501, %v5114, 0
      %v5165 = vsel %vm501, %v5116, 0
      %v5168 = vsel %vm501, %v5118, 0
      %v5171 = vsel %vm501, %v5120, 0
      %v5174 = vsel %vm501, %v5122, 0
      %v5177 = vsel %vm501, %v5124, 0
      %v5180 = vsel %vm556, %v4994, 0
      %5182 = vmatpush.bf16.msra.mxu0 0
      %5183 = vmatpush.bf16.msra.mxu0 0
      %5184 = vmatpush.bf16.msra.mxu0 0
      %5185 = vmatpush.bf16.msra.mxu0 0
      %5186 = vmatpush.bf16.msra.mxu0 0
      %5187 = vmatpush.bf16.msra.mxu0 0
      %5188 = vmatpush.bf16.msra.mxu0 0
      %5189 = vmatpush.bf16.msra.mxu0 %v5180
      %5190 = vmatmul.bf16.gmra.mxu0 %v5126
      %v5191 = vpop.f32.mrf.mxu0
      %v5192 = vadd.f32 0.0, %v5191
      %v5193 = vpop.f32.mrf.mxu0
      %v5194 = vadd.f32 0.0, %v5193
      %5195 = vmatmul.bf16.gmra.mxu0 %v5129
      %v5196 = vpop.f32.mrf.mxu0
      %v5197 = vadd.f32 0.0, %v5196
      %v5198 = vpop.f32.mrf.mxu0
      %v5199 = vadd.f32 0.0, %v5198
      %5200 = vmatmul.bf16.gmra.mxu0 %v5132
      %v5201 = vpop.f32.mrf.mxu0
      %v5202 = vadd.f32 0.0, %v5201
      %v5203 = vpop.f32.mrf.mxu0
      %v5204 = vadd.f32 0.0, %v5203
      %5205 = vmatmul.bf16.gmra.mxu0 %v5135
      %v5206 = vpop.f32.mrf.mxu0
      %v5207 = vadd.f32 0.0, %v5206
      %v5208 = vpop.f32.mrf.mxu0
      %v5209 = vadd.f32 0.0, %v5208
      %5210 = vmatmul.bf16.gmra.mxu0 %v5138
      %v5211 = vpop.f32.mrf.mxu0
      %v5212 = vadd.f32 0.0, %v5211
      %v5213 = vpop.f32.mrf.mxu0
      %v5214 = vadd.f32 0.0, %v5213
      %5215 = vmatmul.bf16.gmra.mxu0 %v5141
      %v5216 = vpop.f32.mrf.mxu0
      %v5217 = vadd.f32 0.0, %v5216
      %v5218 = vpop.f32.mrf.mxu0
      %v5219 = vadd.f32 0.0, %v5218
      %5220 = vmatmul.bf16.gmra.mxu0 %v5144
      %v5221 = vpop.f32.mrf.mxu0
      %v5222 = vadd.f32 0.0, %v5221
      %v5223 = vpop.f32.mrf.mxu0
      %v5224 = vadd.f32 0.0, %v5223
      %5225 = vmatmul.bf16.gmra.mxu0 %v5147
      %v5226 = vpop.f32.mrf.mxu0
      %v5227 = vadd.f32 0.0, %v5226
      %v5228 = vpop.f32.mrf.mxu0
      %v5229 = vadd.f32 0.0, %v5228
      %5230 = vmatmul.bf16.gmra.mxu0 %v5150
      %v5231 = vpop.f32.mrf.mxu0
      %v5232 = vadd.f32 0.0, %v5231
      %v5233 = vpop.f32.mrf.mxu0
      %v5234 = vadd.f32 0.0, %v5233
      %5235 = vmatmul.bf16.gmra.mxu0 %v5153
      %v5236 = vpop.f32.mrf.mxu0
      %v5237 = vadd.f32 0.0, %v5236
      %v5238 = vpop.f32.mrf.mxu0
      %v5239 = vadd.f32 0.0, %v5238
      %5240 = vmatmul.bf16.gmra.mxu0 %v5156
      %v5241 = vpop.f32.mrf.mxu0
      %v5242 = vadd.f32 0.0, %v5241
      %v5243 = vpop.f32.mrf.mxu0
      %v5244 = vadd.f32 0.0, %v5243
      %5245 = vmatmul.bf16.gmra.mxu0 %v5159
      %v5246 = vpop.f32.mrf.mxu0
      %v5247 = vadd.f32 0.0, %v5246
      %v5248 = vpop.f32.mrf.mxu0
      %v5249 = vadd.f32 0.0, %v5248
      %5250 = vmatmul.bf16.gmra.mxu0 %v5162
      %v5251 = vpop.f32.mrf.mxu0
      %v5252 = vadd.f32 0.0, %v5251
      %v5253 = vpop.f32.mrf.mxu0
      %v5254 = vadd.f32 0.0, %v5253
      %5255 = vmatmul.bf16.gmra.mxu0 %v5165
      %v5256 = vpop.f32.mrf.mxu0
      %v5257 = vadd.f32 0.0, %v5256
      %v5258 = vpop.f32.mrf.mxu0
      %v5259 = vadd.f32 0.0, %v5258
      %5260 = vmatmul.bf16.gmra.mxu0 %v5168
      %v5261 = vpop.f32.mrf.mxu0
      %v5262 = vadd.f32 0.0, %v5261
      %v5263 = vpop.f32.mrf.mxu0
      %v5264 = vadd.f32 0.0, %v5263
      %5265 = vmatmul.bf16.gmra.mxu0 %v5171
      %v5266 = vpop.f32.mrf.mxu0
      %v5267 = vadd.f32 0.0, %v5266
      %v5268 = vpop.f32.mrf.mxu0
      %v5269 = vadd.f32 0.0, %v5268
      %5270 = vmatmul.bf16.gmra.mxu0 %v5174
      %v5271 = vpop.f32.mrf.mxu0
      %v5272 = vadd.f32 0.0, %v5271
      %v5273 = vpop.f32.mrf.mxu0
      %v5274 = vadd.f32 0.0, %v5273
      %5275 = vmatmul.bf16.gmra.mxu0 %v5177
      %v5276 = vpop.f32.mrf.mxu0
      %v5277 = vadd.f32 0.0, %v5276
      %v5278 = vpop.f32.mrf.mxu0
      %v5279 = vadd.f32 0.0, %v5278
      %5280 = vdwg.mxu0
      %v5281 = vadd.f32 %v4920, %v5192
      %v5282 = vadd.f32 %v4921, %v5194
      %v5283 = vadd.f32 %v4922, %v5197
      %v5284 = vadd.f32 %v4923, %v5199
      %v5285 = vadd.f32 %v4924, %v5202
      %v5286 = vadd.f32 %v4925, %v5204
      %v5287 = vadd.f32 %v4926, %v5207
      %v5288 = vadd.f32 %v4927, %v5209
      %v5289 = vadd.f32 %v4928, %v5212
      %v5290 = vadd.f32 %v4929, %v5214
      %v5291 = vadd.f32 %v4930, %v5217
      %v5292 = vadd.f32 %v4931, %v5219
      %v5293 = vadd.f32 %v4932, %v5222
      %v5294 = vadd.f32 %v4933, %v5224
      %v5295 = vadd.f32 %v4934, %v5227
      %v5296 = vadd.f32 %v4935, %v5229
      %v5297 = vadd.f32 %v4936, %v5232
      %v5298 = vadd.f32 %v4937, %v5234
      %v5299 = vadd.f32 %v4938, %v5237
      %v5300 = vadd.f32 %v4939, %v5239
      %v5301 = vadd.f32 %v4940, %v5242
      %v5302 = vadd.f32 %v4941, %v5244
      %v5303 = vadd.f32 %v4942, %v5247
      %v5304 = vadd.f32 %v4943, %v5249
      %v5305 = vadd.f32 %v4944, %v5252
      %v5306 = vadd.f32 %v4945, %v5254
      %v5307 = vadd.f32 %v4946, %v5257
      %v5308 = vadd.f32 %v4947, %v5259
      %v5309 = vadd.f32 %v4948, %v5262
      %v5310 = vadd.f32 %v4949, %v5264
      %v5311 = vadd.f32 %v4950, %v5267
      %v5312 = vadd.f32 %v4951, %v5269
      %v5313 = vadd.f32 %v4952, %v5272
      %v5314 = vadd.f32 %v4953, %v5274
      %v5315 = vadd.f32 %v4954, %v5277
      %v5316 = vadd.f32 %v4955, %v5279
      %v5317 = vld [vmem:[%s212 + $0xa0] sm:$0x7]
      %s5318 = scalar_lea.vmem %s2, 64
      %v5319 = vld [vmem:[%s5318] sm:$0xf]
      %v5321 = vunpack.c.l.b16 %v5317
      %v5322 = vpack.c.b16 %v5321, %v5321
      %v5324 = vshrl.u32 %v5069, 16
      %v5326 = vrot.slane %v5324, 2
      %v5327 = vshll.u32 %v5069, 16
      %v5329 = vrot.slane %v5327, 3
      %v5330 = vor.u32 %v5326, %v5329
      %v5332 = vshrl.u32 %v5070, 16
      %v5334 = vrot.slane %v5332, 2
      %v5335 = vshll.u32 %v5070, 16
      %v5337 = vrot.slane %v5335, 3
      %v5338 = vor.u32 %v5334, %v5337
      %v5339 = vsel %vm2366, %v5330, %v5338
      %v5341 = vshrl.u32 %v5071, 16
      %v5343 = vrot.slane %v5341, 2
      %v5344 = vshll.u32 %v5071, 16
      %v5346 = vrot.slane %v5344, 3
      %v5347 = vor.u32 %v5343, %v5346
      %v5348 = vsel %vm2366, %v5338, %v5347
      %v5350 = vshrl.u32 %v5072, 16
      %v5352 = vrot.slane %v5350, 2
      %v5353 = vshll.u32 %v5072, 16
      %v5355 = vrot.slane %v5353, 3
      %v5356 = vor.u32 %v5352, %v5355
      %v5357 = vsel %vm2366, %v5347, %v5356
      %v5359 = vshrl.u32 %v5073, 16
      %v5361 = vrot.slane %v5359, 2
      %v5362 = vshll.u32 %v5073, 16
      %v5364 = vrot.slane %v5362, 3
      %v5365 = vor.u32 %v5361, %v5364
      %v5366 = vsel %vm2366, %v5356, %v5365
      %v5368 = vshrl.u32 %v5074, 16
      %v5370 = vrot.slane %v5368, 2
      %v5371 = vshll.u32 %v5074, 16
      %v5373 = vrot.slane %v5371, 3
      %v5374 = vor.u32 %v5370, %v5373
      %v5375 = vsel %vm2366, %v5365, %v5374
      %v5377 = vshrl.u32 %v5075, 16
      %v5379 = vrot.slane %v5377, 2
      %v5380 = vshll.u32 %v5075, 16
      %v5382 = vrot.slane %v5380, 3
      %v5383 = vor.u32 %v5379, %v5382
      %v5384 = vsel %vm2366, %v5374, %v5383
      %v5386 = vshrl.u32 %v5076, 16
      %v5388 = vrot.slane %v5386, 2
      %v5389 = vshll.u32 %v5076, 16
      %v5391 = vrot.slane %v5389, 3
      %v5392 = vor.u32 %v5388, %v5391
      %v5393 = vsel %vm2366, %v5383, %v5392
      %v5395 = vshrl.u32 %v5077, 16
      %v5397 = vrot.slane %v5395, 2
      %v5398 = vshll.u32 %v5077, 16
      %v5400 = vrot.slane %v5398, 3
      %v5401 = vor.u32 %v5397, %v5400
      %v5402 = vsel %vm2366, %v5392, %v5401
      %v5404 = vshrl.u32 %v5078, 16
      %v5406 = vrot.slane %v5404, 2
      %v5407 = vshll.u32 %v5078, 16
      %v5409 = vrot.slane %v5407, 3
      %v5410 = vor.u32 %v5406, %v5409
      %v5411 = vsel %vm2366, %v5401, %v5410
      %v5413 = vshrl.u32 %v5079, 16
      %v5415 = vrot.slane %v5413, 2
      %v5416 = vshll.u32 %v5079, 16
      %v5418 = vrot.slane %v5416, 3
      %v5419 = vor.u32 %v5415, %v5418
      %v5420 = vsel %vm2366, %v5410, %v5419
      %v5422 = vshrl.u32 %v5080, 16
      %v5424 = vrot.slane %v5422, 2
      %v5425 = vshll.u32 %v5080, 16
      %v5427 = vrot.slane %v5425, 3
      %v5428 = vor.u32 %v5424, %v5427
      %v5429 = vsel %vm2366, %v5419, %v5428
      %v5431 = vshrl.u32 %v5081, 16
      %v5433 = vrot.slane %v5431, 2
      %v5434 = vshll.u32 %v5081, 16
      %v5436 = vrot.slane %v5434, 3
      %v5437 = vor.u32 %v5433, %v5436
      %v5438 = vsel %vm2366, %v5428, %v5437
      %v5440 = vshrl.u32 %v5082, 16
      %v5442 = vrot.slane %v5440, 2
      %v5443 = vshll.u32 %v5082, 16
      %v5445 = vrot.slane %v5443, 3
      %v5446 = vor.u32 %v5442, %v5445
      %v5447 = vsel %vm2366, %v5437, %v5446
      %v5449 = vshrl.u32 %v5083, 16
      %v5451 = vrot.slane %v5449, 2
      %v5452 = vshll.u32 %v5083, 16
      %v5454 = vrot.slane %v5452, 3
      %v5455 = vor.u32 %v5451, %v5454
      %v5456 = vsel %vm2366, %v5446, %v5455
      %v5458 = vshrl.u32 %v5084, 16
      %v5460 = vrot.slane %v5458, 2
      %v5461 = vshll.u32 %v5084, 16
      %v5463 = vrot.slane %v5461, 3
      %v5464 = vor.u32 %v5460, %v5463
      %v5465 = vsel %vm2366, %v5455, %v5464
      %v5467 = vshrl.u32 %v5085, 16
      %v5469 = vrot.slane %v5467, 2
      %v5470 = vshll.u32 %v5085, 16
      %v5472 = vrot.slane %v5470, 3
      %v5473 = vor.u32 %v5469, %v5472
      %v5474 = vsel %vm2366, %v5464, %v5473
      %v5476 = vshrl.u32 %v5086, 16
      %v5478 = vrot.slane %v5476, 2
      %v5479 = vshll.u32 %v5086, 16
      %v5481 = vrot.slane %v5479, 3
      %v5482 = vor.u32 %v5478, %v5481
      %v5483 = vsel %vm2366, %v5473, %v5482
      %v5485 = vshrl.u32 %v5322, 16
      %v5487 = vrot.slane %v5485, 2
      %v5488 = vshll.u32 %v5322, 16
      %v5490 = vrot.slane %v5488, 3
      %v5491 = vor.u32 %v5487, %v5490
      %v5492 = vsel %vm2366, %v5482, %v5491
      %v5494 = vsel %vm501, %v5339, 0
      %v5497 = vsel %vm501, %v5348, 0
      %v5500 = vsel %vm501, %v5357, 0
      %v5503 = vsel %vm501, %v5366, 0
      %v5506 = vsel %vm501, %v5375, 0
      %v5509 = vsel %vm501, %v5384, 0
      %v5512 = vsel %vm501, %v5393, 0
      %v5515 = vsel %vm501, %v5402, 0
      %v5518 = vsel %vm501, %v5411, 0
      %v5521 = vsel %vm501, %v5420, 0
      %v5524 = vsel %vm501, %v5429, 0
      %v5527 = vsel %vm501, %v5438, 0
      %v5530 = vsel %vm501, %v5447, 0
      %v5533 = vsel %vm501, %v5456, 0
      %v5536 = vsel %vm501, %v5465, 0
      %v5539 = vsel %vm501, %v5474, 0
      %v5542 = vsel %vm501, %v5483, 0
      %v5545 = vsel %vm501, %v5492, 0
      %v5548 = vsel %vm556, %v5319, 0
      %5550 = vmatpush.bf16.msra.mxu0 0
      %5551 = vmatpush.bf16.msra.mxu0 0
      %5552 = vmatpush.bf16.msra.mxu0 0
      %5553 = vmatpush.bf16.msra.mxu0 0
      %5554 = vmatpush.bf16.msra.mxu0 0
      %5555 = vmatpush.bf16.msra.mxu0 0
      %5556 = vmatpush.bf16.msra.mxu0 0
      %5557 = vmatpush.bf16.msra.mxu0 %v5548
      %5558 = vmatmul.bf16.gmra.mxu0 %v5494
      %v5559 = vpop.f32.mrf.mxu0
      %v5560 = vadd.f32 0.0, %v5559
      %v5561 = vpop.f32.mrf.mxu0
      %v5562 = vadd.f32 0.0, %v5561
      %5563 = vmatmul.bf16.gmra.mxu0 %v5497
      %v5564 = vpop.f32.mrf.mxu0
      %v5565 = vadd.f32 0.0, %v5564
      %v5566 = vpop.f32.mrf.mxu0
      %v5567 = vadd.f32 0.0, %v5566
      %5568 = vmatmul.bf16.gmra.mxu0 %v5500
      %v5569 = vpop.f32.mrf.mxu0
      %v5570 = vadd.f32 0.0, %v5569
      %v5571 = vpop.f32.mrf.mxu0
      %v5572 = vadd.f32 0.0, %v5571
      %5573 = vmatmul.bf16.gmra.mxu0 %v5503
      %v5574 = vpop.f32.mrf.mxu0
      %v5575 = vadd.f32 0.0, %v5574
      %v5576 = vpop.f32.mrf.mxu0
      %v5577 = vadd.f32 0.0, %v5576
      %5578 = vmatmul.bf16.gmra.mxu0 %v5506
      %v5579 = vpop.f32.mrf.mxu0
      %v5580 = vadd.f32 0.0, %v5579
      %v5581 = vpop.f32.mrf.mxu0
      %v5582 = vadd.f32 0.0, %v5581
      %5583 = vmatmul.bf16.gmra.mxu0 %v5509
      %v5584 = vpop.f32.mrf.mxu0
      %v5585 = vadd.f32 0.0, %v5584
      %v5586 = vpop.f32.mrf.mxu0
      %v5587 = vadd.f32 0.0, %v5586
      %5588 = vmatmul.bf16.gmra.mxu0 %v5512
      %v5589 = vpop.f32.mrf.mxu0
      %v5590 = vadd.f32 0.0, %v5589
      %v5591 = vpop.f32.mrf.mxu0
      %v5592 = vadd.f32 0.0, %v5591
      %5593 = vmatmul.bf16.gmra.mxu0 %v5515
      %v5594 = vpop.f32.mrf.mxu0
      %v5595 = vadd.f32 0.0, %v5594
      %v5596 = vpop.f32.mrf.mxu0
      %v5597 = vadd.f32 0.0, %v5596
      %5598 = vmatmul.bf16.gmra.mxu0 %v5518
      %v5599 = vpop.f32.mrf.mxu0
      %v5600 = vadd.f32 0.0, %v5599
      %v5601 = vpop.f32.mrf.mxu0
      %v5602 = vadd.f32 0.0, %v5601
      %5603 = vmatmul.bf16.gmra.mxu0 %v5521
      %v5604 = vpop.f32.mrf.mxu0
      %v5605 = vadd.f32 0.0, %v5604
      %v5606 = vpop.f32.mrf.mxu0
      %v5607 = vadd.f32 0.0, %v5606
      %5608 = vmatmul.bf16.gmra.mxu0 %v5524
      %v5609 = vpop.f32.mrf.mxu0
      %v5610 = vadd.f32 0.0, %v5609
      %v5611 = vpop.f32.mrf.mxu0
      %v5612 = vadd.f32 0.0, %v5611
      %5613 = vmatmul.bf16.gmra.mxu0 %v5527
      %v5614 = vpop.f32.mrf.mxu0
      %v5615 = vadd.f32 0.0, %v5614
      %v5616 = vpop.f32.mrf.mxu0
      %v5617 = vadd.f32 0.0, %v5616
      %5618 = vmatmul.bf16.gmra.mxu0 %v5530
      %v5619 = vpop.f32.mrf.mxu0
      %v5620 = vadd.f32 0.0, %v5619
      %v5621 = vpop.f32.mrf.mxu0
      %v5622 = vadd.f32 0.0, %v5621
      %5623 = vmatmul.bf16.gmra.mxu0 %v5533
      %v5624 = vpop.f32.mrf.mxu0
      %v5625 = vadd.f32 0.0, %v5624
      %v5626 = vpop.f32.mrf.mxu0
      %v5627 = vadd.f32 0.0, %v5626
      %5628 = vmatmul.bf16.gmra.mxu0 %v5536
      %v5629 = vpop.f32.mrf.mxu0
      %v5630 = vadd.f32 0.0, %v5629
      %v5631 = vpop.f32.mrf.mxu0
      %v5632 = vadd.f32 0.0, %v5631
      %5633 = vmatmul.bf16.gmra.mxu0 %v5539
      %v5634 = vpop.f32.mrf.mxu0
      %v5635 = vadd.f32 0.0, %v5634
      %v5636 = vpop.f32.mrf.mxu0
      %v5637 = vadd.f32 0.0, %v5636
      %5638 = vmatmul.bf16.gmra.mxu0 %v5542
      %v5639 = vpop.f32.mrf.mxu0
      %v5640 = vadd.f32 0.0, %v5639
      %v5641 = vpop.f32.mrf.mxu0
      %v5642 = vadd.f32 0.0, %v5641
      %5643 = vmatmul.bf16.gmra.mxu0 %v5545
      %v5644 = vpop.f32.mrf.mxu0
      %v5645 = vadd.f32 0.0, %v5644
      %v5646 = vpop.f32.mrf.mxu0
      %v5647 = vadd.f32 0.0, %v5646
      %5648 = vdwg.mxu0
      %v5649 = vadd.f32 %v5281, %v5560
      %v5650 = vadd.f32 %v5282, %v5562
      %v5651 = vadd.f32 %v5283, %v5565
      %v5652 = vadd.f32 %v5284, %v5567
      %v5653 = vadd.f32 %v5285, %v5570
      %v5654 = vadd.f32 %v5286, %v5572
      %v5655 = vadd.f32 %v5287, %v5575
      %v5656 = vadd.f32 %v5288, %v5577
      %v5657 = vadd.f32 %v5289, %v5580
      %v5658 = vadd.f32 %v5290, %v5582
      %v5659 = vadd.f32 %v5291, %v5585
      %v5660 = vadd.f32 %v5292, %v5587
      %v5661 = vadd.f32 %v5293, %v5590
      %v5662 = vadd.f32 %v5294, %v5592
      %v5663 = vadd.f32 %v5295, %v5595
      %v5664 = vadd.f32 %v5296, %v5597
      %v5665 = vadd.f32 %v5297, %v5600
      %v5666 = vadd.f32 %v5298, %v5602
      %v5667 = vadd.f32 %v5299, %v5605
      %v5668 = vadd.f32 %v5300, %v5607
      %v5669 = vadd.f32 %v5301, %v5610
      %v5670 = vadd.f32 %v5302, %v5612
      %v5671 = vadd.f32 %v5303, %v5615
      %v5672 = vadd.f32 %v5304, %v5617
      %v5673 = vadd.f32 %v5305, %v5620
      %v5674 = vadd.f32 %v5306, %v5622
      %v5675 = vadd.f32 %v5307, %v5625
      %v5676 = vadd.f32 %v5308, %v5627
      %v5677 = vadd.f32 %v5309, %v5630
      %v5678 = vadd.f32 %v5310, %v5632
      %v5679 = vadd.f32 %v5311, %v5635
      %v5680 = vadd.f32 %v5312, %v5637
      %v5681 = vadd.f32 %v5313, %v5640
      %v5682 = vadd.f32 %v5314, %v5642
      %v5683 = vadd.f32 %v5315, %v5645
      %v5684 = vadd.f32 %v5316, %v5647
      %v5685 = vld [vmem:[%s212 + $0x10] sm:$0x8]
      %s5686 = scalar_lea.vmem %s2, 68
      %v5687 = vld [vmem:[%s5686] sm:$0xf]
      %v5689 = vunpack.c.l.b16 %v5685
      %v5690 = vpack.c.b16 %v5033, %v5689
      %v5691 = vrot.slane %v5690, 3
      %v5692 = vrot.slane %v5070, 3
      %v5693 = vsel %vm2735, %v5691, %v5692
      %v5694 = vrot.slane %v5071, 3
      %v5695 = vsel %vm2735, %v5692, %v5694
      %v5696 = vrot.slane %v5072, 3
      %v5697 = vsel %vm2735, %v5694, %v5696
      %v5698 = vrot.slane %v5073, 3
      %v5699 = vsel %vm2735, %v5696, %v5698
      %v5700 = vrot.slane %v5074, 3
      %v5701 = vsel %vm2735, %v5698, %v5700
      %v5702 = vrot.slane %v5075, 3
      %v5703 = vsel %vm2735, %v5700, %v5702
      %v5704 = vrot.slane %v5076, 3
      %v5705 = vsel %vm2735, %v5702, %v5704
      %v5706 = vrot.slane %v5077, 3
      %v5707 = vsel %vm2735, %v5704, %v5706
      %v5708 = vrot.slane %v5078, 3
      %v5709 = vsel %vm2735, %v5706, %v5708
      %v5710 = vrot.slane %v5079, 3
      %v5711 = vsel %vm2735, %v5708, %v5710
      %v5712 = vrot.slane %v5080, 3
      %v5713 = vsel %vm2735, %v5710, %v5712
      %v5714 = vrot.slane %v5081, 3
      %v5715 = vsel %vm2735, %v5712, %v5714
      %v5716 = vrot.slane %v5082, 3
      %v5717 = vsel %vm2735, %v5714, %v5716
      %v5718 = vrot.slane %v5083, 3
      %v5719 = vsel %vm2735, %v5716, %v5718
      %v5720 = vrot.slane %v5084, 3
      %v5721 = vsel %vm2735, %v5718, %v5720
      %v5722 = vrot.slane %v5085, 3
      %v5723 = vsel %vm2735, %v5720, %v5722
      %v5724 = vrot.slane %v5086, 3
      %v5725 = vsel %vm2735, %v5722, %v5724
      %v5726 = vrot.slane %v5322, 3
      %v5727 = vsel %vm2735, %v5724, %v5726
      %v5729 = vsel %vm501, %v5693, 0
      %v5732 = vsel %vm501, %v5695, 0
      %v5735 = vsel %vm501, %v5697, 0
      %v5738 = vsel %vm501, %v5699, 0
      %v5741 = vsel %vm501, %v5701, 0
      %v5744 = vsel %vm501, %v5703, 0
      %v5747 = vsel %vm501, %v5705, 0
      %v5750 = vsel %vm501, %v5707, 0
      %v5753 = vsel %vm501, %v5709, 0
      %v5756 = vsel %vm501, %v5711, 0
      %v5759 = vsel %vm501, %v5713, 0
      %v5762 = vsel %vm501, %v5715, 0
      %v5765 = vsel %vm501, %v5717, 0
      %v5768 = vsel %vm501, %v5719, 0
      %v5771 = vsel %vm501, %v5721, 0
      %v5774 = vsel %vm501, %v5723, 0
      %v5777 = vsel %vm501, %v5725, 0
      %v5780 = vsel %vm501, %v5727, 0
      %v5783 = vsel %vm556, %v5687, 0
      %5785 = vmatpush.bf16.msra.mxu0 0
      %5786 = vmatpush.bf16.msra.mxu0 0
      %5787 = vmatpush.bf16.msra.mxu0 0
      %5788 = vmatpush.bf16.msra.mxu0 0
      %5789 = vmatpush.bf16.msra.mxu0 0
      %5790 = vmatpush.bf16.msra.mxu0 0
      %5791 = vmatpush.bf16.msra.mxu0 0
      %5792 = vmatpush.bf16.msra.mxu0 %v5783
      %5793 = vmatmul.bf16.gmra.mxu0 %v5729
      %v5794 = vpop.f32.mrf.mxu0
      %v5795 = vadd.f32 0.0, %v5794
      %v5796 = vpop.f32.mrf.mxu0
      %v5797 = vadd.f32 0.0, %v5796
      %5798 = vmatmul.bf16.gmra.mxu0 %v5732
      %v5799 = vpop.f32.mrf.mxu0
      %v5800 = vadd.f32 0.0, %v5799
      %v5801 = vpop.f32.mrf.mxu0
      %v5802 = vadd.f32 0.0, %v5801
      %5803 = vmatmul.bf16.gmra.mxu0 %v5735
      %v5804 = vpop.f32.mrf.mxu0
      %v5805 = vadd.f32 0.0, %v5804
      %v5806 = vpop.f32.mrf.mxu0
      %v5807 = vadd.f32 0.0, %v5806
      %5808 = vmatmul.bf16.gmra.mxu0 %v5738
      %v5809 = vpop.f32.mrf.mxu0
      %v5810 = vadd.f32 0.0, %v5809
      %v5811 = vpop.f32.mrf.mxu0
      %v5812 = vadd.f32 0.0, %v5811
      %5813 = vmatmul.bf16.gmra.mxu0 %v5741
      %v5814 = vpop.f32.mrf.mxu0
      %v5815 = vadd.f32 0.0, %v5814
      %v5816 = vpop.f32.mrf.mxu0
      %v5817 = vadd.f32 0.0, %v5816
      %5818 = vmatmul.bf16.gmra.mxu0 %v5744
      %v5819 = vpop.f32.mrf.mxu0
      %v5820 = vadd.f32 0.0, %v5819
      %v5821 = vpop.f32.mrf.mxu0
      %v5822 = vadd.f32 0.0, %v5821
      %5823 = vmatmul.bf16.gmra.mxu0 %v5747
      %v5824 = vpop.f32.mrf.mxu0
      %v5825 = vadd.f32 0.0, %v5824
      %v5826 = vpop.f32.mrf.mxu0
      %v5827 = vadd.f32 0.0, %v5826
      %5828 = vmatmul.bf16.gmra.mxu0 %v5750
      %v5829 = vpop.f32.mrf.mxu0
      %v5830 = vadd.f32 0.0, %v5829
      %v5831 = vpop.f32.mrf.mxu0
      %v5832 = vadd.f32 0.0, %v5831
      %5833 = vmatmul.bf16.gmra.mxu0 %v5753
      %v5834 = vpop.f32.mrf.mxu0
      %v5835 = vadd.f32 0.0, %v5834
      %v5836 = vpop.f32.mrf.mxu0
      %v5837 = vadd.f32 0.0, %v5836
      %5838 = vmatmul.bf16.gmra.mxu0 %v5756
      %v5839 = vpop.f32.mrf.mxu0
      %v5840 = vadd.f32 0.0, %v5839
      %v5841 = vpop.f32.mrf.mxu0
      %v5842 = vadd.f32 0.0, %v5841
      %5843 = vmatmul.bf16.gmra.mxu0 %v5759
      %v5844 = vpop.f32.mrf.mxu0
      %v5845 = vadd.f32 0.0, %v5844
      %v5846 = vpop.f32.mrf.mxu0
      %v5847 = vadd.f32 0.0, %v5846
      %5848 = vmatmul.bf16.gmra.mxu0 %v5762
      %v5849 = vpop.f32.mrf.mxu0
      %v5850 = vadd.f32 0.0, %v5849
      %v5851 = vpop.f32.mrf.mxu0
      %v5852 = vadd.f32 0.0, %v5851
      %5853 = vmatmul.bf16.gmra.mxu0 %v5765
      %v5854 = vpop.f32.mrf.mxu0
      %v5855 = vadd.f32 0.0, %v5854
      %v5856 = vpop.f32.mrf.mxu0
      %v5857 = vadd.f32 0.0, %v5856
      %5858 = vmatmul.bf16.gmra.mxu0 %v5768
      %v5859 = vpop.f32.mrf.mxu0
      %v5860 = vadd.f32 0.0, %v5859
      %v5861 = vpop.f32.mrf.mxu0
      %v5862 = vadd.f32 0.0, %v5861
      %5863 = vmatmul.bf16.gmra.mxu0 %v5771
      %v5864 = vpop.f32.mrf.mxu0
      %v5865 = vadd.f32 0.0, %v5864
      %v5866 = vpop.f32.mrf.mxu0
      %v5867 = vadd.f32 0.0, %v5866
      %5868 = vmatmul.bf16.gmra.mxu0 %v5774
      %v5869 = vpop.f32.mrf.mxu0
      %v5870 = vadd.f32 0.0, %v5869
      %v5871 = vpop.f32.mrf.mxu0
      %v5872 = vadd.f32 0.0, %v5871
      %5873 = vmatmul.bf16.gmra.mxu0 %v5777
      %v5874 = vpop.f32.mrf.mxu0
      %v5875 = vadd.f32 0.0, %v5874
      %v5876 = vpop.f32.mrf.mxu0
      %v5877 = vadd.f32 0.0, %v5876
      %5878 = vmatmul.bf16.gmra.mxu0 %v5780
      %v5879 = vpop.f32.mrf.mxu0
      %v5880 = vadd.f32 0.0, %v5879
      %v5881 = vpop.f32.mrf.mxu0
      %v5882 = vadd.f32 0.0, %v5881
      %5883 = vdwg.mxu0
      %v5884 = vadd.f32 %v5649, %v5795
      %v5885 = vadd.f32 %v5650, %v5797
      %v5886 = vadd.f32 %v5651, %v5800
      %v5887 = vadd.f32 %v5652, %v5802
      %v5888 = vadd.f32 %v5653, %v5805
      %v5889 = vadd.f32 %v5654, %v5807
      %v5890 = vadd.f32 %v5655, %v5810
      %v5891 = vadd.f32 %v5656, %v5812
      %v5892 = vadd.f32 %v5657, %v5815
      %v5893 = vadd.f32 %v5658, %v5817
      %v5894 = vadd.f32 %v5659, %v5820
      %v5895 = vadd.f32 %v5660, %v5822
      %v5896 = vadd.f32 %v5661, %v5825
      %v5897 = vadd.f32 %v5662, %v5827
      %v5898 = vadd.f32 %v5663, %v5830
      %v5899 = vadd.f32 %v5664, %v5832
      %v5900 = vadd.f32 %v5665, %v5835
      %v5901 = vadd.f32 %v5666, %v5837
      %v5902 = vadd.f32 %v5667, %v5840
      %v5903 = vadd.f32 %v5668, %v5842
      %v5904 = vadd.f32 %v5669, %v5845
      %v5905 = vadd.f32 %v5670, %v5847
      %v5906 = vadd.f32 %v5671, %v5850
      %v5907 = vadd.f32 %v5672, %v5852
      %v5908 = vadd.f32 %v5673, %v5855
      %v5909 = vadd.f32 %v5674, %v5857
      %v5910 = vadd.f32 %v5675, %v5860
      %v5911 = vadd.f32 %v5676, %v5862
      %v5912 = vadd.f32 %v5677, %v5865
      %v5913 = vadd.f32 %v5678, %v5867
      %v5914 = vadd.f32 %v5679, %v5870
      %v5915 = vadd.f32 %v5680, %v5872
      %v5916 = vadd.f32 %v5681, %v5875
      %v5917 = vadd.f32 %v5682, %v5877
      %v5918 = vadd.f32 %v5683, %v5880
      %v5919 = vadd.f32 %v5684, %v5882
      %v5920 = vld [vmem:[%s3] sm:$0x1]
      %v5922 = vperm.slane %v5920, 0
      %v5924 = vadd.f32 %v5884, %v5922
      %v5925 = vadd.f32 %v5885, %v5922
      %v5926 = vadd.f32 %v5886, %v5922
      %v5927 = vadd.f32 %v5887, %v5922
      %v5928 = vadd.f32 %v5888, %v5922
      %v5929 = vadd.f32 %v5889, %v5922
      %v5930 = vadd.f32 %v5890, %v5922
      %v5931 = vadd.f32 %v5891, %v5922
      %v5932 = vadd.f32 %v5892, %v5922
      %v5933 = vadd.f32 %v5893, %v5922
      %v5934 = vadd.f32 %v5894, %v5922
      %v5935 = vadd.f32 %v5895, %v5922
      %v5936 = vadd.f32 %v5896, %v5922
      %v5937 = vadd.f32 %v5897, %v5922
      %v5938 = vadd.f32 %v5898, %v5922
      %v5939 = vadd.f32 %v5899, %v5922
      %v5940 = vadd.f32 %v5900, %v5922
      %v5941 = vadd.f32 %v5901, %v5922
      %v5942 = vadd.f32 %v5902, %v5922
      %v5943 = vadd.f32 %v5903, %v5922
      %v5944 = vadd.f32 %v5904, %v5922
      %v5945 = vadd.f32 %v5905, %v5922
      %v5946 = vadd.f32 %v5906, %v5922
      %v5947 = vadd.f32 %v5907, %v5922
      %v5948 = vadd.f32 %v5908, %v5922
      %v5949 = vadd.f32 %v5909, %v5922
      %v5950 = vadd.f32 %v5910, %v5922
      %v5951 = vadd.f32 %v5911, %v5922
      %v5952 = vadd.f32 %v5912, %v5922
      %v5953 = vadd.f32 %v5913, %v5922
      %v5954 = vadd.f32 %v5914, %v5922
      %v5955 = vadd.f32 %v5915, %v5922
      %v5956 = vadd.f32 %v5916, %v5922
      %v5957 = vadd.f32 %v5917, %v5922
      %v5958 = vadd.f32 %v5918, %v5922
      %v5959 = vadd.f32 %v5919, %v5922
      %v5960 = vmax.f32 %v5924, 0.0
      %v5961 = vmax.f32 %v5925, 0.0
      %v5962 = vmax.f32 %v5926, 0.0
      %v5963 = vmax.f32 %v5927, 0.0
      %v5964 = vmax.f32 %v5928, 0.0
      %v5965 = vmax.f32 %v5929, 0.0
      %v5966 = vmax.f32 %v5930, 0.0
      %v5967 = vmax.f32 %v5931, 0.0
      %v5968 = vmax.f32 %v5932, 0.0
      %v5969 = vmax.f32 %v5933, 0.0
      %v5970 = vmax.f32 %v5934, 0.0
      %v5971 = vmax.f32 %v5935, 0.0
      %v5972 = vmax.f32 %v5936, 0.0
      %v5973 = vmax.f32 %v5937, 0.0
      %v5974 = vmax.f32 %v5938, 0.0
      %v5975 = vmax.f32 %v5939, 0.0
      %v5976 = vmax.f32 %v5940, 0.0
      %v5977 = vmax.f32 %v5941, 0.0
      %v5978 = vmax.f32 %v5942, 0.0
      %v5979 = vmax.f32 %v5943, 0.0
      %v5980 = vmax.f32 %v5944, 0.0
      %v5981 = vmax.f32 %v5945, 0.0
      %v5982 = vmax.f32 %v5946, 0.0
      %v5983 = vmax.f32 %v5947, 0.0
      %v5984 = vmax.f32 %v5948, 0.0
      %v5985 = vmax.f32 %v5949, 0.0
      %v5986 = vmax.f32 %v5950, 0.0
      %v5987 = vmax.f32 %v5951, 0.0
      %v5988 = vmax.f32 %v5952, 0.0
      %v5989 = vmax.f32 %v5953, 0.0
      %v5990 = vmax.f32 %v5954, 0.0
      %v5991 = vmax.f32 %v5955, 0.0
      %v5992 = vmax.f32 %v5956, 0.0
      %v5993 = vmax.f32 %v5957, 0.0
      %v5994 = vmax.f32 %v5958, 0.0
      %v5995 = vmax.f32 %v5959, 0.0
      %5996 = vst.msk [vmem:[%s217] sm:$0xff] %vm501, %v5960
      %5997 = vst.msk [vmem:[%s217 + $0x8] sm:$0xff] %vm501, %v5961
      %5998 = vst.msk [vmem:[%s217 + $0x10] sm:$0xff] %vm501, %v5962
      %5999 = vst.msk [vmem:[%s217 + $0x18] sm:$0xff] %vm501, %v5963
      %6000 = vst.msk [vmem:[%s217 + $0x20] sm:$0xff] %vm501, %v5964
      %6001 = vst.msk [vmem:[%s217 + $0x28] sm:$0xff] %vm501, %v5965
      %6002 = vst.msk [vmem:[%s217 + $0x30] sm:$0xff] %vm501, %v5966
      %6003 = vst.msk [vmem:[%s217 + $0x38] sm:$0xff] %vm501, %v5967
      %6004 = vst.msk [vmem:[%s217 + $0x40] sm:$0xff] %vm501, %v5968
      %6005 = vst.msk [vmem:[%s217 + $0x48] sm:$0xff] %vm501, %v5969
      %6006 = vst.msk [vmem:[%s217 + $0x50] sm:$0xff] %vm501, %v5970
      %6007 = vst.msk [vmem:[%s217 + $0x58] sm:$0xff] %vm501, %v5971
      %6008 = vst.msk [vmem:[%s217 + $0x60] sm:$0xff] %vm501, %v5972
      %6009 = vst.msk [vmem:[%s217 + $0x68] sm:$0xff] %vm501, %v5973
      %6010 = vst.msk [vmem:[%s217 + $0x70] sm:$0xff] %vm501, %v5974
      %6011 = vst.msk [vmem:[%s217 + $0x78] sm:$0xff] %vm501, %v5975
      %6012 = vst.msk [vmem:[%s217 + $0x80] sm:$0xff] %vm501, %v5976
      %6013 = vst.msk [vmem:[%s217 + $0x88] sm:$0xff] %vm501, %v5977
      %6014 = vst.msk [vmem:[%s217 + $0x90] sm:$0xff] %vm501, %v5978
      %6015 = vst.msk [vmem:[%s217 + $0x98] sm:$0xff] %vm501, %v5979
      %6016 = vst.msk [vmem:[%s217 + $0xa0] sm:$0xff] %vm501, %v5980
      %6017 = vst.msk [vmem:[%s217 + $0xa8] sm:$0xff] %vm501, %v5981
      %6018 = vst.msk [vmem:[%s217 + $0xb0] sm:$0xff] %vm501, %v5982
      %6019 = vst.msk [vmem:[%s217 + $0xb8] sm:$0xff] %vm501, %v5983
      %6020 = vst.msk [vmem:[%s217 + $0xc0] sm:$0xff] %vm501, %v5984
      %6021 = vst.msk [vmem:[%s217 + $0xc8] sm:$0xff] %vm501, %v5985
      %6022 = vst.msk [vmem:[%s217 + $0xd0] sm:$0xff] %vm501, %v5986
      %6023 = vst.msk [vmem:[%s217 + $0xd8] sm:$0xff] %vm501, %v5987
      %6024 = vst.msk [vmem:[%s217 + $0xe0] sm:$0xff] %vm501, %v5988
      %6025 = vst.msk [vmem:[%s217 + $0xe8] sm:$0xff] %vm501, %v5989
      %6026 = vst.msk [vmem:[%s217 + $0xf0] sm:$0xff] %vm501, %v5990
      %6027 = vst.msk [vmem:[%s217 + $0xf8] sm:$0xff] %vm501, %v5991
      %6028 = vst.msk [vmem:[%s217 + $0x100] sm:$0xff] %vm501, %v5992
      %6029 = vst.msk [vmem:[%s217 + $0x108] sm:$0xff] %vm501, %v5993
      %6030 = vst.msk [vmem:[%s217 + $0x110] sm:$0xff] %vm501, %v5994
      %6031 = vst.msk [vmem:[%s217 + $0x118] sm:$0xff] %vm501, %v5995
      %p6032 = scmp.lt.s32.totalorder %s15, 1
      %s6033 = scalar_select %p6032, %s15, 1
      %s6034 = smul.addr %s6033, 36
      %s6035 = smul.addr %s6034, 8
      %s6036 = scalar_lea.vmem %s4, %s6035
      // Predicated region
      $region37: #{csfi2_forward.11} parent=35 // pred_check
        %p6037 = pneg %p127
      $region38: #{csfi2_forward.11} parent=35 // pred_check_branch
        %6039 = sbr.rel (%p6037) target = $region40
      $region39: #{csfi2_forward.11} parent=35 // pred_region
        _
      $region40: #{csfi2_forward.11} parent=35 // pred_fallthru
        _
    $region36: #{csfi2_forward.11} parent=5 // pred_fallthru
      _
    %p6040 = scmp.le.s32.totalorder 2, %s10
    // Predicated region
    $region41: #{csfi2_forward.11} parent=5 // pred_check
      %p6041 = pneg %p6040
    $region42: #{csfi2_forward.11} parent=5 // pred_check_branch
      %6043 = sbr.rel (%p6041) target = $region44
    $region43: #{csfi2_forward.11} parent=5 // pred_region
      %s6044 = ssub.s32 %s10, 2
      // Predicated region
      $region45: #{csfi2_forward.11} parent=43 // pred_check
        %p6045 = pneg %p133
      $region46: #{csfi2_forward.11} parent=43 // pred_check_branch
        %6047 = sbr.rel (%p6045) target = $region48
      $region47: #{csfi2_forward.11} parent=43 // pred_region
        %p6048 = scmp.lt.s32.totalorder %s16, 1
        %s6049 = scalar_select %p6048, %s16, 1
        %s6050 = smul.addr %s6049, 36
        %s6051 = smul.addr %s6050, 8
        %s6052 = scalar_lea.vmem %s4, %s6051
      $region48: #{csfi2_forward.11} parent=43 // pred_fallthru
        _
    $region44: #{csfi2_forward.11} parent=5 // pred_fallthru
      _
  $region6: #{csfi2_forward.11} parent=0 // loop_footer
    %s14 = sadd.s32 1, %s10
  $region7: #{csfi2_forward.11} parent=0 // loop_footer_branch
    %9 = sbr.rel target = $region3
  $region8: #{csfi2_forward.11} parent=0 // loop_exit
    _

</llo_original>
